<compile_context>
chip_gen: v7x
topology: tpu7x:2x2x1
jax: 0.10.0
libtpu: 0.0.40
codegen_flags: <defaults>
</compile_context>

<pallas_src>
import jax
import jax.numpy as jnp
from jax.experimental import pallas as pl
from jax.experimental.pallas import tpu as pltpu

EPS = 1e-5


# ---------------------------------------------------------------------------
# Fused kernel: gate + conv9 + BN5 + residual + conv15 + BN9
# ---------------------------------------------------------------------------
def _make_fused_kernel(num_pixels: int):
    inv_p = 1.0 / float(num_pixels)

    def kernel(x23_ref, w8_ref, b8_ref, x20_ref, w9_ref, x43_ref,
               g5_ref, b5_ref, w15_ref, g9_ref, b9_ref, out_ref):
        # ---- conv2d8 (1x1 on a 4-vector) + sigmoid gate, computed ONCE ------
        # w8: [4, 96], x23: [4, 1]  ->  x24: [1, 96]
        x24 = jnp.sum(w8_ref[...] * x23_ref[...], axis=0, keepdims=True) + b8_ref[...]
        gate = jax.nn.sigmoid(x24)                                  # [1, 96]

        # Fold the per-channel gate into conv2d9's weights:
        #   W9 @ (gate * x20) == (W9 * gate) @ x20
        w9g = w9_ref[...] * gate                                    # [24, 96]
        x27 = jnp.dot(w9g, x20_ref[...],
                      preferred_element_type=jnp.float32)           # [24, P]

        # ---- batchnorm2d5 (training mode -> biased batch stats) -------------
        s1 = jnp.sum(x27, axis=1, keepdims=True)                    # [24, 1]
        q1 = jnp.sum(x27 * x27, axis=1, keepdims=True)              # [24, 1]
        m1 = s1 * inv_p
        v1 = jnp.maximum(q1 * inv_p - m1 * m1, 0.0)                 # clamp >= 0
        sc1 = g5_ref[...] * jax.lax.rsqrt(v1 + EPS)
        sh1 = b5_ref[...] - m1 * sc1

        # ---- residual add + conv2d15 -----------------------------------------
        x44 = x43_ref[...] + x27 * sc1 + sh1                        # [24, P]
        x45 = jnp.dot(w15_ref[...], x44,
                      preferred_element_type=jnp.float32)           # [144, P]

        # ---- batchnorm2d9 ----------------------------------------------------
        s2 = jnp.sum(x45, axis=1, keepdims=True)                    # [144, 1]
        q2 = jnp.sum(x45 * x45, axis=1, keepdims=True)              # [144, 1]
        m2 = s2 * inv_p
        v2 = jnp.maximum(q2 * inv_p - m2 * m2, 0.0)
        sc2 = g9_ref[...] * jax.lax.rsqrt(v2 + EPS)
        sh2 = b9_ref[...] - m2 * sc2

        out_ref[...] = x45 * sc2 + sh2                              # [144, P]

    return kernel


# ---------------------------------------------------------------------------
# Wrapper
# ---------------------------------------------------------------------------
def forward(x23, x20, x43, params):
    """x23: [1,4,1,1], x20: [1,96,H,W], x43: [1,24,H,W]  (NCHW, N must be 1)."""
    N, _, H, W = x20.shape
    assert N == 1, "gate broadcast implemented for batch size 1 (as in the module)"
    P = H * W
    f32 = jnp.float32

    # NCHW with N == 1 viewed as [C, H*W]: channels on sublanes, pixels on the
    # 128-lane axis -> lane-dense loads/stores, zero transposes.
    x23c = x23.reshape(4, 1).astype(f32)
    x20v = x20.reshape(96, P).astype(f32)
    x43v = x43.reshape(24, P).astype(f32)

    out = pl.pallas_call(
        _make_fused_kernel(P),
        out_shape=jax.ShapeDtypeStruct((144, P), f32),
        compiler_params=pltpu.CompilerParams(
            vmem_limit_bytes=32 * 1024 * 1024),
    )(x23c, params["w8"], params["b8"], x20v, params["w9"], x43v,
      params["bn5_gamma"], params["bn5_beta"], params["w15"],
      params["bn9_gamma"], params["bn9_beta"])

    return out.reshape(N, 144, H, W)


# ---------------------------------------------------------------------------
# Pure-JAX reference (for self-check)
# ---------------------------------------------------------------------------
def reference(x23, x20, x43, p):
    hp = jax.lax.Precision.HIGHEST
    gate = jax.nn.sigmoid(
        jnp.dot(x23.reshape(1, 4), p["w8"], precision=hp) + p["b8"])        # [1,96]
    x26 = gate.reshape(1, 96, 1, 1) * x20
    x27 = jnp.einsum("oc,nchw->nohw", p["w9"], x26, precision=hp)
    m1 = x27.mean(axis=(0, 2, 3), keepdims=True)
    v1 = x27.var(axis=(0, 2, 3), keepdims=True)
    x28 = (x27 - m1) / jnp.sqrt(v1 + EPS) * p["bn5_gamma"].reshape(1, 24, 1, 1) \
          + p["bn5_beta"].reshape(1, 24, 1, 1)
    x44 = x43 + x28
    x45 = jnp.einsum("oc,nchw->nohw", p["w15"], x44, precision=hp)
    m2 = x45.mean(axis=(0, 2, 3), keepdims=True)
    v2 = x45.var(axis=(0, 2, 3), keepdims=True)
    return (x45 - m2) / jnp.sqrt(v2 + EPS) * p["bn9_gamma"].reshape(1, 144, 1, 1) \
           + p["bn9_beta"].reshape(1, 144, 1, 1)


# ---------------------------------------------------------------------------
if __name__ == "__main__":
    key = jax.random.PRNGKey(0)
    ks = jax.random.split(key, 8)

    # shapes from the original module spec (1x1 convs, N=1, 56x56 spatial)
    N, H, W = 1, 56, 56

    x23 = jax.random.normal(ks[0], (N, 4, 1, 1), dtype=jnp.float32)
    x20 = jax.random.normal(ks[1], (N, 96, H, W), dtype=jnp.float32)
    x43 = jax.random.normal(ks[2], (N, 24, H, W), dtype=jnp.float32)

    # Conv weights created in PyTorch layout [Cout, Cin, 1, 1], then reshaped
    # for the [Cout,Cin] @ [Cin,P] channel-major matmuls.
    w8_t = 0.1 * jax.random.normal(ks[3], (96, 4, 1, 1), dtype=jnp.float32)
    w9_t = 0.1 * jax.random.normal(ks[4], (24, 96, 1, 1), dtype=jnp.float32)
    w15_t = 0.1 * jax.random.normal(ks[5], (144, 24, 1, 1), dtype=jnp.float32)
    b8_t = 0.1 * jax.random.normal(ks[6], (96,), dtype=jnp.float32)

    params = {
        "w8": jnp.transpose(w8_t.reshape(96, 4), (1, 0)),     # [4, 96]
        "b8": b8_t.reshape(1, 96),                            # [1, 96]
        "w9": w9_t.reshape(24, 96),                           # [24, 96]  (Cout, Cin)
        "w15": w15_t.reshape(144, 24),                        # [144, 24] (Cout, Cin)
        # BatchNorm default init: weight=1, bias=0 (training mode -> batch stats)
        "bn5_gamma": jnp.ones((24, 1), jnp.float32),
        "bn5_beta": jnp.zeros((24, 1), jnp.float32),
        "bn9_gamma": jnp.ones((144, 1), jnp.float32),
        "bn9_beta": jnp.zeros((144, 1), jnp.float32),
    }

    out = jax.block_until_ready(forward(x23, x20, x43, params))
    assert out.shape == (N, 144, H, W), out.shape

    ref = jax.block_until_ready(reference(x23, x20, x43, params))
    max_err = float(jnp.max(jnp.abs(out - ref)))
    assert max_err < 2e-2, f"mismatch vs reference: {max_err}"

    print("KERNEL_OK")
</pallas_src>

<mosaic_0001>
module attributes {stable_mosaic.version = 11 : i64} {
  func.func @kernel(%arg0: memref<4x1xf32, #tpu.memory_space<vmem>>, %arg1: memref<4x96xf32, #tpu.memory_space<vmem>>, %arg2: memref<1x96xf32, #tpu.memory_space<vmem>>, %arg3: memref<96x3136xf32, #tpu.memory_space<vmem>>, %arg4: memref<24x96xf32, #tpu.memory_space<vmem>>, %arg5: memref<24x3136xf32, #tpu.memory_space<vmem>>, %arg6: memref<24x1xf32, #tpu.memory_space<vmem>>, %arg7: memref<24x1xf32, #tpu.memory_space<vmem>>, %arg8: memref<144x24xf32, #tpu.memory_space<vmem>>, %arg9: memref<144x1xf32, #tpu.memory_space<vmem>>, %arg10: memref<144x1xf32, #tpu.memory_space<vmem>>, %arg11: memref<144x3136xf32, #tpu.memory_space<vmem>>) attributes {dimension_semantics = [], scalar_prefetch = 0 : i64, scratch_operands = 0 : i64, tpu.core_type = #tpu.core_type<tc>} {
    %c0 = arith.constant 0 : index
    %c0_0 = arith.constant 0 : index
    %0 = vector.load %arg1[%c0, %c0_0] : memref<4x96xf32, #tpu.memory_space<vmem>>, vector<4x96xf32>
    %c0_1 = arith.constant 0 : index
    %c0_2 = arith.constant 0 : index
    %1 = vector.load %arg0[%c0_1, %c0_2] : memref<4x1xf32, #tpu.memory_space<vmem>>, vector<4x1xf32>
    %2 = vector.broadcast %1 : vector<4x1xf32> to vector<4x96xf32>
    %3 = arith.mulf %0, %2 : vector<4x96xf32>
    %cst = arith.constant dense<0.000000e+00> : vector<96xf32>
    %4 = vector.multi_reduction <add>, %3, %cst [0] : vector<4x96xf32> to vector<96xf32>
    %5 = vector.shape_cast %4 : vector<96xf32> to vector<1x96xf32>
    %c0_3 = arith.constant 0 : index
    %c0_4 = arith.constant 0 : index
    %6 = vector.load %arg2[%c0_3, %c0_4] : memref<1x96xf32, #tpu.memory_space<vmem>>, vector<1x96xf32>
    %7 = arith.addf %5, %6 : vector<1x96xf32>
    %8 = arith.negf %7 : vector<1x96xf32>
    %9 = math.exp %8 : vector<1x96xf32>
    %cst_5 = arith.constant 1.000000e+00 : f32
    %10 = vector.broadcast %cst_5 : f32 to vector<1x96xf32>
    %11 = arith.addf %10, %9 : vector<1x96xf32>
    %12 = arith.divf %10, %11 : vector<1x96xf32>
    %c0_6 = arith.constant 0 : index
    %c0_7 = arith.constant 0 : index
    %13 = vector.load %arg4[%c0_6, %c0_7] : memref<24x96xf32, #tpu.memory_space<vmem>>, vector<24x96xf32>
    %14 = vector.broadcast %12 : vector<1x96xf32> to vector<24x96xf32>
    %15 = arith.mulf %13, %14 : vector<24x96xf32>
    %c0_8 = arith.constant 0 : index
    %c0_9 = arith.constant 0 : index
    %16 = vector.load %arg3[%c0_8, %c0_9] : memref<96x3136xf32, #tpu.memory_space<vmem>>, vector<96x3136xf32>
    %cst_10 = arith.constant dense<0.000000e+00> : vector<24x3136xf32>
    %17 = tpu.matmul %15, %16, %cst_10 {dimension_numbers = #tpu.dot_dimension_numbers<[1], [0], [0], [1], [0, 0, 1, 1], [], []>} : vector<24x96xf32>, vector<96x3136xf32>, vector<24x3136xf32> -> vector<24x3136xf32>
    %cst_11 = arith.constant dense<0.000000e+00> : vector<24xf32>
    %18 = vector.multi_reduction <add>, %17, %cst_11 [1] : vector<24x3136xf32> to vector<24xf32>
    %19 = vector.shape_cast %18 : vector<24xf32> to vector<24x1xf32>
    %20 = arith.mulf %17, %17 : vector<24x3136xf32>
    %cst_12 = arith.constant dense<0.000000e+00> : vector<24xf32>
    %21 = vector.multi_reduction <add>, %20, %cst_12 [1] : vector<24x3136xf32> to vector<24xf32>
    %22 = vector.shape_cast %21 : vector<24xf32> to vector<24x1xf32>
    %cst_13 = arith.constant 3.18877544E-4 : f32
    %23 = vector.broadcast %cst_13 : f32 to vector<24x1xf32>
    %24 = arith.mulf %19, %23 : vector<24x1xf32>
    %cst_14 = arith.constant 3.18877544E-4 : f32
    %25 = vector.broadcast %cst_14 : f32 to vector<24x1xf32>
    %26 = arith.mulf %22, %25 : vector<24x1xf32>
    %27 = arith.mulf %24, %24 : vector<24x1xf32>
    %28 = arith.subf %26, %27 : vector<24x1xf32>
    %cst_15 = arith.constant 0.000000e+00 : f32
    %29 = vector.broadcast %cst_15 : f32 to vector<24x1xf32>
    %30 = arith.maximumf %28, %29 : vector<24x1xf32>
    %c0_16 = arith.constant 0 : index
    %c0_17 = arith.constant 0 : index
    %31 = vector.load %arg6[%c0_16, %c0_17] : memref<24x1xf32, #tpu.memory_space<vmem>>, vector<24x1xf32>
    %cst_18 = arith.constant 9.99999974E-6 : f32
    %32 = vector.broadcast %cst_18 : f32 to vector<24x1xf32>
    %33 = arith.addf %30, %32 : vector<24x1xf32>
    %34 = math.rsqrt %33 : vector<24x1xf32>
    %35 = arith.mulf %31, %34 : vector<24x1xf32>
    %c0_19 = arith.constant 0 : index
    %c0_20 = arith.constant 0 : index
    %36 = vector.load %arg7[%c0_19, %c0_20] : memref<24x1xf32, #tpu.memory_space<vmem>>, vector<24x1xf32>
    %37 = arith.mulf %24, %35 : vector<24x1xf32>
    %38 = arith.subf %36, %37 : vector<24x1xf32>
    %c0_21 = arith.constant 0 : index
    %c0_22 = arith.constant 0 : index
    %39 = vector.load %arg5[%c0_21, %c0_22] : memref<24x3136xf32, #tpu.memory_space<vmem>>, vector<24x3136xf32>
    %40 = vector.broadcast %35 : vector<24x1xf32> to vector<24x3136xf32>
    %41 = arith.mulf %17, %40 : vector<24x3136xf32>
    %42 = arith.addf %39, %41 : vector<24x3136xf32>
    %43 = vector.broadcast %38 : vector<24x1xf32> to vector<24x3136xf32>
    %44 = arith.addf %42, %43 : vector<24x3136xf32>
    %c0_23 = arith.constant 0 : index
    %c0_24 = arith.constant 0 : index
    %45 = vector.load %arg8[%c0_23, %c0_24] : memref<144x24xf32, #tpu.memory_space<vmem>>, vector<144x24xf32>
    %cst_25 = arith.constant dense<0.000000e+00> : vector<144x3136xf32>
    %46 = tpu.matmul %45, %44, %cst_25 {dimension_numbers = #tpu.dot_dimension_numbers<[1], [0], [0], [1], [0, 0, 1, 1], [], []>} : vector<144x24xf32>, vector<24x3136xf32>, vector<144x3136xf32> -> vector<144x3136xf32>
    %cst_26 = arith.constant dense<0.000000e+00> : vector<144xf32>
    %47 = vector.multi_reduction <add>, %46, %cst_26 [1] : vector<144x3136xf32> to vector<144xf32>
    %48 = vector.shape_cast %47 : vector<144xf32> to vector<144x1xf32>
    %49 = arith.mulf %46, %46 : vector<144x3136xf32>
    %cst_27 = arith.constant dense<0.000000e+00> : vector<144xf32>
    %50 = vector.multi_reduction <add>, %49, %cst_27 [1] : vector<144x3136xf32> to vector<144xf32>
    %51 = vector.shape_cast %50 : vector<144xf32> to vector<144x1xf32>
    %cst_28 = arith.constant 3.18877544E-4 : f32
    %52 = vector.broadcast %cst_28 : f32 to vector<144x1xf32>
    %53 = arith.mulf %48, %52 : vector<144x1xf32>
    %cst_29 = arith.constant 3.18877544E-4 : f32
    %54 = vector.broadcast %cst_29 : f32 to vector<144x1xf32>
    %55 = arith.mulf %51, %54 : vector<144x1xf32>
    %56 = arith.mulf %53, %53 : vector<144x1xf32>
    %57 = arith.subf %55, %56 : vector<144x1xf32>
    %cst_30 = arith.constant 0.000000e+00 : f32
    %58 = vector.broadcast %cst_30 : f32 to vector<144x1xf32>
    %59 = arith.maximumf %57, %58 : vector<144x1xf32>
    %c0_31 = arith.constant 0 : index
    %c0_32 = arith.constant 0 : index
    %60 = vector.load %arg9[%c0_31, %c0_32] : memref<144x1xf32, #tpu.memory_space<vmem>>, vector<144x1xf32>
    %cst_33 = arith.constant 9.99999974E-6 : f32
    %61 = vector.broadcast %cst_33 : f32 to vector<144x1xf32>
    %62 = arith.addf %59, %61 : vector<144x1xf32>
    %63 = math.rsqrt %62 : vector<144x1xf32>
    %64 = arith.mulf %60, %63 : vector<144x1xf32>
    %c0_34 = arith.constant 0 : index
    %c0_35 = arith.constant 0 : index
    %65 = vector.load %arg10[%c0_34, %c0_35] : memref<144x1xf32, #tpu.memory_space<vmem>>, vector<144x1xf32>
    %66 = arith.mulf %53, %64 : vector<144x1xf32>
    %67 = arith.subf %65, %66 : vector<144x1xf32>
    %68 = vector.broadcast %64 : vector<144x1xf32> to vector<144x3136xf32>
    %69 = arith.mulf %46, %68 : vector<144x3136xf32>
    %70 = vector.broadcast %67 : vector<144x1xf32> to vector<144x3136xf32>
    %71 = arith.addf %69, %70 : vector<144x3136xf32>
    %c0_36 = arith.constant 0 : index
    %c0_37 = arith.constant 0 : index
    %72 = vector.load %arg11[%c0_36, %c0_37] : memref<144x3136xf32, #tpu.memory_space<vmem>>, vector<144x3136xf32>
    tpu.vector_store %arg11[%c0_36, %c0_37], %71 {strides = array<i32>} : memref<144x3136xf32, #tpu.memory_space<vmem>>, vector<144x3136xf32>,
    return
  }
}

</mosaic_0001>

<llo_original>
// kernel: tpu_custom_call.1
$region0: #{tpu_custom_call.1}
  #allocation0 [shape = 'u32[]', space=smem, size = 0x4, offset = 0x4, fixed_abs, tag = 'smem constant byte address 0x4 - core index']
  #allocation1 [shape = 'u32[144,128]{1,0:T(1,128)}', space=vmem, size = 0x12000, scoped, tag = 'internal scratch']
  %s0 = inlined_call_operand.vmem [shape: f32[4,1], index: 0, kind: input, shape index: {}]
  %s1 = inlined_call_operand.hbm [shape: f32[4,96], index: 1, kind: input, shape index: {}]
  %s2 = inlined_call_operand.hbm [shape: f32[1,96], index: 2, kind: input, shape index: {}]
  %s3 = inlined_call_operand.hbm [shape: f32[96,3136], index: 3, kind: input, shape index: {}]
  %s4 = inlined_call_operand.hbm [shape: f32[24,96], index: 4, kind: input, shape index: {}]
  %s5 = inlined_call_operand.hbm [shape: f32[24,3136], index: 5, kind: input, shape index: {}]
  %s6 = inlined_call_operand.vmem [shape: f32[24,1], index: 6, kind: input, shape index: {}]
  %s7 = inlined_call_operand.vmem [shape: f32[24,1], index: 7, kind: input, shape index: {}]
  %s8 = inlined_call_operand.vmem [shape: f32[144,24], index: 8, kind: input, shape index: {}]
  %s9 = inlined_call_operand.vmem [shape: f32[144,1], index: 9, kind: input, shape index: {}]
  %s10 = inlined_call_operand.vmem [shape: f32[144,1], index: 10, kind: input, shape index: {}]
  %s11 = inlined_call_operand.hbm [shape: f32[144,3136], index: 11, kind: output, shape index: {}]
  %s12 = sld [smem:[#allocation0]]
  $region74: #{tpu_custom_call.1} parent=0
    _
  %s14 = ssub.s32 1, %s12
  %s15 = scalar_select 0, %s14, %s12
  $region1: #{tpu_custom_call.1} parent=0
    #allocation2 [shape = 'u8[2048]{0}', space=vmem, size = 0x800, scoped, tag = 'input window, operand 1, single buffered']
    #allocation3 [shape = 's32[1]{0}', space=sflag, size = 0x4, scoped, tag = 'scoped memory for tpu_custom_call.1']
    #allocation4 [shape = 's32[1]{0}', space=sflag, size = 0x4, scoped, tag = 'scoped memory for tpu_custom_call.1']
    #allocation5 [shape = 'u8[512]{0}', space=vmem, size = 0x400, scoped, tag = 'input window, operand 2, single buffered']
    #allocation6 [shape = 's32[1]{0}', space=sflag, size = 0x4, scoped, tag = 'scoped memory for tpu_custom_call.1']
    #allocation7 [shape = 'u8[1228800]{0}', space=vmem, size = 0x12c000, scoped, tag = 'input window, operand 3, single buffered']
    #allocation8 [shape = 'u8[12288]{0}', space=vmem, size = 0x3000, scoped, tag = 'input window, operand 4, single buffered']
    #allocation9 [shape = 's32[1]{0}', space=sflag, size = 0x4, scoped, tag = 'scoped memory for tpu_custom_call.1']
    #allocation10 [shape = 'u8[307200]{0}', space=vmem, size = 0x4b000, scoped, tag = 'input window, operand 5, single buffered']
    #allocation11 [shape = 'u8[1843200]{0}', space=vmem, size = 0x1c2000, scoped, tag = 'output window, operand 0, single buffered']
    %16 = vsyncpa [#allocation3], 0
    %17 = vsyncpa [#allocation6], 0
    %18 = vsyncpa [#allocation9], 0
    %19 = vsyncpa [#allocation4], 0
    // Predicated region
    $region2: #{tpu_custom_call.1} parent=1 // pred_check
      _
    $region3: #{tpu_custom_call.1} parent=1 // pred_check_branch
      %21 = sbr.rel (0) target = $region5
    $region4: #{tpu_custom_call.1} parent=1 // pred_region
      _
    $region5: #{tpu_custom_call.1} parent=1 // pred_fallthru
      _
    // Predicated region
    $region6: #{tpu_custom_call.1} parent=1 // pred_check
      _
    $region7: #{tpu_custom_call.1} parent=1 // pred_check_branch
      %23 = sbr.rel (0) target = $region9
    $region8: #{tpu_custom_call.1} parent=1 // pred_region
      %s25 = ssub.s32 64, 64
      %26 = vsyncadd [#allocation3], %s25
      %s28 = sshll.u32 [#allocation2], 4
      %s29 = int_to_ptr.vmem [resolvable:$true] %s28
      %31 = dma.hbm_to_vmem [thread:$0]  %s1, 64, %s29, [#allocation3]
    $region9: #{tpu_custom_call.1} parent=1 // pred_fallthru
      _
    // Predicated region
    $region10: #{tpu_custom_call.1} parent=1 // pred_check
      _
    $region11: #{tpu_custom_call.1} parent=1 // pred_check_branch
      %33 = sbr.rel (0) target = $region13
    $region12: #{tpu_custom_call.1} parent=1 // pred_region
      %s35 = ssub.s32 16, 16
      %36 = vsyncadd [#allocation6], %s35
      %s38 = sshll.u32 [#allocation5], 4
      %s39 = int_to_ptr.vmem [resolvable:$true] %s38
      %41 = dma.hbm_to_vmem [thread:$0]  %s2, 16, %s39, [#allocation6]
    $region13: #{tpu_custom_call.1} parent=1 // pred_fallthru
      _
    // Predicated region
    $region14: #{tpu_custom_call.1} parent=1 // pred_check
      _
    $region15: #{tpu_custom_call.1} parent=1 // pred_check_branch
      %43 = sbr.rel (0) target = $region17
    $region16: #{tpu_custom_call.1} parent=1 // pred_region
      %s45 = ssub.s32 38400, 38400
      %46 = vsyncadd [#allocation6], %s45
      %s47 = sshll.u32 [#allocation7], 4
      %s48 = int_to_ptr.vmem [resolvable:$true] %s47
      %53 = dma.hbm_to_vmem [thread:$0]  %s3, 38400, %s48, [#allocation6], 3200, 3200, 200
    $region17: #{tpu_custom_call.1} parent=1 // pred_fallthru
      _
    // Predicated region
    $region18: #{tpu_custom_call.1} parent=1 // pred_check
      _
    $region19: #{tpu_custom_call.1} parent=1 // pred_check_branch
      %55 = sbr.rel (0) target = $region21
    $region20: #{tpu_custom_call.1} parent=1 // pred_region
      %s57 = ssub.s32 384, 384
      %58 = vsyncadd [#allocation9], %s57
      %s59 = sshll.u32 [#allocation8], 4
      %s60 = int_to_ptr.vmem [resolvable:$true] %s59
      %65 = dma.hbm_to_vmem [thread:$0]  %s4, 384, %s60, [#allocation9], 128, 128, 8
    $region21: #{tpu_custom_call.1} parent=1 // pred_fallthru
      _
    // Predicated region
    $region22: #{tpu_custom_call.1} parent=1 // pred_check
      _
    $region23: #{tpu_custom_call.1} parent=1 // pred_check_branch
      %67 = sbr.rel (0) target = $region25
    $region24: #{tpu_custom_call.1} parent=1 // pred_region
      %s69 = ssub.s32 9600, 9600
      %70 = vsyncadd [#allocation9], %s69
      %s71 = sshll.u32 [#allocation10], 4
      %s72 = int_to_ptr.vmem [resolvable:$true] %s71
      %77 = dma.hbm_to_vmem [thread:$0]  %s5, 9600, %s72, [#allocation9], 3200, 3200, 200
    $region25: #{tpu_custom_call.1} parent=1 // pred_fallthru
      _
    // Predicated region
    $region26: #{tpu_custom_call.1} parent=1 // pred_check
      _
    $region27: #{tpu_custom_call.1} parent=1 // pred_check_branch
      %79 = sbr.rel (0) target = $region29
    $region28: #{tpu_custom_call.1} parent=1 // pred_region
      _
    $region29: #{tpu_custom_call.1} parent=1 // pred_fallthru
      _
    // Predicated region
    $region30: #{tpu_custom_call.1} parent=1 // pred_check
      _
    $region31: #{tpu_custom_call.1} parent=1 // pred_check_branch
      %81 = sbr.rel (0) target = $region33
    $region32: #{tpu_custom_call.1} parent=1 // pred_region
      _
    $region33: #{tpu_custom_call.1} parent=1 // pred_fallthru
      _
    // Predicated region
    $region34: #{tpu_custom_call.1} parent=1 // pred_check
      _
    $region35: #{tpu_custom_call.1} parent=1 // pred_check_branch
      %83 = sbr.rel (0) target = $region37
    $region36: #{tpu_custom_call.1} parent=1 // pred_region
      _
    $region37: #{tpu_custom_call.1} parent=1 // pred_fallthru
      _
    // Predicated region
    $region38: #{tpu_custom_call.1} parent=1 // pred_check
      _
    $region39: #{tpu_custom_call.1} parent=1 // pred_check_branch
      %85 = sbr.rel (0) target = $region41
    $region40: #{tpu_custom_call.1} parent=1 // pred_region
      _
    $region41: #{tpu_custom_call.1} parent=1 // pred_fallthru
      _
    // Predicated region
    $region42: #{tpu_custom_call.1} parent=1 // pred_check
      _
    $region43: #{tpu_custom_call.1} parent=1 // pred_check_branch
      %87 = sbr.rel (0) target = $region45
    $region44: #{tpu_custom_call.1} parent=1 // pred_region
      _
    $region45: #{tpu_custom_call.1} parent=1 // pred_fallthru
      _
    // Predicated region
    $region46: #{tpu_custom_call.1} parent=1 // pred_check
      _
    $region47: #{tpu_custom_call.1} parent=1 // pred_check_branch
      %89 = sbr.rel (0) target = $region49
    $region48: #{tpu_custom_call.1} parent=1 // pred_region
      %90 = dma.done [#allocation3], 64
    $region49: #{tpu_custom_call.1} parent=1 // pred_fallthru
      _
    // Predicated region
    $region50: #{tpu_custom_call.1} parent=1 // pred_check
      _
    $region51: #{tpu_custom_call.1} parent=1 // pred_check_branch
      %92 = sbr.rel (0) target = $region53
    $region52: #{tpu_custom_call.1} parent=1 // pred_region
      %93 = dma.done [#allocation6], 16
    $region53: #{tpu_custom_call.1} parent=1 // pred_fallthru
      _
    // Predicated region
    $region54: #{tpu_custom_call.1} parent=1 // pred_check
      _
    $region55: #{tpu_custom_call.1} parent=1 // pred_check_branch
      %95 = sbr.rel (0) target = $region57
    $region56: #{tpu_custom_call.1} parent=1 // pred_region
      %96 = dma.done [#allocation6], 38400
    $region57: #{tpu_custom_call.1} parent=1 // pred_fallthru
      _
    // Predicated region
    $region58: #{tpu_custom_call.1} parent=1 // pred_check
      _
    $region59: #{tpu_custom_call.1} parent=1 // pred_check_branch
      %98 = sbr.rel (0) target = $region61
    $region60: #{tpu_custom_call.1} parent=1 // pred_region
      %99 = dma.done [#allocation9], 384
    $region61: #{tpu_custom_call.1} parent=1 // pred_fallthru
      _
    // Predicated region
    $region62: #{tpu_custom_call.1} parent=1 // pred_check
      _
    $region63: #{tpu_custom_call.1} parent=1 // pred_check_branch
      %101 = sbr.rel (0) target = $region65
    $region64: #{tpu_custom_call.1} parent=1 // pred_region
      %102 = dma.done [#allocation9], 9600
    $region65: #{tpu_custom_call.1} parent=1 // pred_fallthru
      _
    %v103 = vld [vmem:[#allocation2] sm:$0xf]
    %v104 = vld [vmem:[%s0] sm:$0xf]
    %106 = vset.pattern.permute.xlu0 0
    %107 = vperm.xlu0 %106, %v104
    %v108 = vpop.permute.xlu0 %107
    %v110 = vmul.f32 %v103, %v108
    %vm111 = vcmask 781312
    %v112 = vsel %vm111, %v110, 0.0
    %v113 = vrot.slane %v112, 4
    %v114 = vadd.f32 %v112, %v113
    %v115 = vrot.slane %v114, 2
    %v116 = vadd.f32 %v114, %v115
    %v117 = vrot.slane %v116, 1
    %v118 = vadd.f32 %v116, %v117
    %v119 = vld [vmem:[#allocation5] sm:$0x1]
    %v120 = vadd.f32 %v118, %v119
    %v121 = vxor.u32 %v120, 2147483648
    %v122 = vmul.f32 %v121, 1.442695
    %v123 = vpow.pop %v122
    %v124 = vadd.f32 %v123, 1.0
    %v125 = vrcp.pop %v124
    %v126 = vmul.f32 1.0, %v125
    %v127 = vld [vmem:[#allocation8] sm:$0xff]
    %v128 = vld [vmem:[#allocation8 + $0x8] sm:$0xff]
    %v129 = vld [vmem:[#allocation8 + $0x10] sm:$0xff]
    %v130 = vlaneseq
    %v131 = vshrl.u32 %v130, 7
    %v132 = vsub.s32 0, %v131
    %v133 = vrot.slane %v126, %v132
    %v134 = vmul.f32 %v127, %v133
    %v135 = vmul.f32 %v128, %v133
    %v136 = vmul.f32 %v129, %v133
    %v137 = vld [vmem:[#allocation7] sm:$0xff]
    %v138 = vld [vmem:[#allocation7 + $0x8] sm:$0xff]
    %v139 = vld [vmem:[#allocation7 + $0x10] sm:$0xff]
    %v140 = vld [vmem:[#allocation7 + $0x18] sm:$0xff]
    %v141 = vld [vmem:[#allocation7 + $0x20] sm:$0xff]
    %v142 = vld [vmem:[#allocation7 + $0x28] sm:$0xff]
    %v143 = vld [vmem:[#allocation7 + $0x30] sm:$0xff]
    %v144 = vld [vmem:[#allocation7 + $0x38] sm:$0xff]
    %v145 = vld [vmem:[#allocation7 + $0x40] sm:$0xff]
    %v146 = vld [vmem:[#allocation7 + $0x48] sm:$0xff]
    %v147 = vld [vmem:[#allocation7 + $0x50] sm:$0xff]
    %v148 = vld [vmem:[#allocation7 + $0x58] sm:$0xff]
    %v149 = vld [vmem:[#allocation7 + $0x60] sm:$0xff]
    %v150 = vld [vmem:[#allocation7 + $0x68] sm:$0xff]
    %v151 = vld [vmem:[#allocation7 + $0x70] sm:$0xff]
    %v152 = vld [vmem:[#allocation7 + $0x78] sm:$0xff]
    %v153 = vld [vmem:[#allocation7 + $0x80] sm:$0xff]
    %v154 = vld [vmem:[#allocation7 + $0x88] sm:$0xff]
    %v155 = vld [vmem:[#allocation7 + $0x90] sm:$0xff]
    %v156 = vld [vmem:[#allocation7 + $0x98] sm:$0xff]
    %v157 = vld [vmem:[#allocation7 + $0xa0] sm:$0xff]
    %v158 = vld [vmem:[#allocation7 + $0xa8] sm:$0xff]
    %v159 = vld [vmem:[#allocation7 + $0xb0] sm:$0xff]
    %v160 = vld [vmem:[#allocation7 + $0xb8] sm:$0xff]
    %v161 = vld [vmem:[#allocation7 + $0xc0] sm:$0xff]
    %v162 = vld [vmem:[#allocation7 + $0xc8] sm:$0xff]
    %v163 = vld [vmem:[#allocation7 + $0xd0] sm:$0xff]
    %v164 = vld [vmem:[#allocation7 + $0xd8] sm:$0xff]
    %v165 = vld [vmem:[#allocation7 + $0xe0] sm:$0xff]
    %v166 = vld [vmem:[#allocation7 + $0xe8] sm:$0xff]
    %v167 = vld [vmem:[#allocation7 + $0xf0] sm:$0xff]
    %v168 = vld [vmem:[#allocation7 + $0xf8] sm:$0xff]
    %v169 = vld [vmem:[#allocation7 + $0x100] sm:$0xff]
    %v170 = vld [vmem:[#allocation7 + $0x108] sm:$0xff]
    %v171 = vld [vmem:[#allocation7 + $0x110] sm:$0xff]
    %v172 = vld [vmem:[#allocation7 + $0x118] sm:$0xff]
    %v173 = vld [vmem:[#allocation7 + $0x120] sm:$0xff]
    %v174 = vld [vmem:[#allocation7 + $0x128] sm:$0xff]
    %v175 = vld [vmem:[#allocation7 + $0x130] sm:$0xff]
    %v176 = vld [vmem:[#allocation7 + $0x138] sm:$0xff]
    %v177 = vld [vmem:[#allocation7 + $0x140] sm:$0xff]
    %v178 = vld [vmem:[#allocation7 + $0x148] sm:$0xff]
    %v179 = vld [vmem:[#allocation7 + $0x150] sm:$0xff]
    %v180 = vld [vmem:[#allocation7 + $0x158] sm:$0xff]
    %v181 = vld [vmem:[#allocation7 + $0x160] sm:$0xff]
    %v182 = vld [vmem:[#allocation7 + $0x168] sm:$0xff]
    %v183 = vld [vmem:[#allocation7 + $0x170] sm:$0xff]
    %v184 = vld [vmem:[#allocation7 + $0x178] sm:$0xff]
    %v185 = vld [vmem:[#allocation7 + $0x180] sm:$0xff]
    %v186 = vld [vmem:[#allocation7 + $0x188] sm:$0xff]
    %v187 = vld [vmem:[#allocation7 + $0x190] sm:$0xff]
    %v188 = vld [vmem:[#allocation7 + $0x198] sm:$0xff]
    %v189 = vld [vmem:[#allocation7 + $0x1a0] sm:$0xff]
    %v190 = vld [vmem:[#allocation7 + $0x1a8] sm:$0xff]
    %v191 = vld [vmem:[#allocation7 + $0x1b0] sm:$0xff]
    %v192 = vld [vmem:[#allocation7 + $0x1b8] sm:$0xff]
    %v193 = vld [vmem:[#allocation7 + $0x1c0] sm:$0xff]
    %v194 = vld [vmem:[#allocation7 + $0x1c8] sm:$0xff]
    %v195 = vld [vmem:[#allocation7 + $0x1d0] sm:$0xff]
    %v196 = vld [vmem:[#allocation7 + $0x1d8] sm:$0xff]
    %v197 = vld [vmem:[#allocation7 + $0x1e0] sm:$0xff]
    %v198 = vld [vmem:[#allocation7 + $0x1e8] sm:$0xff]
    %v199 = vld [vmem:[#allocation7 + $0x1f0] sm:$0xff]
    %v200 = vld [vmem:[#allocation7 + $0x1f8] sm:$0xff]
    %v201 = vld [vmem:[#allocation7 + $0x200] sm:$0xff]
    %v202 = vld [vmem:[#allocation7 + $0x208] sm:$0xff]
    %v203 = vld [vmem:[#allocation7 + $0x210] sm:$0xff]
    %v204 = vld [vmem:[#allocation7 + $0x218] sm:$0xff]
    %v205 = vld [vmem:[#allocation7 + $0x220] sm:$0xff]
    %v206 = vld [vmem:[#allocation7 + $0x228] sm:$0xff]
    %v207 = vld [vmem:[#allocation7 + $0x230] sm:$0xff]
    %v208 = vld [vmem:[#allocation7 + $0x238] sm:$0xff]
    %v209 = vld [vmem:[#allocation7 + $0x240] sm:$0xff]
    %v210 = vld [vmem:[#allocation7 + $0x248] sm:$0xff]
    %v211 = vld [vmem:[#allocation7 + $0x250] sm:$0xff]
    %v212 = vld [vmem:[#allocation7 + $0x258] sm:$0xff]
    %v213 = vld [vmem:[#allocation7 + $0x260] sm:$0xff]
    %v214 = vld [vmem:[#allocation7 + $0x268] sm:$0xff]
    %v215 = vld [vmem:[#allocation7 + $0x270] sm:$0xff]
    %v216 = vld [vmem:[#allocation7 + $0x278] sm:$0xff]
    %v217 = vld [vmem:[#allocation7 + $0x280] sm:$0xff]
    %v218 = vld [vmem:[#allocation7 + $0x288] sm:$0xff]
    %v219 = vld [vmem:[#allocation7 + $0x290] sm:$0xff]
    %v220 = vld [vmem:[#allocation7 + $0x298] sm:$0xff]
    %v221 = vld [vmem:[#allocation7 + $0x2a0] sm:$0xff]
    %v222 = vld [vmem:[#allocation7 + $0x2a8] sm:$0xff]
    %v223 = vld [vmem:[#allocation7 + $0x2b0] sm:$0xff]
    %v224 = vld [vmem:[#allocation7 + $0x2b8] sm:$0xff]
    %v225 = vld [vmem:[#allocation7 + $0x2c0] sm:$0xff]
    %v226 = vld [vmem:[#allocation7 + $0x2c8] sm:$0xff]
    %v227 = vld [vmem:[#allocation7 + $0x2d0] sm:$0xff]
    %v228 = vld [vmem:[#allocation7 + $0x2d8] sm:$0xff]
    %v229 = vld [vmem:[#allocation7 + $0x2e0] sm:$0xff]
    %v230 = vld [vmem:[#allocation7 + $0x2e8] sm:$0xff]
    %v231 = vld [vmem:[#allocation7 + $0x2f0] sm:$0xff]
    %v232 = vld [vmem:[#allocation7 + $0x2f8] sm:$0xff]
    %v233 = vld [vmem:[#allocation7 + $0x300] sm:$0xff]
    %v234 = vld [vmem:[#allocation7 + $0x308] sm:$0xff]
    %v235 = vld [vmem:[#allocation7 + $0x310] sm:$0xff]
    %v236 = vld [vmem:[#allocation7 + $0x318] sm:$0xff]
    %v237 = vld [vmem:[#allocation7 + $0x320] sm:$0xff]
    %v238 = vld [vmem:[#allocation7 + $0x328] sm:$0xff]
    %v239 = vld [vmem:[#allocation7 + $0x330] sm:$0xff]
    %v240 = vld [vmem:[#allocation7 + $0x338] sm:$0xff]
    %v241 = vld [vmem:[#allocation7 + $0x340] sm:$0xff]
    %v242 = vld [vmem:[#allocation7 + $0x348] sm:$0xff]
    %v243 = vld [vmem:[#allocation7 + $0x350] sm:$0xff]
    %v244 = vld [vmem:[#allocation7 + $0x358] sm:$0xff]
    %v245 = vld [vmem:[#allocation7 + $0x360] sm:$0xff]
    %v246 = vld [vmem:[#allocation7 + $0x368] sm:$0xff]
    %v247 = vld [vmem:[#allocation7 + $0x370] sm:$0xff]
    %v248 = vld [vmem:[#allocation7 + $0x378] sm:$0xff]
    %v249 = vld [vmem:[#allocation7 + $0x380] sm:$0xff]
    %v250 = vld [vmem:[#allocation7 + $0x388] sm:$0xff]
    %v251 = vld [vmem:[#allocation7 + $0x390] sm:$0xff]
    %v252 = vld [vmem:[#allocation7 + $0x398] sm:$0xff]
    %v253 = vld [vmem:[#allocation7 + $0x3a0] sm:$0xff]
    %v254 = vld [vmem:[#allocation7 + $0x3a8] sm:$0xff]
    %v255 = vld [vmem:[#allocation7 + $0x3b0] sm:$0xff]
    %v256 = vld [vmem:[#allocation7 + $0x3b8] sm:$0xff]
    %v257 = vld [vmem:[#allocation7 + $0x3c0] sm:$0xff]
    %v258 = vld [vmem:[#allocation7 + $0x3c8] sm:$0xff]
    %v259 = vld [vmem:[#allocation7 + $0x3d0] sm:$0xff]
    %v260 = vld [vmem:[#allocation7 + $0x3d8] sm:$0xff]
    %v261 = vld [vmem:[#allocation7 + $0x3e0] sm:$0xff]
    %v262 = vld [vmem:[#allocation7 + $0x3e8] sm:$0xff]
    %v263 = vld [vmem:[#allocation7 + $0x3f0] sm:$0xff]
    %v264 = vld [vmem:[#allocation7 + $0x3f8] sm:$0xff]
    %v265 = vld [vmem:[#allocation7 + $0x400] sm:$0xff]
    %v266 = vld [vmem:[#allocation7 + $0x408] sm:$0xff]
    %v267 = vld [vmem:[#allocation7 + $0x410] sm:$0xff]
    %v268 = vld [vmem:[#allocation7 + $0x418] sm:$0xff]
    %v269 = vld [vmem:[#allocation7 + $0x420] sm:$0xff]
    %v270 = vld [vmem:[#allocation7 + $0x428] sm:$0xff]
    %v271 = vld [vmem:[#allocation7 + $0x430] sm:$0xff]
    %v272 = vld [vmem:[#allocation7 + $0x438] sm:$0xff]
    %v273 = vld [vmem:[#allocation7 + $0x440] sm:$0xff]
    %v274 = vld [vmem:[#allocation7 + $0x448] sm:$0xff]
    %v275 = vld [vmem:[#allocation7 + $0x450] sm:$0xff]
    %v276 = vld [vmem:[#allocation7 + $0x458] sm:$0xff]
    %v277 = vld [vmem:[#allocation7 + $0x460] sm:$0xff]
    %v278 = vld [vmem:[#allocation7 + $0x468] sm:$0xff]
    %v279 = vld [vmem:[#allocation7 + $0x470] sm:$0xff]
    %v280 = vld [vmem:[#allocation7 + $0x478] sm:$0xff]
    %v281 = vld [vmem:[#allocation7 + $0x480] sm:$0xff]
    %v282 = vld [vmem:[#allocation7 + $0x488] sm:$0xff]
    %v283 = vld [vmem:[#allocation7 + $0x490] sm:$0xff]
    %v284 = vld [vmem:[#allocation7 + $0x498] sm:$0xff]
    %v285 = vld [vmem:[#allocation7 + $0x4a0] sm:$0xff]
    %v286 = vld [vmem:[#allocation7 + $0x4a8] sm:$0xff]
    %v287 = vld [vmem:[#allocation7 + $0x4b0] sm:$0xff]
    %v288 = vld [vmem:[#allocation7 + $0x4b8] sm:$0xff]
    %v289 = vld [vmem:[#allocation7 + $0x4c0] sm:$0xff]
    %v290 = vld [vmem:[#allocation7 + $0x4c8] sm:$0xff]
    %v291 = vld [vmem:[#allocation7 + $0x4d0] sm:$0xff]
    %v292 = vld [vmem:[#allocation7 + $0x4d8] sm:$0xff]
    %v293 = vld [vmem:[#allocation7 + $0x4e0] sm:$0xff]
    %v294 = vld [vmem:[#allocation7 + $0x4e8] sm:$0xff]
    %v295 = vld [vmem:[#allocation7 + $0x4f0] sm:$0xff]
    %v296 = vld [vmem:[#allocation7 + $0x4f8] sm:$0xff]
    %v297 = vld [vmem:[#allocation7 + $0x500] sm:$0xff]
    %v298 = vld [vmem:[#allocation7 + $0x508] sm:$0xff]
    %v299 = vld [vmem:[#allocation7 + $0x510] sm:$0xff]
    %v300 = vld [vmem:[#allocation7 + $0x518] sm:$0xff]
    %v301 = vld [vmem:[#allocation7 + $0x520] sm:$0xff]
    %v302 = vld [vmem:[#allocation7 + $0x528] sm:$0xff]
    %v303 = vld [vmem:[#allocation7 + $0x530] sm:$0xff]
    %v304 = vld [vmem:[#allocation7 + $0x538] sm:$0xff]
    %v305 = vld [vmem:[#allocation7 + $0x540] sm:$0xff]
    %v306 = vld [vmem:[#allocation7 + $0x548] sm:$0xff]
    %v307 = vld [vmem:[#allocation7 + $0x550] sm:$0xff]
    %v308 = vld [vmem:[#allocation7 + $0x558] sm:$0xff]
    %v309 = vld [vmem:[#allocation7 + $0x560] sm:$0xff]
    %v310 = vld [vmem:[#allocation7 + $0x568] sm:$0xff]
    %v311 = vld [vmem:[#allocation7 + $0x570] sm:$0xff]
    %v312 = vld [vmem:[#allocation7 + $0x578] sm:$0xff]
    %v313 = vld [vmem:[#allocation7 + $0x580] sm:$0xff]
    %v314 = vld [vmem:[#allocation7 + $0x588] sm:$0xff]
    %v315 = vld [vmem:[#allocation7 + $0x590] sm:$0xff]
    %v316 = vld [vmem:[#allocation7 + $0x598] sm:$0xff]
    %v317 = vld [vmem:[#allocation7 + $0x5a0] sm:$0xff]
    %v318 = vld [vmem:[#allocation7 + $0x5a8] sm:$0xff]
    %v319 = vld [vmem:[#allocation7 + $0x5b0] sm:$0xff]
    %v320 = vld [vmem:[#allocation7 + $0x5b8] sm:$0xff]
    %v321 = vld [vmem:[#allocation7 + $0x5c0] sm:$0xff]
    %v322 = vld [vmem:[#allocation7 + $0x5c8] sm:$0xff]
    %v323 = vld [vmem:[#allocation7 + $0x5d0] sm:$0xff]
    %v324 = vld [vmem:[#allocation7 + $0x5d8] sm:$0xff]
    %v325 = vld [vmem:[#allocation7 + $0x5e0] sm:$0xff]
    %v326 = vld [vmem:[#allocation7 + $0x5e8] sm:$0xff]
    %v327 = vld [vmem:[#allocation7 + $0x5f0] sm:$0xff]
    %v328 = vld [vmem:[#allocation7 + $0x5f8] sm:$0xff]
    %v329 = vld [vmem:[#allocation7 + $0x600] sm:$0xff]
    %v330 = vld [vmem:[#allocation7 + $0x608] sm:$0xff]
    %v331 = vld [vmem:[#allocation7 + $0x610] sm:$0xff]
    %v332 = vld [vmem:[#allocation7 + $0x618] sm:$0xff]
    %v333 = vld [vmem:[#allocation7 + $0x620] sm:$0xff]
    %v334 = vld [vmem:[#allocation7 + $0x628] sm:$0xff]
    %v335 = vld [vmem:[#allocation7 + $0x630] sm:$0xff]
    %v336 = vld [vmem:[#allocation7 + $0x638] sm:$0xff]
    %v337 = vld [vmem:[#allocation7 + $0x640] sm:$0xff]
    %v338 = vld [vmem:[#allocation7 + $0x648] sm:$0xff]
    %v339 = vld [vmem:[#allocation7 + $0x650] sm:$0xff]
    %v340 = vld [vmem:[#allocation7 + $0x658] sm:$0xff]
    %v341 = vld [vmem:[#allocation7 + $0x660] sm:$0xff]
    %v342 = vld [vmem:[#allocation7 + $0x668] sm:$0xff]
    %v343 = vld [vmem:[#allocation7 + $0x670] sm:$0xff]
    %v344 = vld [vmem:[#allocation7 + $0x678] sm:$0xff]
    %v345 = vld [vmem:[#allocation7 + $0x680] sm:$0xff]
    %v346 = vld [vmem:[#allocation7 + $0x688] sm:$0xff]
    %v347 = vld [vmem:[#allocation7 + $0x690] sm:$0xff]
    %v348 = vld [vmem:[#allocation7 + $0x698] sm:$0xff]
    %v349 = vld [vmem:[#allocation7 + $0x6a0] sm:$0xff]
    %v350 = vld [vmem:[#allocation7 + $0x6a8] sm:$0xff]
    %v351 = vld [vmem:[#allocation7 + $0x6b0] sm:$0xff]
    %v352 = vld [vmem:[#allocation7 + $0x6b8] sm:$0xff]
    %v353 = vld [vmem:[#allocation7 + $0x6c0] sm:$0xff]
    %v354 = vld [vmem:[#allocation7 + $0x6c8] sm:$0xff]
    %v355 = vld [vmem:[#allocation7 + $0x6d0] sm:$0xff]
    %v356 = vld [vmem:[#allocation7 + $0x6d8] sm:$0xff]
    %v357 = vld [vmem:[#allocation7 + $0x6e0] sm:$0xff]
    %v358 = vld [vmem:[#allocation7 + $0x6e8] sm:$0xff]
    %v359 = vld [vmem:[#allocation7 + $0x6f0] sm:$0xff]
    %v360 = vld [vmem:[#allocation7 + $0x6f8] sm:$0xff]
    %v361 = vld [vmem:[#allocation7 + $0x700] sm:$0xff]
    %v362 = vld [vmem:[#allocation7 + $0x708] sm:$0xff]
    %v363 = vld [vmem:[#allocation7 + $0x710] sm:$0xff]
    %v364 = vld [vmem:[#allocation7 + $0x718] sm:$0xff]
    %v365 = vld [vmem:[#allocation7 + $0x720] sm:$0xff]
    %v366 = vld [vmem:[#allocation7 + $0x728] sm:$0xff]
    %v367 = vld [vmem:[#allocation7 + $0x730] sm:$0xff]
    %v368 = vld [vmem:[#allocation7 + $0x738] sm:$0xff]
    %v369 = vld [vmem:[#allocation7 + $0x740] sm:$0xff]
    %v370 = vld [vmem:[#allocation7 + $0x748] sm:$0xff]
    %v371 = vld [vmem:[#allocation7 + $0x750] sm:$0xff]
    %v372 = vld [vmem:[#allocation7 + $0x758] sm:$0xff]
    %v373 = vld [vmem:[#allocation7 + $0x760] sm:$0xff]
    %v374 = vld [vmem:[#allocation7 + $0x768] sm:$0xff]
    %v375 = vld [vmem:[#allocation7 + $0x770] sm:$0xff]
    %v376 = vld [vmem:[#allocation7 + $0x778] sm:$0xff]
    %v377 = vld [vmem:[#allocation7 + $0x780] sm:$0xff]
    %v378 = vld [vmem:[#allocation7 + $0x788] sm:$0xff]
    %v379 = vld [vmem:[#allocation7 + $0x790] sm:$0xff]
    %v380 = vld [vmem:[#allocation7 + $0x798] sm:$0xff]
    %v381 = vld [vmem:[#allocation7 + $0x7a0] sm:$0xff]
    %v382 = vld [vmem:[#allocation7 + $0x7a8] sm:$0xff]
    %v383 = vld [vmem:[#allocation7 + $0x7b0] sm:$0xff]
    %v384 = vld [vmem:[#allocation7 + $0x7b8] sm:$0xff]
    %v385 = vld [vmem:[#allocation7 + $0x7c0] sm:$0xff]
    %v386 = vld [vmem:[#allocation7 + $0x7c8] sm:$0xff]
    %v387 = vld [vmem:[#allocation7 + $0x7d0] sm:$0xff]
    %v388 = vld [vmem:[#allocation7 + $0x7d8] sm:$0xff]
    %v389 = vld [vmem:[#allocation7 + $0x7e0] sm:$0xff]
    %v390 = vld [vmem:[#allocation7 + $0x7e8] sm:$0xff]
    %v391 = vld [vmem:[#allocation7 + $0x7f0] sm:$0xff]
    %v392 = vld [vmem:[#allocation7 + $0x7f8] sm:$0xff]
    %v393 = vld [vmem:[#allocation7 + $0x800] sm:$0xff]
    %v394 = vld [vmem:[#allocation7 + $0x808] sm:$0xff]
    %v395 = vld [vmem:[#allocation7 + $0x810] sm:$0xff]
    %v396 = vld [vmem:[#allocation7 + $0x818] sm:$0xff]
    %v397 = vld [vmem:[#allocation7 + $0x820] sm:$0xff]
    %v398 = vld [vmem:[#allocation7 + $0x828] sm:$0xff]
    %v399 = vld [vmem:[#allocation7 + $0x830] sm:$0xff]
    %v400 = vld [vmem:[#allocation7 + $0x838] sm:$0xff]
    %v401 = vld [vmem:[#allocation7 + $0x840] sm:$0xff]
    %v402 = vld [vmem:[#allocation7 + $0x848] sm:$0xff]
    %v403 = vld [vmem:[#allocation7 + $0x850] sm:$0xff]
    %v404 = vld [vmem:[#allocation7 + $0x858] sm:$0xff]
    %v405 = vld [vmem:[#allocation7 + $0x860] sm:$0xff]
    %v406 = vld [vmem:[#allocation7 + $0x868] sm:$0xff]
    %v407 = vld [vmem:[#allocation7 + $0x870] sm:$0xff]
    %v408 = vld [vmem:[#allocation7 + $0x878] sm:$0xff]
    %v409 = vld [vmem:[#allocation7 + $0x880] sm:$0xff]
    %v410 = vld [vmem:[#allocation7 + $0x888] sm:$0xff]
    %v411 = vld [vmem:[#allocation7 + $0x890] sm:$0xff]
    %v412 = vld [vmem:[#allocation7 + $0x898] sm:$0xff]
    %v413 = vld [vmem:[#allocation7 + $0x8a0] sm:$0xff]
    %v414 = vld [vmem:[#allocation7 + $0x8a8] sm:$0xff]
    %v415 = vld [vmem:[#allocation7 + $0x8b0] sm:$0xff]
    %v416 = vld [vmem:[#allocation7 + $0x8b8] sm:$0xff]
    %v417 = vld [vmem:[#allocation7 + $0x8c0] sm:$0xff]
    %v418 = vld [vmem:[#allocation7 + $0x8c8] sm:$0xff]
    %v419 = vld [vmem:[#allocation7 + $0x8d0] sm:$0xff]
    %v420 = vld [vmem:[#allocation7 + $0x8d8] sm:$0xff]
    %v421 = vld [vmem:[#allocation7 + $0x8e0] sm:$0xff]
    %v422 = vld [vmem:[#allocation7 + $0x8e8] sm:$0xff]
    %v423 = vld [vmem:[#allocation7 + $0x8f0] sm:$0xff]
    %v424 = vld [vmem:[#allocation7 + $0x8f8] sm:$0xff]
    %v425 = vld [vmem:[#allocation7 + $0x900] sm:$0xff]
    %v426 = vld [vmem:[#allocation7 + $0x908] sm:$0xff]
    %v427 = vld [vmem:[#allocation7 + $0x910] sm:$0xff]
    %v428 = vld [vmem:[#allocation7 + $0x918] sm:$0xff]
    %v429 = vld [vmem:[#allocation7 + $0x920] sm:$0xff]
    %v430 = vld [vmem:[#allocation7 + $0x928] sm:$0xff]
    %v431 = vld [vmem:[#allocation7 + $0x930] sm:$0xff]
    %v432 = vld [vmem:[#allocation7 + $0x938] sm:$0xff]
    %v433 = vld [vmem:[#allocation7 + $0x940] sm:$0xff]
    %v434 = vld [vmem:[#allocation7 + $0x948] sm:$0xff]
    %v435 = vld [vmem:[#allocation7 + $0x950] sm:$0xff]
    %v436 = vld [vmem:[#allocation7 + $0x958] sm:$0xff]
    %vm437 = vcmask 785408
    %v439 = vsel %vm437, %v134, 0
    %v442 = vsel %vm437, %v135, 0
    %v445 = vsel %vm437, %v136, 0
    %447 = vmatprep.subr.mxu0 %v138
    %448 = vmatpush1.msra.mxu0 %v137
    %449 = vmatprep.subr.mxu0 %v163
    %450 = vmatpush1.msra.mxu0 %v162
    %451 = vmatprep.subr.mxu0 %v188
    %452 = vmatpush1.msra.mxu0 %v187
    %453 = vmatprep.subr.mxu0 %v213
    %454 = vmatpush1.msra.mxu0 %v212
    %455 = vmatprep.subr.mxu0 %v238
    %456 = vmatpush1.msra.mxu0 %v237
    %457 = vmatprep.subr.mxu0 %v263
    %458 = vmatpush1.msra.mxu0 %v262
    %459 = vmatprep.subr.mxu0 %v288
    %460 = vmatpush1.msra.mxu0 %v287
    %461 = vmatprep.subr.mxu0 %v313
    %462 = vmatpush1.msra.mxu0 %v312
    %463 = vmatprep.subr.mxu0 %v338
    %464 = vmatpush1.msra.mxu0 %v337
    %465 = vmatprep.subr.mxu0 %v363
    %466 = vmatpush1.msra.mxu0 %v362
    %467 = vmatprep.subr.mxu0 %v388
    %468 = vmatpush1.msra.mxu0 %v387
    %469 = vmatprep.subr.mxu0 %v413
    %470 = vmatpush1.msra.mxu0 %v412
    %471 = vmatprep.subr.mxu0 0.0
    %472 = vmatpush1.msra.mxu0 0.0
    %473 = vmatprep.subr.mxu0 0.0
    %474 = vmatpush1.msra.mxu0 0.0
    %475 = vmatprep.subr.mxu0 0.0
    %476 = vmatpush1.msra.mxu0 0.0
    %477 = vmatprep.subr.mxu0 0.0
    %478 = vmatpush1.msra.mxu0 0.0
    %479 = vmatprep.subr.mxu0 0.0
    %480 = vmatpush1.msra.mxu0 0.0
    %481 = vmatprep.subr.mxu0 0.0
    %482 = vmatpush1.msra.mxu0 0.0
    %483 = vmatprep.subr.mxu0 0.0
    %484 = vmatpush1.msra.mxu0 0.0
    %485 = vmatprep.subr.mxu0 0.0
    %486 = vmatpush1.msra.mxu0 0.0
    %487 = vmatprep.subr.mxu0 0.0
    %488 = vmatpush1.msra.mxu0 0.0
    %489 = vmatprep.subr.mxu0 0.0
    %490 = vmatpush1.msra.mxu0 0.0
    %491 = vmatprep.subr.mxu0 0.0
    %492 = vmatpush1.msra.mxu0 0.0
    %493 = vmatprep.subr.mxu0 0.0
    %494 = vmatpush1.msra.mxu0 0.0
    %495 = vmatprep.subr.mxu0 0.0
    %496 = vmatpush1.msra.mxu0 0.0
    %497 = vmatprep.subr.mxu0 0.0
    %498 = vmatpush1.msra.mxu0 0.0
    %499 = vmatprep.subr.mxu0 0.0
    %500 = vmatpush1.msra.mxu0 0.0
    %501 = vmatprep.subr.mxu0 0.0
    %502 = vmatpush1.msra.mxu0 0.0
    %503 = vmatprep.subr.mxu0 0.0
    %504 = vmatpush1.msra.mxu0 0.0
    %505 = vmatprep.subr.mxu0 0.0
    %506 = vmatpush1.msra.mxu0 0.0
    %507 = vmatprep.subr.mxu0 0.0
    %508 = vmatpush1.msra.mxu0 0.0
    %509 = vmatprep.subr.mxu0 0.0
    %510 = vmatpush1.msra.mxu0 0.0
    %511 = vmatprep.mubr.f32.mxu0 0.0
    %512 = vmatmul.mubr.f32.gmra.mrb[0].mxu0 %v439
    %v513 = vpop.f32.mrb[0].mxu0
    %v514 = vadd.f32 0.0, %v513
    %v515 = vpop.f32.mrb[0].mxu0
    %v516 = vadd.f32 0.0, %v515
    %517 = vmatprep.mubr.f32.mxu0 0.0
    %518 = vmatmul.mubr.f32.gmra.mrb[0].mxu0 %v442
    %v519 = vpop.f32.mrb[0].mxu0
    %v520 = vadd.f32 0.0, %v519
    %v521 = vpop.f32.mrb[0].mxu0
    %v522 = vadd.f32 0.0, %v521
    %523 = vmatprep.mubr.f32.mxu0 0.0
    %524 = vmatmul.mubr.f32.gmra.mrb[0].mxu0 %v445
    %v525 = vpop.f32.mrb[0].mxu0
    %v526 = vadd.f32 0.0, %v525
    %v527 = vpop.f32.mrb[0].mxu0
    %v528 = vadd.f32 0.0, %v527
    %529 = vdwg.mxu0
    %530 = vmatprep.subr.mxu0 %v140
    %531 = vmatpush1.msra.mxu0 %v139
    %532 = vmatprep.subr.mxu0 %v165
    %533 = vmatpush1.msra.mxu0 %v164
    %534 = vmatprep.subr.mxu0 %v190
    %535 = vmatpush1.msra.mxu0 %v189
    %536 = vmatprep.subr.mxu0 %v215
    %537 = vmatpush1.msra.mxu0 %v214
    %538 = vmatprep.subr.mxu0 %v240
    %539 = vmatpush1.msra.mxu0 %v239
    %540 = vmatprep.subr.mxu0 %v265
    %541 = vmatpush1.msra.mxu0 %v264
    %542 = vmatprep.subr.mxu0 %v290
    %543 = vmatpush1.msra.mxu0 %v289
    %544 = vmatprep.subr.mxu0 %v315
    %545 = vmatpush1.msra.mxu0 %v314
    %546 = vmatprep.subr.mxu0 %v340
    %547 = vmatpush1.msra.mxu0 %v339
    %548 = vmatprep.subr.mxu0 %v365
    %549 = vmatpush1.msra.mxu0 %v364
    %550 = vmatprep.subr.mxu0 %v390
    %551 = vmatpush1.msra.mxu0 %v389
    %552 = vmatprep.subr.mxu0 %v415
    %553 = vmatpush1.msra.mxu0 %v414
    %554 = vmatprep.subr.mxu0 0.0
    %555 = vmatpush1.msra.mxu0 0.0
    %556 = vmatprep.subr.mxu0 0.0
    %557 = vmatpush1.msra.mxu0 0.0
    %558 = vmatprep.subr.mxu0 0.0
    %559 = vmatpush1.msra.mxu0 0.0
    %560 = vmatprep.subr.mxu0 0.0
    %561 = vmatpush1.msra.mxu0 0.0
    %562 = vmatprep.subr.mxu0 0.0
    %563 = vmatpush1.msra.mxu0 0.0
    %564 = vmatprep.subr.mxu0 0.0
    %565 = vmatpush1.msra.mxu0 0.0
    %566 = vmatprep.subr.mxu0 0.0
    %567 = vmatpush1.msra.mxu0 0.0
    %568 = vmatprep.subr.mxu0 0.0
    %569 = vmatpush1.msra.mxu0 0.0
    %570 = vmatprep.subr.mxu0 0.0
    %571 = vmatpush1.msra.mxu0 0.0
    %572 = vmatprep.subr.mxu0 0.0
    %573 = vmatpush1.msra.mxu0 0.0
    %574 = vmatprep.subr.mxu0 0.0
    %575 = vmatpush1.msra.mxu0 0.0
    %576 = vmatprep.subr.mxu0 0.0
    %577 = vmatpush1.msra.mxu0 0.0
    %578 = vmatprep.subr.mxu0 0.0
    %579 = vmatpush1.msra.mxu0 0.0
    %580 = vmatprep.subr.mxu0 0.0
    %581 = vmatpush1.msra.mxu0 0.0
    %582 = vmatprep.subr.mxu0 0.0
    %583 = vmatpush1.msra.mxu0 0.0
    %584 = vmatprep.subr.mxu0 0.0
    %585 = vmatpush1.msra.mxu0 0.0
    %586 = vmatprep.subr.mxu0 0.0
    %587 = vmatpush1.msra.mxu0 0.0
    %588 = vmatprep.subr.mxu0 0.0
    %589 = vmatpush1.msra.mxu0 0.0
    %590 = vmatprep.subr.mxu0 0.0
    %591 = vmatpush1.msra.mxu0 0.0
    %592 = vmatprep.subr.mxu0 0.0
    %593 = vmatpush1.msra.mxu0 0.0
    %594 = vmatprep.mubr.f32.mxu0 0.0
    %595 = vmatmul.mubr.f32.gmra.mrb[0].mxu0 %v439
    %v596 = vpop.f32.mrb[0].mxu0
    %v597 = vadd.f32 0.0, %v596
    %v598 = vpop.f32.mrb[0].mxu0
    %v599 = vadd.f32 0.0, %v598
    %600 = vmatprep.mubr.f32.mxu0 0.0
    %601 = vmatmul.mubr.f32.gmra.mrb[0].mxu0 %v442
    %v602 = vpop.f32.mrb[0].mxu0
    %v603 = vadd.f32 0.0, %v602
    %v604 = vpop.f32.mrb[0].mxu0
    %v605 = vadd.f32 0.0, %v604
    %606 = vmatprep.mubr.f32.mxu0 0.0
    %607 = vmatmul.mubr.f32.gmra.mrb[0].mxu0 %v445
    %v608 = vpop.f32.mrb[0].mxu0
    %v609 = vadd.f32 0.0, %v608
    %v610 = vpop.f32.mrb[0].mxu0
    %v611 = vadd.f32 0.0, %v610
    %612 = vdwg.mxu0
    %613 = vmatprep.subr.mxu0 %v142
    %614 = vmatpush1.msra.mxu0 %v141
    %615 = vmatprep.subr.mxu0 %v167
    %616 = vmatpush1.msra.mxu0 %v166
    %617 = vmatprep.subr.mxu0 %v192
    %618 = vmatpush1.msra.mxu0 %v191
    %619 = vmatprep.subr.mxu0 %v217
    %620 = vmatpush1.msra.mxu0 %v216
    %621 = vmatprep.subr.mxu0 %v242
    %622 = vmatpush1.msra.mxu0 %v241
    %623 = vmatprep.subr.mxu0 %v267
    %624 = vmatpush1.msra.mxu0 %v266
    %625 = vmatprep.subr.mxu0 %v292
    %626 = vmatpush1.msra.mxu0 %v291
    %627 = vmatprep.subr.mxu0 %v317
    %628 = vmatpush1.msra.mxu0 %v316
    %629 = vmatprep.subr.mxu0 %v342
    %630 = vmatpush1.msra.mxu0 %v341
    %631 = vmatprep.subr.mxu0 %v367
    %632 = vmatpush1.msra.mxu0 %v366
    %633 = vmatprep.subr.mxu0 %v392
    %634 = vmatpush1.msra.mxu0 %v391
    %635 = vmatprep.subr.mxu0 %v417
    %636 = vmatpush1.msra.mxu0 %v416
    %637 = vmatprep.subr.mxu0 0.0
    %638 = vmatpush1.msra.mxu0 0.0
    %639 = vmatprep.subr.mxu0 0.0
    %640 = vmatpush1.msra.mxu0 0.0
    %641 = vmatprep.subr.mxu0 0.0
    %642 = vmatpush1.msra.mxu0 0.0
    %643 = vmatprep.subr.mxu0 0.0
    %644 = vmatpush1.msra.mxu0 0.0
    %645 = vmatprep.subr.mxu0 0.0
    %646 = vmatpush1.msra.mxu0 0.0
    %647 = vmatprep.subr.mxu0 0.0
    %648 = vmatpush1.msra.mxu0 0.0
    %649 = vmatprep.subr.mxu0 0.0
    %650 = vmatpush1.msra.mxu0 0.0
    %651 = vmatprep.subr.mxu0 0.0
    %652 = vmatpush1.msra.mxu0 0.0
    %653 = vmatprep.subr.mxu0 0.0
    %654 = vmatpush1.msra.mxu0 0.0
    %655 = vmatprep.subr.mxu0 0.0
    %656 = vmatpush1.msra.mxu0 0.0
    %657 = vmatprep.subr.mxu0 0.0
    %658 = vmatpush1.msra.mxu0 0.0
    %659 = vmatprep.subr.mxu0 0.0
    %660 = vmatpush1.msra.mxu0 0.0
    %661 = vmatprep.subr.mxu0 0.0
    %662 = vmatpush1.msra.mxu0 0.0
    %663 = vmatprep.subr.mxu0 0.0
    %664 = vmatpush1.msra.mxu0 0.0
    %665 = vmatprep.subr.mxu0 0.0
    %666 = vmatpush1.msra.mxu0 0.0
    %667 = vmatprep.subr.mxu0 0.0
    %668 = vmatpush1.msra.mxu0 0.0
    %669 = vmatprep.subr.mxu0 0.0
    %670 = vmatpush1.msra.mxu0 0.0
    %671 = vmatprep.subr.mxu0 0.0
    %672 = vmatpush1.msra.mxu0 0.0
    %673 = vmatprep.subr.mxu0 0.0
    %674 = vmatpush1.msra.mxu0 0.0
    %675 = vmatprep.subr.mxu0 0.0
    %676 = vmatpush1.msra.mxu0 0.0
    %677 = vmatprep.mubr.f32.mxu0 0.0
    %678 = vmatmul.mubr.f32.gmra.mrb[0].mxu0 %v439
    %v679 = vpop.f32.mrb[0].mxu0
    %v680 = vadd.f32 0.0, %v679
    %v681 = vpop.f32.mrb[0].mxu0
    %v682 = vadd.f32 0.0, %v681
    %683 = vmatprep.mubr.f32.mxu0 0.0
    %684 = vmatmul.mubr.f32.gmra.mrb[0].mxu0 %v442
    %v685 = vpop.f32.mrb[0].mxu0
    %v686 = vadd.f32 0.0, %v685
    %v687 = vpop.f32.mrb[0].mxu0
    %v688 = vadd.f32 0.0, %v687
    %689 = vmatprep.mubr.f32.mxu0 0.0
    %690 = vmatmul.mubr.f32.gmra.mrb[0].mxu0 %v445
    %v691 = vpop.f32.mrb[0].mxu0
    %v692 = vadd.f32 0.0, %v691
    %v693 = vpop.f32.mrb[0].mxu0
    %v694 = vadd.f32 0.0, %v693
    %695 = vdwg.mxu0
    %696 = vmatprep.subr.mxu0 %v144
    %697 = vmatpush1.msra.mxu0 %v143
    %698 = vmatprep.subr.mxu0 %v169
    %699 = vmatpush1.msra.mxu0 %v168
    %700 = vmatprep.subr.mxu0 %v194
    %701 = vmatpush1.msra.mxu0 %v193
    %702 = vmatprep.subr.mxu0 %v219
    %703 = vmatpush1.msra.mxu0 %v218
    %704 = vmatprep.subr.mxu0 %v244
    %705 = vmatpush1.msra.mxu0 %v243
    %706 = vmatprep.subr.mxu0 %v269
    %707 = vmatpush1.msra.mxu0 %v268
    %708 = vmatprep.subr.mxu0 %v294
    %709 = vmatpush1.msra.mxu0 %v293
    %710 = vmatprep.subr.mxu0 %v319
    %711 = vmatpush1.msra.mxu0 %v318
    %712 = vmatprep.subr.mxu0 %v344
    %713 = vmatpush1.msra.mxu0 %v343
    %714 = vmatprep.subr.mxu0 %v369
    %715 = vmatpush1.msra.mxu0 %v368
    %716 = vmatprep.subr.mxu0 %v394
    %717 = vmatpush1.msra.mxu0 %v393
    %718 = vmatprep.subr.mxu0 %v419
    %719 = vmatpush1.msra.mxu0 %v418
    %720 = vmatprep.subr.mxu0 0.0
    %721 = vmatpush1.msra.mxu0 0.0
    %722 = vmatprep.subr.mxu0 0.0
    %723 = vmatpush1.msra.mxu0 0.0
    %724 = vmatprep.subr.mxu0 0.0
    %725 = vmatpush1.msra.mxu0 0.0
    %726 = vmatprep.subr.mxu0 0.0
    %727 = vmatpush1.msra.mxu0 0.0
    %728 = vmatprep.subr.mxu0 0.0
    %729 = vmatpush1.msra.mxu0 0.0
    %730 = vmatprep.subr.mxu0 0.0
    %731 = vmatpush1.msra.mxu0 0.0
    %732 = vmatprep.subr.mxu0 0.0
    %733 = vmatpush1.msra.mxu0 0.0
    %734 = vmatprep.subr.mxu0 0.0
    %735 = vmatpush1.msra.mxu0 0.0
    %736 = vmatprep.subr.mxu0 0.0
    %737 = vmatpush1.msra.mxu0 0.0
    %738 = vmatprep.subr.mxu0 0.0
    %739 = vmatpush1.msra.mxu0 0.0
    %740 = vmatprep.subr.mxu0 0.0
    %741 = vmatpush1.msra.mxu0 0.0
    %742 = vmatprep.subr.mxu0 0.0
    %743 = vmatpush1.msra.mxu0 0.0
    %744 = vmatprep.subr.mxu0 0.0
    %745 = vmatpush1.msra.mxu0 0.0
    %746 = vmatprep.subr.mxu0 0.0
    %747 = vmatpush1.msra.mxu0 0.0
    %748 = vmatprep.subr.mxu0 0.0
    %749 = vmatpush1.msra.mxu0 0.0
    %750 = vmatprep.subr.mxu0 0.0
    %751 = vmatpush1.msra.mxu0 0.0
    %752 = vmatprep.subr.mxu0 0.0
    %753 = vmatpush1.msra.mxu0 0.0
    %754 = vmatprep.subr.mxu0 0.0
    %755 = vmatpush1.msra.mxu0 0.0
    %756 = vmatprep.subr.mxu0 0.0
    %757 = vmatpush1.msra.mxu0 0.0
    %758 = vmatprep.subr.mxu0 0.0
    %759 = vmatpush1.msra.mxu0 0.0
    %760 = vmatprep.mubr.f32.mxu0 0.0
    %761 = vmatmul.mubr.f32.gmra.mrb[0].mxu0 %v439
    %v762 = vpop.f32.mrb[0].mxu0
    %v763 = vadd.f32 0.0, %v762
    %v764 = vpop.f32.mrb[0].mxu0
    %v765 = vadd.f32 0.0, %v764
    %766 = vmatprep.mubr.f32.mxu0 0.0
    %767 = vmatmul.mubr.f32.gmra.mrb[0].mxu0 %v442
    %v768 = vpop.f32.mrb[0].mxu0
    %v769 = vadd.f32 0.0, %v768
    %v770 = vpop.f32.mrb[0].mxu0
    %v771 = vadd.f32 0.0, %v770
    %772 = vmatprep.mubr.f32.mxu0 0.0
    %773 = vmatmul.mubr.f32.gmra.mrb[0].mxu0 %v445
    %v774 = vpop.f32.mrb[0].mxu0
    %v775 = vadd.f32 0.0, %v774
    %v776 = vpop.f32.mrb[0].mxu0
    %v777 = vadd.f32 0.0, %v776
    %778 = vdwg.mxu0
    %779 = vmatprep.subr.mxu0 %v146
    %780 = vmatpush1.msra.mxu0 %v145
    %781 = vmatprep.subr.mxu0 %v171
    %782 = vmatpush1.msra.mxu0 %v170
    %783 = vmatprep.subr.mxu0 %v196
    %784 = vmatpush1.msra.mxu0 %v195
    %785 = vmatprep.subr.mxu0 %v221
    %786 = vmatpush1.msra.mxu0 %v220
    %787 = vmatprep.subr.mxu0 %v246
    %788 = vmatpush1.msra.mxu0 %v245
    %789 = vmatprep.subr.mxu0 %v271
    %790 = vmatpush1.msra.mxu0 %v270
    %791 = vmatprep.subr.mxu0 %v296
    %792 = vmatpush1.msra.mxu0 %v295
    %793 = vmatprep.subr.mxu0 %v321
    %794 = vmatpush1.msra.mxu0 %v320
    %795 = vmatprep.subr.mxu0 %v346
    %796 = vmatpush1.msra.mxu0 %v345
    %797 = vmatprep.subr.mxu0 %v371
    %798 = vmatpush1.msra.mxu0 %v370
    %799 = vmatprep.subr.mxu0 %v396
    %800 = vmatpush1.msra.mxu0 %v395
    %801 = vmatprep.subr.mxu0 %v421
    %802 = vmatpush1.msra.mxu0 %v420
    %803 = vmatprep.subr.mxu0 0.0
    %804 = vmatpush1.msra.mxu0 0.0
    %805 = vmatprep.subr.mxu0 0.0
    %806 = vmatpush1.msra.mxu0 0.0
    %807 = vmatprep.subr.mxu0 0.0
    %808 = vmatpush1.msra.mxu0 0.0
    %809 = vmatprep.subr.mxu0 0.0
    %810 = vmatpush1.msra.mxu0 0.0
    %811 = vmatprep.subr.mxu0 0.0
    %812 = vmatpush1.msra.mxu0 0.0
    %813 = vmatprep.subr.mxu0 0.0
    %814 = vmatpush1.msra.mxu0 0.0
    %815 = vmatprep.subr.mxu0 0.0
    %816 = vmatpush1.msra.mxu0 0.0
    %817 = vmatprep.subr.mxu0 0.0
    %818 = vmatpush1.msra.mxu0 0.0
    %819 = vmatprep.subr.mxu0 0.0
    %820 = vmatpush1.msra.mxu0 0.0
    %821 = vmatprep.subr.mxu0 0.0
    %822 = vmatpush1.msra.mxu0 0.0
    %823 = vmatprep.subr.mxu0 0.0
    %824 = vmatpush1.msra.mxu0 0.0
    %825 = vmatprep.subr.mxu0 0.0
    %826 = vmatpush1.msra.mxu0 0.0
    %827 = vmatprep.subr.mxu0 0.0
    %828 = vmatpush1.msra.mxu0 0.0
    %829 = vmatprep.subr.mxu0 0.0
    %830 = vmatpush1.msra.mxu0 0.0
    %831 = vmatprep.subr.mxu0 0.0
    %832 = vmatpush1.msra.mxu0 0.0
    %833 = vmatprep.subr.mxu0 0.0
    %834 = vmatpush1.msra.mxu0 0.0
    %835 = vmatprep.subr.mxu0 0.0
    %836 = vmatpush1.msra.mxu0 0.0
    %837 = vmatprep.subr.mxu0 0.0
    %838 = vmatpush1.msra.mxu0 0.0
    %839 = vmatprep.subr.mxu0 0.0
    %840 = vmatpush1.msra.mxu0 0.0
    %841 = vmatprep.subr.mxu0 0.0
    %842 = vmatpush1.msra.mxu0 0.0
    %843 = vmatprep.mubr.f32.mxu0 0.0
    %844 = vmatmul.mubr.f32.gmra.mrb[0].mxu0 %v439
    %v845 = vpop.f32.mrb[0].mxu0
    %v846 = vadd.f32 0.0, %v845
    %v847 = vpop.f32.mrb[0].mxu0
    %v848 = vadd.f32 0.0, %v847
    %849 = vmatprep.mubr.f32.mxu0 0.0
    %850 = vmatmul.mubr.f32.gmra.mrb[0].mxu0 %v442
    %v851 = vpop.f32.mrb[0].mxu0
    %v852 = vadd.f32 0.0, %v851
    %v853 = vpop.f32.mrb[0].mxu0
    %v854 = vadd.f32 0.0, %v853
    %855 = vmatprep.mubr.f32.mxu0 0.0
    %856 = vmatmul.mubr.f32.gmra.mrb[0].mxu0 %v445
    %v857 = vpop.f32.mrb[0].mxu0
    %v858 = vadd.f32 0.0, %v857
    %v859 = vpop.f32.mrb[0].mxu0
    %v860 = vadd.f32 0.0, %v859
    %861 = vdwg.mxu0
    %862 = vmatprep.subr.mxu0 %v148
    %863 = vmatpush1.msra.mxu0 %v147
    %864 = vmatprep.subr.mxu0 %v173
    %865 = vmatpush1.msra.mxu0 %v172
    %866 = vmatprep.subr.mxu0 %v198
    %867 = vmatpush1.msra.mxu0 %v197
    %868 = vmatprep.subr.mxu0 %v223
    %869 = vmatpush1.msra.mxu0 %v222
    %870 = vmatprep.subr.mxu0 %v248
    %871 = vmatpush1.msra.mxu0 %v247
    %872 = vmatprep.subr.mxu0 %v273
    %873 = vmatpush1.msra.mxu0 %v272
    %874 = vmatprep.subr.mxu0 %v298
    %875 = vmatpush1.msra.mxu0 %v297
    %876 = vmatprep.subr.mxu0 %v323
    %877 = vmatpush1.msra.mxu0 %v322
    %878 = vmatprep.subr.mxu0 %v348
    %879 = vmatpush1.msra.mxu0 %v347
    %880 = vmatprep.subr.mxu0 %v373
    %881 = vmatpush1.msra.mxu0 %v372
    %882 = vmatprep.subr.mxu0 %v398
    %883 = vmatpush1.msra.mxu0 %v397
    %884 = vmatprep.subr.mxu0 %v423
    %885 = vmatpush1.msra.mxu0 %v422
    %886 = vmatprep.subr.mxu0 0.0
    %887 = vmatpush1.msra.mxu0 0.0
    %888 = vmatprep.subr.mxu0 0.0
    %889 = vmatpush1.msra.mxu0 0.0
    %890 = vmatprep.subr.mxu0 0.0
    %891 = vmatpush1.msra.mxu0 0.0
    %892 = vmatprep.subr.mxu0 0.0
    %893 = vmatpush1.msra.mxu0 0.0
    %894 = vmatprep.subr.mxu0 0.0
    %895 = vmatpush1.msra.mxu0 0.0
    %896 = vmatprep.subr.mxu0 0.0
    %897 = vmatpush1.msra.mxu0 0.0
    %898 = vmatprep.subr.mxu0 0.0
    %899 = vmatpush1.msra.mxu0 0.0
    %900 = vmatprep.subr.mxu0 0.0
    %901 = vmatpush1.msra.mxu0 0.0
    %902 = vmatprep.subr.mxu0 0.0
    %903 = vmatpush1.msra.mxu0 0.0
    %904 = vmatprep.subr.mxu0 0.0
    %905 = vmatpush1.msra.mxu0 0.0
    %906 = vmatprep.subr.mxu0 0.0
    %907 = vmatpush1.msra.mxu0 0.0
    %908 = vmatprep.subr.mxu0 0.0
    %909 = vmatpush1.msra.mxu0 0.0
    %910 = vmatprep.subr.mxu0 0.0
    %911 = vmatpush1.msra.mxu0 0.0
    %912 = vmatprep.subr.mxu0 0.0
    %913 = vmatpush1.msra.mxu0 0.0
    %914 = vmatprep.subr.mxu0 0.0
    %915 = vmatpush1.msra.mxu0 0.0
    %916 = vmatprep.subr.mxu0 0.0
    %917 = vmatpush1.msra.mxu0 0.0
    %918 = vmatprep.subr.mxu0 0.0
    %919 = vmatpush1.msra.mxu0 0.0
    %920 = vmatprep.subr.mxu0 0.0
    %921 = vmatpush1.msra.mxu0 0.0
    %922 = vmatprep.subr.mxu0 0.0
    %923 = vmatpush1.msra.mxu0 0.0
    %924 = vmatprep.subr.mxu0 0.0
    %925 = vmatpush1.msra.mxu0 0.0
    %926 = vmatprep.mubr.f32.mxu0 0.0
    %927 = vmatmul.mubr.f32.gmra.mrb[0].mxu0 %v439
    %v928 = vpop.f32.mrb[0].mxu0
    %v929 = vadd.f32 0.0, %v928
    %v930 = vpop.f32.mrb[0].mxu0
    %v931 = vadd.f32 0.0, %v930
    %932 = vmatprep.mubr.f32.mxu0 0.0
    %933 = vmatmul.mubr.f32.gmra.mrb[0].mxu0 %v442
    %v934 = vpop.f32.mrb[0].mxu0
    %v935 = vadd.f32 0.0, %v934
    %v936 = vpop.f32.mrb[0].mxu0
    %v937 = vadd.f32 0.0, %v936
    %938 = vmatprep.mubr.f32.mxu0 0.0
    %939 = vmatmul.mubr.f32.gmra.mrb[0].mxu0 %v445
    %v940 = vpop.f32.mrb[0].mxu0
    %v941 = vadd.f32 0.0, %v940
    %v942 = vpop.f32.mrb[0].mxu0
    %v943 = vadd.f32 0.0, %v942
    %944 = vdwg.mxu0
    %945 = vmatprep.subr.mxu0 %v150
    %946 = vmatpush1.msra.mxu0 %v149
    %947 = vmatprep.subr.mxu0 %v175
    %948 = vmatpush1.msra.mxu0 %v174
    %949 = vmatprep.subr.mxu0 %v200
    %950 = vmatpush1.msra.mxu0 %v199
    %951 = vmatprep.subr.mxu0 %v225
    %952 = vmatpush1.msra.mxu0 %v224
    %953 = vmatprep.subr.mxu0 %v250
    %954 = vmatpush1.msra.mxu0 %v249
    %955 = vmatprep.subr.mxu0 %v275
    %956 = vmatpush1.msra.mxu0 %v274
    %957 = vmatprep.subr.mxu0 %v300
    %958 = vmatpush1.msra.mxu0 %v299
    %959 = vmatprep.subr.mxu0 %v325
    %960 = vmatpush1.msra.mxu0 %v324
    %961 = vmatprep.subr.mxu0 %v350
    %962 = vmatpush1.msra.mxu0 %v349
    %963 = vmatprep.subr.mxu0 %v375
    %964 = vmatpush1.msra.mxu0 %v374
    %965 = vmatprep.subr.mxu0 %v400
    %966 = vmatpush1.msra.mxu0 %v399
    %967 = vmatprep.subr.mxu0 %v425
    %968 = vmatpush1.msra.mxu0 %v424
    %969 = vmatprep.subr.mxu0 0.0
    %970 = vmatpush1.msra.mxu0 0.0
    %971 = vmatprep.subr.mxu0 0.0
    %972 = vmatpush1.msra.mxu0 0.0
    %973 = vmatprep.subr.mxu0 0.0
    %974 = vmatpush1.msra.mxu0 0.0
    %975 = vmatprep.subr.mxu0 0.0
    %976 = vmatpush1.msra.mxu0 0.0
    %977 = vmatprep.subr.mxu0 0.0
    %978 = vmatpush1.msra.mxu0 0.0
    %979 = vmatprep.subr.mxu0 0.0
    %980 = vmatpush1.msra.mxu0 0.0
    %981 = vmatprep.subr.mxu0 0.0
    %982 = vmatpush1.msra.mxu0 0.0
    %983 = vmatprep.subr.mxu0 0.0
    %984 = vmatpush1.msra.mxu0 0.0
    %985 = vmatprep.subr.mxu0 0.0
    %986 = vmatpush1.msra.mxu0 0.0
    %987 = vmatprep.subr.mxu0 0.0
    %988 = vmatpush1.msra.mxu0 0.0
    %989 = vmatprep.subr.mxu0 0.0
    %990 = vmatpush1.msra.mxu0 0.0
    %991 = vmatprep.subr.mxu0 0.0
    %992 = vmatpush1.msra.mxu0 0.0
    %993 = vmatprep.subr.mxu0 0.0
    %994 = vmatpush1.msra.mxu0 0.0
    %995 = vmatprep.subr.mxu0 0.0
    %996 = vmatpush1.msra.mxu0 0.0
    %997 = vmatprep.subr.mxu0 0.0
    %998 = vmatpush1.msra.mxu0 0.0
    %999 = vmatprep.subr.mxu0 0.0
    %1000 = vmatpush1.msra.mxu0 0.0
    %1001 = vmatprep.subr.mxu0 0.0
    %1002 = vmatpush1.msra.mxu0 0.0
    %1003 = vmatprep.subr.mxu0 0.0
    %1004 = vmatpush1.msra.mxu0 0.0
    %1005 = vmatprep.subr.mxu0 0.0
    %1006 = vmatpush1.msra.mxu0 0.0
    %1007 = vmatprep.subr.mxu0 0.0
    %1008 = vmatpush1.msra.mxu0 0.0
    %1009 = vmatprep.mubr.f32.mxu0 0.0
    %1010 = vmatmul.mubr.f32.gmra.mrb[0].mxu0 %v439
    %v1011 = vpop.f32.mrb[0].mxu0
    %v1012 = vadd.f32 0.0, %v1011
    %v1013 = vpop.f32.mrb[0].mxu0
    %v1014 = vadd.f32 0.0, %v1013
    %1015 = vmatprep.mubr.f32.mxu0 0.0
    %1016 = vmatmul.mubr.f32.gmra.mrb[0].mxu0 %v442
    %v1017 = vpop.f32.mrb[0].mxu0
    %v1018 = vadd.f32 0.0, %v1017
    %v1019 = vpop.f32.mrb[0].mxu0
    %v1020 = vadd.f32 0.0, %v1019
    %1021 = vmatprep.mubr.f32.mxu0 0.0
    %1022 = vmatmul.mubr.f32.gmra.mrb[0].mxu0 %v445
    %v1023 = vpop.f32.mrb[0].mxu0
    %v1024 = vadd.f32 0.0, %v1023
    %v1025 = vpop.f32.mrb[0].mxu0
    %v1026 = vadd.f32 0.0, %v1025
    %1027 = vdwg.mxu0
    %1028 = vmatprep.subr.mxu0 %v152
    %1029 = vmatpush1.msra.mxu0 %v151
    %1030 = vmatprep.subr.mxu0 %v177
    %1031 = vmatpush1.msra.mxu0 %v176
    %1032 = vmatprep.subr.mxu0 %v202
    %1033 = vmatpush1.msra.mxu0 %v201
    %1034 = vmatprep.subr.mxu0 %v227
    %1035 = vmatpush1.msra.mxu0 %v226
    %1036 = vmatprep.subr.mxu0 %v252
    %1037 = vmatpush1.msra.mxu0 %v251
    %1038 = vmatprep.subr.mxu0 %v277
    %1039 = vmatpush1.msra.mxu0 %v276
    %1040 = vmatprep.subr.mxu0 %v302
    %1041 = vmatpush1.msra.mxu0 %v301
    %1042 = vmatprep.subr.mxu0 %v327
    %1043 = vmatpush1.msra.mxu0 %v326
    %1044 = vmatprep.subr.mxu0 %v352
    %1045 = vmatpush1.msra.mxu0 %v351
    %1046 = vmatprep.subr.mxu0 %v377
    %1047 = vmatpush1.msra.mxu0 %v376
    %1048 = vmatprep.subr.mxu0 %v402
    %1049 = vmatpush1.msra.mxu0 %v401
    %1050 = vmatprep.subr.mxu0 %v427
    %1051 = vmatpush1.msra.mxu0 %v426
    %1052 = vmatprep.subr.mxu0 0.0
    %1053 = vmatpush1.msra.mxu0 0.0
    %1054 = vmatprep.subr.mxu0 0.0
    %1055 = vmatpush1.msra.mxu0 0.0
    %1056 = vmatprep.subr.mxu0 0.0
    %1057 = vmatpush1.msra.mxu0 0.0
    %1058 = vmatprep.subr.mxu0 0.0
    %1059 = vmatpush1.msra.mxu0 0.0
    %1060 = vmatprep.subr.mxu0 0.0
    %1061 = vmatpush1.msra.mxu0 0.0
    %1062 = vmatprep.subr.mxu0 0.0
    %1063 = vmatpush1.msra.mxu0 0.0
    %1064 = vmatprep.subr.mxu0 0.0
    %1065 = vmatpush1.msra.mxu0 0.0
    %1066 = vmatprep.subr.mxu0 0.0
    %1067 = vmatpush1.msra.mxu0 0.0
    %1068 = vmatprep.subr.mxu0 0.0
    %1069 = vmatpush1.msra.mxu0 0.0
    %1070 = vmatprep.subr.mxu0 0.0
    %1071 = vmatpush1.msra.mxu0 0.0
    %1072 = vmatprep.subr.mxu0 0.0
    %1073 = vmatpush1.msra.mxu0 0.0
    %1074 = vmatprep.subr.mxu0 0.0
    %1075 = vmatpush1.msra.mxu0 0.0
    %1076 = vmatprep.subr.mxu0 0.0
    %1077 = vmatpush1.msra.mxu0 0.0
    %1078 = vmatprep.subr.mxu0 0.0
    %1079 = vmatpush1.msra.mxu0 0.0
    %1080 = vmatprep.subr.mxu0 0.0
    %1081 = vmatpush1.msra.mxu0 0.0
    %1082 = vmatprep.subr.mxu0 0.0
    %1083 = vmatpush1.msra.mxu0 0.0
    %1084 = vmatprep.subr.mxu0 0.0
    %1085 = vmatpush1.msra.mxu0 0.0
    %1086 = vmatprep.subr.mxu0 0.0
    %1087 = vmatpush1.msra.mxu0 0.0
    %1088 = vmatprep.subr.mxu0 0.0
    %1089 = vmatpush1.msra.mxu0 0.0
    %1090 = vmatprep.subr.mxu0 0.0
    %1091 = vmatpush1.msra.mxu0 0.0
    %1092 = vmatprep.mubr.f32.mxu0 0.0
    %1093 = vmatmul.mubr.f32.gmra.mrb[0].mxu0 %v439
    %v1094 = vpop.f32.mrb[0].mxu0
    %v1095 = vadd.f32 0.0, %v1094
    %v1096 = vpop.f32.mrb[0].mxu0
    %v1097 = vadd.f32 0.0, %v1096
    %1098 = vmatprep.mubr.f32.mxu0 0.0
    %1099 = vmatmul.mubr.f32.gmra.mrb[0].mxu0 %v442
    %v1100 = vpop.f32.mrb[0].mxu0
    %v1101 = vadd.f32 0.0, %v1100
    %v1102 = vpop.f32.mrb[0].mxu0
    %v1103 = vadd.f32 0.0, %v1102
    %1104 = vmatprep.mubr.f32.mxu0 0.0
    %1105 = vmatmul.mubr.f32.gmra.mrb[0].mxu0 %v445
    %v1106 = vpop.f32.mrb[0].mxu0
    %v1107 = vadd.f32 0.0, %v1106
    %v1108 = vpop.f32.mrb[0].mxu0
    %v1109 = vadd.f32 0.0, %v1108
    %1110 = vdwg.mxu0
    %1111 = vmatprep.subr.mxu0 %v154
    %1112 = vmatpush1.msra.mxu0 %v153
    %1113 = vmatprep.subr.mxu0 %v179
    %1114 = vmatpush1.msra.mxu0 %v178
    %1115 = vmatprep.subr.mxu0 %v204
    %1116 = vmatpush1.msra.mxu0 %v203
    %1117 = vmatprep.subr.mxu0 %v229
    %1118 = vmatpush1.msra.mxu0 %v228
    %1119 = vmatprep.subr.mxu0 %v254
    %1120 = vmatpush1.msra.mxu0 %v253
    %1121 = vmatprep.subr.mxu0 %v279
    %1122 = vmatpush1.msra.mxu0 %v278
    %1123 = vmatprep.subr.mxu0 %v304
    %1124 = vmatpush1.msra.mxu0 %v303
    %1125 = vmatprep.subr.mxu0 %v329
    %1126 = vmatpush1.msra.mxu0 %v328
    %1127 = vmatprep.subr.mxu0 %v354
    %1128 = vmatpush1.msra.mxu0 %v353
    %1129 = vmatprep.subr.mxu0 %v379
    %1130 = vmatpush1.msra.mxu0 %v378
    %1131 = vmatprep.subr.mxu0 %v404
    %1132 = vmatpush1.msra.mxu0 %v403
    %1133 = vmatprep.subr.mxu0 %v429
    %1134 = vmatpush1.msra.mxu0 %v428
    %1135 = vmatprep.subr.mxu0 0.0
    %1136 = vmatpush1.msra.mxu0 0.0
    %1137 = vmatprep.subr.mxu0 0.0
    %1138 = vmatpush1.msra.mxu0 0.0
    %1139 = vmatprep.subr.mxu0 0.0
    %1140 = vmatpush1.msra.mxu0 0.0
    %1141 = vmatprep.subr.mxu0 0.0
    %1142 = vmatpush1.msra.mxu0 0.0
    %1143 = vmatprep.subr.mxu0 0.0
    %1144 = vmatpush1.msra.mxu0 0.0
    %1145 = vmatprep.subr.mxu0 0.0
    %1146 = vmatpush1.msra.mxu0 0.0
    %1147 = vmatprep.subr.mxu0 0.0
    %1148 = vmatpush1.msra.mxu0 0.0
    %1149 = vmatprep.subr.mxu0 0.0
    %1150 = vmatpush1.msra.mxu0 0.0
    %1151 = vmatprep.subr.mxu0 0.0
    %1152 = vmatpush1.msra.mxu0 0.0
    %1153 = vmatprep.subr.mxu0 0.0
    %1154 = vmatpush1.msra.mxu0 0.0
    %1155 = vmatprep.subr.mxu0 0.0
    %1156 = vmatpush1.msra.mxu0 0.0
    %1157 = vmatprep.subr.mxu0 0.0
    %1158 = vmatpush1.msra.mxu0 0.0
    %1159 = vmatprep.subr.mxu0 0.0
    %1160 = vmatpush1.msra.mxu0 0.0
    %1161 = vmatprep.subr.mxu0 0.0
    %1162 = vmatpush1.msra.mxu0 0.0
    %1163 = vmatprep.subr.mxu0 0.0
    %1164 = vmatpush1.msra.mxu0 0.0
    %1165 = vmatprep.subr.mxu0 0.0
    %1166 = vmatpush1.msra.mxu0 0.0
    %1167 = vmatprep.subr.mxu0 0.0
    %1168 = vmatpush1.msra.mxu0 0.0
    %1169 = vmatprep.subr.mxu0 0.0
    %1170 = vmatpush1.msra.mxu0 0.0
    %1171 = vmatprep.subr.mxu0 0.0
    %1172 = vmatpush1.msra.mxu0 0.0
    %1173 = vmatprep.subr.mxu0 0.0
    %1174 = vmatpush1.msra.mxu0 0.0
    %1175 = vmatprep.mubr.f32.mxu0 0.0
    %1176 = vmatmul.mubr.f32.gmra.mrb[0].mxu0 %v439
    %v1177 = vpop.f32.mrb[0].mxu0
    %v1178 = vadd.f32 0.0, %v1177
    %v1179 = vpop.f32.mrb[0].mxu0
    %v1180 = vadd.f32 0.0, %v1179
    %1181 = vmatprep.mubr.f32.mxu0 0.0
    %1182 = vmatmul.mubr.f32.gmra.mrb[0].mxu0 %v442
    %v1183 = vpop.f32.mrb[0].mxu0
    %v1184 = vadd.f32 0.0, %v1183
    %v1185 = vpop.f32.mrb[0].mxu0
    %v1186 = vadd.f32 0.0, %v1185
    %1187 = vmatprep.mubr.f32.mxu0 0.0
    %1188 = vmatmul.mubr.f32.gmra.mrb[0].mxu0 %v445
    %v1189 = vpop.f32.mrb[0].mxu0
    %v1190 = vadd.f32 0.0, %v1189
    %v1191 = vpop.f32.mrb[0].mxu0
    %v1192 = vadd.f32 0.0, %v1191
    %1193 = vdwg.mxu0
    %1194 = vmatprep.subr.mxu0 %v156
    %1195 = vmatpush1.msra.mxu0 %v155
    %1196 = vmatprep.subr.mxu0 %v181
    %1197 = vmatpush1.msra.mxu0 %v180
    %1198 = vmatprep.subr.mxu0 %v206
    %1199 = vmatpush1.msra.mxu0 %v205
    %1200 = vmatprep.subr.mxu0 %v231
    %1201 = vmatpush1.msra.mxu0 %v230
    %1202 = vmatprep.subr.mxu0 %v256
    %1203 = vmatpush1.msra.mxu0 %v255
    %1204 = vmatprep.subr.mxu0 %v281
    %1205 = vmatpush1.msra.mxu0 %v280
    %1206 = vmatprep.subr.mxu0 %v306
    %1207 = vmatpush1.msra.mxu0 %v305
    %1208 = vmatprep.subr.mxu0 %v331
    %1209 = vmatpush1.msra.mxu0 %v330
    %1210 = vmatprep.subr.mxu0 %v356
    %1211 = vmatpush1.msra.mxu0 %v355
    %1212 = vmatprep.subr.mxu0 %v381
    %1213 = vmatpush1.msra.mxu0 %v380
    %1214 = vmatprep.subr.mxu0 %v406
    %1215 = vmatpush1.msra.mxu0 %v405
    %1216 = vmatprep.subr.mxu0 %v431
    %1217 = vmatpush1.msra.mxu0 %v430
    %1218 = vmatprep.subr.mxu0 0.0
    %1219 = vmatpush1.msra.mxu0 0.0
    %1220 = vmatprep.subr.mxu0 0.0
    %1221 = vmatpush1.msra.mxu0 0.0
    %1222 = vmatprep.subr.mxu0 0.0
    %1223 = vmatpush1.msra.mxu0 0.0
    %1224 = vmatprep.subr.mxu0 0.0
    %1225 = vmatpush1.msra.mxu0 0.0
    %1226 = vmatprep.subr.mxu0 0.0
    %1227 = vmatpush1.msra.mxu0 0.0
    %1228 = vmatprep.subr.mxu0 0.0
    %1229 = vmatpush1.msra.mxu0 0.0
    %1230 = vmatprep.subr.mxu0 0.0
    %1231 = vmatpush1.msra.mxu0 0.0
    %1232 = vmatprep.subr.mxu0 0.0
    %1233 = vmatpush1.msra.mxu0 0.0
    %1234 = vmatprep.subr.mxu0 0.0
    %1235 = vmatpush1.msra.mxu0 0.0
    %1236 = vmatprep.subr.mxu0 0.0
    %1237 = vmatpush1.msra.mxu0 0.0
    %1238 = vmatprep.subr.mxu0 0.0
    %1239 = vmatpush1.msra.mxu0 0.0
    %1240 = vmatprep.subr.mxu0 0.0
    %1241 = vmatpush1.msra.mxu0 0.0
    %1242 = vmatprep.subr.mxu0 0.0
    %1243 = vmatpush1.msra.mxu0 0.0
    %1244 = vmatprep.subr.mxu0 0.0
    %1245 = vmatpush1.msra.mxu0 0.0
    %1246 = vmatprep.subr.mxu0 0.0
    %1247 = vmatpush1.msra.mxu0 0.0
    %1248 = vmatprep.subr.mxu0 0.0
    %1249 = vmatpush1.msra.mxu0 0.0
    %1250 = vmatprep.subr.mxu0 0.0
    %1251 = vmatpush1.msra.mxu0 0.0
    %1252 = vmatprep.subr.mxu0 0.0
    %1253 = vmatpush1.msra.mxu0 0.0
    %1254 = vmatprep.subr.mxu0 0.0
    %1255 = vmatpush1.msra.mxu0 0.0
    %1256 = vmatprep.subr.mxu0 0.0
    %1257 = vmatpush1.msra.mxu0 0.0
    %1258 = vmatprep.mubr.f32.mxu0 0.0
    %1259 = vmatmul.mubr.f32.gmra.mrb[0].mxu0 %v439
    %v1260 = vpop.f32.mrb[0].mxu0
    %v1261 = vadd.f32 0.0, %v1260
    %v1262 = vpop.f32.mrb[0].mxu0
    %v1263 = vadd.f32 0.0, %v1262
    %1264 = vmatprep.mubr.f32.mxu0 0.0
    %1265 = vmatmul.mubr.f32.gmra.mrb[0].mxu0 %v442
    %v1266 = vpop.f32.mrb[0].mxu0
    %v1267 = vadd.f32 0.0, %v1266
    %v1268 = vpop.f32.mrb[0].mxu0
    %v1269 = vadd.f32 0.0, %v1268
    %1270 = vmatprep.mubr.f32.mxu0 0.0
    %1271 = vmatmul.mubr.f32.gmra.mrb[0].mxu0 %v445
    %v1272 = vpop.f32.mrb[0].mxu0
    %v1273 = vadd.f32 0.0, %v1272
    %v1274 = vpop.f32.mrb[0].mxu0
    %v1275 = vadd.f32 0.0, %v1274
    %1276 = vdwg.mxu0
    %1277 = vmatprep.subr.mxu0 %v158
    %1278 = vmatpush1.msra.mxu0 %v157
    %1279 = vmatprep.subr.mxu0 %v183
    %1280 = vmatpush1.msra.mxu0 %v182
    %1281 = vmatprep.subr.mxu0 %v208
    %1282 = vmatpush1.msra.mxu0 %v207
    %1283 = vmatprep.subr.mxu0 %v233
    %1284 = vmatpush1.msra.mxu0 %v232
    %1285 = vmatprep.subr.mxu0 %v258
    %1286 = vmatpush1.msra.mxu0 %v257
    %1287 = vmatprep.subr.mxu0 %v283
    %1288 = vmatpush1.msra.mxu0 %v282
    %1289 = vmatprep.subr.mxu0 %v308
    %1290 = vmatpush1.msra.mxu0 %v307
    %1291 = vmatprep.subr.mxu0 %v333
    %1292 = vmatpush1.msra.mxu0 %v332
    %1293 = vmatprep.subr.mxu0 %v358
    %1294 = vmatpush1.msra.mxu0 %v357
    %1295 = vmatprep.subr.mxu0 %v383
    %1296 = vmatpush1.msra.mxu0 %v382
    %1297 = vmatprep.subr.mxu0 %v408
    %1298 = vmatpush1.msra.mxu0 %v407
    %1299 = vmatprep.subr.mxu0 %v433
    %1300 = vmatpush1.msra.mxu0 %v432
    %1301 = vmatprep.subr.mxu0 0.0
    %1302 = vmatpush1.msra.mxu0 0.0
    %1303 = vmatprep.subr.mxu0 0.0
    %1304 = vmatpush1.msra.mxu0 0.0
    %1305 = vmatprep.subr.mxu0 0.0
    %1306 = vmatpush1.msra.mxu0 0.0
    %1307 = vmatprep.subr.mxu0 0.0
    %1308 = vmatpush1.msra.mxu0 0.0
    %1309 = vmatprep.subr.mxu0 0.0
    %1310 = vmatpush1.msra.mxu0 0.0
    %1311 = vmatprep.subr.mxu0 0.0
    %1312 = vmatpush1.msra.mxu0 0.0
    %1313 = vmatprep.subr.mxu0 0.0
    %1314 = vmatpush1.msra.mxu0 0.0
    %1315 = vmatprep.subr.mxu0 0.0
    %1316 = vmatpush1.msra.mxu0 0.0
    %1317 = vmatprep.subr.mxu0 0.0
    %1318 = vmatpush1.msra.mxu0 0.0
    %1319 = vmatprep.subr.mxu0 0.0
    %1320 = vmatpush1.msra.mxu0 0.0
    %1321 = vmatprep.subr.mxu0 0.0
    %1322 = vmatpush1.msra.mxu0 0.0
    %1323 = vmatprep.subr.mxu0 0.0
    %1324 = vmatpush1.msra.mxu0 0.0
    %1325 = vmatprep.subr.mxu0 0.0
    %1326 = vmatpush1.msra.mxu0 0.0
    %1327 = vmatprep.subr.mxu0 0.0
    %1328 = vmatpush1.msra.mxu0 0.0
    %1329 = vmatprep.subr.mxu0 0.0
    %1330 = vmatpush1.msra.mxu0 0.0
    %1331 = vmatprep.subr.mxu0 0.0
    %1332 = vmatpush1.msra.mxu0 0.0
    %1333 = vmatprep.subr.mxu0 0.0
    %1334 = vmatpush1.msra.mxu0 0.0
    %1335 = vmatprep.subr.mxu0 0.0
    %1336 = vmatpush1.msra.mxu0 0.0
    %1337 = vmatprep.subr.mxu0 0.0
    %1338 = vmatpush1.msra.mxu0 0.0
    %1339 = vmatprep.subr.mxu0 0.0
    %1340 = vmatpush1.msra.mxu0 0.0
    %1341 = vmatprep.mubr.f32.mxu0 0.0
    %1342 = vmatmul.mubr.f32.gmra.mrb[0].mxu0 %v439
    %v1343 = vpop.f32.mrb[0].mxu0
    %v1344 = vadd.f32 0.0, %v1343
    %v1345 = vpop.f32.mrb[0].mxu0
    %v1346 = vadd.f32 0.0, %v1345
    %1347 = vmatprep.mubr.f32.mxu0 0.0
    %1348 = vmatmul.mubr.f32.gmra.mrb[0].mxu0 %v442
    %v1349 = vpop.f32.mrb[0].mxu0
    %v1350 = vadd.f32 0.0, %v1349
    %v1351 = vpop.f32.mrb[0].mxu0
    %v1352 = vadd.f32 0.0, %v1351
    %1353 = vmatprep.mubr.f32.mxu0 0.0
    %1354 = vmatmul.mubr.f32.gmra.mrb[0].mxu0 %v445
    %v1355 = vpop.f32.mrb[0].mxu0
    %v1356 = vadd.f32 0.0, %v1355
    %v1357 = vpop.f32.mrb[0].mxu0
    %v1358 = vadd.f32 0.0, %v1357
    %1359 = vdwg.mxu0
    %1360 = vmatprep.subr.mxu0 %v160
    %1361 = vmatpush1.msra.mxu0 %v159
    %1362 = vmatprep.subr.mxu0 %v185
    %1363 = vmatpush1.msra.mxu0 %v184
    %1364 = vmatprep.subr.mxu0 %v210
    %1365 = vmatpush1.msra.mxu0 %v209
    %1366 = vmatprep.subr.mxu0 %v235
    %1367 = vmatpush1.msra.mxu0 %v234
    %1368 = vmatprep.subr.mxu0 %v260
    %1369 = vmatpush1.msra.mxu0 %v259
    %1370 = vmatprep.subr.mxu0 %v285
    %1371 = vmatpush1.msra.mxu0 %v284
    %1372 = vmatprep.subr.mxu0 %v310
    %1373 = vmatpush1.msra.mxu0 %v309
    %1374 = vmatprep.subr.mxu0 %v335
    %1375 = vmatpush1.msra.mxu0 %v334
    %1376 = vmatprep.subr.mxu0 %v360
    %1377 = vmatpush1.msra.mxu0 %v359
    %1378 = vmatprep.subr.mxu0 %v385
    %1379 = vmatpush1.msra.mxu0 %v384
    %1380 = vmatprep.subr.mxu0 %v410
    %1381 = vmatpush1.msra.mxu0 %v409
    %1382 = vmatprep.subr.mxu0 %v435
    %1383 = vmatpush1.msra.mxu0 %v434
    %1384 = vmatprep.subr.mxu0 0.0
    %1385 = vmatpush1.msra.mxu0 0.0
    %1386 = vmatprep.subr.mxu0 0.0
    %1387 = vmatpush1.msra.mxu0 0.0
    %1388 = vmatprep.subr.mxu0 0.0
    %1389 = vmatpush1.msra.mxu0 0.0
    %1390 = vmatprep.subr.mxu0 0.0
    %1391 = vmatpush1.msra.mxu0 0.0
    %1392 = vmatprep.subr.mxu0 0.0
    %1393 = vmatpush1.msra.mxu0 0.0
    %1394 = vmatprep.subr.mxu0 0.0
    %1395 = vmatpush1.msra.mxu0 0.0
    %1396 = vmatprep.subr.mxu0 0.0
    %1397 = vmatpush1.msra.mxu0 0.0
    %1398 = vmatprep.subr.mxu0 0.0
    %1399 = vmatpush1.msra.mxu0 0.0
    %1400 = vmatprep.subr.mxu0 0.0
    %1401 = vmatpush1.msra.mxu0 0.0
    %1402 = vmatprep.subr.mxu0 0.0
    %1403 = vmatpush1.msra.mxu0 0.0
    %1404 = vmatprep.subr.mxu0 0.0
    %1405 = vmatpush1.msra.mxu0 0.0
    %1406 = vmatprep.subr.mxu0 0.0
    %1407 = vmatpush1.msra.mxu0 0.0
    %1408 = vmatprep.subr.mxu0 0.0
    %1409 = vmatpush1.msra.mxu0 0.0
    %1410 = vmatprep.subr.mxu0 0.0
    %1411 = vmatpush1.msra.mxu0 0.0
    %1412 = vmatprep.subr.mxu0 0.0
    %1413 = vmatpush1.msra.mxu0 0.0
    %1414 = vmatprep.subr.mxu0 0.0
    %1415 = vmatpush1.msra.mxu0 0.0
    %1416 = vmatprep.subr.mxu0 0.0
    %1417 = vmatpush1.msra.mxu0 0.0
    %1418 = vmatprep.subr.mxu0 0.0
    %1419 = vmatpush1.msra.mxu0 0.0
    %1420 = vmatprep.subr.mxu0 0.0
    %1421 = vmatpush1.msra.mxu0 0.0
    %1422 = vmatprep.subr.mxu0 0.0
    %1423 = vmatpush1.msra.mxu0 0.0
    %1424 = vmatprep.mubr.f32.mxu0 0.0
    %1425 = vmatmul.mubr.f32.gmra.mrb[0].mxu0 %v439
    %v1426 = vpop.f32.mrb[0].mxu0
    %v1427 = vadd.f32 0.0, %v1426
    %v1428 = vpop.f32.mrb[0].mxu0
    %v1429 = vadd.f32 0.0, %v1428
    %1430 = vmatprep.mubr.f32.mxu0 0.0
    %1431 = vmatmul.mubr.f32.gmra.mrb[0].mxu0 %v442
    %v1432 = vpop.f32.mrb[0].mxu0
    %v1433 = vadd.f32 0.0, %v1432
    %v1434 = vpop.f32.mrb[0].mxu0
    %v1435 = vadd.f32 0.0, %v1434
    %1436 = vmatprep.mubr.f32.mxu0 0.0
    %1437 = vmatmul.mubr.f32.gmra.mrb[0].mxu0 %v445
    %v1438 = vpop.f32.mrb[0].mxu0
    %v1439 = vadd.f32 0.0, %v1438
    %v1440 = vpop.f32.mrb[0].mxu0
    %v1441 = vadd.f32 0.0, %v1440
    %1442 = vdwg.mxu0
    %1443 = vmatprep.subr.mxu0 0.0
    %1444 = vmatpush1.msra.mxu0 %v161
    %1445 = vmatprep.subr.mxu0 0.0
    %1446 = vmatpush1.msra.mxu0 %v186
    %1447 = vmatprep.subr.mxu0 0.0
    %1448 = vmatpush1.msra.mxu0 %v211
    %1449 = vmatprep.subr.mxu0 0.0
    %1450 = vmatpush1.msra.mxu0 %v236
    %1451 = vmatprep.subr.mxu0 0.0
    %1452 = vmatpush1.msra.mxu0 %v261
    %1453 = vmatprep.subr.mxu0 0.0
    %1454 = vmatpush1.msra.mxu0 %v286
    %1455 = vmatprep.subr.mxu0 0.0
    %1456 = vmatpush1.msra.mxu0 %v311
    %1457 = vmatprep.subr.mxu0 0.0
    %1458 = vmatpush1.msra.mxu0 %v336
    %1459 = vmatprep.subr.mxu0 0.0
    %1460 = vmatpush1.msra.mxu0 %v361
    %1461 = vmatprep.subr.mxu0 0.0
    %1462 = vmatpush1.msra.mxu0 %v386
    %1463 = vmatprep.subr.mxu0 0.0
    %1464 = vmatpush1.msra.mxu0 %v411
    %1465 = vmatprep.subr.mxu0 0.0
    %1466 = vmatpush1.msra.mxu0 %v436
    %1467 = vmatprep.subr.mxu0 0.0
    %1468 = vmatpush1.msra.mxu0 0.0
    %1469 = vmatprep.subr.mxu0 0.0
    %1470 = vmatpush1.msra.mxu0 0.0
    %1471 = vmatprep.subr.mxu0 0.0
    %1472 = vmatpush1.msra.mxu0 0.0
    %1473 = vmatprep.subr.mxu0 0.0
    %1474 = vmatpush1.msra.mxu0 0.0
    %1475 = vmatprep.subr.mxu0 0.0
    %1476 = vmatpush1.msra.mxu0 0.0
    %1477 = vmatprep.subr.mxu0 0.0
    %1478 = vmatpush1.msra.mxu0 0.0
    %1479 = vmatprep.subr.mxu0 0.0
    %1480 = vmatpush1.msra.mxu0 0.0
    %1481 = vmatprep.subr.mxu0 0.0
    %1482 = vmatpush1.msra.mxu0 0.0
    %1483 = vmatprep.subr.mxu0 0.0
    %1484 = vmatpush1.msra.mxu0 0.0
    %1485 = vmatprep.subr.mxu0 0.0
    %1486 = vmatpush1.msra.mxu0 0.0
    %1487 = vmatprep.subr.mxu0 0.0
    %1488 = vmatpush1.msra.mxu0 0.0
    %1489 = vmatprep.subr.mxu0 0.0
    %1490 = vmatpush1.msra.mxu0 0.0
    %1491 = vmatprep.subr.mxu0 0.0
    %1492 = vmatpush1.msra.mxu0 0.0
    %1493 = vmatprep.subr.mxu0 0.0
    %1494 = vmatpush1.msra.mxu0 0.0
    %1495 = vmatprep.subr.mxu0 0.0
    %1496 = vmatpush1.msra.mxu0 0.0
    %1497 = vmatprep.subr.mxu0 0.0
    %1498 = vmatpush1.msra.mxu0 0.0
    %1499 = vmatprep.subr.mxu0 0.0
    %1500 = vmatpush1.msra.mxu0 0.0
    %1501 = vmatprep.subr.mxu0 0.0
    %1502 = vmatpush1.msra.mxu0 0.0
    %1503 = vmatprep.subr.mxu0 0.0
    %1504 = vmatpush1.msra.mxu0 0.0
    %1505 = vmatprep.subr.mxu0 0.0
    %1506 = vmatpush1.msra.mxu0 0.0
    %1507 = vmatprep.mubr.f32.mxu0 0.0
    %1508 = vmatmul.mubr.f32.gmra.mrb[0].mxu0 %v439
    %v1509 = vpop.f32.mrb[0].mxu0
    %v1510 = vadd.f32 0.0, %v1509
    %v1511 = vpop.f32.mrb[0].mxu0
    %1512 = vmatprep.mubr.f32.mxu0 0.0
    %1513 = vmatmul.mubr.f32.gmra.mrb[0].mxu0 %v442
    %v1514 = vpop.f32.mrb[0].mxu0
    %v1515 = vadd.f32 0.0, %v1514
    %v1516 = vpop.f32.mrb[0].mxu0
    %1517 = vmatprep.mubr.f32.mxu0 0.0
    %1518 = vmatmul.mubr.f32.gmra.mrb[0].mxu0 %v445
    %v1519 = vpop.f32.mrb[0].mxu0
    %v1520 = vadd.f32 0.0, %v1519
    %v1521 = vpop.f32.mrb[0].mxu0
    %1522 = vdwg.mxu0
    %v1523 = vadd.f32 %v514, %v516
    %v1524 = vadd.f32 %v1523, %v597
    %v1525 = vadd.f32 %v1524, %v599
    %v1526 = vadd.f32 %v1525, %v680
    %v1527 = vadd.f32 %v1526, %v682
    %v1528 = vadd.f32 %v1527, %v763
    %v1529 = vadd.f32 %v1528, %v765
    %v1530 = vadd.f32 %v1529, %v846
    %v1531 = vadd.f32 %v1530, %v848
    %v1532 = vadd.f32 %v1531, %v929
    %v1533 = vadd.f32 %v1532, %v931
    %v1534 = vadd.f32 %v1533, %v1012
    %v1535 = vadd.f32 %v1534, %v1014
    %v1536 = vadd.f32 %v1535, %v1095
    %v1537 = vadd.f32 %v1536, %v1097
    %v1538 = vadd.f32 %v1537, %v1178
    %v1539 = vadd.f32 %v1538, %v1180
    %v1540 = vadd.f32 %v1539, %v1261
    %v1541 = vadd.f32 %v1540, %v1263
    %v1542 = vadd.f32 %v1541, %v1344
    %v1543 = vadd.f32 %v1542, %v1346
    %v1544 = vadd.f32 %v1543, %v1427
    %v1545 = vadd.f32 %v1544, %v1429
    %vm1546 = vcmask 523264
    %v1547 = vsel %vm1546, %v1510, 0.0
    %v1548 = vadd.f32 %v1545, %v1547
    %1549 = vadd.xlane.f32.xlu0 %v1548
    %v1550 = vpop.xlane.xlu0 %1549
    %v1551 = vadd.f32 %v520, %v522
    %v1552 = vadd.f32 %v1551, %v603
    %v1553 = vadd.f32 %v1552, %v605
    %v1554 = vadd.f32 %v1553, %v686
    %v1555 = vadd.f32 %v1554, %v688
    %v1556 = vadd.f32 %v1555, %v769
    %v1557 = vadd.f32 %v1556, %v771
    %v1558 = vadd.f32 %v1557, %v852
    %v1559 = vadd.f32 %v1558, %v854
    %v1560 = vadd.f32 %v1559, %v935
    %v1561 = vadd.f32 %v1560, %v937
    %v1562 = vadd.f32 %v1561, %v1018
    %v1563 = vadd.f32 %v1562, %v1020
    %v1564 = vadd.f32 %v1563, %v1101
    %v1565 = vadd.f32 %v1564, %v1103
    %v1566 = vadd.f32 %v1565, %v1184
    %v1567 = vadd.f32 %v1566, %v1186
    %v1568 = vadd.f32 %v1567, %v1267
    %v1569 = vadd.f32 %v1568, %v1269
    %v1570 = vadd.f32 %v1569, %v1350
    %v1571 = vadd.f32 %v1570, %v1352
    %v1572 = vadd.f32 %v1571, %v1433
    %v1573 = vadd.f32 %v1572, %v1435
    %v1574 = vsel %vm1546, %v1515, 0.0
    %v1575 = vadd.f32 %v1573, %v1574
    %1576 = vadd.xlane.f32.xlu0 %v1575
    %v1577 = vpop.xlane.xlu0 %1576
    %v1578 = vadd.f32 %v526, %v528
    %v1579 = vadd.f32 %v1578, %v609
    %v1580 = vadd.f32 %v1579, %v611
    %v1581 = vadd.f32 %v1580, %v692
    %v1582 = vadd.f32 %v1581, %v694
    %v1583 = vadd.f32 %v1582, %v775
    %v1584 = vadd.f32 %v1583, %v777
    %v1585 = vadd.f32 %v1584, %v858
    %v1586 = vadd.f32 %v1585, %v860
    %v1587 = vadd.f32 %v1586, %v941
    %v1588 = vadd.f32 %v1587, %v943
    %v1589 = vadd.f32 %v1588, %v1024
    %v1590 = vadd.f32 %v1589, %v1026
    %v1591 = vadd.f32 %v1590, %v1107
    %v1592 = vadd.f32 %v1591, %v1109
    %v1593 = vadd.f32 %v1592, %v1190
    %v1594 = vadd.f32 %v1593, %v1192
    %v1595 = vadd.f32 %v1594, %v1273
    %v1596 = vadd.f32 %v1595, %v1275
    %v1597 = vadd.f32 %v1596, %v1356
    %v1598 = vadd.f32 %v1597, %v1358
    %v1599 = vadd.f32 %v1598, %v1439
    %v1600 = vadd.f32 %v1599, %v1441
    %v1601 = vsel %vm1546, %v1520, 0.0
    %v1602 = vadd.f32 %v1600, %v1601
    %1603 = vadd.xlane.f32.xlu0 %v1602
    %v1604 = vpop.xlane.xlu0 %1603
    %v1605 = vmul.f32 %v514, %v514
    %v1606 = vmul.f32 %v516, %v516
    %v1607 = vmul.f32 %v597, %v597
    %v1608 = vmul.f32 %v599, %v599
    %v1609 = vmul.f32 %v680, %v680
    %v1610 = vmul.f32 %v682, %v682
    %v1611 = vmul.f32 %v763, %v763
    %v1612 = vmul.f32 %v765, %v765
    %v1613 = vmul.f32 %v846, %v846
    %v1614 = vmul.f32 %v848, %v848
    %v1615 = vmul.f32 %v929, %v929
    %v1616 = vmul.f32 %v931, %v931
    %v1617 = vmul.f32 %v1012, %v1012
    %v1618 = vmul.f32 %v1014, %v1014
    %v1619 = vmul.f32 %v1095, %v1095
    %v1620 = vmul.f32 %v1097, %v1097
    %v1621 = vmul.f32 %v1178, %v1178
    %v1622 = vmul.f32 %v1180, %v1180
    %v1623 = vmul.f32 %v1261, %v1261
    %v1624 = vmul.f32 %v1263, %v1263
    %v1625 = vmul.f32 %v1344, %v1344
    %v1626 = vmul.f32 %v1346, %v1346
    %v1627 = vmul.f32 %v1427, %v1427
    %v1628 = vmul.f32 %v1429, %v1429
    %v1629 = vmul.f32 %v1510, %v1510
    %v1630 = vmul.f32 %v520, %v520
    %v1631 = vmul.f32 %v522, %v522
    %v1632 = vmul.f32 %v603, %v603
    %v1633 = vmul.f32 %v605, %v605
    %v1634 = vmul.f32 %v686, %v686
    %v1635 = vmul.f32 %v688, %v688
    %v1636 = vmul.f32 %v769, %v769
    %v1637 = vmul.f32 %v771, %v771
    %v1638 = vmul.f32 %v852, %v852
    %v1639 = vmul.f32 %v854, %v854
    %v1640 = vmul.f32 %v935, %v935
    %v1641 = vmul.f32 %v937, %v937
    %v1642 = vmul.f32 %v1018, %v1018
    %v1643 = vmul.f32 %v1020, %v1020
    %v1644 = vmul.f32 %v1101, %v1101
    %v1645 = vmul.f32 %v1103, %v1103
    %v1646 = vmul.f32 %v1184, %v1184
    %v1647 = vmul.f32 %v1186, %v1186
    %v1648 = vmul.f32 %v1267, %v1267
    %v1649 = vmul.f32 %v1269, %v1269
    %v1650 = vmul.f32 %v1350, %v1350
    %v1651 = vmul.f32 %v1352, %v1352
    %v1652 = vmul.f32 %v1433, %v1433
    %v1653 = vmul.f32 %v1435, %v1435
    %v1654 = vmul.f32 %v1515, %v1515
    %v1655 = vmul.f32 %v526, %v526
    %v1656 = vmul.f32 %v528, %v528
    %v1657 = vmul.f32 %v609, %v609
    %v1658 = vmul.f32 %v611, %v611
    %v1659 = vmul.f32 %v692, %v692
    %v1660 = vmul.f32 %v694, %v694
    %v1661 = vmul.f32 %v775, %v775
    %v1662 = vmul.f32 %v777, %v777
    %v1663 = vmul.f32 %v858, %v858
    %v1664 = vmul.f32 %v860, %v860
    %v1665 = vmul.f32 %v941, %v941
    %v1666 = vmul.f32 %v943, %v943
    %v1667 = vmul.f32 %v1024, %v1024
    %v1668 = vmul.f32 %v1026, %v1026
    %v1669 = vmul.f32 %v1107, %v1107
    %v1670 = vmul.f32 %v1109, %v1109
    %v1671 = vmul.f32 %v1190, %v1190
    %v1672 = vmul.f32 %v1192, %v1192
    %v1673 = vmul.f32 %v1273, %v1273
    %v1674 = vmul.f32 %v1275, %v1275
    %v1675 = vmul.f32 %v1356, %v1356
    %v1676 = vmul.f32 %v1358, %v1358
    %v1677 = vmul.f32 %v1439, %v1439
    %v1678 = vmul.f32 %v1441, %v1441
    %v1679 = vmul.f32 %v1520, %v1520
    %v1680 = vadd.f32 %v1605, %v1606
    %v1681 = vadd.f32 %v1680, %v1607
    %v1682 = vadd.f32 %v1681, %v1608
    %v1683 = vadd.f32 %v1682, %v1609
    %v1684 = vadd.f32 %v1683, %v1610
    %v1685 = vadd.f32 %v1684, %v1611
    %v1686 = vadd.f32 %v1685, %v1612
    %v1687 = vadd.f32 %v1686, %v1613
    %v1688 = vadd.f32 %v1687, %v1614
    %v1689 = vadd.f32 %v1688, %v1615
    %v1690 = vadd.f32 %v1689, %v1616
    %v1691 = vadd.f32 %v1690, %v1617
    %v1692 = vadd.f32 %v1691, %v1618
    %v1693 = vadd.f32 %v1692, %v1619
    %v1694 = vadd.f32 %v1693, %v1620
    %v1695 = vadd.f32 %v1694, %v1621
    %v1696 = vadd.f32 %v1695, %v1622
    %v1697 = vadd.f32 %v1696, %v1623
    %v1698 = vadd.f32 %v1697, %v1624
    %v1699 = vadd.f32 %v1698, %v1625
    %v1700 = vadd.f32 %v1699, %v1626
    %v1701 = vadd.f32 %v1700, %v1627
    %v1702 = vadd.f32 %v1701, %v1628
    %v1703 = vsel %vm1546, %v1629, 0.0
    %v1704 = vadd.f32 %v1702, %v1703
    %1705 = vadd.xlane.f32.xlu0 %v1704
    %v1706 = vpop.xlane.xlu0 %1705
    %v1707 = vadd.f32 %v1630, %v1631
    %v1708 = vadd.f32 %v1707, %v1632
    %v1709 = vadd.f32 %v1708, %v1633
    %v1710 = vadd.f32 %v1709, %v1634
    %v1711 = vadd.f32 %v1710, %v1635
    %v1712 = vadd.f32 %v1711, %v1636
    %v1713 = vadd.f32 %v1712, %v1637
    %v1714 = vadd.f32 %v1713, %v1638
    %v1715 = vadd.f32 %v1714, %v1639
    %v1716 = vadd.f32 %v1715, %v1640
    %v1717 = vadd.f32 %v1716, %v1641
    %v1718 = vadd.f32 %v1717, %v1642
    %v1719 = vadd.f32 %v1718, %v1643
    %v1720 = vadd.f32 %v1719, %v1644
    %v1721 = vadd.f32 %v1720, %v1645
    %v1722 = vadd.f32 %v1721, %v1646
    %v1723 = vadd.f32 %v1722, %v1647
    %v1724 = vadd.f32 %v1723, %v1648
    %v1725 = vadd.f32 %v1724, %v1649
    %v1726 = vadd.f32 %v1725, %v1650
    %v1727 = vadd.f32 %v1726, %v1651
    %v1728 = vadd.f32 %v1727, %v1652
    %v1729 = vadd.f32 %v1728, %v1653
    %v1730 = vsel %vm1546, %v1654, 0.0
    %v1731 = vadd.f32 %v1729, %v1730
    %1732 = vadd.xlane.f32.xlu0 %v1731
    %v1733 = vpop.xlane.xlu0 %1732
    %v1734 = vadd.f32 %v1655, %v1656
    %v1735 = vadd.f32 %v1734, %v1657
    %v1736 = vadd.f32 %v1735, %v1658
    %v1737 = vadd.f32 %v1736, %v1659
    %v1738 = vadd.f32 %v1737, %v1660
    %v1739 = vadd.f32 %v1738, %v1661
    %v1740 = vadd.f32 %v1739, %v1662
    %v1741 = vadd.f32 %v1740, %v1663
    %v1742 = vadd.f32 %v1741, %v1664
    %v1743 = vadd.f32 %v1742, %v1665
    %v1744 = vadd.f32 %v1743, %v1666
    %v1745 = vadd.f32 %v1744, %v1667
    %v1746 = vadd.f32 %v1745, %v1668
    %v1747 = vadd.f32 %v1746, %v1669
    %v1748 = vadd.f32 %v1747, %v1670
    %v1749 = vadd.f32 %v1748, %v1671
    %v1750 = vadd.f32 %v1749, %v1672
    %v1751 = vadd.f32 %v1750, %v1673
    %v1752 = vadd.f32 %v1751, %v1674
    %v1753 = vadd.f32 %v1752, %v1675
    %v1754 = vadd.f32 %v1753, %v1676
    %v1755 = vadd.f32 %v1754, %v1677
    %v1756 = vadd.f32 %v1755, %v1678
    %v1757 = vsel %vm1546, %v1679, 0.0
    %v1758 = vadd.f32 %v1756, %v1757
    %1759 = vadd.xlane.f32.xlu0 %v1758
    %v1760 = vpop.xlane.xlu0 %1759
    %v1761 = vmul.f32 %v1550, 0.00031887754
    %v1762 = vmul.f32 %v1577, 0.00031887754
    %v1763 = vmul.f32 %v1604, 0.00031887754
    %v1764 = vmul.f32 %v1706, 0.00031887754
    %v1765 = vmul.f32 %v1733, 0.00031887754
    %v1766 = vmul.f32 %v1760, 0.00031887754
    %v1767 = vmul.f32 %v1761, %v1761
    %v1768 = vmul.f32 %v1762, %v1762
    %v1769 = vmul.f32 %v1763, %v1763
    %v1770 = vsub.f32 %v1764, %v1767
    %v1771 = vsub.f32 %v1765, %v1768
    %v1772 = vsub.f32 %v1766, %v1769
    %v1773 = vmax.f32 %v1770, 0.0
    %v1774 = vmax.f32 %v1771, 0.0
    %v1775 = vmax.f32 %v1772, 0.0
    %v1776 = vld [vmem:[%s6] sm:$0xff]
    %v1777 = vld [vmem:[%s6 + $0x8] sm:$0xff]
    %v1778 = vld [vmem:[%s6 + $0x10] sm:$0xff]
    %v1779 = vadd.f32 %v1773, 1e-05
    %v1780 = vadd.f32 %v1774, 1e-05
    %v1781 = vadd.f32 %v1775, 1e-05
    %v1782 = vrsqrt.pop %v1779
    %v1783 = vrsqrt.pop %v1780
    %v1784 = vrsqrt.pop %v1781
    %v1785 = vmul.f32 %v1776, %v1782
    %v1786 = vmul.f32 %v1777, %v1783
    %v1787 = vmul.f32 %v1778, %v1784
    %v1788 = vld [vmem:[%s7] sm:$0xff]
    %v1789 = vld [vmem:[%s7 + $0x8] sm:$0xff]
    %v1790 = vld [vmem:[%s7 + $0x10] sm:$0xff]
    %v1791 = vmul.f32 %v1761, %v1785
    %v1792 = vmul.f32 %v1762, %v1786
    %v1793 = vmul.f32 %v1763, %v1787
    %v1794 = vsub.f32 %v1788, %v1791
    %v1795 = vsub.f32 %v1789, %v1792
    %v1796 = vsub.f32 %v1790, %v1793
    %v1797 = vld [vmem:[#allocation10] sm:$0xff]
    %v1798 = vld [vmem:[#allocation10 + $0x8] sm:$0xff]
    %v1799 = vld [vmem:[#allocation10 + $0x10] sm:$0xff]
    %v1800 = vld [vmem:[#allocation10 + $0x18] sm:$0xff]
    %v1801 = vld [vmem:[#allocation10 + $0x20] sm:$0xff]
    %v1802 = vld [vmem:[#allocation10 + $0x28] sm:$0xff]
    %v1803 = vld [vmem:[#allocation10 + $0x30] sm:$0xff]
    %v1804 = vld [vmem:[#allocation10 + $0x38] sm:$0xff]
    %v1805 = vld [vmem:[#allocation10 + $0x40] sm:$0xff]
    %v1806 = vld [vmem:[#allocation10 + $0x48] sm:$0xff]
    %v1807 = vld [vmem:[#allocation10 + $0x50] sm:$0xff]
    %v1808 = vld [vmem:[#allocation10 + $0x58] sm:$0xff]
    %v1809 = vld [vmem:[#allocation10 + $0x60] sm:$0xff]
    %v1810 = vld [vmem:[#allocation10 + $0x68] sm:$0xff]
    %v1811 = vld [vmem:[#allocation10 + $0x70] sm:$0xff]
    %v1812 = vld [vmem:[#allocation10 + $0x78] sm:$0xff]
    %v1813 = vld [vmem:[#allocation10 + $0x80] sm:$0xff]
    %v1814 = vld [vmem:[#allocation10 + $0x88] sm:$0xff]
    %v1815 = vld [vmem:[#allocation10 + $0x90] sm:$0xff]
    %v1816 = vld [vmem:[#allocation10 + $0x98] sm:$0xff]
    %v1817 = vld [vmem:[#allocation10 + $0xa0] sm:$0xff]
    %v1818 = vld [vmem:[#allocation10 + $0xa8] sm:$0xff]
    %v1819 = vld [vmem:[#allocation10 + $0xb0] sm:$0xff]
    %v1820 = vld [vmem:[#allocation10 + $0xb8] sm:$0xff]
    %v1821 = vld [vmem:[#allocation10 + $0xc0] sm:$0xff]
    %v1822 = vld [vmem:[#allocation10 + $0xc8] sm:$0xff]
    %v1823 = vld [vmem:[#allocation10 + $0xd0] sm:$0xff]
    %v1824 = vld [vmem:[#allocation10 + $0xd8] sm:$0xff]
    %v1825 = vld [vmem:[#allocation10 + $0xe0] sm:$0xff]
    %v1826 = vld [vmem:[#allocation10 + $0xe8] sm:$0xff]
    %v1827 = vld [vmem:[#allocation10 + $0xf0] sm:$0xff]
    %v1828 = vld [vmem:[#allocation10 + $0xf8] sm:$0xff]
    %v1829 = vld [vmem:[#allocation10 + $0x100] sm:$0xff]
    %v1830 = vld [vmem:[#allocation10 + $0x108] sm:$0xff]
    %v1831 = vld [vmem:[#allocation10 + $0x110] sm:$0xff]
    %v1832 = vld [vmem:[#allocation10 + $0x118] sm:$0xff]
    %v1833 = vld [vmem:[#allocation10 + $0x120] sm:$0xff]
    %v1834 = vld [vmem:[#allocation10 + $0x128] sm:$0xff]
    %v1835 = vld [vmem:[#allocation10 + $0x130] sm:$0xff]
    %v1836 = vld [vmem:[#allocation10 + $0x138] sm:$0xff]
    %v1837 = vld [vmem:[#allocation10 + $0x140] sm:$0xff]
    %v1838 = vld [vmem:[#allocation10 + $0x148] sm:$0xff]
    %v1839 = vld [vmem:[#allocation10 + $0x150] sm:$0xff]
    %v1840 = vld [vmem:[#allocation10 + $0x158] sm:$0xff]
    %v1841 = vld [vmem:[#allocation10 + $0x160] sm:$0xff]
    %v1842 = vld [vmem:[#allocation10 + $0x168] sm:$0xff]
    %v1843 = vld [vmem:[#allocation10 + $0x170] sm:$0xff]
    %v1844 = vld [vmem:[#allocation10 + $0x178] sm:$0xff]
    %v1845 = vld [vmem:[#allocation10 + $0x180] sm:$0xff]
    %v1846 = vld [vmem:[#allocation10 + $0x188] sm:$0xff]
    %v1847 = vld [vmem:[#allocation10 + $0x190] sm:$0xff]
    %v1848 = vld [vmem:[#allocation10 + $0x198] sm:$0xff]
    %v1849 = vld [vmem:[#allocation10 + $0x1a0] sm:$0xff]
    %v1850 = vld [vmem:[#allocation10 + $0x1a8] sm:$0xff]
    %v1851 = vld [vmem:[#allocation10 + $0x1b0] sm:$0xff]
    %v1852 = vld [vmem:[#allocation10 + $0x1b8] sm:$0xff]
    %v1853 = vld [vmem:[#allocation10 + $0x1c0] sm:$0xff]
    %v1854 = vld [vmem:[#allocation10 + $0x1c8] sm:$0xff]
    %v1855 = vld [vmem:[#allocation10 + $0x1d0] sm:$0xff]
    %v1856 = vld [vmem:[#allocation10 + $0x1d8] sm:$0xff]
    %v1857 = vld [vmem:[#allocation10 + $0x1e0] sm:$0xff]
    %v1858 = vld [vmem:[#allocation10 + $0x1e8] sm:$0xff]
    %v1859 = vld [vmem:[#allocation10 + $0x1f0] sm:$0xff]
    %v1860 = vld [vmem:[#allocation10 + $0x1f8] sm:$0xff]
    %v1861 = vld [vmem:[#allocation10 + $0x200] sm:$0xff]
    %v1862 = vld [vmem:[#allocation10 + $0x208] sm:$0xff]
    %v1863 = vld [vmem:[#allocation10 + $0x210] sm:$0xff]
    %v1864 = vld [vmem:[#allocation10 + $0x218] sm:$0xff]
    %v1865 = vld [vmem:[#allocation10 + $0x220] sm:$0xff]
    %v1866 = vld [vmem:[#allocation10 + $0x228] sm:$0xff]
    %v1867 = vld [vmem:[#allocation10 + $0x230] sm:$0xff]
    %v1868 = vld [vmem:[#allocation10 + $0x238] sm:$0xff]
    %v1869 = vld [vmem:[#allocation10 + $0x240] sm:$0xff]
    %v1870 = vld [vmem:[#allocation10 + $0x248] sm:$0xff]
    %v1871 = vld [vmem:[#allocation10 + $0x250] sm:$0xff]
    %1873 = vset.pattern.permute.xlu0 0
    %1874 = vperm.xlu0 %1873, %v1785
    %v1875 = vpop.permute.xlu0 %1874
    %1878 = vset.pattern.permute.xlu0 0
    %1879 = vperm.xlu0 %1878, %v1786
    %v1880 = vpop.permute.xlu0 %1879
    %1883 = vset.pattern.permute.xlu0 0
    %1884 = vperm.xlu0 %1883, %v1787
    %v1885 = vpop.permute.xlu0 %1884
    %v1887 = vmul.f32 %v514, %v1875
    %v1888 = vmul.f32 %v516, %v1875
    %v1889 = vmul.f32 %v597, %v1875
    %v1890 = vmul.f32 %v599, %v1875
    %v1891 = vmul.f32 %v680, %v1875
    %v1892 = vmul.f32 %v682, %v1875
    %v1893 = vmul.f32 %v763, %v1875
    %v1894 = vmul.f32 %v765, %v1875
    %v1895 = vmul.f32 %v846, %v1875
    %v1896 = vmul.f32 %v848, %v1875
    %v1897 = vmul.f32 %v929, %v1875
    %v1898 = vmul.f32 %v931, %v1875
    %v1899 = vmul.f32 %v1012, %v1875
    %v1900 = vmul.f32 %v1014, %v1875
    %v1901 = vmul.f32 %v1095, %v1875
    %v1902 = vmul.f32 %v1097, %v1875
    %v1903 = vmul.f32 %v1178, %v1875
    %v1904 = vmul.f32 %v1180, %v1875
    %v1905 = vmul.f32 %v1261, %v1875
    %v1906 = vmul.f32 %v1263, %v1875
    %v1907 = vmul.f32 %v1344, %v1875
    %v1908 = vmul.f32 %v1346, %v1875
    %v1909 = vmul.f32 %v1427, %v1875
    %v1910 = vmul.f32 %v1429, %v1875
    %v1911 = vmul.f32 %v1510, %v1875
    %v1912 = vmul.f32 %v520, %v1880
    %v1913 = vmul.f32 %v522, %v1880
    %v1914 = vmul.f32 %v603, %v1880
    %v1915 = vmul.f32 %v605, %v1880
    %v1916 = vmul.f32 %v686, %v1880
    %v1917 = vmul.f32 %v688, %v1880
    %v1918 = vmul.f32 %v769, %v1880
    %v1919 = vmul.f32 %v771, %v1880
    %v1920 = vmul.f32 %v852, %v1880
    %v1921 = vmul.f32 %v854, %v1880
    %v1922 = vmul.f32 %v935, %v1880
    %v1923 = vmul.f32 %v937, %v1880
    %v1924 = vmul.f32 %v1018, %v1880
    %v1925 = vmul.f32 %v1020, %v1880
    %v1926 = vmul.f32 %v1101, %v1880
    %v1927 = vmul.f32 %v1103, %v1880
    %v1928 = vmul.f32 %v1184, %v1880
    %v1929 = vmul.f32 %v1186, %v1880
    %v1930 = vmul.f32 %v1267, %v1880
    %v1931 = vmul.f32 %v1269, %v1880
    %v1932 = vmul.f32 %v1350, %v1880
    %v1933 = vmul.f32 %v1352, %v1880
    %v1934 = vmul.f32 %v1433, %v1880
    %v1935 = vmul.f32 %v1435, %v1880
    %v1936 = vmul.f32 %v1515, %v1880
    %v1937 = vmul.f32 %v526, %v1885
    %v1938 = vmul.f32 %v528, %v1885
    %v1939 = vmul.f32 %v609, %v1885
    %v1940 = vmul.f32 %v611, %v1885
    %v1941 = vmul.f32 %v692, %v1885
    %v1942 = vmul.f32 %v694, %v1885
    %v1943 = vmul.f32 %v775, %v1885
    %v1944 = vmul.f32 %v777, %v1885
    %v1945 = vmul.f32 %v858, %v1885
    %v1946 = vmul.f32 %v860, %v1885
    %v1947 = vmul.f32 %v941, %v1885
    %v1948 = vmul.f32 %v943, %v1885
    %v1949 = vmul.f32 %v1024, %v1885
    %v1950 = vmul.f32 %v1026, %v1885
    %v1951 = vmul.f32 %v1107, %v1885
    %v1952 = vmul.f32 %v1109, %v1885
    %v1953 = vmul.f32 %v1190, %v1885
    %v1954 = vmul.f32 %v1192, %v1885
    %v1955 = vmul.f32 %v1273, %v1885
    %v1956 = vmul.f32 %v1275, %v1885
    %v1957 = vmul.f32 %v1356, %v1885
    %v1958 = vmul.f32 %v1358, %v1885
    %v1959 = vmul.f32 %v1439, %v1885
    %v1960 = vmul.f32 %v1441, %v1885
    %v1961 = vmul.f32 %v1520, %v1885
    %v1962 = vadd.f32 %v1797, %v1887
    %v1963 = vadd.f32 %v1798, %v1888
    %v1964 = vadd.f32 %v1799, %v1889
    %v1965 = vadd.f32 %v1800, %v1890
    %v1966 = vadd.f32 %v1801, %v1891
    %v1967 = vadd.f32 %v1802, %v1892
    %v1968 = vadd.f32 %v1803, %v1893
    %v1969 = vadd.f32 %v1804, %v1894
    %v1970 = vadd.f32 %v1805, %v1895
    %v1971 = vadd.f32 %v1806, %v1896
    %v1972 = vadd.f32 %v1807, %v1897
    %v1973 = vadd.f32 %v1808, %v1898
    %v1974 = vadd.f32 %v1809, %v1899
    %v1975 = vadd.f32 %v1810, %v1900
    %v1976 = vadd.f32 %v1811, %v1901
    %v1977 = vadd.f32 %v1812, %v1902
    %v1978 = vadd.f32 %v1813, %v1903
    %v1979 = vadd.f32 %v1814, %v1904
    %v1980 = vadd.f32 %v1815, %v1905
    %v1981 = vadd.f32 %v1816, %v1906
    %v1982 = vadd.f32 %v1817, %v1907
    %v1983 = vadd.f32 %v1818, %v1908
    %v1984 = vadd.f32 %v1819, %v1909
    %v1985 = vadd.f32 %v1820, %v1910
    %v1986 = vadd.f32 %v1821, %v1911
    %v1987 = vadd.f32 %v1822, %v1912
    %v1988 = vadd.f32 %v1823, %v1913
    %v1989 = vadd.f32 %v1824, %v1914
    %v1990 = vadd.f32 %v1825, %v1915
    %v1991 = vadd.f32 %v1826, %v1916
    %v1992 = vadd.f32 %v1827, %v1917
    %v1993 = vadd.f32 %v1828, %v1918
    %v1994 = vadd.f32 %v1829, %v1919
    %v1995 = vadd.f32 %v1830, %v1920
    %v1996 = vadd.f32 %v1831, %v1921
    %v1997 = vadd.f32 %v1832, %v1922
    %v1998 = vadd.f32 %v1833, %v1923
    %v1999 = vadd.f32 %v1834, %v1924
    %v2000 = vadd.f32 %v1835, %v1925
    %v2001 = vadd.f32 %v1836, %v1926
    %v2002 = vadd.f32 %v1837, %v1927
    %v2003 = vadd.f32 %v1838, %v1928
    %v2004 = vadd.f32 %v1839, %v1929
    %v2005 = vadd.f32 %v1840, %v1930
    %v2006 = vadd.f32 %v1841, %v1931
    %v2007 = vadd.f32 %v1842, %v1932
    %v2008 = vadd.f32 %v1843, %v1933
    %v2009 = vadd.f32 %v1844, %v1934
    %v2010 = vadd.f32 %v1845, %v1935
    %v2011 = vadd.f32 %v1846, %v1936
    %v2012 = vadd.f32 %v1847, %v1937
    %v2013 = vadd.f32 %v1848, %v1938
    %v2014 = vadd.f32 %v1849, %v1939
    %v2015 = vadd.f32 %v1850, %v1940
    %v2016 = vadd.f32 %v1851, %v1941
    %v2017 = vadd.f32 %v1852, %v1942
    %v2018 = vadd.f32 %v1853, %v1943
    %v2019 = vadd.f32 %v1854, %v1944
    %v2020 = vadd.f32 %v1855, %v1945
    %v2021 = vadd.f32 %v1856, %v1946
    %v2022 = vadd.f32 %v1857, %v1947
    %v2023 = vadd.f32 %v1858, %v1948
    %v2024 = vadd.f32 %v1859, %v1949
    %v2025 = vadd.f32 %v1860, %v1950
    %v2026 = vadd.f32 %v1861, %v1951
    %v2027 = vadd.f32 %v1862, %v1952
    %v2028 = vadd.f32 %v1863, %v1953
    %v2029 = vadd.f32 %v1864, %v1954
    %v2030 = vadd.f32 %v1865, %v1955
    %v2031 = vadd.f32 %v1866, %v1956
    %v2032 = vadd.f32 %v1867, %v1957
    %v2033 = vadd.f32 %v1868, %v1958
    %v2034 = vadd.f32 %v1869, %v1959
    %v2035 = vadd.f32 %v1870, %v1960
    %v2036 = vadd.f32 %v1871, %v1961
    %2038 = vset.pattern.permute.xlu0 0
    %2039 = vperm.xlu0 %2038, %v1794
    %v2040 = vpop.permute.xlu0 %2039
    %2043 = vset.pattern.permute.xlu0 0
    %2044 = vperm.xlu0 %2043, %v1795
    %v2045 = vpop.permute.xlu0 %2044
    %2048 = vset.pattern.permute.xlu0 0
    %2049 = vperm.xlu0 %2048, %v1796
    %v2050 = vpop.permute.xlu0 %2049
    %v2052 = vadd.f32 %v1962, %v2040
    %v2053 = vadd.f32 %v1963, %v2040
    %v2054 = vadd.f32 %v1964, %v2040
    %v2055 = vadd.f32 %v1965, %v2040
    %v2056 = vadd.f32 %v1966, %v2040
    %v2057 = vadd.f32 %v1967, %v2040
    %v2058 = vadd.f32 %v1968, %v2040
    %v2059 = vadd.f32 %v1969, %v2040
    %v2060 = vadd.f32 %v1970, %v2040
    %v2061 = vadd.f32 %v1971, %v2040
    %v2062 = vadd.f32 %v1972, %v2040
    %v2063 = vadd.f32 %v1973, %v2040
    %v2064 = vadd.f32 %v1974, %v2040
    %v2065 = vadd.f32 %v1975, %v2040
    %v2066 = vadd.f32 %v1976, %v2040
    %v2067 = vadd.f32 %v1977, %v2040
    %v2068 = vadd.f32 %v1978, %v2040
    %v2069 = vadd.f32 %v1979, %v2040
    %v2070 = vadd.f32 %v1980, %v2040
    %v2071 = vadd.f32 %v1981, %v2040
    %v2072 = vadd.f32 %v1982, %v2040
    %v2073 = vadd.f32 %v1983, %v2040
    %v2074 = vadd.f32 %v1984, %v2040
    %v2075 = vadd.f32 %v1985, %v2040
    %v2076 = vadd.f32 %v1986, %v2040
    %v2077 = vadd.f32 %v1987, %v2045
    %v2078 = vadd.f32 %v1988, %v2045
    %v2079 = vadd.f32 %v1989, %v2045
    %v2080 = vadd.f32 %v1990, %v2045
    %v2081 = vadd.f32 %v1991, %v2045
    %v2082 = vadd.f32 %v1992, %v2045
    %v2083 = vadd.f32 %v1993, %v2045
    %v2084 = vadd.f32 %v1994, %v2045
    %v2085 = vadd.f32 %v1995, %v2045
    %v2086 = vadd.f32 %v1996, %v2045
    %v2087 = vadd.f32 %v1997, %v2045
    %v2088 = vadd.f32 %v1998, %v2045
    %v2089 = vadd.f32 %v1999, %v2045
    %v2090 = vadd.f32 %v2000, %v2045
    %v2091 = vadd.f32 %v2001, %v2045
    %v2092 = vadd.f32 %v2002, %v2045
    %v2093 = vadd.f32 %v2003, %v2045
    %v2094 = vadd.f32 %v2004, %v2045
    %v2095 = vadd.f32 %v2005, %v2045
    %v2096 = vadd.f32 %v2006, %v2045
    %v2097 = vadd.f32 %v2007, %v2045
    %v2098 = vadd.f32 %v2008, %v2045
    %v2099 = vadd.f32 %v2009, %v2045
    %v2100 = vadd.f32 %v2010, %v2045
    %v2101 = vadd.f32 %v2011, %v2045
    %v2102 = vadd.f32 %v2012, %v2050
    %v2103 = vadd.f32 %v2013, %v2050
    %v2104 = vadd.f32 %v2014, %v2050
    %v2105 = vadd.f32 %v2015, %v2050
    %v2106 = vadd.f32 %v2016, %v2050
    %v2107 = vadd.f32 %v2017, %v2050
    %v2108 = vadd.f32 %v2018, %v2050
    %v2109 = vadd.f32 %v2019, %v2050
    %v2110 = vadd.f32 %v2020, %v2050
    %v2111 = vadd.f32 %v2021, %v2050
    %v2112 = vadd.f32 %v2022, %v2050
    %v2113 = vadd.f32 %v2023, %v2050
    %v2114 = vadd.f32 %v2024, %v2050
    %v2115 = vadd.f32 %v2025, %v2050
    %v2116 = vadd.f32 %v2026, %v2050
    %v2117 = vadd.f32 %v2027, %v2050
    %v2118 = vadd.f32 %v2028, %v2050
    %v2119 = vadd.f32 %v2029, %v2050
    %v2120 = vadd.f32 %v2030, %v2050
    %v2121 = vadd.f32 %v2031, %v2050
    %v2122 = vadd.f32 %v2032, %v2050
    %v2123 = vadd.f32 %v2033, %v2050
    %v2124 = vadd.f32 %v2034, %v2050
    %v2125 = vadd.f32 %v2035, %v2050
    %v2126 = vadd.f32 %v2036, %v2050
    %v2127 = vld [vmem:[%s8] sm:$0xff]
    %v2128 = vld [vmem:[%s8 + $0x8] sm:$0xff]
    %v2129 = vld [vmem:[%s8 + $0x10] sm:$0xff]
    %v2130 = vld [vmem:[%s8 + $0x18] sm:$0xff]
    %v2131 = vld [vmem:[%s8 + $0x20] sm:$0xff]
    %v2132 = vld [vmem:[%s8 + $0x28] sm:$0xff]
    %v2133 = vld [vmem:[%s8 + $0x30] sm:$0xff]
    %v2134 = vld [vmem:[%s8 + $0x38] sm:$0xff]
    %v2135 = vld [vmem:[%s8 + $0x40] sm:$0xff]
    %v2136 = vld [vmem:[%s8 + $0x48] sm:$0xff]
    %v2137 = vld [vmem:[%s8 + $0x50] sm:$0xff]
    %v2138 = vld [vmem:[%s8 + $0x58] sm:$0xff]
    %v2139 = vld [vmem:[%s8 + $0x60] sm:$0xff]
    %v2140 = vld [vmem:[%s8 + $0x68] sm:$0xff]
    %v2141 = vld [vmem:[%s8 + $0x70] sm:$0xff]
    %v2142 = vld [vmem:[%s8 + $0x78] sm:$0xff]
    %v2143 = vld [vmem:[%s8 + $0x80] sm:$0xff]
    %v2144 = vld [vmem:[%s8 + $0x88] sm:$0xff]
    %vm2145 = vcmask 195584
    %v2147 = vsel %vm2145, %v2127, 0
    %v2150 = vsel %vm2145, %v2128, 0
    %v2153 = vsel %vm2145, %v2129, 0
    %v2156 = vsel %vm2145, %v2130, 0
    %v2159 = vsel %vm2145, %v2131, 0
    %v2162 = vsel %vm2145, %v2132, 0
    %v2165 = vsel %vm2145, %v2133, 0
    %v2168 = vsel %vm2145, %v2134, 0
    %v2171 = vsel %vm2145, %v2135, 0
    %v2174 = vsel %vm2145, %v2136, 0
    %v2177 = vsel %vm2145, %v2137, 0
    %v2180 = vsel %vm2145, %v2138, 0
    %v2183 = vsel %vm2145, %v2139, 0
    %v2186 = vsel %vm2145, %v2140, 0
    %v2189 = vsel %vm2145, %v2141, 0
    %v2192 = vsel %vm2145, %v2142, 0
    %v2195 = vsel %vm2145, %v2143, 0
    %v2198 = vsel %vm2145, %v2144, 0
    %2200 = vmatprep.subr.mxu0 %v2053
    %2201 = vmatpush1.msra.mxu0 %v2052
    %2202 = vmatprep.subr.mxu0 %v2078
    %2203 = vmatpush1.msra.mxu0 %v2077
    %2204 = vmatprep.subr.mxu0 %v2103
    %2205 = vmatpush1.msra.mxu0 %v2102
    %2206 = vmatprep.subr.mxu0 0.0
    %2207 = vmatpush1.msra.mxu0 0.0
    %2208 = vmatprep.subr.mxu0 0.0
    %2209 = vmatpush1.msra.mxu0 0.0
    %2210 = vmatprep.subr.mxu0 0.0
    %2211 = vmatpush1.msra.mxu0 0.0
    %2212 = vmatprep.subr.mxu0 0.0
    %2213 = vmatpush1.msra.mxu0 0.0
    %2214 = vmatprep.subr.mxu0 0.0
    %2215 = vmatpush1.msra.mxu0 0.0
    %2216 = vmatprep.subr.mxu0 0.0
    %2217 = vmatpush1.msra.mxu0 0.0
    %2218 = vmatprep.subr.mxu0 0.0
    %2219 = vmatpush1.msra.mxu0 0.0
    %2220 = vmatprep.subr.mxu0 0.0
    %2221 = vmatpush1.msra.mxu0 0.0
    %2222 = vmatprep.subr.mxu0 0.0
    %2223 = vmatpush1.msra.mxu0 0.0
    %2224 = vmatprep.subr.mxu0 0.0
    %2225 = vmatpush1.msra.mxu0 0.0
    %2226 = vmatprep.subr.mxu0 0.0
    %2227 = vmatpush1.msra.mxu0 0.0
    %2228 = vmatprep.subr.mxu0 0.0
    %2229 = vmatpush1.msra.mxu0 0.0
    %2230 = vmatprep.subr.mxu0 0.0
    %2231 = vmatpush1.msra.mxu0 0.0
    %2232 = vmatprep.subr.mxu0 0.0
    %2233 = vmatpush1.msra.mxu0 0.0
    %2234 = vmatprep.subr.mxu0 0.0
    %2235 = vmatpush1.msra.mxu0 0.0
    %2236 = vmatprep.subr.mxu0 0.0
    %2237 = vmatpush1.msra.mxu0 0.0
    %2238 = vmatprep.subr.mxu0 0.0
    %2239 = vmatpush1.msra.mxu0 0.0
    %2240 = vmatprep.subr.mxu0 0.0
    %2241 = vmatpush1.msra.mxu0 0.0
    %2242 = vmatprep.subr.mxu0 0.0
    %2243 = vmatpush1.msra.mxu0 0.0
    %2244 = vmatprep.subr.mxu0 0.0
    %2245 = vmatpush1.msra.mxu0 0.0
    %2246 = vmatprep.subr.mxu0 0.0
    %2247 = vmatpush1.msra.mxu0 0.0
    %2248 = vmatprep.subr.mxu0 0.0
    %2249 = vmatpush1.msra.mxu0 0.0
    %2250 = vmatprep.subr.mxu0 0.0
    %2251 = vmatpush1.msra.mxu0 0.0
    %2252 = vmatprep.subr.mxu0 0.0
    %2253 = vmatpush1.msra.mxu0 0.0
    %2254 = vmatprep.subr.mxu0 0.0
    %2255 = vmatpush1.msra.mxu0 0.0
    %2256 = vmatprep.subr.mxu0 0.0
    %2257 = vmatpush1.msra.mxu0 0.0
    %2258 = vmatprep.subr.mxu0 0.0
    %2259 = vmatpush1.msra.mxu0 0.0
    %2260 = vmatprep.subr.mxu0 0.0
    %2261 = vmatpush1.msra.mxu0 0.0
    %2262 = vmatprep.subr.mxu0 0.0
    %2263 = vmatpush1.msra.mxu0 0.0
    %2264 = vmatprep.mubr.f32.mxu0 0.0
    %2265 = vmatmul.mubr.f32.gmra.mrb[0].mxu0 %v2147
    %v2266 = vpop.f32.mrb[0].mxu0
    %v2267 = vadd.f32 0.0, %v2266
    %v2268 = vpop.f32.mrb[0].mxu0
    %v2269 = vadd.f32 0.0, %v2268
    %2270 = vmatprep.mubr.f32.mxu0 0.0
    %2271 = vmatmul.mubr.f32.gmra.mrb[0].mxu0 %v2150
    %v2272 = vpop.f32.mrb[0].mxu0
    %v2273 = vadd.f32 0.0, %v2272
    %v2274 = vpop.f32.mrb[0].mxu0
    %v2275 = vadd.f32 0.0, %v2274
    %2276 = vmatprep.mubr.f32.mxu0 0.0
    %2277 = vmatmul.mubr.f32.gmra.mrb[0].mxu0 %v2153
    %v2278 = vpop.f32.mrb[0].mxu0
    %v2279 = vadd.f32 0.0, %v2278
    %v2280 = vpop.f32.mrb[0].mxu0
    %v2281 = vadd.f32 0.0, %v2280
    %2282 = vmatprep.mubr.f32.mxu0 0.0
    %2283 = vmatmul.mubr.f32.gmra.mrb[0].mxu0 %v2156
    %v2284 = vpop.f32.mrb[0].mxu0
    %v2285 = vadd.f32 0.0, %v2284
    %v2286 = vpop.f32.mrb[0].mxu0
    %v2287 = vadd.f32 0.0, %v2286
    %2288 = vmatprep.mubr.f32.mxu0 0.0
    %2289 = vmatmul.mubr.f32.gmra.mrb[0].mxu0 %v2159
    %v2290 = vpop.f32.mrb[0].mxu0
    %v2291 = vadd.f32 0.0, %v2290
    %v2292 = vpop.f32.mrb[0].mxu0
    %v2293 = vadd.f32 0.0, %v2292
    %2294 = vmatprep.mubr.f32.mxu0 0.0
    %2295 = vmatmul.mubr.f32.gmra.mrb[0].mxu0 %v2162
    %v2296 = vpop.f32.mrb[0].mxu0
    %v2297 = vadd.f32 0.0, %v2296
    %v2298 = vpop.f32.mrb[0].mxu0
    %v2299 = vadd.f32 0.0, %v2298
    %2300 = vmatprep.mubr.f32.mxu0 0.0
    %2301 = vmatmul.mubr.f32.gmra.mrb[0].mxu0 %v2165
    %v2302 = vpop.f32.mrb[0].mxu0
    %v2303 = vadd.f32 0.0, %v2302
    %v2304 = vpop.f32.mrb[0].mxu0
    %v2305 = vadd.f32 0.0, %v2304
    %2306 = vmatprep.mubr.f32.mxu0 0.0
    %2307 = vmatmul.mubr.f32.gmra.mrb[0].mxu0 %v2168
    %v2308 = vpop.f32.mrb[0].mxu0
    %v2309 = vadd.f32 0.0, %v2308
    %v2310 = vpop.f32.mrb[0].mxu0
    %v2311 = vadd.f32 0.0, %v2310
    %2312 = vmatprep.mubr.f32.mxu0 0.0
    %2313 = vmatmul.mubr.f32.gmra.mrb[0].mxu0 %v2171
    %v2314 = vpop.f32.mrb[0].mxu0
    %v2315 = vadd.f32 0.0, %v2314
    %v2316 = vpop.f32.mrb[0].mxu0
    %v2317 = vadd.f32 0.0, %v2316
    %2318 = vmatprep.mubr.f32.mxu0 0.0
    %2319 = vmatmul.mubr.f32.gmra.mrb[0].mxu0 %v2174
    %v2320 = vpop.f32.mrb[0].mxu0
    %v2321 = vadd.f32 0.0, %v2320
    %v2322 = vpop.f32.mrb[0].mxu0
    %v2323 = vadd.f32 0.0, %v2322
    %2324 = vmatprep.mubr.f32.mxu0 0.0
    %2325 = vmatmul.mubr.f32.gmra.mrb[0].mxu0 %v2177
    %v2326 = vpop.f32.mrb[0].mxu0
    %v2327 = vadd.f32 0.0, %v2326
    %v2328 = vpop.f32.mrb[0].mxu0
    %v2329 = vadd.f32 0.0, %v2328
    %2330 = vmatprep.mubr.f32.mxu0 0.0
    %2331 = vmatmul.mubr.f32.gmra.mrb[0].mxu0 %v2180
    %v2332 = vpop.f32.mrb[0].mxu0
    %v2333 = vadd.f32 0.0, %v2332
    %v2334 = vpop.f32.mrb[0].mxu0
    %v2335 = vadd.f32 0.0, %v2334
    %2336 = vmatprep.mubr.f32.mxu0 0.0
    %2337 = vmatmul.mubr.f32.gmra.mrb[0].mxu0 %v2183
    %v2338 = vpop.f32.mrb[0].mxu0
    %v2339 = vadd.f32 0.0, %v2338
    %v2340 = vpop.f32.mrb[0].mxu0
    %v2341 = vadd.f32 0.0, %v2340
    %2342 = vmatprep.mubr.f32.mxu0 0.0
    %2343 = vmatmul.mubr.f32.gmra.mrb[0].mxu0 %v2186
    %v2344 = vpop.f32.mrb[0].mxu0
    %v2345 = vadd.f32 0.0, %v2344
    %v2346 = vpop.f32.mrb[0].mxu0
    %v2347 = vadd.f32 0.0, %v2346
    %2348 = vmatprep.mubr.f32.mxu0 0.0
    %2349 = vmatmul.mubr.f32.gmra.mrb[0].mxu0 %v2189
    %v2350 = vpop.f32.mrb[0].mxu0
    %v2351 = vadd.f32 0.0, %v2350
    %v2352 = vpop.f32.mrb[0].mxu0
    %v2353 = vadd.f32 0.0, %v2352
    %2354 = vmatprep.mubr.f32.mxu0 0.0
    %2355 = vmatmul.mubr.f32.gmra.mrb[0].mxu0 %v2192
    %v2356 = vpop.f32.mrb[0].mxu0
    %v2357 = vadd.f32 0.0, %v2356
    %v2358 = vpop.f32.mrb[0].mxu0
    %v2359 = vadd.f32 0.0, %v2358
    %2360 = vmatprep.mubr.f32.mxu0 0.0
    %2361 = vmatmul.mubr.f32.gmra.mrb[0].mxu0 %v2195
    %v2362 = vpop.f32.mrb[0].mxu0
    %v2363 = vadd.f32 0.0, %v2362
    %v2364 = vpop.f32.mrb[0].mxu0
    %v2365 = vadd.f32 0.0, %v2364
    %2366 = vmatprep.mubr.f32.mxu0 0.0
    %2367 = vmatmul.mubr.f32.gmra.mrb[0].mxu0 %v2198
    %v2368 = vpop.f32.mrb[0].mxu0
    %v2369 = vadd.f32 0.0, %v2368
    %v2370 = vpop.f32.mrb[0].mxu0
    %v2371 = vadd.f32 0.0, %v2370
    %2372 = vdwg.mxu0
    %2373 = vmatprep.subr.mxu0 %v2055
    %2374 = vmatpush1.msra.mxu0 %v2054
    %2375 = vmatprep.subr.mxu0 %v2080
    %2376 = vmatpush1.msra.mxu0 %v2079
    %2377 = vmatprep.subr.mxu0 %v2105
    %2378 = vmatpush1.msra.mxu0 %v2104
    %2379 = vmatprep.subr.mxu0 0.0
    %2380 = vmatpush1.msra.mxu0 0.0
    %2381 = vmatprep.subr.mxu0 0.0
    %2382 = vmatpush1.msra.mxu0 0.0
    %2383 = vmatprep.subr.mxu0 0.0
    %2384 = vmatpush1.msra.mxu0 0.0
    %2385 = vmatprep.subr.mxu0 0.0
    %2386 = vmatpush1.msra.mxu0 0.0
    %2387 = vmatprep.subr.mxu0 0.0
    %2388 = vmatpush1.msra.mxu0 0.0
    %2389 = vmatprep.subr.mxu0 0.0
    %2390 = vmatpush1.msra.mxu0 0.0
    %2391 = vmatprep.subr.mxu0 0.0
    %2392 = vmatpush1.msra.mxu0 0.0
    %2393 = vmatprep.subr.mxu0 0.0
    %2394 = vmatpush1.msra.mxu0 0.0
    %2395 = vmatprep.subr.mxu0 0.0
    %2396 = vmatpush1.msra.mxu0 0.0
    %2397 = vmatprep.subr.mxu0 0.0
    %2398 = vmatpush1.msra.mxu0 0.0
    %2399 = vmatprep.subr.mxu0 0.0
    %2400 = vmatpush1.msra.mxu0 0.0
    %2401 = vmatprep.subr.mxu0 0.0
    %2402 = vmatpush1.msra.mxu0 0.0
    %2403 = vmatprep.subr.mxu0 0.0
    %2404 = vmatpush1.msra.mxu0 0.0
    %2405 = vmatprep.subr.mxu0 0.0
    %2406 = vmatpush1.msra.mxu0 0.0
    %2407 = vmatprep.subr.mxu0 0.0
    %2408 = vmatpush1.msra.mxu0 0.0
    %2409 = vmatprep.subr.mxu0 0.0
    %2410 = vmatpush1.msra.mxu0 0.0
    %2411 = vmatprep.subr.mxu0 0.0
    %2412 = vmatpush1.msra.mxu0 0.0
    %2413 = vmatprep.subr.mxu0 0.0
    %2414 = vmatpush1.msra.mxu0 0.0
    %2415 = vmatprep.subr.mxu0 0.0
    %2416 = vmatpush1.msra.mxu0 0.0
    %2417 = vmatprep.subr.mxu0 0.0
    %2418 = vmatpush1.msra.mxu0 0.0
    %2419 = vmatprep.subr.mxu0 0.0
    %2420 = vmatpush1.msra.mxu0 0.0
    %2421 = vmatprep.subr.mxu0 0.0
    %2422 = vmatpush1.msra.mxu0 0.0
    %2423 = vmatprep.subr.mxu0 0.0
    %2424 = vmatpush1.msra.mxu0 0.0
    %2425 = vmatprep.subr.mxu0 0.0
    %2426 = vmatpush1.msra.mxu0 0.0
    %2427 = vmatprep.subr.mxu0 0.0
    %2428 = vmatpush1.msra.mxu0 0.0
    %2429 = vmatprep.subr.mxu0 0.0
    %2430 = vmatpush1.msra.mxu0 0.0
    %2431 = vmatprep.subr.mxu0 0.0
    %2432 = vmatpush1.msra.mxu0 0.0
    %2433 = vmatprep.subr.mxu0 0.0
    %2434 = vmatpush1.msra.mxu0 0.0
    %2435 = vmatprep.subr.mxu0 0.0
    %2436 = vmatpush1.msra.mxu0 0.0
    %2437 = vmatprep.mubr.f32.mxu0 0.0
    %2438 = vmatmul.mubr.f32.gmra.mrb[0].mxu0 %v2147
    %v2439 = vpop.f32.mrb[0].mxu0
    %v2440 = vadd.f32 0.0, %v2439
    %v2441 = vpop.f32.mrb[0].mxu0
    %v2442 = vadd.f32 0.0, %v2441
    %2443 = vmatprep.mubr.f32.mxu0 0.0
    %2444 = vmatmul.mubr.f32.gmra.mrb[0].mxu0 %v2150
    %v2445 = vpop.f32.mrb[0].mxu0
    %v2446 = vadd.f32 0.0, %v2445
    %v2447 = vpop.f32.mrb[0].mxu0
    %v2448 = vadd.f32 0.0, %v2447
    %2449 = vmatprep.mubr.f32.mxu0 0.0
    %2450 = vmatmul.mubr.f32.gmra.mrb[0].mxu0 %v2153
    %v2451 = vpop.f32.mrb[0].mxu0
    %v2452 = vadd.f32 0.0, %v2451
    %v2453 = vpop.f32.mrb[0].mxu0
    %v2454 = vadd.f32 0.0, %v2453
    %2455 = vmatprep.mubr.f32.mxu0 0.0
    %2456 = vmatmul.mubr.f32.gmra.mrb[0].mxu0 %v2156
    %v2457 = vpop.f32.mrb[0].mxu0
    %v2458 = vadd.f32 0.0, %v2457
    %v2459 = vpop.f32.mrb[0].mxu0
    %v2460 = vadd.f32 0.0, %v2459
    %2461 = vmatprep.mubr.f32.mxu0 0.0
    %2462 = vmatmul.mubr.f32.gmra.mrb[0].mxu0 %v2159
    %v2463 = vpop.f32.mrb[0].mxu0
    %v2464 = vadd.f32 0.0, %v2463
    %v2465 = vpop.f32.mrb[0].mxu0
    %v2466 = vadd.f32 0.0, %v2465
    %2467 = vmatprep.mubr.f32.mxu0 0.0
    %2468 = vmatmul.mubr.f32.gmra.mrb[0].mxu0 %v2162
    %v2469 = vpop.f32.mrb[0].mxu0
    %v2470 = vadd.f32 0.0, %v2469
    %v2471 = vpop.f32.mrb[0].mxu0
    %v2472 = vadd.f32 0.0, %v2471
    %2473 = vmatprep.mubr.f32.mxu0 0.0
    %2474 = vmatmul.mubr.f32.gmra.mrb[0].mxu0 %v2165
    %v2475 = vpop.f32.mrb[0].mxu0
    %v2476 = vadd.f32 0.0, %v2475
    %v2477 = vpop.f32.mrb[0].mxu0
    %v2478 = vadd.f32 0.0, %v2477
    %2479 = vmatprep.mubr.f32.mxu0 0.0
    %2480 = vmatmul.mubr.f32.gmra.mrb[0].mxu0 %v2168
    %v2481 = vpop.f32.mrb[0].mxu0
    %v2482 = vadd.f32 0.0, %v2481
    %v2483 = vpop.f32.mrb[0].mxu0
    %v2484 = vadd.f32 0.0, %v2483
    %2485 = vmatprep.mubr.f32.mxu0 0.0
    %2486 = vmatmul.mubr.f32.gmra.mrb[0].mxu0 %v2171
    %v2487 = vpop.f32.mrb[0].mxu0
    %v2488 = vadd.f32 0.0, %v2487
    %v2489 = vpop.f32.mrb[0].mxu0
    %v2490 = vadd.f32 0.0, %v2489
    %2491 = vmatprep.mubr.f32.mxu0 0.0
    %2492 = vmatmul.mubr.f32.gmra.mrb[0].mxu0 %v2174
    %v2493 = vpop.f32.mrb[0].mxu0
    %v2494 = vadd.f32 0.0, %v2493
    %v2495 = vpop.f32.mrb[0].mxu0
    %v2496 = vadd.f32 0.0, %v2495
    %2497 = vmatprep.mubr.f32.mxu0 0.0
    %2498 = vmatmul.mubr.f32.gmra.mrb[0].mxu0 %v2177
    %v2499 = vpop.f32.mrb[0].mxu0
    %v2500 = vadd.f32 0.0, %v2499
    %v2501 = vpop.f32.mrb[0].mxu0
    %v2502 = vadd.f32 0.0, %v2501
    %2503 = vmatprep.mubr.f32.mxu0 0.0
    %2504 = vmatmul.mubr.f32.gmra.mrb[0].mxu0 %v2180
    %v2505 = vpop.f32.mrb[0].mxu0
    %v2506 = vadd.f32 0.0, %v2505
    %v2507 = vpop.f32.mrb[0].mxu0
    %v2508 = vadd.f32 0.0, %v2507
    %2509 = vmatprep.mubr.f32.mxu0 0.0
    %2510 = vmatmul.mubr.f32.gmra.mrb[0].mxu0 %v2183
    %v2511 = vpop.f32.mrb[0].mxu0
    %v2512 = vadd.f32 0.0, %v2511
    %v2513 = vpop.f32.mrb[0].mxu0
    %v2514 = vadd.f32 0.0, %v2513
    %2515 = vmatprep.mubr.f32.mxu0 0.0
    %2516 = vmatmul.mubr.f32.gmra.mrb[0].mxu0 %v2186
    %v2517 = vpop.f32.mrb[0].mxu0
    %v2518 = vadd.f32 0.0, %v2517
    %v2519 = vpop.f32.mrb[0].mxu0
    %v2520 = vadd.f32 0.0, %v2519
    %2521 = vmatprep.mubr.f32.mxu0 0.0
    %2522 = vmatmul.mubr.f32.gmra.mrb[0].mxu0 %v2189
    %v2523 = vpop.f32.mrb[0].mxu0
    %v2524 = vadd.f32 0.0, %v2523
    %v2525 = vpop.f32.mrb[0].mxu0
    %v2526 = vadd.f32 0.0, %v2525
    %2527 = vmatprep.mubr.f32.mxu0 0.0
    %2528 = vmatmul.mubr.f32.gmra.mrb[0].mxu0 %v2192
    %v2529 = vpop.f32.mrb[0].mxu0
    %v2530 = vadd.f32 0.0, %v2529
    %v2531 = vpop.f32.mrb[0].mxu0
    %v2532 = vadd.f32 0.0, %v2531
    %2533 = vmatprep.mubr.f32.mxu0 0.0
    %2534 = vmatmul.mubr.f32.gmra.mrb[0].mxu0 %v2195
    %v2535 = vpop.f32.mrb[0].mxu0
    %v2536 = vadd.f32 0.0, %v2535
    %v2537 = vpop.f32.mrb[0].mxu0
    %v2538 = vadd.f32 0.0, %v2537
    %2539 = vmatprep.mubr.f32.mxu0 0.0
    %2540 = vmatmul.mubr.f32.gmra.mrb[0].mxu0 %v2198
    %v2541 = vpop.f32.mrb[0].mxu0
    %v2542 = vadd.f32 0.0, %v2541
    %v2543 = vpop.f32.mrb[0].mxu0
    %v2544 = vadd.f32 0.0, %v2543
    %2545 = vdwg.mxu0
    %2546 = vmatprep.subr.mxu0 %v2057
    %2547 = vmatpush1.msra.mxu0 %v2056
    %2548 = vmatprep.subr.mxu0 %v2082
    %2549 = vmatpush1.msra.mxu0 %v2081
    %2550 = vmatprep.subr.mxu0 %v2107
    %2551 = vmatpush1.msra.mxu0 %v2106
    %2552 = vmatprep.subr.mxu0 0.0
    %2553 = vmatpush1.msra.mxu0 0.0
    %2554 = vmatprep.subr.mxu0 0.0
    %2555 = vmatpush1.msra.mxu0 0.0
    %2556 = vmatprep.subr.mxu0 0.0
    %2557 = vmatpush1.msra.mxu0 0.0
    %2558 = vmatprep.subr.mxu0 0.0
    %2559 = vmatpush1.msra.mxu0 0.0
    %2560 = vmatprep.subr.mxu0 0.0
    %2561 = vmatpush1.msra.mxu0 0.0
    %2562 = vmatprep.subr.mxu0 0.0
    %2563 = vmatpush1.msra.mxu0 0.0
    %2564 = vmatprep.subr.mxu0 0.0
    %2565 = vmatpush1.msra.mxu0 0.0
    %2566 = vmatprep.subr.mxu0 0.0
    %2567 = vmatpush1.msra.mxu0 0.0
    %2568 = vmatprep.subr.mxu0 0.0
    %2569 = vmatpush1.msra.mxu0 0.0
    %2570 = vmatprep.subr.mxu0 0.0
    %2571 = vmatpush1.msra.mxu0 0.0
    %2572 = vmatprep.subr.mxu0 0.0
    %2573 = vmatpush1.msra.mxu0 0.0
    %2574 = vmatprep.subr.mxu0 0.0
    %2575 = vmatpush1.msra.mxu0 0.0
    %2576 = vmatprep.subr.mxu0 0.0
    %2577 = vmatpush1.msra.mxu0 0.0
    %2578 = vmatprep.subr.mxu0 0.0
    %2579 = vmatpush1.msra.mxu0 0.0
    %2580 = vmatprep.subr.mxu0 0.0
    %2581 = vmatpush1.msra.mxu0 0.0
    %2582 = vmatprep.subr.mxu0 0.0
    %2583 = vmatpush1.msra.mxu0 0.0
    %2584 = vmatprep.subr.mxu0 0.0
    %2585 = vmatpush1.msra.mxu0 0.0
    %2586 = vmatprep.subr.mxu0 0.0
    %2587 = vmatpush1.msra.mxu0 0.0
    %2588 = vmatprep.subr.mxu0 0.0
    %2589 = vmatpush1.msra.mxu0 0.0
    %2590 = vmatprep.subr.mxu0 0.0
    %2591 = vmatpush1.msra.mxu0 0.0
    %2592 = vmatprep.subr.mxu0 0.0
    %2593 = vmatpush1.msra.mxu0 0.0
    %2594 = vmatprep.subr.mxu0 0.0
    %2595 = vmatpush1.msra.mxu0 0.0
    %2596 = vmatprep.subr.mxu0 0.0
    %2597 = vmatpush1.msra.mxu0 0.0
    %2598 = vmatprep.subr.mxu0 0.0
    %2599 = vmatpush1.msra.mxu0 0.0
    %2600 = vmatprep.subr.mxu0 0.0
    %2601 = vmatpush1.msra.mxu0 0.0
    %2602 = vmatprep.subr.mxu0 0.0
    %2603 = vmatpush1.msra.mxu0 0.0
    %2604 = vmatprep.subr.mxu0 0.0
    %2605 = vmatpush1.msra.mxu0 0.0
    %2606 = vmatprep.subr.mxu0 0.0
    %2607 = vmatpush1.msra.mxu0 0.0
    %2608 = vmatprep.subr.mxu0 0.0
    %2609 = vmatpush1.msra.mxu0 0.0
    %2610 = vmatprep.mubr.f32.mxu0 0.0
    %2611 = vmatmul.mubr.f32.gmra.mrb[0].mxu0 %v2147
    %v2612 = vpop.f32.mrb[0].mxu0
    %v2613 = vadd.f32 0.0, %v2612
    %v2614 = vpop.f32.mrb[0].mxu0
    %v2615 = vadd.f32 0.0, %v2614
    %2616 = vmatprep.mubr.f32.mxu0 0.0
    %2617 = vmatmul.mubr.f32.gmra.mrb[0].mxu0 %v2150
    %v2618 = vpop.f32.mrb[0].mxu0
    %v2619 = vadd.f32 0.0, %v2618
    %v2620 = vpop.f32.mrb[0].mxu0
    %v2621 = vadd.f32 0.0, %v2620
    %2622 = vmatprep.mubr.f32.mxu0 0.0
    %2623 = vmatmul.mubr.f32.gmra.mrb[0].mxu0 %v2153
    %v2624 = vpop.f32.mrb[0].mxu0
    %v2625 = vadd.f32 0.0, %v2624
    %v2626 = vpop.f32.mrb[0].mxu0
    %v2627 = vadd.f32 0.0, %v2626
    %2628 = vmatprep.mubr.f32.mxu0 0.0
    %2629 = vmatmul.mubr.f32.gmra.mrb[0].mxu0 %v2156
    %v2630 = vpop.f32.mrb[0].mxu0
    %v2631 = vadd.f32 0.0, %v2630
    %v2632 = vpop.f32.mrb[0].mxu0
    %v2633 = vadd.f32 0.0, %v2632
    %2634 = vmatprep.mubr.f32.mxu0 0.0
    %2635 = vmatmul.mubr.f32.gmra.mrb[0].mxu0 %v2159
    %v2636 = vpop.f32.mrb[0].mxu0
    %v2637 = vadd.f32 0.0, %v2636
    %v2638 = vpop.f32.mrb[0].mxu0
    %v2639 = vadd.f32 0.0, %v2638
    %2640 = vmatprep.mubr.f32.mxu0 0.0
    %2641 = vmatmul.mubr.f32.gmra.mrb[0].mxu0 %v2162
    %v2642 = vpop.f32.mrb[0].mxu0
    %v2643 = vadd.f32 0.0, %v2642
    %v2644 = vpop.f32.mrb[0].mxu0
    %v2645 = vadd.f32 0.0, %v2644
    %2646 = vmatprep.mubr.f32.mxu0 0.0
    %2647 = vmatmul.mubr.f32.gmra.mrb[0].mxu0 %v2165
    %v2648 = vpop.f32.mrb[0].mxu0
    %v2649 = vadd.f32 0.0, %v2648
    %v2650 = vpop.f32.mrb[0].mxu0
    %v2651 = vadd.f32 0.0, %v2650
    %2652 = vmatprep.mubr.f32.mxu0 0.0
    %2653 = vmatmul.mubr.f32.gmra.mrb[0].mxu0 %v2168
    %v2654 = vpop.f32.mrb[0].mxu0
    %v2655 = vadd.f32 0.0, %v2654
    %v2656 = vpop.f32.mrb[0].mxu0
    %v2657 = vadd.f32 0.0, %v2656
    %2658 = vmatprep.mubr.f32.mxu0 0.0
    %2659 = vmatmul.mubr.f32.gmra.mrb[0].mxu0 %v2171
    %v2660 = vpop.f32.mrb[0].mxu0
    %v2661 = vadd.f32 0.0, %v2660
    %v2662 = vpop.f32.mrb[0].mxu0
    %v2663 = vadd.f32 0.0, %v2662
    %2664 = vmatprep.mubr.f32.mxu0 0.0
    %2665 = vmatmul.mubr.f32.gmra.mrb[0].mxu0 %v2174
    %v2666 = vpop.f32.mrb[0].mxu0
    %v2667 = vadd.f32 0.0, %v2666
    %v2668 = vpop.f32.mrb[0].mxu0
    %v2669 = vadd.f32 0.0, %v2668
    %2670 = vmatprep.mubr.f32.mxu0 0.0
    %2671 = vmatmul.mubr.f32.gmra.mrb[0].mxu0 %v2177
    %v2672 = vpop.f32.mrb[0].mxu0
    %v2673 = vadd.f32 0.0, %v2672
    %v2674 = vpop.f32.mrb[0].mxu0
    %v2675 = vadd.f32 0.0, %v2674
    %2676 = vmatprep.mubr.f32.mxu0 0.0
    %2677 = vmatmul.mubr.f32.gmra.mrb[0].mxu0 %v2180
    %v2678 = vpop.f32.mrb[0].mxu0
    %v2679 = vadd.f32 0.0, %v2678
    %v2680 = vpop.f32.mrb[0].mxu0
    %v2681 = vadd.f32 0.0, %v2680
    %2682 = vmatprep.mubr.f32.mxu0 0.0
    %2683 = vmatmul.mubr.f32.gmra.mrb[0].mxu0 %v2183
    %v2684 = vpop.f32.mrb[0].mxu0
    %v2685 = vadd.f32 0.0, %v2684
    %v2686 = vpop.f32.mrb[0].mxu0
    %v2687 = vadd.f32 0.0, %v2686
    %2688 = vmatprep.mubr.f32.mxu0 0.0
    %2689 = vmatmul.mubr.f32.gmra.mrb[0].mxu0 %v2186
    %v2690 = vpop.f32.mrb[0].mxu0
    %v2691 = vadd.f32 0.0, %v2690
    %v2692 = vpop.f32.mrb[0].mxu0
    %v2693 = vadd.f32 0.0, %v2692
    %2694 = vmatprep.mubr.f32.mxu0 0.0
    %2695 = vmatmul.mubr.f32.gmra.mrb[0].mxu0 %v2189
    %v2696 = vpop.f32.mrb[0].mxu0
    %v2697 = vadd.f32 0.0, %v2696
    %v2698 = vpop.f32.mrb[0].mxu0
    %v2699 = vadd.f32 0.0, %v2698
    %2700 = vmatprep.mubr.f32.mxu0 0.0
    %2701 = vmatmul.mubr.f32.gmra.mrb[0].mxu0 %v2192
    %v2702 = vpop.f32.mrb[0].mxu0
    %v2703 = vadd.f32 0.0, %v2702
    %v2704 = vpop.f32.mrb[0].mxu0
    %v2705 = vadd.f32 0.0, %v2704
    %2706 = vmatprep.mubr.f32.mxu0 0.0
    %2707 = vmatmul.mubr.f32.gmra.mrb[0].mxu0 %v2195
    %v2708 = vpop.f32.mrb[0].mxu0
    %v2709 = vadd.f32 0.0, %v2708
    %v2710 = vpop.f32.mrb[0].mxu0
    %v2711 = vadd.f32 0.0, %v2710
    %2712 = vmatprep.mubr.f32.mxu0 0.0
    %2713 = vmatmul.mubr.f32.gmra.mrb[0].mxu0 %v2198
    %v2714 = vpop.f32.mrb[0].mxu0
    %v2715 = vadd.f32 0.0, %v2714
    %v2716 = vpop.f32.mrb[0].mxu0
    %v2717 = vadd.f32 0.0, %v2716
    %2718 = vdwg.mxu0
    %2719 = vmatprep.subr.mxu0 %v2059
    %2720 = vmatpush1.msra.mxu0 %v2058
    %2721 = vmatprep.subr.mxu0 %v2084
    %2722 = vmatpush1.msra.mxu0 %v2083
    %2723 = vmatprep.subr.mxu0 %v2109
    %2724 = vmatpush1.msra.mxu0 %v2108
    %2725 = vmatprep.subr.mxu0 0.0
    %2726 = vmatpush1.msra.mxu0 0.0
    %2727 = vmatprep.subr.mxu0 0.0
    %2728 = vmatpush1.msra.mxu0 0.0
    %2729 = vmatprep.subr.mxu0 0.0
    %2730 = vmatpush1.msra.mxu0 0.0
    %2731 = vmatprep.subr.mxu0 0.0
    %2732 = vmatpush1.msra.mxu0 0.0
    %2733 = vmatprep.subr.mxu0 0.0
    %2734 = vmatpush1.msra.mxu0 0.0
    %2735 = vmatprep.subr.mxu0 0.0
    %2736 = vmatpush1.msra.mxu0 0.0
    %2737 = vmatprep.subr.mxu0 0.0
    %2738 = vmatpush1.msra.mxu0 0.0
    %2739 = vmatprep.subr.mxu0 0.0
    %2740 = vmatpush1.msra.mxu0 0.0
    %2741 = vmatprep.subr.mxu0 0.0
    %2742 = vmatpush1.msra.mxu0 0.0
    %2743 = vmatprep.subr.mxu0 0.0
    %2744 = vmatpush1.msra.mxu0 0.0
    %2745 = vmatprep.subr.mxu0 0.0
    %2746 = vmatpush1.msra.mxu0 0.0
    %2747 = vmatprep.subr.mxu0 0.0
    %2748 = vmatpush1.msra.mxu0 0.0
    %2749 = vmatprep.subr.mxu0 0.0
    %2750 = vmatpush1.msra.mxu0 0.0
    %2751 = vmatprep.subr.mxu0 0.0
    %2752 = vmatpush1.msra.mxu0 0.0
    %2753 = vmatprep.subr.mxu0 0.0
    %2754 = vmatpush1.msra.mxu0 0.0
    %2755 = vmatprep.subr.mxu0 0.0
    %2756 = vmatpush1.msra.mxu0 0.0
    %2757 = vmatprep.subr.mxu0 0.0
    %2758 = vmatpush1.msra.mxu0 0.0
    %2759 = vmatprep.subr.mxu0 0.0
    %2760 = vmatpush1.msra.mxu0 0.0
    %2761 = vmatprep.subr.mxu0 0.0
    %2762 = vmatpush1.msra.mxu0 0.0
    %2763 = vmatprep.subr.mxu0 0.0
    %2764 = vmatpush1.msra.mxu0 0.0
    %2765 = vmatprep.subr.mxu0 0.0
    %2766 = vmatpush1.msra.mxu0 0.0
    %2767 = vmatprep.subr.mxu0 0.0
    %2768 = vmatpush1.msra.mxu0 0.0
    %2769 = vmatprep.subr.mxu0 0.0
    %2770 = vmatpush1.msra.mxu0 0.0
    %2771 = vmatprep.subr.mxu0 0.0
    %2772 = vmatpush1.msra.mxu0 0.0
    %2773 = vmatprep.subr.mxu0 0.0
    %2774 = vmatpush1.msra.mxu0 0.0
    %2775 = vmatprep.subr.mxu0 0.0
    %2776 = vmatpush1.msra.mxu0 0.0
    %2777 = vmatprep.subr.mxu0 0.0
    %2778 = vmatpush1.msra.mxu0 0.0
    %2779 = vmatprep.subr.mxu0 0.0
    %2780 = vmatpush1.msra.mxu0 0.0
    %2781 = vmatprep.subr.mxu0 0.0
    %2782 = vmatpush1.msra.mxu0 0.0
    %2783 = vmatprep.mubr.f32.mxu0 0.0
    %2784 = vmatmul.mubr.f32.gmra.mrb[0].mxu0 %v2147
    %v2785 = vpop.f32.mrb[0].mxu0
    %v2786 = vadd.f32 0.0, %v2785
    %v2787 = vpop.f32.mrb[0].mxu0
    %v2788 = vadd.f32 0.0, %v2787
    %2789 = vmatprep.mubr.f32.mxu0 0.0
    %2790 = vmatmul.mubr.f32.gmra.mrb[0].mxu0 %v2150
    %v2791 = vpop.f32.mrb[0].mxu0
    %v2792 = vadd.f32 0.0, %v2791
    %v2793 = vpop.f32.mrb[0].mxu0
    %v2794 = vadd.f32 0.0, %v2793
    %2795 = vmatprep.mubr.f32.mxu0 0.0
    %2796 = vmatmul.mubr.f32.gmra.mrb[0].mxu0 %v2153
    %v2797 = vpop.f32.mrb[0].mxu0
    %v2798 = vadd.f32 0.0, %v2797
    %v2799 = vpop.f32.mrb[0].mxu0
    %v2800 = vadd.f32 0.0, %v2799
    %2801 = vmatprep.mubr.f32.mxu0 0.0
    %2802 = vmatmul.mubr.f32.gmra.mrb[0].mxu0 %v2156
    %v2803 = vpop.f32.mrb[0].mxu0
    %v2804 = vadd.f32 0.0, %v2803
    %v2805 = vpop.f32.mrb[0].mxu0
    %v2806 = vadd.f32 0.0, %v2805
    %2807 = vmatprep.mubr.f32.mxu0 0.0
    %2808 = vmatmul.mubr.f32.gmra.mrb[0].mxu0 %v2159
    %v2809 = vpop.f32.mrb[0].mxu0
    %v2810 = vadd.f32 0.0, %v2809
    %v2811 = vpop.f32.mrb[0].mxu0
    %v2812 = vadd.f32 0.0, %v2811
    %2813 = vmatprep.mubr.f32.mxu0 0.0
    %2814 = vmatmul.mubr.f32.gmra.mrb[0].mxu0 %v2162
    %v2815 = vpop.f32.mrb[0].mxu0
    %v2816 = vadd.f32 0.0, %v2815
    %v2817 = vpop.f32.mrb[0].mxu0
    %v2818 = vadd.f32 0.0, %v2817
    %2819 = vmatprep.mubr.f32.mxu0 0.0
    %2820 = vmatmul.mubr.f32.gmra.mrb[0].mxu0 %v2165
    %v2821 = vpop.f32.mrb[0].mxu0
    %v2822 = vadd.f32 0.0, %v2821
    %v2823 = vpop.f32.mrb[0].mxu0
    %v2824 = vadd.f32 0.0, %v2823
    %2825 = vmatprep.mubr.f32.mxu0 0.0
    %2826 = vmatmul.mubr.f32.gmra.mrb[0].mxu0 %v2168
    %v2827 = vpop.f32.mrb[0].mxu0
    %v2828 = vadd.f32 0.0, %v2827
    %v2829 = vpop.f32.mrb[0].mxu0
    %v2830 = vadd.f32 0.0, %v2829
    %2831 = vmatprep.mubr.f32.mxu0 0.0
    %2832 = vmatmul.mubr.f32.gmra.mrb[0].mxu0 %v2171
    %v2833 = vpop.f32.mrb[0].mxu0
    %v2834 = vadd.f32 0.0, %v2833
    %v2835 = vpop.f32.mrb[0].mxu0
    %v2836 = vadd.f32 0.0, %v2835
    %2837 = vmatprep.mubr.f32.mxu0 0.0
    %2838 = vmatmul.mubr.f32.gmra.mrb[0].mxu0 %v2174
    %v2839 = vpop.f32.mrb[0].mxu0
    %v2840 = vadd.f32 0.0, %v2839
    %v2841 = vpop.f32.mrb[0].mxu0
    %v2842 = vadd.f32 0.0, %v2841
    %2843 = vmatprep.mubr.f32.mxu0 0.0
    %2844 = vmatmul.mubr.f32.gmra.mrb[0].mxu0 %v2177
    %v2845 = vpop.f32.mrb[0].mxu0
    %v2846 = vadd.f32 0.0, %v2845
    %v2847 = vpop.f32.mrb[0].mxu0
    %v2848 = vadd.f32 0.0, %v2847
    %2849 = vmatprep.mubr.f32.mxu0 0.0
    %2850 = vmatmul.mubr.f32.gmra.mrb[0].mxu0 %v2180
    %v2851 = vpop.f32.mrb[0].mxu0
    %v2852 = vadd.f32 0.0, %v2851
    %v2853 = vpop.f32.mrb[0].mxu0
    %v2854 = vadd.f32 0.0, %v2853
    %2855 = vmatprep.mubr.f32.mxu0 0.0
    %2856 = vmatmul.mubr.f32.gmra.mrb[0].mxu0 %v2183
    %v2857 = vpop.f32.mrb[0].mxu0
    %v2858 = vadd.f32 0.0, %v2857
    %v2859 = vpop.f32.mrb[0].mxu0
    %v2860 = vadd.f32 0.0, %v2859
    %2861 = vmatprep.mubr.f32.mxu0 0.0
    %2862 = vmatmul.mubr.f32.gmra.mrb[0].mxu0 %v2186
    %v2863 = vpop.f32.mrb[0].mxu0
    %v2864 = vadd.f32 0.0, %v2863
    %v2865 = vpop.f32.mrb[0].mxu0
    %v2866 = vadd.f32 0.0, %v2865
    %2867 = vmatprep.mubr.f32.mxu0 0.0
    %2868 = vmatmul.mubr.f32.gmra.mrb[0].mxu0 %v2189
    %v2869 = vpop.f32.mrb[0].mxu0
    %v2870 = vadd.f32 0.0, %v2869
    %v2871 = vpop.f32.mrb[0].mxu0
    %v2872 = vadd.f32 0.0, %v2871
    %2873 = vmatprep.mubr.f32.mxu0 0.0
    %2874 = vmatmul.mubr.f32.gmra.mrb[0].mxu0 %v2192
    %v2875 = vpop.f32.mrb[0].mxu0
    %v2876 = vadd.f32 0.0, %v2875
    %v2877 = vpop.f32.mrb[0].mxu0
    %v2878 = vadd.f32 0.0, %v2877
    %2879 = vmatprep.mubr.f32.mxu0 0.0
    %2880 = vmatmul.mubr.f32.gmra.mrb[0].mxu0 %v2195
    %v2881 = vpop.f32.mrb[0].mxu0
    %v2882 = vadd.f32 0.0, %v2881
    %v2883 = vpop.f32.mrb[0].mxu0
    %v2884 = vadd.f32 0.0, %v2883
    %2885 = vmatprep.mubr.f32.mxu0 0.0
    %2886 = vmatmul.mubr.f32.gmra.mrb[0].mxu0 %v2198
    %v2887 = vpop.f32.mrb[0].mxu0
    %v2888 = vadd.f32 0.0, %v2887
    %v2889 = vpop.f32.mrb[0].mxu0
    %v2890 = vadd.f32 0.0, %v2889
    %2891 = vdwg.mxu0
    %2892 = vmatprep.subr.mxu0 %v2061
    %2893 = vmatpush1.msra.mxu0 %v2060
    %2894 = vmatprep.subr.mxu0 %v2086
    %2895 = vmatpush1.msra.mxu0 %v2085
    %2896 = vmatprep.subr.mxu0 %v2111
    %2897 = vmatpush1.msra.mxu0 %v2110
    %2898 = vmatprep.subr.mxu0 0.0
    %2899 = vmatpush1.msra.mxu0 0.0
    %2900 = vmatprep.subr.mxu0 0.0
    %2901 = vmatpush1.msra.mxu0 0.0
    %2902 = vmatprep.subr.mxu0 0.0
    %2903 = vmatpush1.msra.mxu0 0.0
    %2904 = vmatprep.subr.mxu0 0.0
    %2905 = vmatpush1.msra.mxu0 0.0
    %2906 = vmatprep.subr.mxu0 0.0
    %2907 = vmatpush1.msra.mxu0 0.0
    %2908 = vmatprep.subr.mxu0 0.0
    %2909 = vmatpush1.msra.mxu0 0.0
    %2910 = vmatprep.subr.mxu0 0.0
    %2911 = vmatpush1.msra.mxu0 0.0
    %2912 = vmatprep.subr.mxu0 0.0
    %2913 = vmatpush1.msra.mxu0 0.0
    %2914 = vmatprep.subr.mxu0 0.0
    %2915 = vmatpush1.msra.mxu0 0.0
    %2916 = vmatprep.subr.mxu0 0.0
    %2917 = vmatpush1.msra.mxu0 0.0
    %2918 = vmatprep.subr.mxu0 0.0
    %2919 = vmatpush1.msra.mxu0 0.0
    %2920 = vmatprep.subr.mxu0 0.0
    %2921 = vmatpush1.msra.mxu0 0.0
    %2922 = vmatprep.subr.mxu0 0.0
    %2923 = vmatpush1.msra.mxu0 0.0
    %2924 = vmatprep.subr.mxu0 0.0
    %2925 = vmatpush1.msra.mxu0 0.0
    %2926 = vmatprep.subr.mxu0 0.0
    %2927 = vmatpush1.msra.mxu0 0.0
    %2928 = vmatprep.subr.mxu0 0.0
    %2929 = vmatpush1.msra.mxu0 0.0
    %2930 = vmatprep.subr.mxu0 0.0
    %2931 = vmatpush1.msra.mxu0 0.0
    %2932 = vmatprep.subr.mxu0 0.0
    %2933 = vmatpush1.msra.mxu0 0.0
    %2934 = vmatprep.subr.mxu0 0.0
    %2935 = vmatpush1.msra.mxu0 0.0
    %2936 = vmatprep.subr.mxu0 0.0
    %2937 = vmatpush1.msra.mxu0 0.0
    %2938 = vmatprep.subr.mxu0 0.0
    %2939 = vmatpush1.msra.mxu0 0.0
    %2940 = vmatprep.subr.mxu0 0.0
    %2941 = vmatpush1.msra.mxu0 0.0
    %2942 = vmatprep.subr.mxu0 0.0
    %2943 = vmatpush1.msra.mxu0 0.0
    %2944 = vmatprep.subr.mxu0 0.0
    %2945 = vmatpush1.msra.mxu0 0.0
    %2946 = vmatprep.subr.mxu0 0.0
    %2947 = vmatpush1.msra.mxu0 0.0
    %2948 = vmatprep.subr.mxu0 0.0
    %2949 = vmatpush1.msra.mxu0 0.0
    %2950 = vmatprep.subr.mxu0 0.0
    %2951 = vmatpush1.msra.mxu0 0.0
    %2952 = vmatprep.subr.mxu0 0.0
    %2953 = vmatpush1.msra.mxu0 0.0
    %2954 = vmatprep.subr.mxu0 0.0
    %2955 = vmatpush1.msra.mxu0 0.0
    %2956 = vmatprep.mubr.f32.mxu0 0.0
    %2957 = vmatmul.mubr.f32.gmra.mrb[0].mxu0 %v2147
    %v2958 = vpop.f32.mrb[0].mxu0
    %v2959 = vadd.f32 0.0, %v2958
    %v2960 = vpop.f32.mrb[0].mxu0
    %v2961 = vadd.f32 0.0, %v2960
    %2962 = vmatprep.mubr.f32.mxu0 0.0
    %2963 = vmatmul.mubr.f32.gmra.mrb[0].mxu0 %v2150
    %v2964 = vpop.f32.mrb[0].mxu0
    %v2965 = vadd.f32 0.0, %v2964
    %v2966 = vpop.f32.mrb[0].mxu0
    %v2967 = vadd.f32 0.0, %v2966
    %2968 = vmatprep.mubr.f32.mxu0 0.0
    %2969 = vmatmul.mubr.f32.gmra.mrb[0].mxu0 %v2153
    %v2970 = vpop.f32.mrb[0].mxu0
    %v2971 = vadd.f32 0.0, %v2970
    %v2972 = vpop.f32.mrb[0].mxu0
    %v2973 = vadd.f32 0.0, %v2972
    %2974 = vmatprep.mubr.f32.mxu0 0.0
    %2975 = vmatmul.mubr.f32.gmra.mrb[0].mxu0 %v2156
    %v2976 = vpop.f32.mrb[0].mxu0
    %v2977 = vadd.f32 0.0, %v2976
    %v2978 = vpop.f32.mrb[0].mxu0
    %v2979 = vadd.f32 0.0, %v2978
    %2980 = vmatprep.mubr.f32.mxu0 0.0
    %2981 = vmatmul.mubr.f32.gmra.mrb[0].mxu0 %v2159
    %v2982 = vpop.f32.mrb[0].mxu0
    %v2983 = vadd.f32 0.0, %v2982
    %v2984 = vpop.f32.mrb[0].mxu0
    %v2985 = vadd.f32 0.0, %v2984
    %2986 = vmatprep.mubr.f32.mxu0 0.0
    %2987 = vmatmul.mubr.f32.gmra.mrb[0].mxu0 %v2162
    %v2988 = vpop.f32.mrb[0].mxu0
    %v2989 = vadd.f32 0.0, %v2988
    %v2990 = vpop.f32.mrb[0].mxu0
    %v2991 = vadd.f32 0.0, %v2990
    %2992 = vmatprep.mubr.f32.mxu0 0.0
    %2993 = vmatmul.mubr.f32.gmra.mrb[0].mxu0 %v2165
    %v2994 = vpop.f32.mrb[0].mxu0
    %v2995 = vadd.f32 0.0, %v2994
    %v2996 = vpop.f32.mrb[0].mxu0
    %v2997 = vadd.f32 0.0, %v2996
    %2998 = vmatprep.mubr.f32.mxu0 0.0
    %2999 = vmatmul.mubr.f32.gmra.mrb[0].mxu0 %v2168
    %v3000 = vpop.f32.mrb[0].mxu0
    %v3001 = vadd.f32 0.0, %v3000
    %v3002 = vpop.f32.mrb[0].mxu0
    %v3003 = vadd.f32 0.0, %v3002
    %3004 = vmatprep.mubr.f32.mxu0 0.0
    %3005 = vmatmul.mubr.f32.gmra.mrb[0].mxu0 %v2171
    %v3006 = vpop.f32.mrb[0].mxu0
    %v3007 = vadd.f32 0.0, %v3006
    %v3008 = vpop.f32.mrb[0].mxu0
    %v3009 = vadd.f32 0.0, %v3008
    %3010 = vmatprep.mubr.f32.mxu0 0.0
    %3011 = vmatmul.mubr.f32.gmra.mrb[0].mxu0 %v2174
    %v3012 = vpop.f32.mrb[0].mxu0
    %v3013 = vadd.f32 0.0, %v3012
    %v3014 = vpop.f32.mrb[0].mxu0
    %v3015 = vadd.f32 0.0, %v3014
    %3016 = vmatprep.mubr.f32.mxu0 0.0
    %3017 = vmatmul.mubr.f32.gmra.mrb[0].mxu0 %v2177
    %v3018 = vpop.f32.mrb[0].mxu0
    %v3019 = vadd.f32 0.0, %v3018
    %v3020 = vpop.f32.mrb[0].mxu0
    %v3021 = vadd.f32 0.0, %v3020
    %3022 = vmatprep.mubr.f32.mxu0 0.0
    %3023 = vmatmul.mubr.f32.gmra.mrb[0].mxu0 %v2180
    %v3024 = vpop.f32.mrb[0].mxu0
    %v3025 = vadd.f32 0.0, %v3024
    %v3026 = vpop.f32.mrb[0].mxu0
    %v3027 = vadd.f32 0.0, %v3026
    %3028 = vmatprep.mubr.f32.mxu0 0.0
    %3029 = vmatmul.mubr.f32.gmra.mrb[0].mxu0 %v2183
    %v3030 = vpop.f32.mrb[0].mxu0
    %v3031 = vadd.f32 0.0, %v3030
    %v3032 = vpop.f32.mrb[0].mxu0
    %v3033 = vadd.f32 0.0, %v3032
    %3034 = vmatprep.mubr.f32.mxu0 0.0
    %3035 = vmatmul.mubr.f32.gmra.mrb[0].mxu0 %v2186
    %v3036 = vpop.f32.mrb[0].mxu0
    %v3037 = vadd.f32 0.0, %v3036
    %v3038 = vpop.f32.mrb[0].mxu0
    %v3039 = vadd.f32 0.0, %v3038
    %3040 = vmatprep.mubr.f32.mxu0 0.0
    %3041 = vmatmul.mubr.f32.gmra.mrb[0].mxu0 %v2189
    %v3042 = vpop.f32.mrb[0].mxu0
    %v3043 = vadd.f32 0.0, %v3042
    %v3044 = vpop.f32.mrb[0].mxu0
    %v3045 = vadd.f32 0.0, %v3044
    %3046 = vmatprep.mubr.f32.mxu0 0.0
    %3047 = vmatmul.mubr.f32.gmra.mrb[0].mxu0 %v2192
    %v3048 = vpop.f32.mrb[0].mxu0
    %v3049 = vadd.f32 0.0, %v3048
    %v3050 = vpop.f32.mrb[0].mxu0
    %v3051 = vadd.f32 0.0, %v3050
    %3052 = vmatprep.mubr.f32.mxu0 0.0
    %3053 = vmatmul.mubr.f32.gmra.mrb[0].mxu0 %v2195
    %v3054 = vpop.f32.mrb[0].mxu0
    %v3055 = vadd.f32 0.0, %v3054
    %v3056 = vpop.f32.mrb[0].mxu0
    %v3057 = vadd.f32 0.0, %v3056
    %3058 = vmatprep.mubr.f32.mxu0 0.0
    %3059 = vmatmul.mubr.f32.gmra.mrb[0].mxu0 %v2198
    %v3060 = vpop.f32.mrb[0].mxu0
    %v3061 = vadd.f32 0.0, %v3060
    %v3062 = vpop.f32.mrb[0].mxu0
    %v3063 = vadd.f32 0.0, %v3062
    %3064 = vdwg.mxu0
    %3065 = vmatprep.subr.mxu0 %v2063
    %3066 = vmatpush1.msra.mxu0 %v2062
    %3067 = vmatprep.subr.mxu0 %v2088
    %3068 = vmatpush1.msra.mxu0 %v2087
    %3069 = vmatprep.subr.mxu0 %v2113
    %3070 = vmatpush1.msra.mxu0 %v2112
    %3071 = vmatprep.subr.mxu0 0.0
    %3072 = vmatpush1.msra.mxu0 0.0
    %3073 = vmatprep.subr.mxu0 0.0
    %3074 = vmatpush1.msra.mxu0 0.0
    %3075 = vmatprep.subr.mxu0 0.0
    %3076 = vmatpush1.msra.mxu0 0.0
    %3077 = vmatprep.subr.mxu0 0.0
    %3078 = vmatpush1.msra.mxu0 0.0
    %3079 = vmatprep.subr.mxu0 0.0
    %3080 = vmatpush1.msra.mxu0 0.0
    %3081 = vmatprep.subr.mxu0 0.0
    %3082 = vmatpush1.msra.mxu0 0.0
    %3083 = vmatprep.subr.mxu0 0.0
    %3084 = vmatpush1.msra.mxu0 0.0
    %3085 = vmatprep.subr.mxu0 0.0
    %3086 = vmatpush1.msra.mxu0 0.0
    %3087 = vmatprep.subr.mxu0 0.0
    %3088 = vmatpush1.msra.mxu0 0.0
    %3089 = vmatprep.subr.mxu0 0.0
    %3090 = vmatpush1.msra.mxu0 0.0
    %3091 = vmatprep.subr.mxu0 0.0
    %3092 = vmatpush1.msra.mxu0 0.0
    %3093 = vmatprep.subr.mxu0 0.0
    %3094 = vmatpush1.msra.mxu0 0.0
    %3095 = vmatprep.subr.mxu0 0.0
    %3096 = vmatpush1.msra.mxu0 0.0
    %3097 = vmatprep.subr.mxu0 0.0
    %3098 = vmatpush1.msra.mxu0 0.0
    %3099 = vmatprep.subr.mxu0 0.0
    %3100 = vmatpush1.msra.mxu0 0.0
    %3101 = vmatprep.subr.mxu0 0.0
    %3102 = vmatpush1.msra.mxu0 0.0
    %3103 = vmatprep.subr.mxu0 0.0
    %3104 = vmatpush1.msra.mxu0 0.0
    %3105 = vmatprep.subr.mxu0 0.0
    %3106 = vmatpush1.msra.mxu0 0.0
    %3107 = vmatprep.subr.mxu0 0.0
    %3108 = vmatpush1.msra.mxu0 0.0
    %3109 = vmatprep.subr.mxu0 0.0
    %3110 = vmatpush1.msra.mxu0 0.0
    %3111 = vmatprep.subr.mxu0 0.0
    %3112 = vmatpush1.msra.mxu0 0.0
    %3113 = vmatprep.subr.mxu0 0.0
    %3114 = vmatpush1.msra.mxu0 0.0
    %3115 = vmatprep.subr.mxu0 0.0
    %3116 = vmatpush1.msra.mxu0 0.0
    %3117 = vmatprep.subr.mxu0 0.0
    %3118 = vmatpush1.msra.mxu0 0.0
    %3119 = vmatprep.subr.mxu0 0.0
    %3120 = vmatpush1.msra.mxu0 0.0
    %3121 = vmatprep.subr.mxu0 0.0
    %3122 = vmatpush1.msra.mxu0 0.0
    %3123 = vmatprep.subr.mxu0 0.0
    %3124 = vmatpush1.msra.mxu0 0.0
    %3125 = vmatprep.subr.mxu0 0.0
    %3126 = vmatpush1.msra.mxu0 0.0
    %3127 = vmatprep.subr.mxu0 0.0
    %3128 = vmatpush1.msra.mxu0 0.0
    %3129 = vmatprep.mubr.f32.mxu0 0.0
    %3130 = vmatmul.mubr.f32.gmra.mrb[0].mxu0 %v2147
    %v3131 = vpop.f32.mrb[0].mxu0
    %v3132 = vadd.f32 0.0, %v3131
    %v3133 = vpop.f32.mrb[0].mxu0
    %v3134 = vadd.f32 0.0, %v3133
    %3135 = vmatprep.mubr.f32.mxu0 0.0
    %3136 = vmatmul.mubr.f32.gmra.mrb[0].mxu0 %v2150
    %v3137 = vpop.f32.mrb[0].mxu0
    %v3138 = vadd.f32 0.0, %v3137
    %v3139 = vpop.f32.mrb[0].mxu0
    %v3140 = vadd.f32 0.0, %v3139
    %3141 = vmatprep.mubr.f32.mxu0 0.0
    %3142 = vmatmul.mubr.f32.gmra.mrb[0].mxu0 %v2153
    %v3143 = vpop.f32.mrb[0].mxu0
    %v3144 = vadd.f32 0.0, %v3143
    %v3145 = vpop.f32.mrb[0].mxu0
    %v3146 = vadd.f32 0.0, %v3145
    %3147 = vmatprep.mubr.f32.mxu0 0.0
    %3148 = vmatmul.mubr.f32.gmra.mrb[0].mxu0 %v2156
    %v3149 = vpop.f32.mrb[0].mxu0
    %v3150 = vadd.f32 0.0, %v3149
    %v3151 = vpop.f32.mrb[0].mxu0
    %v3152 = vadd.f32 0.0, %v3151
    %3153 = vmatprep.mubr.f32.mxu0 0.0
    %3154 = vmatmul.mubr.f32.gmra.mrb[0].mxu0 %v2159
    %v3155 = vpop.f32.mrb[0].mxu0
    %v3156 = vadd.f32 0.0, %v3155
    %v3157 = vpop.f32.mrb[0].mxu0
    %v3158 = vadd.f32 0.0, %v3157
    %3159 = vmatprep.mubr.f32.mxu0 0.0
    %3160 = vmatmul.mubr.f32.gmra.mrb[0].mxu0 %v2162
    %v3161 = vpop.f32.mrb[0].mxu0
    %v3162 = vadd.f32 0.0, %v3161
    %v3163 = vpop.f32.mrb[0].mxu0
    %v3164 = vadd.f32 0.0, %v3163
    %3165 = vmatprep.mubr.f32.mxu0 0.0
    %3166 = vmatmul.mubr.f32.gmra.mrb[0].mxu0 %v2165
    %v3167 = vpop.f32.mrb[0].mxu0
    %v3168 = vadd.f32 0.0, %v3167
    %v3169 = vpop.f32.mrb[0].mxu0
    %v3170 = vadd.f32 0.0, %v3169
    %3171 = vmatprep.mubr.f32.mxu0 0.0
    %3172 = vmatmul.mubr.f32.gmra.mrb[0].mxu0 %v2168
    %v3173 = vpop.f32.mrb[0].mxu0
    %v3174 = vadd.f32 0.0, %v3173
    %v3175 = vpop.f32.mrb[0].mxu0
    %v3176 = vadd.f32 0.0, %v3175
    %3177 = vmatprep.mubr.f32.mxu0 0.0
    %3178 = vmatmul.mubr.f32.gmra.mrb[0].mxu0 %v2171
    %v3179 = vpop.f32.mrb[0].mxu0
    %v3180 = vadd.f32 0.0, %v3179
    %v3181 = vpop.f32.mrb[0].mxu0
    %v3182 = vadd.f32 0.0, %v3181
    %3183 = vmatprep.mubr.f32.mxu0 0.0
    %3184 = vmatmul.mubr.f32.gmra.mrb[0].mxu0 %v2174
    %v3185 = vpop.f32.mrb[0].mxu0
    %v3186 = vadd.f32 0.0, %v3185
    %v3187 = vpop.f32.mrb[0].mxu0
    %v3188 = vadd.f32 0.0, %v3187
    %3189 = vmatprep.mubr.f32.mxu0 0.0
    %3190 = vmatmul.mubr.f32.gmra.mrb[0].mxu0 %v2177
    %v3191 = vpop.f32.mrb[0].mxu0
    %v3192 = vadd.f32 0.0, %v3191
    %v3193 = vpop.f32.mrb[0].mxu0
    %v3194 = vadd.f32 0.0, %v3193
    %3195 = vmatprep.mubr.f32.mxu0 0.0
    %3196 = vmatmul.mubr.f32.gmra.mrb[0].mxu0 %v2180
    %v3197 = vpop.f32.mrb[0].mxu0
    %v3198 = vadd.f32 0.0, %v3197
    %v3199 = vpop.f32.mrb[0].mxu0
    %v3200 = vadd.f32 0.0, %v3199
    %3201 = vmatprep.mubr.f32.mxu0 0.0
    %3202 = vmatmul.mubr.f32.gmra.mrb[0].mxu0 %v2183
    %v3203 = vpop.f32.mrb[0].mxu0
    %v3204 = vadd.f32 0.0, %v3203
    %v3205 = vpop.f32.mrb[0].mxu0
    %v3206 = vadd.f32 0.0, %v3205
    %3207 = vmatprep.mubr.f32.mxu0 0.0
    %3208 = vmatmul.mubr.f32.gmra.mrb[0].mxu0 %v2186
    %v3209 = vpop.f32.mrb[0].mxu0
    %v3210 = vadd.f32 0.0, %v3209
    %v3211 = vpop.f32.mrb[0].mxu0
    %v3212 = vadd.f32 0.0, %v3211
    %3213 = vmatprep.mubr.f32.mxu0 0.0
    %3214 = vmatmul.mubr.f32.gmra.mrb[0].mxu0 %v2189
    %v3215 = vpop.f32.mrb[0].mxu0
    %v3216 = vadd.f32 0.0, %v3215
    %v3217 = vpop.f32.mrb[0].mxu0
    %v3218 = vadd.f32 0.0, %v3217
    %3219 = vmatprep.mubr.f32.mxu0 0.0
    %3220 = vmatmul.mubr.f32.gmra.mrb[0].mxu0 %v2192
    %v3221 = vpop.f32.mrb[0].mxu0
    %v3222 = vadd.f32 0.0, %v3221
    %v3223 = vpop.f32.mrb[0].mxu0
    %v3224 = vadd.f32 0.0, %v3223
    %3225 = vmatprep.mubr.f32.mxu0 0.0
    %3226 = vmatmul.mubr.f32.gmra.mrb[0].mxu0 %v2195
    %v3227 = vpop.f32.mrb[0].mxu0
    %v3228 = vadd.f32 0.0, %v3227
    %v3229 = vpop.f32.mrb[0].mxu0
    %v3230 = vadd.f32 0.0, %v3229
    %3231 = vmatprep.mubr.f32.mxu0 0.0
    %3232 = vmatmul.mubr.f32.gmra.mrb[0].mxu0 %v2198
    %v3233 = vpop.f32.mrb[0].mxu0
    %v3234 = vadd.f32 0.0, %v3233
    %v3235 = vpop.f32.mrb[0].mxu0
    %v3236 = vadd.f32 0.0, %v3235
    %3237 = vdwg.mxu0
    %3238 = vmatprep.subr.mxu0 %v2065
    %3239 = vmatpush1.msra.mxu0 %v2064
    %3240 = vmatprep.subr.mxu0 %v2090
    %3241 = vmatpush1.msra.mxu0 %v2089
    %3242 = vmatprep.subr.mxu0 %v2115
    %3243 = vmatpush1.msra.mxu0 %v2114
    %3244 = vmatprep.subr.mxu0 0.0
    %3245 = vmatpush1.msra.mxu0 0.0
    %3246 = vmatprep.subr.mxu0 0.0
    %3247 = vmatpush1.msra.mxu0 0.0
    %3248 = vmatprep.subr.mxu0 0.0
    %3249 = vmatpush1.msra.mxu0 0.0
    %3250 = vmatprep.subr.mxu0 0.0
    %3251 = vmatpush1.msra.mxu0 0.0
    %3252 = vmatprep.subr.mxu0 0.0
    %3253 = vmatpush1.msra.mxu0 0.0
    %3254 = vmatprep.subr.mxu0 0.0
    %3255 = vmatpush1.msra.mxu0 0.0
    %3256 = vmatprep.subr.mxu0 0.0
    %3257 = vmatpush1.msra.mxu0 0.0
    %3258 = vmatprep.subr.mxu0 0.0
    %3259 = vmatpush1.msra.mxu0 0.0
    %3260 = vmatprep.subr.mxu0 0.0
    %3261 = vmatpush1.msra.mxu0 0.0
    %3262 = vmatprep.subr.mxu0 0.0
    %3263 = vmatpush1.msra.mxu0 0.0
    %3264 = vmatprep.subr.mxu0 0.0
    %3265 = vmatpush1.msra.mxu0 0.0
    %3266 = vmatprep.subr.mxu0 0.0
    %3267 = vmatpush1.msra.mxu0 0.0
    %3268 = vmatprep.subr.mxu0 0.0
    %3269 = vmatpush1.msra.mxu0 0.0
    %3270 = vmatprep.subr.mxu0 0.0
    %3271 = vmatpush1.msra.mxu0 0.0
    %3272 = vmatprep.subr.mxu0 0.0
    %3273 = vmatpush1.msra.mxu0 0.0
    %3274 = vmatprep.subr.mxu0 0.0
    %3275 = vmatpush1.msra.mxu0 0.0
    %3276 = vmatprep.subr.mxu0 0.0
    %3277 = vmatpush1.msra.mxu0 0.0
    %3278 = vmatprep.subr.mxu0 0.0
    %3279 = vmatpush1.msra.mxu0 0.0
    %3280 = vmatprep.subr.mxu0 0.0
    %3281 = vmatpush1.msra.mxu0 0.0
    %3282 = vmatprep.subr.mxu0 0.0
    %3283 = vmatpush1.msra.mxu0 0.0
    %3284 = vmatprep.subr.mxu0 0.0
    %3285 = vmatpush1.msra.mxu0 0.0
    %3286 = vmatprep.subr.mxu0 0.0
    %3287 = vmatpush1.msra.mxu0 0.0
    %3288 = vmatprep.subr.mxu0 0.0
    %3289 = vmatpush1.msra.mxu0 0.0
    %3290 = vmatprep.subr.mxu0 0.0
    %3291 = vmatpush1.msra.mxu0 0.0
    %3292 = vmatprep.subr.mxu0 0.0
    %3293 = vmatpush1.msra.mxu0 0.0
    %3294 = vmatprep.subr.mxu0 0.0
    %3295 = vmatpush1.msra.mxu0 0.0
    %3296 = vmatprep.subr.mxu0 0.0
    %3297 = vmatpush1.msra.mxu0 0.0
    %3298 = vmatprep.subr.mxu0 0.0
    %3299 = vmatpush1.msra.mxu0 0.0
    %3300 = vmatprep.subr.mxu0 0.0
    %3301 = vmatpush1.msra.mxu0 0.0
    %3302 = vmatprep.mubr.f32.mxu0 0.0
    %3303 = vmatmul.mubr.f32.gmra.mrb[0].mxu0 %v2147
    %v3304 = vpop.f32.mrb[0].mxu0
    %v3305 = vadd.f32 0.0, %v3304
    %v3306 = vpop.f32.mrb[0].mxu0
    %v3307 = vadd.f32 0.0, %v3306
    %3308 = vmatprep.mubr.f32.mxu0 0.0
    %3309 = vmatmul.mubr.f32.gmra.mrb[0].mxu0 %v2150
    %v3310 = vpop.f32.mrb[0].mxu0
    %v3311 = vadd.f32 0.0, %v3310
    %v3312 = vpop.f32.mrb[0].mxu0
    %v3313 = vadd.f32 0.0, %v3312
    %3314 = vmatprep.mubr.f32.mxu0 0.0
    %3315 = vmatmul.mubr.f32.gmra.mrb[0].mxu0 %v2153
    %v3316 = vpop.f32.mrb[0].mxu0
    %v3317 = vadd.f32 0.0, %v3316
    %v3318 = vpop.f32.mrb[0].mxu0
    %v3319 = vadd.f32 0.0, %v3318
    %3320 = vmatprep.mubr.f32.mxu0 0.0
    %3321 = vmatmul.mubr.f32.gmra.mrb[0].mxu0 %v2156
    %v3322 = vpop.f32.mrb[0].mxu0
    %v3323 = vadd.f32 0.0, %v3322
    %v3324 = vpop.f32.mrb[0].mxu0
    %v3325 = vadd.f32 0.0, %v3324
    %3326 = vmatprep.mubr.f32.mxu0 0.0
    %3327 = vmatmul.mubr.f32.gmra.mrb[0].mxu0 %v2159
    %v3328 = vpop.f32.mrb[0].mxu0
    %v3329 = vadd.f32 0.0, %v3328
    %v3330 = vpop.f32.mrb[0].mxu0
    %v3331 = vadd.f32 0.0, %v3330
    %3332 = vmatprep.mubr.f32.mxu0 0.0
    %3333 = vmatmul.mubr.f32.gmra.mrb[0].mxu0 %v2162
    %v3334 = vpop.f32.mrb[0].mxu0
    %v3335 = vadd.f32 0.0, %v3334
    %v3336 = vpop.f32.mrb[0].mxu0
    %v3337 = vadd.f32 0.0, %v3336
    %3338 = vmatprep.mubr.f32.mxu0 0.0
    %3339 = vmatmul.mubr.f32.gmra.mrb[0].mxu0 %v2165
    %v3340 = vpop.f32.mrb[0].mxu0
    %v3341 = vadd.f32 0.0, %v3340
    %v3342 = vpop.f32.mrb[0].mxu0
    %v3343 = vadd.f32 0.0, %v3342
    %3344 = vmatprep.mubr.f32.mxu0 0.0
    %3345 = vmatmul.mubr.f32.gmra.mrb[0].mxu0 %v2168
    %v3346 = vpop.f32.mrb[0].mxu0
    %v3347 = vadd.f32 0.0, %v3346
    %v3348 = vpop.f32.mrb[0].mxu0
    %v3349 = vadd.f32 0.0, %v3348
    %3350 = vmatprep.mubr.f32.mxu0 0.0
    %3351 = vmatmul.mubr.f32.gmra.mrb[0].mxu0 %v2171
    %v3352 = vpop.f32.mrb[0].mxu0
    %v3353 = vadd.f32 0.0, %v3352
    %v3354 = vpop.f32.mrb[0].mxu0
    %v3355 = vadd.f32 0.0, %v3354
    %3356 = vmatprep.mubr.f32.mxu0 0.0
    %3357 = vmatmul.mubr.f32.gmra.mrb[0].mxu0 %v2174
    %v3358 = vpop.f32.mrb[0].mxu0
    %v3359 = vadd.f32 0.0, %v3358
    %v3360 = vpop.f32.mrb[0].mxu0
    %v3361 = vadd.f32 0.0, %v3360
    %3362 = vmatprep.mubr.f32.mxu0 0.0
    %3363 = vmatmul.mubr.f32.gmra.mrb[0].mxu0 %v2177
    %v3364 = vpop.f32.mrb[0].mxu0
    %v3365 = vadd.f32 0.0, %v3364
    %v3366 = vpop.f32.mrb[0].mxu0
    %v3367 = vadd.f32 0.0, %v3366
    %3368 = vmatprep.mubr.f32.mxu0 0.0
    %3369 = vmatmul.mubr.f32.gmra.mrb[0].mxu0 %v2180
    %v3370 = vpop.f32.mrb[0].mxu0
    %v3371 = vadd.f32 0.0, %v3370
    %v3372 = vpop.f32.mrb[0].mxu0
    %v3373 = vadd.f32 0.0, %v3372
    %3374 = vmatprep.mubr.f32.mxu0 0.0
    %3375 = vmatmul.mubr.f32.gmra.mrb[0].mxu0 %v2183
    %v3376 = vpop.f32.mrb[0].mxu0
    %v3377 = vadd.f32 0.0, %v3376
    %v3378 = vpop.f32.mrb[0].mxu0
    %v3379 = vadd.f32 0.0, %v3378
    %3380 = vmatprep.mubr.f32.mxu0 0.0
    %3381 = vmatmul.mubr.f32.gmra.mrb[0].mxu0 %v2186
    %v3382 = vpop.f32.mrb[0].mxu0
    %v3383 = vadd.f32 0.0, %v3382
    %v3384 = vpop.f32.mrb[0].mxu0
    %v3385 = vadd.f32 0.0, %v3384
    %3386 = vmatprep.mubr.f32.mxu0 0.0
    %3387 = vmatmul.mubr.f32.gmra.mrb[0].mxu0 %v2189
    %v3388 = vpop.f32.mrb[0].mxu0
    %v3389 = vadd.f32 0.0, %v3388
    %v3390 = vpop.f32.mrb[0].mxu0
    %v3391 = vadd.f32 0.0, %v3390
    %3392 = vmatprep.mubr.f32.mxu0 0.0
    %3393 = vmatmul.mubr.f32.gmra.mrb[0].mxu0 %v2192
    %v3394 = vpop.f32.mrb[0].mxu0
    %v3395 = vadd.f32 0.0, %v3394
    %v3396 = vpop.f32.mrb[0].mxu0
    %v3397 = vadd.f32 0.0, %v3396
    %3398 = vmatprep.mubr.f32.mxu0 0.0
    %3399 = vmatmul.mubr.f32.gmra.mrb[0].mxu0 %v2195
    %v3400 = vpop.f32.mrb[0].mxu0
    %v3401 = vadd.f32 0.0, %v3400
    %v3402 = vpop.f32.mrb[0].mxu0
    %v3403 = vadd.f32 0.0, %v3402
    %3404 = vmatprep.mubr.f32.mxu0 0.0
    %3405 = vmatmul.mubr.f32.gmra.mrb[0].mxu0 %v2198
    %v3406 = vpop.f32.mrb[0].mxu0
    %v3407 = vadd.f32 0.0, %v3406
    %v3408 = vpop.f32.mrb[0].mxu0
    %v3409 = vadd.f32 0.0, %v3408
    %3410 = vdwg.mxu0
    %3411 = vmatprep.subr.mxu0 %v2067
    %3412 = vmatpush1.msra.mxu0 %v2066
    %3413 = vmatprep.subr.mxu0 %v2092
    %3414 = vmatpush1.msra.mxu0 %v2091
    %3415 = vmatprep.subr.mxu0 %v2117
    %3416 = vmatpush1.msra.mxu0 %v2116
    %3417 = vmatprep.subr.mxu0 0.0
    %3418 = vmatpush1.msra.mxu0 0.0
    %3419 = vmatprep.subr.mxu0 0.0
    %3420 = vmatpush1.msra.mxu0 0.0
    %3421 = vmatprep.subr.mxu0 0.0
    %3422 = vmatpush1.msra.mxu0 0.0
    %3423 = vmatprep.subr.mxu0 0.0
    %3424 = vmatpush1.msra.mxu0 0.0
    %3425 = vmatprep.subr.mxu0 0.0
    %3426 = vmatpush1.msra.mxu0 0.0
    %3427 = vmatprep.subr.mxu0 0.0
    %3428 = vmatpush1.msra.mxu0 0.0
    %3429 = vmatprep.subr.mxu0 0.0
    %3430 = vmatpush1.msra.mxu0 0.0
    %3431 = vmatprep.subr.mxu0 0.0
    %3432 = vmatpush1.msra.mxu0 0.0
    %3433 = vmatprep.subr.mxu0 0.0
    %3434 = vmatpush1.msra.mxu0 0.0
    %3435 = vmatprep.subr.mxu0 0.0
    %3436 = vmatpush1.msra.mxu0 0.0
    %3437 = vmatprep.subr.mxu0 0.0
    %3438 = vmatpush1.msra.mxu0 0.0
    %3439 = vmatprep.subr.mxu0 0.0
    %3440 = vmatpush1.msra.mxu0 0.0
    %3441 = vmatprep.subr.mxu0 0.0
    %3442 = vmatpush1.msra.mxu0 0.0
    %3443 = vmatprep.subr.mxu0 0.0
    %3444 = vmatpush1.msra.mxu0 0.0
    %3445 = vmatprep.subr.mxu0 0.0
    %3446 = vmatpush1.msra.mxu0 0.0
    %3447 = vmatprep.subr.mxu0 0.0
    %3448 = vmatpush1.msra.mxu0 0.0
    %3449 = vmatprep.subr.mxu0 0.0
    %3450 = vmatpush1.msra.mxu0 0.0
    %3451 = vmatprep.subr.mxu0 0.0
    %3452 = vmatpush1.msra.mxu0 0.0
    %3453 = vmatprep.subr.mxu0 0.0
    %3454 = vmatpush1.msra.mxu0 0.0
    %3455 = vmatprep.subr.mxu0 0.0
    %3456 = vmatpush1.msra.mxu0 0.0
    %3457 = vmatprep.subr.mxu0 0.0
    %3458 = vmatpush1.msra.mxu0 0.0
    %3459 = vmatprep.subr.mxu0 0.0
    %3460 = vmatpush1.msra.mxu0 0.0
    %3461 = vmatprep.subr.mxu0 0.0
    %3462 = vmatpush1.msra.mxu0 0.0
    %3463 = vmatprep.subr.mxu0 0.0
    %3464 = vmatpush1.msra.mxu0 0.0
    %3465 = vmatprep.subr.mxu0 0.0
    %3466 = vmatpush1.msra.mxu0 0.0
    %3467 = vmatprep.subr.mxu0 0.0
    %3468 = vmatpush1.msra.mxu0 0.0
    %3469 = vmatprep.subr.mxu0 0.0
    %3470 = vmatpush1.msra.mxu0 0.0
    %3471 = vmatprep.subr.mxu0 0.0
    %3472 = vmatpush1.msra.mxu0 0.0
    %3473 = vmatprep.subr.mxu0 0.0
    %3474 = vmatpush1.msra.mxu0 0.0
    %3475 = vmatprep.mubr.f32.mxu0 0.0
    %3476 = vmatmul.mubr.f32.gmra.mrb[0].mxu0 %v2147
    %v3477 = vpop.f32.mrb[0].mxu0
    %v3478 = vadd.f32 0.0, %v3477
    %v3479 = vpop.f32.mrb[0].mxu0
    %v3480 = vadd.f32 0.0, %v3479
    %3481 = vmatprep.mubr.f32.mxu0 0.0
    %3482 = vmatmul.mubr.f32.gmra.mrb[0].mxu0 %v2150
    %v3483 = vpop.f32.mrb[0].mxu0
    %v3484 = vadd.f32 0.0, %v3483
    %v3485 = vpop.f32.mrb[0].mxu0
    %v3486 = vadd.f32 0.0, %v3485
    %3487 = vmatprep.mubr.f32.mxu0 0.0
    %3488 = vmatmul.mubr.f32.gmra.mrb[0].mxu0 %v2153
    %v3489 = vpop.f32.mrb[0].mxu0
    %v3490 = vadd.f32 0.0, %v3489
    %v3491 = vpop.f32.mrb[0].mxu0
    %v3492 = vadd.f32 0.0, %v3491
    %3493 = vmatprep.mubr.f32.mxu0 0.0
    %3494 = vmatmul.mubr.f32.gmra.mrb[0].mxu0 %v2156
    %v3495 = vpop.f32.mrb[0].mxu0
    %v3496 = vadd.f32 0.0, %v3495
    %v3497 = vpop.f32.mrb[0].mxu0
    %v3498 = vadd.f32 0.0, %v3497
    %3499 = vmatprep.mubr.f32.mxu0 0.0
    %3500 = vmatmul.mubr.f32.gmra.mrb[0].mxu0 %v2159
    %v3501 = vpop.f32.mrb[0].mxu0
    %v3502 = vadd.f32 0.0, %v3501
    %v3503 = vpop.f32.mrb[0].mxu0
    %v3504 = vadd.f32 0.0, %v3503
    %3505 = vmatprep.mubr.f32.mxu0 0.0
    %3506 = vmatmul.mubr.f32.gmra.mrb[0].mxu0 %v2162
    %v3507 = vpop.f32.mrb[0].mxu0
    %v3508 = vadd.f32 0.0, %v3507
    %v3509 = vpop.f32.mrb[0].mxu0
    %v3510 = vadd.f32 0.0, %v3509
    %3511 = vmatprep.mubr.f32.mxu0 0.0
    %3512 = vmatmul.mubr.f32.gmra.mrb[0].mxu0 %v2165
    %v3513 = vpop.f32.mrb[0].mxu0
    %v3514 = vadd.f32 0.0, %v3513
    %v3515 = vpop.f32.mrb[0].mxu0
    %v3516 = vadd.f32 0.0, %v3515
    %3517 = vmatprep.mubr.f32.mxu0 0.0
    %3518 = vmatmul.mubr.f32.gmra.mrb[0].mxu0 %v2168
    %v3519 = vpop.f32.mrb[0].mxu0
    %v3520 = vadd.f32 0.0, %v3519
    %v3521 = vpop.f32.mrb[0].mxu0
    %v3522 = vadd.f32 0.0, %v3521
    %3523 = vmatprep.mubr.f32.mxu0 0.0
    %3524 = vmatmul.mubr.f32.gmra.mrb[0].mxu0 %v2171
    %v3525 = vpop.f32.mrb[0].mxu0
    %v3526 = vadd.f32 0.0, %v3525
    %v3527 = vpop.f32.mrb[0].mxu0
    %v3528 = vadd.f32 0.0, %v3527
    %3529 = vmatprep.mubr.f32.mxu0 0.0
    %3530 = vmatmul.mubr.f32.gmra.mrb[0].mxu0 %v2174
    %v3531 = vpop.f32.mrb[0].mxu0
    %v3532 = vadd.f32 0.0, %v3531
    %v3533 = vpop.f32.mrb[0].mxu0
    %v3534 = vadd.f32 0.0, %v3533
    %3535 = vmatprep.mubr.f32.mxu0 0.0
    %3536 = vmatmul.mubr.f32.gmra.mrb[0].mxu0 %v2177
    %v3537 = vpop.f32.mrb[0].mxu0
    %v3538 = vadd.f32 0.0, %v3537
    %v3539 = vpop.f32.mrb[0].mxu0
    %v3540 = vadd.f32 0.0, %v3539
    %3541 = vmatprep.mubr.f32.mxu0 0.0
    %3542 = vmatmul.mubr.f32.gmra.mrb[0].mxu0 %v2180
    %v3543 = vpop.f32.mrb[0].mxu0
    %v3544 = vadd.f32 0.0, %v3543
    %v3545 = vpop.f32.mrb[0].mxu0
    %v3546 = vadd.f32 0.0, %v3545
    %3547 = vmatprep.mubr.f32.mxu0 0.0
    %3548 = vmatmul.mubr.f32.gmra.mrb[0].mxu0 %v2183
    %v3549 = vpop.f32.mrb[0].mxu0
    %v3550 = vadd.f32 0.0, %v3549
    %v3551 = vpop.f32.mrb[0].mxu0
    %v3552 = vadd.f32 0.0, %v3551
    %3553 = vmatprep.mubr.f32.mxu0 0.0
    %3554 = vmatmul.mubr.f32.gmra.mrb[0].mxu0 %v2186
    %v3555 = vpop.f32.mrb[0].mxu0
    %v3556 = vadd.f32 0.0, %v3555
    %v3557 = vpop.f32.mrb[0].mxu0
    %v3558 = vadd.f32 0.0, %v3557
    %3559 = vmatprep.mubr.f32.mxu0 0.0
    %3560 = vmatmul.mubr.f32.gmra.mrb[0].mxu0 %v2189
    %v3561 = vpop.f32.mrb[0].mxu0
    %v3562 = vadd.f32 0.0, %v3561
    %v3563 = vpop.f32.mrb[0].mxu0
    %v3564 = vadd.f32 0.0, %v3563
    %3565 = vmatprep.mubr.f32.mxu0 0.0
    %3566 = vmatmul.mubr.f32.gmra.mrb[0].mxu0 %v2192
    %v3567 = vpop.f32.mrb[0].mxu0
    %v3568 = vadd.f32 0.0, %v3567
    %v3569 = vpop.f32.mrb[0].mxu0
    %v3570 = vadd.f32 0.0, %v3569
    %3571 = vmatprep.mubr.f32.mxu0 0.0
    %3572 = vmatmul.mubr.f32.gmra.mrb[0].mxu0 %v2195
    %v3573 = vpop.f32.mrb[0].mxu0
    %v3574 = vadd.f32 0.0, %v3573
    %v3575 = vpop.f32.mrb[0].mxu0
    %v3576 = vadd.f32 0.0, %v3575
    %3577 = vmatprep.mubr.f32.mxu0 0.0
    %3578 = vmatmul.mubr.f32.gmra.mrb[0].mxu0 %v2198
    %v3579 = vpop.f32.mrb[0].mxu0
    %v3580 = vadd.f32 0.0, %v3579
    %v3581 = vpop.f32.mrb[0].mxu0
    %v3582 = vadd.f32 0.0, %v3581
    %3583 = vdwg.mxu0
    %3584 = vmatprep.subr.mxu0 %v2069
    %3585 = vmatpush1.msra.mxu0 %v2068
    %3586 = vmatprep.subr.mxu0 %v2094
    %3587 = vmatpush1.msra.mxu0 %v2093
    %3588 = vmatprep.subr.mxu0 %v2119
    %3589 = vmatpush1.msra.mxu0 %v2118
    %3590 = vmatprep.subr.mxu0 0.0
    %3591 = vmatpush1.msra.mxu0 0.0
    %3592 = vmatprep.subr.mxu0 0.0
    %3593 = vmatpush1.msra.mxu0 0.0
    %3594 = vmatprep.subr.mxu0 0.0
    %3595 = vmatpush1.msra.mxu0 0.0
    %3596 = vmatprep.subr.mxu0 0.0
    %3597 = vmatpush1.msra.mxu0 0.0
    %3598 = vmatprep.subr.mxu0 0.0
    %3599 = vmatpush1.msra.mxu0 0.0
    %3600 = vmatprep.subr.mxu0 0.0
    %3601 = vmatpush1.msra.mxu0 0.0
    %3602 = vmatprep.subr.mxu0 0.0
    %3603 = vmatpush1.msra.mxu0 0.0
    %3604 = vmatprep.subr.mxu0 0.0
    %3605 = vmatpush1.msra.mxu0 0.0
    %3606 = vmatprep.subr.mxu0 0.0
    %3607 = vmatpush1.msra.mxu0 0.0
    %3608 = vmatprep.subr.mxu0 0.0
    %3609 = vmatpush1.msra.mxu0 0.0
    %3610 = vmatprep.subr.mxu0 0.0
    %3611 = vmatpush1.msra.mxu0 0.0
    %3612 = vmatprep.subr.mxu0 0.0
    %3613 = vmatpush1.msra.mxu0 0.0
    %3614 = vmatprep.subr.mxu0 0.0
    %3615 = vmatpush1.msra.mxu0 0.0
    %3616 = vmatprep.subr.mxu0 0.0
    %3617 = vmatpush1.msra.mxu0 0.0
    %3618 = vmatprep.subr.mxu0 0.0
    %3619 = vmatpush1.msra.mxu0 0.0
    %3620 = vmatprep.subr.mxu0 0.0
    %3621 = vmatpush1.msra.mxu0 0.0
    %3622 = vmatprep.subr.mxu0 0.0
    %3623 = vmatpush1.msra.mxu0 0.0
    %3624 = vmatprep.subr.mxu0 0.0
    %3625 = vmatpush1.msra.mxu0 0.0
    %3626 = vmatprep.subr.mxu0 0.0
    %3627 = vmatpush1.msra.mxu0 0.0
    %3628 = vmatprep.subr.mxu0 0.0
    %3629 = vmatpush1.msra.mxu0 0.0
    %3630 = vmatprep.subr.mxu0 0.0
    %3631 = vmatpush1.msra.mxu0 0.0
    %3632 = vmatprep.subr.mxu0 0.0
    %3633 = vmatpush1.msra.mxu0 0.0
    %3634 = vmatprep.subr.mxu0 0.0
    %3635 = vmatpush1.msra.mxu0 0.0
    %3636 = vmatprep.subr.mxu0 0.0
    %3637 = vmatpush1.msra.mxu0 0.0
    %3638 = vmatprep.subr.mxu0 0.0
    %3639 = vmatpush1.msra.mxu0 0.0
    %3640 = vmatprep.subr.mxu0 0.0
    %3641 = vmatpush1.msra.mxu0 0.0
    %3642 = vmatprep.subr.mxu0 0.0
    %3643 = vmatpush1.msra.mxu0 0.0
    %3644 = vmatprep.subr.mxu0 0.0
    %3645 = vmatpush1.msra.mxu0 0.0
    %3646 = vmatprep.subr.mxu0 0.0
    %3647 = vmatpush1.msra.mxu0 0.0
    %3648 = vmatprep.mubr.f32.mxu0 0.0
    %3649 = vmatmul.mubr.f32.gmra.mrb[0].mxu0 %v2147
    %v3650 = vpop.f32.mrb[0].mxu0
    %v3651 = vadd.f32 0.0, %v3650
    %v3652 = vpop.f32.mrb[0].mxu0
    %v3653 = vadd.f32 0.0, %v3652
    %3654 = vmatprep.mubr.f32.mxu0 0.0
    %3655 = vmatmul.mubr.f32.gmra.mrb[0].mxu0 %v2150
    %v3656 = vpop.f32.mrb[0].mxu0
    %v3657 = vadd.f32 0.0, %v3656
    %v3658 = vpop.f32.mrb[0].mxu0
    %v3659 = vadd.f32 0.0, %v3658
    %3660 = vmatprep.mubr.f32.mxu0 0.0
    %3661 = vmatmul.mubr.f32.gmra.mrb[0].mxu0 %v2153
    %v3662 = vpop.f32.mrb[0].mxu0
    %v3663 = vadd.f32 0.0, %v3662
    %v3664 = vpop.f32.mrb[0].mxu0
    %v3665 = vadd.f32 0.0, %v3664
    %3666 = vmatprep.mubr.f32.mxu0 0.0
    %3667 = vmatmul.mubr.f32.gmra.mrb[0].mxu0 %v2156
    %v3668 = vpop.f32.mrb[0].mxu0
    %v3669 = vadd.f32 0.0, %v3668
    %v3670 = vpop.f32.mrb[0].mxu0
    %v3671 = vadd.f32 0.0, %v3670
    %3672 = vmatprep.mubr.f32.mxu0 0.0
    %3673 = vmatmul.mubr.f32.gmra.mrb[0].mxu0 %v2159
    %v3674 = vpop.f32.mrb[0].mxu0
    %v3675 = vadd.f32 0.0, %v3674
    %v3676 = vpop.f32.mrb[0].mxu0
    %v3677 = vadd.f32 0.0, %v3676
    %3678 = vmatprep.mubr.f32.mxu0 0.0
    %3679 = vmatmul.mubr.f32.gmra.mrb[0].mxu0 %v2162
    %v3680 = vpop.f32.mrb[0].mxu0
    %v3681 = vadd.f32 0.0, %v3680
    %v3682 = vpop.f32.mrb[0].mxu0
    %v3683 = vadd.f32 0.0, %v3682
    %3684 = vmatprep.mubr.f32.mxu0 0.0
    %3685 = vmatmul.mubr.f32.gmra.mrb[0].mxu0 %v2165
    %v3686 = vpop.f32.mrb[0].mxu0
    %v3687 = vadd.f32 0.0, %v3686
    %v3688 = vpop.f32.mrb[0].mxu0
    %v3689 = vadd.f32 0.0, %v3688
    %3690 = vmatprep.mubr.f32.mxu0 0.0
    %3691 = vmatmul.mubr.f32.gmra.mrb[0].mxu0 %v2168
    %v3692 = vpop.f32.mrb[0].mxu0
    %v3693 = vadd.f32 0.0, %v3692
    %v3694 = vpop.f32.mrb[0].mxu0
    %v3695 = vadd.f32 0.0, %v3694
    %3696 = vmatprep.mubr.f32.mxu0 0.0
    %3697 = vmatmul.mubr.f32.gmra.mrb[0].mxu0 %v2171
    %v3698 = vpop.f32.mrb[0].mxu0
    %v3699 = vadd.f32 0.0, %v3698
    %v3700 = vpop.f32.mrb[0].mxu0
    %v3701 = vadd.f32 0.0, %v3700
    %3702 = vmatprep.mubr.f32.mxu0 0.0
    %3703 = vmatmul.mubr.f32.gmra.mrb[0].mxu0 %v2174
    %v3704 = vpop.f32.mrb[0].mxu0
    %v3705 = vadd.f32 0.0, %v3704
    %v3706 = vpop.f32.mrb[0].mxu0
    %v3707 = vadd.f32 0.0, %v3706
    %3708 = vmatprep.mubr.f32.mxu0 0.0
    %3709 = vmatmul.mubr.f32.gmra.mrb[0].mxu0 %v2177
    %v3710 = vpop.f32.mrb[0].mxu0
    %v3711 = vadd.f32 0.0, %v3710
    %v3712 = vpop.f32.mrb[0].mxu0
    %v3713 = vadd.f32 0.0, %v3712
    %3714 = vmatprep.mubr.f32.mxu0 0.0
    %3715 = vmatmul.mubr.f32.gmra.mrb[0].mxu0 %v2180
    %v3716 = vpop.f32.mrb[0].mxu0
    %v3717 = vadd.f32 0.0, %v3716
    %v3718 = vpop.f32.mrb[0].mxu0
    %v3719 = vadd.f32 0.0, %v3718
    %3720 = vmatprep.mubr.f32.mxu0 0.0
    %3721 = vmatmul.mubr.f32.gmra.mrb[0].mxu0 %v2183
    %v3722 = vpop.f32.mrb[0].mxu0
    %v3723 = vadd.f32 0.0, %v3722
    %v3724 = vpop.f32.mrb[0].mxu0
    %v3725 = vadd.f32 0.0, %v3724
    %3726 = vmatprep.mubr.f32.mxu0 0.0
    %3727 = vmatmul.mubr.f32.gmra.mrb[0].mxu0 %v2186
    %v3728 = vpop.f32.mrb[0].mxu0
    %v3729 = vadd.f32 0.0, %v3728
    %v3730 = vpop.f32.mrb[0].mxu0
    %v3731 = vadd.f32 0.0, %v3730
    %3732 = vmatprep.mubr.f32.mxu0 0.0
    %3733 = vmatmul.mubr.f32.gmra.mrb[0].mxu0 %v2189
    %v3734 = vpop.f32.mrb[0].mxu0
    %v3735 = vadd.f32 0.0, %v3734
    %v3736 = vpop.f32.mrb[0].mxu0
    %v3737 = vadd.f32 0.0, %v3736
    %3738 = vmatprep.mubr.f32.mxu0 0.0
    %3739 = vmatmul.mubr.f32.gmra.mrb[0].mxu0 %v2192
    %v3740 = vpop.f32.mrb[0].mxu0
    %v3741 = vadd.f32 0.0, %v3740
    %v3742 = vpop.f32.mrb[0].mxu0
    %v3743 = vadd.f32 0.0, %v3742
    %3744 = vmatprep.mubr.f32.mxu0 0.0
    %3745 = vmatmul.mubr.f32.gmra.mrb[0].mxu0 %v2195
    %v3746 = vpop.f32.mrb[0].mxu0
    %v3747 = vadd.f32 0.0, %v3746
    %v3748 = vpop.f32.mrb[0].mxu0
    %v3749 = vadd.f32 0.0, %v3748
    %3750 = vmatprep.mubr.f32.mxu0 0.0
    %3751 = vmatmul.mubr.f32.gmra.mrb[0].mxu0 %v2198
    %v3752 = vpop.f32.mrb[0].mxu0
    %v3753 = vadd.f32 0.0, %v3752
    %v3754 = vpop.f32.mrb[0].mxu0
    %v3755 = vadd.f32 0.0, %v3754
    %3756 = vdwg.mxu0
    %3757 = vmatprep.subr.mxu0 %v2071
    %3758 = vmatpush1.msra.mxu0 %v2070
    %3759 = vmatprep.subr.mxu0 %v2096
    %3760 = vmatpush1.msra.mxu0 %v2095
    %3761 = vmatprep.subr.mxu0 %v2121
    %3762 = vmatpush1.msra.mxu0 %v2120
    %3763 = vmatprep.subr.mxu0 0.0
    %3764 = vmatpush1.msra.mxu0 0.0
    %3765 = vmatprep.subr.mxu0 0.0
    %3766 = vmatpush1.msra.mxu0 0.0
    %3767 = vmatprep.subr.mxu0 0.0
    %3768 = vmatpush1.msra.mxu0 0.0
    %3769 = vmatprep.subr.mxu0 0.0
    %3770 = vmatpush1.msra.mxu0 0.0
    %3771 = vmatprep.subr.mxu0 0.0
    %3772 = vmatpush1.msra.mxu0 0.0
    %3773 = vmatprep.subr.mxu0 0.0
    %3774 = vmatpush1.msra.mxu0 0.0
    %3775 = vmatprep.subr.mxu0 0.0
    %3776 = vmatpush1.msra.mxu0 0.0
    %3777 = vmatprep.subr.mxu0 0.0
    %3778 = vmatpush1.msra.mxu0 0.0
    %3779 = vmatprep.subr.mxu0 0.0
    %3780 = vmatpush1.msra.mxu0 0.0
    %3781 = vmatprep.subr.mxu0 0.0
    %3782 = vmatpush1.msra.mxu0 0.0
    %3783 = vmatprep.subr.mxu0 0.0
    %3784 = vmatpush1.msra.mxu0 0.0
    %3785 = vmatprep.subr.mxu0 0.0
    %3786 = vmatpush1.msra.mxu0 0.0
    %3787 = vmatprep.subr.mxu0 0.0
    %3788 = vmatpush1.msra.mxu0 0.0
    %3789 = vmatprep.subr.mxu0 0.0
    %3790 = vmatpush1.msra.mxu0 0.0
    %3791 = vmatprep.subr.mxu0 0.0
    %3792 = vmatpush1.msra.mxu0 0.0
    %3793 = vmatprep.subr.mxu0 0.0
    %3794 = vmatpush1.msra.mxu0 0.0
    %3795 = vmatprep.subr.mxu0 0.0
    %3796 = vmatpush1.msra.mxu0 0.0
    %3797 = vmatprep.subr.mxu0 0.0
    %3798 = vmatpush1.msra.mxu0 0.0
    %3799 = vmatprep.subr.mxu0 0.0
    %3800 = vmatpush1.msra.mxu0 0.0
    %3801 = vmatprep.subr.mxu0 0.0
    %3802 = vmatpush1.msra.mxu0 0.0
    %3803 = vmatprep.subr.mxu0 0.0
    %3804 = vmatpush1.msra.mxu0 0.0
    %3805 = vmatprep.subr.mxu0 0.0
    %3806 = vmatpush1.msra.mxu0 0.0
    %3807 = vmatprep.subr.mxu0 0.0
    %3808 = vmatpush1.msra.mxu0 0.0
    %3809 = vmatprep.subr.mxu0 0.0
    %3810 = vmatpush1.msra.mxu0 0.0
    %3811 = vmatprep.subr.mxu0 0.0
    %3812 = vmatpush1.msra.mxu0 0.0
    %3813 = vmatprep.subr.mxu0 0.0
    %3814 = vmatpush1.msra.mxu0 0.0
    %3815 = vmatprep.subr.mxu0 0.0
    %3816 = vmatpush1.msra.mxu0 0.0
    %3817 = vmatprep.subr.mxu0 0.0
    %3818 = vmatpush1.msra.mxu0 0.0
    %3819 = vmatprep.subr.mxu0 0.0
    %3820 = vmatpush1.msra.mxu0 0.0
    %3821 = vmatprep.mubr.f32.mxu0 0.0
    %3822 = vmatmul.mubr.f32.gmra.mrb[0].mxu0 %v2147
    %v3823 = vpop.f32.mrb[0].mxu0
    %v3824 = vadd.f32 0.0, %v3823
    %v3825 = vpop.f32.mrb[0].mxu0
    %v3826 = vadd.f32 0.0, %v3825
    %3827 = vmatprep.mubr.f32.mxu0 0.0
    %3828 = vmatmul.mubr.f32.gmra.mrb[0].mxu0 %v2150
    %v3829 = vpop.f32.mrb[0].mxu0
    %v3830 = vadd.f32 0.0, %v3829
    %v3831 = vpop.f32.mrb[0].mxu0
    %v3832 = vadd.f32 0.0, %v3831
    %3833 = vmatprep.mubr.f32.mxu0 0.0
    %3834 = vmatmul.mubr.f32.gmra.mrb[0].mxu0 %v2153
    %v3835 = vpop.f32.mrb[0].mxu0
    %v3836 = vadd.f32 0.0, %v3835
    %v3837 = vpop.f32.mrb[0].mxu0
    %v3838 = vadd.f32 0.0, %v3837
    %3839 = vmatprep.mubr.f32.mxu0 0.0
    %3840 = vmatmul.mubr.f32.gmra.mrb[0].mxu0 %v2156
    %v3841 = vpop.f32.mrb[0].mxu0
    %v3842 = vadd.f32 0.0, %v3841
    %v3843 = vpop.f32.mrb[0].mxu0
    %v3844 = vadd.f32 0.0, %v3843
    %3845 = vmatprep.mubr.f32.mxu0 0.0
    %3846 = vmatmul.mubr.f32.gmra.mrb[0].mxu0 %v2159
    %v3847 = vpop.f32.mrb[0].mxu0
    %v3848 = vadd.f32 0.0, %v3847
    %v3849 = vpop.f32.mrb[0].mxu0
    %v3850 = vadd.f32 0.0, %v3849
    %3851 = vmatprep.mubr.f32.mxu0 0.0
    %3852 = vmatmul.mubr.f32.gmra.mrb[0].mxu0 %v2162
    %v3853 = vpop.f32.mrb[0].mxu0
    %v3854 = vadd.f32 0.0, %v3853
    %v3855 = vpop.f32.mrb[0].mxu0
    %v3856 = vadd.f32 0.0, %v3855
    %3857 = vmatprep.mubr.f32.mxu0 0.0
    %3858 = vmatmul.mubr.f32.gmra.mrb[0].mxu0 %v2165
    %v3859 = vpop.f32.mrb[0].mxu0
    %v3860 = vadd.f32 0.0, %v3859
    %v3861 = vpop.f32.mrb[0].mxu0
    %v3862 = vadd.f32 0.0, %v3861
    %3863 = vmatprep.mubr.f32.mxu0 0.0
    %3864 = vmatmul.mubr.f32.gmra.mrb[0].mxu0 %v2168
    %v3865 = vpop.f32.mrb[0].mxu0
    %v3866 = vadd.f32 0.0, %v3865
    %v3867 = vpop.f32.mrb[0].mxu0
    %v3868 = vadd.f32 0.0, %v3867
    %3869 = vmatprep.mubr.f32.mxu0 0.0
    %3870 = vmatmul.mubr.f32.gmra.mrb[0].mxu0 %v2171
    %v3871 = vpop.f32.mrb[0].mxu0
    %v3872 = vadd.f32 0.0, %v3871
    %v3873 = vpop.f32.mrb[0].mxu0
    %v3874 = vadd.f32 0.0, %v3873
    %3875 = vmatprep.mubr.f32.mxu0 0.0
    %3876 = vmatmul.mubr.f32.gmra.mrb[0].mxu0 %v2174
    %v3877 = vpop.f32.mrb[0].mxu0
    %v3878 = vadd.f32 0.0, %v3877
    %v3879 = vpop.f32.mrb[0].mxu0
    %v3880 = vadd.f32 0.0, %v3879
    %3881 = vmatprep.mubr.f32.mxu0 0.0
    %3882 = vmatmul.mubr.f32.gmra.mrb[0].mxu0 %v2177
    %v3883 = vpop.f32.mrb[0].mxu0
    %v3884 = vadd.f32 0.0, %v3883
    %v3885 = vpop.f32.mrb[0].mxu0
    %v3886 = vadd.f32 0.0, %v3885
    %3887 = vmatprep.mubr.f32.mxu0 0.0
    %3888 = vmatmul.mubr.f32.gmra.mrb[0].mxu0 %v2180
    %v3889 = vpop.f32.mrb[0].mxu0
    %v3890 = vadd.f32 0.0, %v3889
    %v3891 = vpop.f32.mrb[0].mxu0
    %v3892 = vadd.f32 0.0, %v3891
    %3893 = vmatprep.mubr.f32.mxu0 0.0
    %3894 = vmatmul.mubr.f32.gmra.mrb[0].mxu0 %v2183
    %v3895 = vpop.f32.mrb[0].mxu0
    %v3896 = vadd.f32 0.0, %v3895
    %v3897 = vpop.f32.mrb[0].mxu0
    %v3898 = vadd.f32 0.0, %v3897
    %3899 = vmatprep.mubr.f32.mxu0 0.0
    %3900 = vmatmul.mubr.f32.gmra.mrb[0].mxu0 %v2186
    %v3901 = vpop.f32.mrb[0].mxu0
    %v3902 = vadd.f32 0.0, %v3901
    %v3903 = vpop.f32.mrb[0].mxu0
    %v3904 = vadd.f32 0.0, %v3903
    %3905 = vmatprep.mubr.f32.mxu0 0.0
    %3906 = vmatmul.mubr.f32.gmra.mrb[0].mxu0 %v2189
    %v3907 = vpop.f32.mrb[0].mxu0
    %v3908 = vadd.f32 0.0, %v3907
    %v3909 = vpop.f32.mrb[0].mxu0
    %v3910 = vadd.f32 0.0, %v3909
    %3911 = vmatprep.mubr.f32.mxu0 0.0
    %3912 = vmatmul.mubr.f32.gmra.mrb[0].mxu0 %v2192
    %v3913 = vpop.f32.mrb[0].mxu0
    %v3914 = vadd.f32 0.0, %v3913
    %v3915 = vpop.f32.mrb[0].mxu0
    %v3916 = vadd.f32 0.0, %v3915
    %3917 = vmatprep.mubr.f32.mxu0 0.0
    %3918 = vmatmul.mubr.f32.gmra.mrb[0].mxu0 %v2195
    %v3919 = vpop.f32.mrb[0].mxu0
    %v3920 = vadd.f32 0.0, %v3919
    %v3921 = vpop.f32.mrb[0].mxu0
    %v3922 = vadd.f32 0.0, %v3921
    %3923 = vmatprep.mubr.f32.mxu0 0.0
    %3924 = vmatmul.mubr.f32.gmra.mrb[0].mxu0 %v2198
    %v3925 = vpop.f32.mrb[0].mxu0
    %v3926 = vadd.f32 0.0, %v3925
    %v3927 = vpop.f32.mrb[0].mxu0
    %v3928 = vadd.f32 0.0, %v3927
    %3929 = vdwg.mxu0
    %3930 = vmatprep.subr.mxu0 %v2073
    %3931 = vmatpush1.msra.mxu0 %v2072
    %3932 = vmatprep.subr.mxu0 %v2098
    %3933 = vmatpush1.msra.mxu0 %v2097
    %3934 = vmatprep.subr.mxu0 %v2123
    %3935 = vmatpush1.msra.mxu0 %v2122
    %3936 = vmatprep.subr.mxu0 0.0
    %3937 = vmatpush1.msra.mxu0 0.0
    %3938 = vmatprep.subr.mxu0 0.0
    %3939 = vmatpush1.msra.mxu0 0.0
    %3940 = vmatprep.subr.mxu0 0.0
    %3941 = vmatpush1.msra.mxu0 0.0
    %3942 = vmatprep.subr.mxu0 0.0
    %3943 = vmatpush1.msra.mxu0 0.0
    %3944 = vmatprep.subr.mxu0 0.0
    %3945 = vmatpush1.msra.mxu0 0.0
    %3946 = vmatprep.subr.mxu0 0.0
    %3947 = vmatpush1.msra.mxu0 0.0
    %3948 = vmatprep.subr.mxu0 0.0
    %3949 = vmatpush1.msra.mxu0 0.0
    %3950 = vmatprep.subr.mxu0 0.0
    %3951 = vmatpush1.msra.mxu0 0.0
    %3952 = vmatprep.subr.mxu0 0.0
    %3953 = vmatpush1.msra.mxu0 0.0
    %3954 = vmatprep.subr.mxu0 0.0
    %3955 = vmatpush1.msra.mxu0 0.0
    %3956 = vmatprep.subr.mxu0 0.0
    %3957 = vmatpush1.msra.mxu0 0.0
    %3958 = vmatprep.subr.mxu0 0.0
    %3959 = vmatpush1.msra.mxu0 0.0
    %3960 = vmatprep.subr.mxu0 0.0
    %3961 = vmatpush1.msra.mxu0 0.0
    %3962 = vmatprep.subr.mxu0 0.0
    %3963 = vmatpush1.msra.mxu0 0.0
    %3964 = vmatprep.subr.mxu0 0.0
    %3965 = vmatpush1.msra.mxu0 0.0
    %3966 = vmatprep.subr.mxu0 0.0
    %3967 = vmatpush1.msra.mxu0 0.0
    %3968 = vmatprep.subr.mxu0 0.0
    %3969 = vmatpush1.msra.mxu0 0.0
    %3970 = vmatprep.subr.mxu0 0.0
    %3971 = vmatpush1.msra.mxu0 0.0
    %3972 = vmatprep.subr.mxu0 0.0
    %3973 = vmatpush1.msra.mxu0 0.0
    %3974 = vmatprep.subr.mxu0 0.0
    %3975 = vmatpush1.msra.mxu0 0.0
    %3976 = vmatprep.subr.mxu0 0.0
    %3977 = vmatpush1.msra.mxu0 0.0
    %3978 = vmatprep.subr.mxu0 0.0
    %3979 = vmatpush1.msra.mxu0 0.0
    %3980 = vmatprep.subr.mxu0 0.0
    %3981 = vmatpush1.msra.mxu0 0.0
    %3982 = vmatprep.subr.mxu0 0.0
    %3983 = vmatpush1.msra.mxu0 0.0
    %3984 = vmatprep.subr.mxu0 0.0
    %3985 = vmatpush1.msra.mxu0 0.0
    %3986 = vmatprep.subr.mxu0 0.0
    %3987 = vmatpush1.msra.mxu0 0.0
    %3988 = vmatprep.subr.mxu0 0.0
    %3989 = vmatpush1.msra.mxu0 0.0
    %3990 = vmatprep.subr.mxu0 0.0
    %3991 = vmatpush1.msra.mxu0 0.0
    %3992 = vmatprep.subr.mxu0 0.0
    %3993 = vmatpush1.msra.mxu0 0.0
    %3994 = vmatprep.mubr.f32.mxu0 0.0
    %3995 = vmatmul.mubr.f32.gmra.mrb[0].mxu0 %v2147
    %v3996 = vpop.f32.mrb[0].mxu0
    %v3997 = vadd.f32 0.0, %v3996
    %v3998 = vpop.f32.mrb[0].mxu0
    %v3999 = vadd.f32 0.0, %v3998
    %4000 = vmatprep.mubr.f32.mxu0 0.0
    %4001 = vmatmul.mubr.f32.gmra.mrb[0].mxu0 %v2150
    %v4002 = vpop.f32.mrb[0].mxu0
    %v4003 = vadd.f32 0.0, %v4002
    %v4004 = vpop.f32.mrb[0].mxu0
    %v4005 = vadd.f32 0.0, %v4004
    %4006 = vmatprep.mubr.f32.mxu0 0.0
    %4007 = vmatmul.mubr.f32.gmra.mrb[0].mxu0 %v2153
    %v4008 = vpop.f32.mrb[0].mxu0
    %v4009 = vadd.f32 0.0, %v4008
    %v4010 = vpop.f32.mrb[0].mxu0
    %v4011 = vadd.f32 0.0, %v4010
    %4012 = vmatprep.mubr.f32.mxu0 0.0
    %4013 = vmatmul.mubr.f32.gmra.mrb[0].mxu0 %v2156
    %v4014 = vpop.f32.mrb[0].mxu0
    %v4015 = vadd.f32 0.0, %v4014
    %v4016 = vpop.f32.mrb[0].mxu0
    %v4017 = vadd.f32 0.0, %v4016
    %4018 = vmatprep.mubr.f32.mxu0 0.0
    %4019 = vmatmul.mubr.f32.gmra.mrb[0].mxu0 %v2159
    %v4020 = vpop.f32.mrb[0].mxu0
    %v4021 = vadd.f32 0.0, %v4020
    %v4022 = vpop.f32.mrb[0].mxu0
    %v4023 = vadd.f32 0.0, %v4022
    %4024 = vmatprep.mubr.f32.mxu0 0.0
    %4025 = vmatmul.mubr.f32.gmra.mrb[0].mxu0 %v2162
    %v4026 = vpop.f32.mrb[0].mxu0
    %v4027 = vadd.f32 0.0, %v4026
    %v4028 = vpop.f32.mrb[0].mxu0
    %v4029 = vadd.f32 0.0, %v4028
    %4030 = vmatprep.mubr.f32.mxu0 0.0
    %4031 = vmatmul.mubr.f32.gmra.mrb[0].mxu0 %v2165
    %v4032 = vpop.f32.mrb[0].mxu0
    %v4033 = vadd.f32 0.0, %v4032
    %v4034 = vpop.f32.mrb[0].mxu0
    %v4035 = vadd.f32 0.0, %v4034
    %4036 = vmatprep.mubr.f32.mxu0 0.0
    %4037 = vmatmul.mubr.f32.gmra.mrb[0].mxu0 %v2168
    %v4038 = vpop.f32.mrb[0].mxu0
    %v4039 = vadd.f32 0.0, %v4038
    %v4040 = vpop.f32.mrb[0].mxu0
    %v4041 = vadd.f32 0.0, %v4040
    %4042 = vmatprep.mubr.f32.mxu0 0.0
    %4043 = vmatmul.mubr.f32.gmra.mrb[0].mxu0 %v2171
    %v4044 = vpop.f32.mrb[0].mxu0
    %v4045 = vadd.f32 0.0, %v4044
    %v4046 = vpop.f32.mrb[0].mxu0
    %v4047 = vadd.f32 0.0, %v4046
    %4048 = vmatprep.mubr.f32.mxu0 0.0
    %4049 = vmatmul.mubr.f32.gmra.mrb[0].mxu0 %v2174
    %v4050 = vpop.f32.mrb[0].mxu0
    %v4051 = vadd.f32 0.0, %v4050
    %v4052 = vpop.f32.mrb[0].mxu0
    %v4053 = vadd.f32 0.0, %v4052
    %4054 = vmatprep.mubr.f32.mxu0 0.0
    %4055 = vmatmul.mubr.f32.gmra.mrb[0].mxu0 %v2177
    %v4056 = vpop.f32.mrb[0].mxu0
    %v4057 = vadd.f32 0.0, %v4056
    %v4058 = vpop.f32.mrb[0].mxu0
    %v4059 = vadd.f32 0.0, %v4058
    %4060 = vmatprep.mubr.f32.mxu0 0.0
    %4061 = vmatmul.mubr.f32.gmra.mrb[0].mxu0 %v2180
    %v4062 = vpop.f32.mrb[0].mxu0
    %v4063 = vadd.f32 0.0, %v4062
    %v4064 = vpop.f32.mrb[0].mxu0
    %v4065 = vadd.f32 0.0, %v4064
    %4066 = vmatprep.mubr.f32.mxu0 0.0
    %4067 = vmatmul.mubr.f32.gmra.mrb[0].mxu0 %v2183
    %v4068 = vpop.f32.mrb[0].mxu0
    %v4069 = vadd.f32 0.0, %v4068
    %v4070 = vpop.f32.mrb[0].mxu0
    %v4071 = vadd.f32 0.0, %v4070
    %4072 = vmatprep.mubr.f32.mxu0 0.0
    %4073 = vmatmul.mubr.f32.gmra.mrb[0].mxu0 %v2186
    %v4074 = vpop.f32.mrb[0].mxu0
    %v4075 = vadd.f32 0.0, %v4074
    %v4076 = vpop.f32.mrb[0].mxu0
    %v4077 = vadd.f32 0.0, %v4076
    %4078 = vmatprep.mubr.f32.mxu0 0.0
    %4079 = vmatmul.mubr.f32.gmra.mrb[0].mxu0 %v2189
    %v4080 = vpop.f32.mrb[0].mxu0
    %v4081 = vadd.f32 0.0, %v4080
    %v4082 = vpop.f32.mrb[0].mxu0
    %v4083 = vadd.f32 0.0, %v4082
    %4084 = vmatprep.mubr.f32.mxu0 0.0
    %4085 = vmatmul.mubr.f32.gmra.mrb[0].mxu0 %v2192
    %v4086 = vpop.f32.mrb[0].mxu0
    %v4087 = vadd.f32 0.0, %v4086
    %v4088 = vpop.f32.mrb[0].mxu0
    %v4089 = vadd.f32 0.0, %v4088
    %4090 = vmatprep.mubr.f32.mxu0 0.0
    %4091 = vmatmul.mubr.f32.gmra.mrb[0].mxu0 %v2195
    %v4092 = vpop.f32.mrb[0].mxu0
    %v4093 = vadd.f32 0.0, %v4092
    %v4094 = vpop.f32.mrb[0].mxu0
    %v4095 = vadd.f32 0.0, %v4094
    %4096 = vmatprep.mubr.f32.mxu0 0.0
    %4097 = vmatmul.mubr.f32.gmra.mrb[0].mxu0 %v2198
    %v4098 = vpop.f32.mrb[0].mxu0
    %v4099 = vadd.f32 0.0, %v4098
    %v4100 = vpop.f32.mrb[0].mxu0
    %v4101 = vadd.f32 0.0, %v4100
    %4102 = vdwg.mxu0
    %4103 = vmatprep.subr.mxu0 %v2075
    %4104 = vmatpush1.msra.mxu0 %v2074
    %4105 = vmatprep.subr.mxu0 %v2100
    %4106 = vmatpush1.msra.mxu0 %v2099
    %4107 = vmatprep.subr.mxu0 %v2125
    %4108 = vmatpush1.msra.mxu0 %v2124
    %4109 = vmatprep.subr.mxu0 0.0
    %4110 = vmatpush1.msra.mxu0 0.0
    %4111 = vmatprep.subr.mxu0 0.0
    %4112 = vmatpush1.msra.mxu0 0.0
    %4113 = vmatprep.subr.mxu0 0.0
    %4114 = vmatpush1.msra.mxu0 0.0
    %4115 = vmatprep.subr.mxu0 0.0
    %4116 = vmatpush1.msra.mxu0 0.0
    %4117 = vmatprep.subr.mxu0 0.0
    %4118 = vmatpush1.msra.mxu0 0.0
    %4119 = vmatprep.subr.mxu0 0.0
    %4120 = vmatpush1.msra.mxu0 0.0
    %4121 = vmatprep.subr.mxu0 0.0
    %4122 = vmatpush1.msra.mxu0 0.0
    %4123 = vmatprep.subr.mxu0 0.0
    %4124 = vmatpush1.msra.mxu0 0.0
    %4125 = vmatprep.subr.mxu0 0.0
    %4126 = vmatpush1.msra.mxu0 0.0
    %4127 = vmatprep.subr.mxu0 0.0
    %4128 = vmatpush1.msra.mxu0 0.0
    %4129 = vmatprep.subr.mxu0 0.0
    %4130 = vmatpush1.msra.mxu0 0.0
    %4131 = vmatprep.subr.mxu0 0.0
    %4132 = vmatpush1.msra.mxu0 0.0
    %4133 = vmatprep.subr.mxu0 0.0
    %4134 = vmatpush1.msra.mxu0 0.0
    %4135 = vmatprep.subr.mxu0 0.0
    %4136 = vmatpush1.msra.mxu0 0.0
    %4137 = vmatprep.subr.mxu0 0.0
    %4138 = vmatpush1.msra.mxu0 0.0
    %4139 = vmatprep.subr.mxu0 0.0
    %4140 = vmatpush1.msra.mxu0 0.0
    %4141 = vmatprep.subr.mxu0 0.0
    %4142 = vmatpush1.msra.mxu0 0.0
    %4143 = vmatprep.subr.mxu0 0.0
    %4144 = vmatpush1.msra.mxu0 0.0
    %4145 = vmatprep.subr.mxu0 0.0
    %4146 = vmatpush1.msra.mxu0 0.0
    %4147 = vmatprep.subr.mxu0 0.0
    %4148 = vmatpush1.msra.mxu0 0.0
    %4149 = vmatprep.subr.mxu0 0.0
    %4150 = vmatpush1.msra.mxu0 0.0
    %4151 = vmatprep.subr.mxu0 0.0
    %4152 = vmatpush1.msra.mxu0 0.0
    %4153 = vmatprep.subr.mxu0 0.0
    %4154 = vmatpush1.msra.mxu0 0.0
    %4155 = vmatprep.subr.mxu0 0.0
    %4156 = vmatpush1.msra.mxu0 0.0
    %4157 = vmatprep.subr.mxu0 0.0
    %4158 = vmatpush1.msra.mxu0 0.0
    %4159 = vmatprep.subr.mxu0 0.0
    %4160 = vmatpush1.msra.mxu0 0.0
    %4161 = vmatprep.subr.mxu0 0.0
    %4162 = vmatpush1.msra.mxu0 0.0
    %4163 = vmatprep.subr.mxu0 0.0
    %4164 = vmatpush1.msra.mxu0 0.0
    %4165 = vmatprep.subr.mxu0 0.0
    %4166 = vmatpush1.msra.mxu0 0.0
    %4167 = vmatprep.mubr.f32.mxu0 0.0
    %4168 = vmatmul.mubr.f32.gmra.mrb[0].mxu0 %v2147
    %v4169 = vpop.f32.mrb[0].mxu0
    %v4170 = vadd.f32 0.0, %v4169
    %v4171 = vpop.f32.mrb[0].mxu0
    %v4172 = vadd.f32 0.0, %v4171
    %4173 = vmatprep.mubr.f32.mxu0 0.0
    %4174 = vmatmul.mubr.f32.gmra.mrb[0].mxu0 %v2150
    %v4175 = vpop.f32.mrb[0].mxu0
    %v4176 = vadd.f32 0.0, %v4175
    %v4177 = vpop.f32.mrb[0].mxu0
    %v4178 = vadd.f32 0.0, %v4177
    %4179 = vmatprep.mubr.f32.mxu0 0.0
    %4180 = vmatmul.mubr.f32.gmra.mrb[0].mxu0 %v2153
    %v4181 = vpop.f32.mrb[0].mxu0
    %v4182 = vadd.f32 0.0, %v4181
    %v4183 = vpop.f32.mrb[0].mxu0
    %v4184 = vadd.f32 0.0, %v4183
    %4185 = vmatprep.mubr.f32.mxu0 0.0
    %4186 = vmatmul.mubr.f32.gmra.mrb[0].mxu0 %v2156
    %v4187 = vpop.f32.mrb[0].mxu0
    %v4188 = vadd.f32 0.0, %v4187
    %v4189 = vpop.f32.mrb[0].mxu0
    %v4190 = vadd.f32 0.0, %v4189
    %4191 = vmatprep.mubr.f32.mxu0 0.0
    %4192 = vmatmul.mubr.f32.gmra.mrb[0].mxu0 %v2159
    %v4193 = vpop.f32.mrb[0].mxu0
    %v4194 = vadd.f32 0.0, %v4193
    %v4195 = vpop.f32.mrb[0].mxu0
    %v4196 = vadd.f32 0.0, %v4195
    %4197 = vmatprep.mubr.f32.mxu0 0.0
    %4198 = vmatmul.mubr.f32.gmra.mrb[0].mxu0 %v2162
    %v4199 = vpop.f32.mrb[0].mxu0
    %v4200 = vadd.f32 0.0, %v4199
    %v4201 = vpop.f32.mrb[0].mxu0
    %v4202 = vadd.f32 0.0, %v4201
    %4203 = vmatprep.mubr.f32.mxu0 0.0
    %4204 = vmatmul.mubr.f32.gmra.mrb[0].mxu0 %v2165
    %v4205 = vpop.f32.mrb[0].mxu0
    %v4206 = vadd.f32 0.0, %v4205
    %v4207 = vpop.f32.mrb[0].mxu0
    %v4208 = vadd.f32 0.0, %v4207
    %4209 = vmatprep.mubr.f32.mxu0 0.0
    %4210 = vmatmul.mubr.f32.gmra.mrb[0].mxu0 %v2168
    %v4211 = vpop.f32.mrb[0].mxu0
    %v4212 = vadd.f32 0.0, %v4211
    %v4213 = vpop.f32.mrb[0].mxu0
    %v4214 = vadd.f32 0.0, %v4213
    %4215 = vmatprep.mubr.f32.mxu0 0.0
    %4216 = vmatmul.mubr.f32.gmra.mrb[0].mxu0 %v2171
    %v4217 = vpop.f32.mrb[0].mxu0
    %v4218 = vadd.f32 0.0, %v4217
    %v4219 = vpop.f32.mrb[0].mxu0
    %v4220 = vadd.f32 0.0, %v4219
    %4221 = vmatprep.mubr.f32.mxu0 0.0
    %4222 = vmatmul.mubr.f32.gmra.mrb[0].mxu0 %v2174
    %v4223 = vpop.f32.mrb[0].mxu0
    %v4224 = vadd.f32 0.0, %v4223
    %v4225 = vpop.f32.mrb[0].mxu0
    %v4226 = vadd.f32 0.0, %v4225
    %4227 = vmatprep.mubr.f32.mxu0 0.0
    %4228 = vmatmul.mubr.f32.gmra.mrb[0].mxu0 %v2177
    %v4229 = vpop.f32.mrb[0].mxu0
    %v4230 = vadd.f32 0.0, %v4229
    %v4231 = vpop.f32.mrb[0].mxu0
    %v4232 = vadd.f32 0.0, %v4231
    %4233 = vmatprep.mubr.f32.mxu0 0.0
    %4234 = vmatmul.mubr.f32.gmra.mrb[0].mxu0 %v2180
    %v4235 = vpop.f32.mrb[0].mxu0
    %v4236 = vadd.f32 0.0, %v4235
    %v4237 = vpop.f32.mrb[0].mxu0
    %v4238 = vadd.f32 0.0, %v4237
    %4239 = vmatprep.mubr.f32.mxu0 0.0
    %4240 = vmatmul.mubr.f32.gmra.mrb[0].mxu0 %v2183
    %v4241 = vpop.f32.mrb[0].mxu0
    %v4242 = vadd.f32 0.0, %v4241
    %v4243 = vpop.f32.mrb[0].mxu0
    %v4244 = vadd.f32 0.0, %v4243
    %4245 = vmatprep.mubr.f32.mxu0 0.0
    %4246 = vmatmul.mubr.f32.gmra.mrb[0].mxu0 %v2186
    %v4247 = vpop.f32.mrb[0].mxu0
    %v4248 = vadd.f32 0.0, %v4247
    %v4249 = vpop.f32.mrb[0].mxu0
    %v4250 = vadd.f32 0.0, %v4249
    %4251 = vmatprep.mubr.f32.mxu0 0.0
    %4252 = vmatmul.mubr.f32.gmra.mrb[0].mxu0 %v2189
    %v4253 = vpop.f32.mrb[0].mxu0
    %v4254 = vadd.f32 0.0, %v4253
    %v4255 = vpop.f32.mrb[0].mxu0
    %v4256 = vadd.f32 0.0, %v4255
    %4257 = vmatprep.mubr.f32.mxu0 0.0
    %4258 = vmatmul.mubr.f32.gmra.mrb[0].mxu0 %v2192
    %v4259 = vpop.f32.mrb[0].mxu0
    %v4260 = vadd.f32 0.0, %v4259
    %v4261 = vpop.f32.mrb[0].mxu0
    %v4262 = vadd.f32 0.0, %v4261
    %4263 = vmatprep.mubr.f32.mxu0 0.0
    %4264 = vmatmul.mubr.f32.gmra.mrb[0].mxu0 %v2195
    %v4265 = vpop.f32.mrb[0].mxu0
    %v4266 = vadd.f32 0.0, %v4265
    %v4267 = vpop.f32.mrb[0].mxu0
    %v4268 = vadd.f32 0.0, %v4267
    %4269 = vmatprep.mubr.f32.mxu0 0.0
    %4270 = vmatmul.mubr.f32.gmra.mrb[0].mxu0 %v2198
    %v4271 = vpop.f32.mrb[0].mxu0
    %v4272 = vadd.f32 0.0, %v4271
    %v4273 = vpop.f32.mrb[0].mxu0
    %v4274 = vadd.f32 0.0, %v4273
    %4275 = vdwg.mxu0
    %4276 = vmatprep.subr.mxu0 0.0
    %4277 = vmatpush1.msra.mxu0 %v2076
    %4278 = vmatprep.subr.mxu0 0.0
    %4279 = vmatpush1.msra.mxu0 %v2101
    %4280 = vmatprep.subr.mxu0 0.0
    %4281 = vmatpush1.msra.mxu0 %v2126
    %4282 = vmatprep.subr.mxu0 0.0
    %4283 = vmatpush1.msra.mxu0 0.0
    %4284 = vmatprep.subr.mxu0 0.0
    %4285 = vmatpush1.msra.mxu0 0.0
    %4286 = vmatprep.subr.mxu0 0.0
    %4287 = vmatpush1.msra.mxu0 0.0
    %4288 = vmatprep.subr.mxu0 0.0
    %4289 = vmatpush1.msra.mxu0 0.0
    %4290 = vmatprep.subr.mxu0 0.0
    %4291 = vmatpush1.msra.mxu0 0.0
    %4292 = vmatprep.subr.mxu0 0.0
    %4293 = vmatpush1.msra.mxu0 0.0
    %4294 = vmatprep.subr.mxu0 0.0
    %4295 = vmatpush1.msra.mxu0 0.0
    %4296 = vmatprep.subr.mxu0 0.0
    %4297 = vmatpush1.msra.mxu0 0.0
    %4298 = vmatprep.subr.mxu0 0.0
    %4299 = vmatpush1.msra.mxu0 0.0
    %4300 = vmatprep.subr.mxu0 0.0
    %4301 = vmatpush1.msra.mxu0 0.0
    %4302 = vmatprep.subr.mxu0 0.0
    %4303 = vmatpush1.msra.mxu0 0.0
    %4304 = vmatprep.subr.mxu0 0.0
    %4305 = vmatpush1.msra.mxu0 0.0
    %4306 = vmatprep.subr.mxu0 0.0
    %4307 = vmatpush1.msra.mxu0 0.0
    %4308 = vmatprep.subr.mxu0 0.0
    %4309 = vmatpush1.msra.mxu0 0.0
    %4310 = vmatprep.subr.mxu0 0.0
    %4311 = vmatpush1.msra.mxu0 0.0
    %4312 = vmatprep.subr.mxu0 0.0
    %4313 = vmatpush1.msra.mxu0 0.0
    %4314 = vmatprep.subr.mxu0 0.0
    %4315 = vmatpush1.msra.mxu0 0.0
    %4316 = vmatprep.subr.mxu0 0.0
    %4317 = vmatpush1.msra.mxu0 0.0
    %4318 = vmatprep.subr.mxu0 0.0
    %4319 = vmatpush1.msra.mxu0 0.0
    %4320 = vmatprep.subr.mxu0 0.0
    %4321 = vmatpush1.msra.mxu0 0.0
    %4322 = vmatprep.subr.mxu0 0.0
    %4323 = vmatpush1.msra.mxu0 0.0
    %4324 = vmatprep.subr.mxu0 0.0
    %4325 = vmatpush1.msra.mxu0 0.0
    %4326 = vmatprep.subr.mxu0 0.0
    %4327 = vmatpush1.msra.mxu0 0.0
    %4328 = vmatprep.subr.mxu0 0.0
    %4329 = vmatpush1.msra.mxu0 0.0
    %4330 = vmatprep.subr.mxu0 0.0
    %4331 = vmatpush1.msra.mxu0 0.0
    %4332 = vmatprep.subr.mxu0 0.0
    %4333 = vmatpush1.msra.mxu0 0.0
    %4334 = vmatprep.subr.mxu0 0.0
    %4335 = vmatpush1.msra.mxu0 0.0
    %4336 = vmatprep.subr.mxu0 0.0
    %4337 = vmatpush1.msra.mxu0 0.0
    %4338 = vmatprep.subr.mxu0 0.0
    %4339 = vmatpush1.msra.mxu0 0.0
    %4340 = vmatprep.mubr.f32.mxu0 0.0
    %4341 = vmatmul.mubr.f32.gmra.mrb[0].mxu0 %v2147
    %v4342 = vpop.f32.mrb[0].mxu0
    %v4343 = vadd.f32 0.0, %v4342
    %v4344 = vpop.f32.mrb[0].mxu0
    %4345 = vmatprep.mubr.f32.mxu0 0.0
    %4346 = vmatmul.mubr.f32.gmra.mrb[0].mxu0 %v2150
    %v4347 = vpop.f32.mrb[0].mxu0
    %v4348 = vadd.f32 0.0, %v4347
    %v4349 = vpop.f32.mrb[0].mxu0
    %4350 = vmatprep.mubr.f32.mxu0 0.0
    %4351 = vmatmul.mubr.f32.gmra.mrb[0].mxu0 %v2153
    %v4352 = vpop.f32.mrb[0].mxu0
    %v4353 = vadd.f32 0.0, %v4352
    %v4354 = vpop.f32.mrb[0].mxu0
    %4355 = vmatprep.mubr.f32.mxu0 0.0
    %4356 = vmatmul.mubr.f32.gmra.mrb[0].mxu0 %v2156
    %v4357 = vpop.f32.mrb[0].mxu0
    %v4358 = vadd.f32 0.0, %v4357
    %v4359 = vpop.f32.mrb[0].mxu0
    %4360 = vmatprep.mubr.f32.mxu0 0.0
    %4361 = vmatmul.mubr.f32.gmra.mrb[0].mxu0 %v2159
    %v4362 = vpop.f32.mrb[0].mxu0
    %v4363 = vadd.f32 0.0, %v4362
    %v4364 = vpop.f32.mrb[0].mxu0
    %4365 = vmatprep.mubr.f32.mxu0 0.0
    %4366 = vmatmul.mubr.f32.gmra.mrb[0].mxu0 %v2162
    %v4367 = vpop.f32.mrb[0].mxu0
    %v4368 = vadd.f32 0.0, %v4367
    %v4369 = vpop.f32.mrb[0].mxu0
    %4370 = vmatprep.mubr.f32.mxu0 0.0
    %4371 = vmatmul.mubr.f32.gmra.mrb[0].mxu0 %v2165
    %v4372 = vpop.f32.mrb[0].mxu0
    %v4373 = vadd.f32 0.0, %v4372
    %v4374 = vpop.f32.mrb[0].mxu0
    %4375 = vmatprep.mubr.f32.mxu0 0.0
    %4376 = vmatmul.mubr.f32.gmra.mrb[0].mxu0 %v2168
    %v4377 = vpop.f32.mrb[0].mxu0
    %v4378 = vadd.f32 0.0, %v4377
    %v4379 = vpop.f32.mrb[0].mxu0
    %4380 = vmatprep.mubr.f32.mxu0 0.0
    %4381 = vmatmul.mubr.f32.gmra.mrb[0].mxu0 %v2171
    %v4382 = vpop.f32.mrb[0].mxu0
    %v4383 = vadd.f32 0.0, %v4382
    %v4384 = vpop.f32.mrb[0].mxu0
    %4385 = vmatprep.mubr.f32.mxu0 0.0
    %4386 = vmatmul.mubr.f32.gmra.mrb[0].mxu0 %v2174
    %v4387 = vpop.f32.mrb[0].mxu0
    %v4388 = vadd.f32 0.0, %v4387
    %v4389 = vpop.f32.mrb[0].mxu0
    %4390 = vmatprep.mubr.f32.mxu0 0.0
    %4391 = vmatmul.mubr.f32.gmra.mrb[0].mxu0 %v2177
    %v4392 = vpop.f32.mrb[0].mxu0
    %v4393 = vadd.f32 0.0, %v4392
    %v4394 = vpop.f32.mrb[0].mxu0
    %4395 = vmatprep.mubr.f32.mxu0 0.0
    %4396 = vmatmul.mubr.f32.gmra.mrb[0].mxu0 %v2180
    %v4397 = vpop.f32.mrb[0].mxu0
    %v4398 = vadd.f32 0.0, %v4397
    %v4399 = vpop.f32.mrb[0].mxu0
    %4400 = vmatprep.mubr.f32.mxu0 0.0
    %4401 = vmatmul.mubr.f32.gmra.mrb[0].mxu0 %v2183
    %v4402 = vpop.f32.mrb[0].mxu0
    %v4403 = vadd.f32 0.0, %v4402
    %v4404 = vpop.f32.mrb[0].mxu0
    %4405 = vmatprep.mubr.f32.mxu0 0.0
    %4406 = vmatmul.mubr.f32.gmra.mrb[0].mxu0 %v2186
    %v4407 = vpop.f32.mrb[0].mxu0
    %v4408 = vadd.f32 0.0, %v4407
    %v4409 = vpop.f32.mrb[0].mxu0
    %4410 = vmatprep.mubr.f32.mxu0 0.0
    %4411 = vmatmul.mubr.f32.gmra.mrb[0].mxu0 %v2189
    %v4412 = vpop.f32.mrb[0].mxu0
    %v4413 = vadd.f32 0.0, %v4412
    %v4414 = vpop.f32.mrb[0].mxu0
    %4415 = vmatprep.mubr.f32.mxu0 0.0
    %4416 = vmatmul.mubr.f32.gmra.mrb[0].mxu0 %v2192
    %v4417 = vpop.f32.mrb[0].mxu0
    %v4418 = vadd.f32 0.0, %v4417
    %v4419 = vpop.f32.mrb[0].mxu0
    %4420 = vmatprep.mubr.f32.mxu0 0.0
    %4421 = vmatmul.mubr.f32.gmra.mrb[0].mxu0 %v2195
    %v4422 = vpop.f32.mrb[0].mxu0
    %v4423 = vadd.f32 0.0, %v4422
    %v4424 = vpop.f32.mrb[0].mxu0
    %4425 = vmatprep.mubr.f32.mxu0 0.0
    %4426 = vmatmul.mubr.f32.gmra.mrb[0].mxu0 %v2198
    %v4427 = vpop.f32.mrb[0].mxu0
    %v4428 = vadd.f32 0.0, %v4427
    %v4429 = vpop.f32.mrb[0].mxu0
    %4430 = vdwg.mxu0
    %v4431 = vadd.f32 %v2267, %v2269
    %v4432 = vadd.f32 %v4431, %v2440
    %v4433 = vadd.f32 %v4432, %v2442
    %v4434 = vadd.f32 %v4433, %v2613
    %v4435 = vadd.f32 %v4434, %v2615
    %v4436 = vadd.f32 %v4435, %v2786
    %v4437 = vadd.f32 %v4436, %v2788
    %v4438 = vadd.f32 %v4437, %v2959
    %v4439 = vadd.f32 %v4438, %v2961
    %v4440 = vadd.f32 %v4439, %v3132
    %v4441 = vadd.f32 %v4440, %v3134
    %v4442 = vadd.f32 %v4441, %v3305
    %v4443 = vadd.f32 %v4442, %v3307
    %v4444 = vadd.f32 %v4443, %v3478
    %v4445 = vadd.f32 %v4444, %v3480
    %v4446 = vadd.f32 %v4445, %v3651
    %v4447 = vadd.f32 %v4446, %v3653
    %v4448 = vadd.f32 %v4447, %v3824
    %v4449 = vadd.f32 %v4448, %v3826
    %v4450 = vadd.f32 %v4449, %v3997
    %v4451 = vadd.f32 %v4450, %v3999
    %v4452 = vadd.f32 %v4451, %v4170
    %v4453 = vadd.f32 %v4452, %v4172
    %v4454 = vsel %vm1546, %v4343, 0.0
    %v4455 = vadd.f32 %v4453, %v4454
    %4456 = vadd.xlane.f32.xlu0 %v4455
    %v4457 = vpop.xlane.xlu0 %4456
    %v4458 = vadd.f32 %v2273, %v2275
    %v4459 = vadd.f32 %v4458, %v2446
    %v4460 = vadd.f32 %v4459, %v2448
    %v4461 = vadd.f32 %v4460, %v2619
    %v4462 = vadd.f32 %v4461, %v2621
    %v4463 = vadd.f32 %v4462, %v2792
    %v4464 = vadd.f32 %v4463, %v2794
    %v4465 = vadd.f32 %v4464, %v2965
    %v4466 = vadd.f32 %v4465, %v2967
    %v4467 = vadd.f32 %v4466, %v3138
    %v4468 = vadd.f32 %v4467, %v3140
    %v4469 = vadd.f32 %v4468, %v3311
    %v4470 = vadd.f32 %v4469, %v3313
    %v4471 = vadd.f32 %v4470, %v3484
    %v4472 = vadd.f32 %v4471, %v3486
    %v4473 = vadd.f32 %v4472, %v3657
    %v4474 = vadd.f32 %v4473, %v3659
    %v4475 = vadd.f32 %v4474, %v3830
    %v4476 = vadd.f32 %v4475, %v3832
    %v4477 = vadd.f32 %v4476, %v4003
    %v4478 = vadd.f32 %v4477, %v4005
    %v4479 = vadd.f32 %v4478, %v4176
    %v4480 = vadd.f32 %v4479, %v4178
    %v4481 = vsel %vm1546, %v4348, 0.0
    %v4482 = vadd.f32 %v4480, %v4481
    %4483 = vadd.xlane.f32.xlu0 %v4482
    %v4484 = vpop.xlane.xlu0 %4483
    %v4485 = vadd.f32 %v2279, %v2281
    %v4486 = vadd.f32 %v4485, %v2452
    %v4487 = vadd.f32 %v4486, %v2454
    %v4488 = vadd.f32 %v4487, %v2625
    %v4489 = vadd.f32 %v4488, %v2627
    %v4490 = vadd.f32 %v4489, %v2798
    %v4491 = vadd.f32 %v4490, %v2800
    %v4492 = vadd.f32 %v4491, %v2971
    %v4493 = vadd.f32 %v4492, %v2973
    %v4494 = vadd.f32 %v4493, %v3144
    %v4495 = vadd.f32 %v4494, %v3146
    %v4496 = vadd.f32 %v4495, %v3317
    %v4497 = vadd.f32 %v4496, %v3319
    %v4498 = vadd.f32 %v4497, %v3490
    %v4499 = vadd.f32 %v4498, %v3492
    %v4500 = vadd.f32 %v4499, %v3663
    %v4501 = vadd.f32 %v4500, %v3665
    %v4502 = vadd.f32 %v4501, %v3836
    %v4503 = vadd.f32 %v4502, %v3838
    %v4504 = vadd.f32 %v4503, %v4009
    %v4505 = vadd.f32 %v4504, %v4011
    %v4506 = vadd.f32 %v4505, %v4182
    %v4507 = vadd.f32 %v4506, %v4184
    %v4508 = vsel %vm1546, %v4353, 0.0
    %v4509 = vadd.f32 %v4507, %v4508
    %4510 = vadd.xlane.f32.xlu0 %v4509
    %v4511 = vpop.xlane.xlu0 %4510
    %v4512 = vadd.f32 %v2285, %v2287
    %v4513 = vadd.f32 %v4512, %v2458
    %v4514 = vadd.f32 %v4513, %v2460
    %v4515 = vadd.f32 %v4514, %v2631
    %v4516 = vadd.f32 %v4515, %v2633
    %v4517 = vadd.f32 %v4516, %v2804
    %v4518 = vadd.f32 %v4517, %v2806
    %v4519 = vadd.f32 %v4518, %v2977
    %v4520 = vadd.f32 %v4519, %v2979
    %v4521 = vadd.f32 %v4520, %v3150
    %v4522 = vadd.f32 %v4521, %v3152
    %v4523 = vadd.f32 %v4522, %v3323
    %v4524 = vadd.f32 %v4523, %v3325
    %v4525 = vadd.f32 %v4524, %v3496
    %v4526 = vadd.f32 %v4525, %v3498
    %v4527 = vadd.f32 %v4526, %v3669
    %v4528 = vadd.f32 %v4527, %v3671
    %v4529 = vadd.f32 %v4528, %v3842
    %v4530 = vadd.f32 %v4529, %v3844
    %v4531 = vadd.f32 %v4530, %v4015
    %v4532 = vadd.f32 %v4531, %v4017
    %v4533 = vadd.f32 %v4532, %v4188
    %v4534 = vadd.f32 %v4533, %v4190
    %v4535 = vsel %vm1546, %v4358, 0.0
    %v4536 = vadd.f32 %v4534, %v4535
    %4537 = vadd.xlane.f32.xlu0 %v4536
    %v4538 = vpop.xlane.xlu0 %4537
    %v4539 = vadd.f32 %v2291, %v2293
    %v4540 = vadd.f32 %v4539, %v2464
    %v4541 = vadd.f32 %v4540, %v2466
    %v4542 = vadd.f32 %v4541, %v2637
    %v4543 = vadd.f32 %v4542, %v2639
    %v4544 = vadd.f32 %v4543, %v2810
    %v4545 = vadd.f32 %v4544, %v2812
    %v4546 = vadd.f32 %v4545, %v2983
    %v4547 = vadd.f32 %v4546, %v2985
    %v4548 = vadd.f32 %v4547, %v3156
    %v4549 = vadd.f32 %v4548, %v3158
    %v4550 = vadd.f32 %v4549, %v3329
    %v4551 = vadd.f32 %v4550, %v3331
    %v4552 = vadd.f32 %v4551, %v3502
    %v4553 = vadd.f32 %v4552, %v3504
    %v4554 = vadd.f32 %v4553, %v3675
    %v4555 = vadd.f32 %v4554, %v3677
    %v4556 = vadd.f32 %v4555, %v3848
    %v4557 = vadd.f32 %v4556, %v3850
    %v4558 = vadd.f32 %v4557, %v4021
    %v4559 = vadd.f32 %v4558, %v4023
    %v4560 = vadd.f32 %v4559, %v4194
    %v4561 = vadd.f32 %v4560, %v4196
    %v4562 = vsel %vm1546, %v4363, 0.0
    %v4563 = vadd.f32 %v4561, %v4562
    %4564 = vadd.xlane.f32.xlu0 %v4563
    %v4565 = vpop.xlane.xlu0 %4564
    %v4566 = vadd.f32 %v2297, %v2299
    %v4567 = vadd.f32 %v4566, %v2470
    %v4568 = vadd.f32 %v4567, %v2472
    %v4569 = vadd.f32 %v4568, %v2643
    %v4570 = vadd.f32 %v4569, %v2645
    %v4571 = vadd.f32 %v4570, %v2816
    %v4572 = vadd.f32 %v4571, %v2818
    %v4573 = vadd.f32 %v4572, %v2989
    %v4574 = vadd.f32 %v4573, %v2991
    %v4575 = vadd.f32 %v4574, %v3162
    %v4576 = vadd.f32 %v4575, %v3164
    %v4577 = vadd.f32 %v4576, %v3335
    %v4578 = vadd.f32 %v4577, %v3337
    %v4579 = vadd.f32 %v4578, %v3508
    %v4580 = vadd.f32 %v4579, %v3510
    %v4581 = vadd.f32 %v4580, %v3681
    %v4582 = vadd.f32 %v4581, %v3683
    %v4583 = vadd.f32 %v4582, %v3854
    %v4584 = vadd.f32 %v4583, %v3856
    %v4585 = vadd.f32 %v4584, %v4027
    %v4586 = vadd.f32 %v4585, %v4029
    %v4587 = vadd.f32 %v4586, %v4200
    %v4588 = vadd.f32 %v4587, %v4202
    %v4589 = vsel %vm1546, %v4368, 0.0
    %v4590 = vadd.f32 %v4588, %v4589
    %4591 = vadd.xlane.f32.xlu0 %v4590
    %v4592 = vpop.xlane.xlu0 %4591
    %v4593 = vadd.f32 %v2303, %v2305
    %v4594 = vadd.f32 %v4593, %v2476
    %v4595 = vadd.f32 %v4594, %v2478
    %v4596 = vadd.f32 %v4595, %v2649
    %v4597 = vadd.f32 %v4596, %v2651
    %v4598 = vadd.f32 %v4597, %v2822
    %v4599 = vadd.f32 %v4598, %v2824
    %v4600 = vadd.f32 %v4599, %v2995
    %v4601 = vadd.f32 %v4600, %v2997
    %v4602 = vadd.f32 %v4601, %v3168
    %v4603 = vadd.f32 %v4602, %v3170
    %v4604 = vadd.f32 %v4603, %v3341
    %v4605 = vadd.f32 %v4604, %v3343
    %v4606 = vadd.f32 %v4605, %v3514
    %v4607 = vadd.f32 %v4606, %v3516
    %v4608 = vadd.f32 %v4607, %v3687
    %v4609 = vadd.f32 %v4608, %v3689
    %v4610 = vadd.f32 %v4609, %v3860
    %v4611 = vadd.f32 %v4610, %v3862
    %v4612 = vadd.f32 %v4611, %v4033
    %v4613 = vadd.f32 %v4612, %v4035
    %v4614 = vadd.f32 %v4613, %v4206
    %v4615 = vadd.f32 %v4614, %v4208
    %v4616 = vsel %vm1546, %v4373, 0.0
    %v4617 = vadd.f32 %v4615, %v4616
    %4618 = vadd.xlane.f32.xlu0 %v4617
    %v4619 = vpop.xlane.xlu0 %4618
    %v4620 = vadd.f32 %v2309, %v2311
    %v4621 = vadd.f32 %v4620, %v2482
    %v4622 = vadd.f32 %v4621, %v2484
    %v4623 = vadd.f32 %v4622, %v2655
    %v4624 = vadd.f32 %v4623, %v2657
    %v4625 = vadd.f32 %v4624, %v2828
    %v4626 = vadd.f32 %v4625, %v2830
    %v4627 = vadd.f32 %v4626, %v3001
    %v4628 = vadd.f32 %v4627, %v3003
    %v4629 = vadd.f32 %v4628, %v3174
    %v4630 = vadd.f32 %v4629, %v3176
    %v4631 = vadd.f32 %v4630, %v3347
    %v4632 = vadd.f32 %v4631, %v3349
    %v4633 = vadd.f32 %v4632, %v3520
    %v4634 = vadd.f32 %v4633, %v3522
    %v4635 = vadd.f32 %v4634, %v3693
    %v4636 = vadd.f32 %v4635, %v3695
    %v4637 = vadd.f32 %v4636, %v3866
    %v4638 = vadd.f32 %v4637, %v3868
    %v4639 = vadd.f32 %v4638, %v4039
    %v4640 = vadd.f32 %v4639, %v4041
    %v4641 = vadd.f32 %v4640, %v4212
    %v4642 = vadd.f32 %v4641, %v4214
    %v4643 = vsel %vm1546, %v4378, 0.0
    %v4644 = vadd.f32 %v4642, %v4643
    %4645 = vadd.xlane.f32.xlu0 %v4644
    %v4646 = vpop.xlane.xlu0 %4645
    %v4647 = vadd.f32 %v2315, %v2317
    %v4648 = vadd.f32 %v4647, %v2488
    %v4649 = vadd.f32 %v4648, %v2490
    %v4650 = vadd.f32 %v4649, %v2661
    %v4651 = vadd.f32 %v4650, %v2663
    %v4652 = vadd.f32 %v4651, %v2834
    %v4653 = vadd.f32 %v4652, %v2836
    %v4654 = vadd.f32 %v4653, %v3007
    %v4655 = vadd.f32 %v4654, %v3009
    %v4656 = vadd.f32 %v4655, %v3180
    %v4657 = vadd.f32 %v4656, %v3182
    %v4658 = vadd.f32 %v4657, %v3353
    %v4659 = vadd.f32 %v4658, %v3355
    %v4660 = vadd.f32 %v4659, %v3526
    %v4661 = vadd.f32 %v4660, %v3528
    %v4662 = vadd.f32 %v4661, %v3699
    %v4663 = vadd.f32 %v4662, %v3701
    %v4664 = vadd.f32 %v4663, %v3872
    %v4665 = vadd.f32 %v4664, %v3874
    %v4666 = vadd.f32 %v4665, %v4045
    %v4667 = vadd.f32 %v4666, %v4047
    %v4668 = vadd.f32 %v4667, %v4218
    %v4669 = vadd.f32 %v4668, %v4220
    %v4670 = vsel %vm1546, %v4383, 0.0
    %v4671 = vadd.f32 %v4669, %v4670
    %4672 = vadd.xlane.f32.xlu0 %v4671
    %v4673 = vpop.xlane.xlu0 %4672
    %v4674 = vadd.f32 %v2321, %v2323
    %v4675 = vadd.f32 %v4674, %v2494
    %v4676 = vadd.f32 %v4675, %v2496
    %v4677 = vadd.f32 %v4676, %v2667
    %v4678 = vadd.f32 %v4677, %v2669
    %v4679 = vadd.f32 %v4678, %v2840
    %v4680 = vadd.f32 %v4679, %v2842
    %v4681 = vadd.f32 %v4680, %v3013
    %v4682 = vadd.f32 %v4681, %v3015
    %v4683 = vadd.f32 %v4682, %v3186
    %v4684 = vadd.f32 %v4683, %v3188
    %v4685 = vadd.f32 %v4684, %v3359
    %v4686 = vadd.f32 %v4685, %v3361
    %v4687 = vadd.f32 %v4686, %v3532
    %v4688 = vadd.f32 %v4687, %v3534
    %v4689 = vadd.f32 %v4688, %v3705
    %v4690 = vadd.f32 %v4689, %v3707
    %v4691 = vadd.f32 %v4690, %v3878
    %v4692 = vadd.f32 %v4691, %v3880
    %v4693 = vadd.f32 %v4692, %v4051
    %v4694 = vadd.f32 %v4693, %v4053
    %v4695 = vadd.f32 %v4694, %v4224
    %v4696 = vadd.f32 %v4695, %v4226
    %v4697 = vsel %vm1546, %v4388, 0.0
    %v4698 = vadd.f32 %v4696, %v4697
    %4699 = vadd.xlane.f32.xlu0 %v4698
    %v4700 = vpop.xlane.xlu0 %4699
    %v4701 = vadd.f32 %v2327, %v2329
    %v4702 = vadd.f32 %v4701, %v2500
    %v4703 = vadd.f32 %v4702, %v2502
    %v4704 = vadd.f32 %v4703, %v2673
    %v4705 = vadd.f32 %v4704, %v2675
    %v4706 = vadd.f32 %v4705, %v2846
    %v4707 = vadd.f32 %v4706, %v2848
    %v4708 = vadd.f32 %v4707, %v3019
    %v4709 = vadd.f32 %v4708, %v3021
    %v4710 = vadd.f32 %v4709, %v3192
    %v4711 = vadd.f32 %v4710, %v3194
    %v4712 = vadd.f32 %v4711, %v3365
    %v4713 = vadd.f32 %v4712, %v3367
    %v4714 = vadd.f32 %v4713, %v3538
    %v4715 = vadd.f32 %v4714, %v3540
    %v4716 = vadd.f32 %v4715, %v3711
    %v4717 = vadd.f32 %v4716, %v3713
    %v4718 = vadd.f32 %v4717, %v3884
    %v4719 = vadd.f32 %v4718, %v3886
    %v4720 = vadd.f32 %v4719, %v4057
    %v4721 = vadd.f32 %v4720, %v4059
    %v4722 = vadd.f32 %v4721, %v4230
    %v4723 = vadd.f32 %v4722, %v4232
    %v4724 = vsel %vm1546, %v4393, 0.0
    %v4725 = vadd.f32 %v4723, %v4724
    %4726 = vadd.xlane.f32.xlu0 %v4725
    %v4727 = vpop.xlane.xlu0 %4726
    %v4728 = vadd.f32 %v2333, %v2335
    %v4729 = vadd.f32 %v4728, %v2506
    %v4730 = vadd.f32 %v4729, %v2508
    %v4731 = vadd.f32 %v4730, %v2679
    %v4732 = vadd.f32 %v4731, %v2681
    %v4733 = vadd.f32 %v4732, %v2852
    %v4734 = vadd.f32 %v4733, %v2854
    %v4735 = vadd.f32 %v4734, %v3025
    %v4736 = vadd.f32 %v4735, %v3027
    %v4737 = vadd.f32 %v4736, %v3198
    %v4738 = vadd.f32 %v4737, %v3200
    %v4739 = vadd.f32 %v4738, %v3371
    %v4740 = vadd.f32 %v4739, %v3373
    %v4741 = vadd.f32 %v4740, %v3544
    %v4742 = vadd.f32 %v4741, %v3546
    %v4743 = vadd.f32 %v4742, %v3717
    %v4744 = vadd.f32 %v4743, %v3719
    %v4745 = vadd.f32 %v4744, %v3890
    %v4746 = vadd.f32 %v4745, %v3892
    %v4747 = vadd.f32 %v4746, %v4063
    %v4748 = vadd.f32 %v4747, %v4065
    %v4749 = vadd.f32 %v4748, %v4236
    %v4750 = vadd.f32 %v4749, %v4238
    %v4751 = vsel %vm1546, %v4398, 0.0
    %v4752 = vadd.f32 %v4750, %v4751
    %4753 = vadd.xlane.f32.xlu0 %v4752
    %v4754 = vpop.xlane.xlu0 %4753
    %v4755 = vadd.f32 %v2339, %v2341
    %v4756 = vadd.f32 %v4755, %v2512
    %v4757 = vadd.f32 %v4756, %v2514
    %v4758 = vadd.f32 %v4757, %v2685
    %v4759 = vadd.f32 %v4758, %v2687
    %v4760 = vadd.f32 %v4759, %v2858
    %v4761 = vadd.f32 %v4760, %v2860
    %v4762 = vadd.f32 %v4761, %v3031
    %v4763 = vadd.f32 %v4762, %v3033
    %v4764 = vadd.f32 %v4763, %v3204
    %v4765 = vadd.f32 %v4764, %v3206
    %v4766 = vadd.f32 %v4765, %v3377
    %v4767 = vadd.f32 %v4766, %v3379
    %v4768 = vadd.f32 %v4767, %v3550
    %v4769 = vadd.f32 %v4768, %v3552
    %v4770 = vadd.f32 %v4769, %v3723
    %v4771 = vadd.f32 %v4770, %v3725
    %v4772 = vadd.f32 %v4771, %v3896
    %v4773 = vadd.f32 %v4772, %v3898
    %v4774 = vadd.f32 %v4773, %v4069
    %v4775 = vadd.f32 %v4774, %v4071
    %v4776 = vadd.f32 %v4775, %v4242
    %v4777 = vadd.f32 %v4776, %v4244
    %v4778 = vsel %vm1546, %v4403, 0.0
    %v4779 = vadd.f32 %v4777, %v4778
    %4780 = vadd.xlane.f32.xlu0 %v4779
    %v4781 = vpop.xlane.xlu0 %4780
    %v4782 = vadd.f32 %v2345, %v2347
    %v4783 = vadd.f32 %v4782, %v2518
    %v4784 = vadd.f32 %v4783, %v2520
    %v4785 = vadd.f32 %v4784, %v2691
    %v4786 = vadd.f32 %v4785, %v2693
    %v4787 = vadd.f32 %v4786, %v2864
    %v4788 = vadd.f32 %v4787, %v2866
    %v4789 = vadd.f32 %v4788, %v3037
    %v4790 = vadd.f32 %v4789, %v3039
    %v4791 = vadd.f32 %v4790, %v3210
    %v4792 = vadd.f32 %v4791, %v3212
    %v4793 = vadd.f32 %v4792, %v3383
    %v4794 = vadd.f32 %v4793, %v3385
    %v4795 = vadd.f32 %v4794, %v3556
    %v4796 = vadd.f32 %v4795, %v3558
    %v4797 = vadd.f32 %v4796, %v3729
    %v4798 = vadd.f32 %v4797, %v3731
    %v4799 = vadd.f32 %v4798, %v3902
    %v4800 = vadd.f32 %v4799, %v3904
    %v4801 = vadd.f32 %v4800, %v4075
    %v4802 = vadd.f32 %v4801, %v4077
    %v4803 = vadd.f32 %v4802, %v4248
    %v4804 = vadd.f32 %v4803, %v4250
    %v4805 = vsel %vm1546, %v4408, 0.0
    %v4806 = vadd.f32 %v4804, %v4805
    %4807 = vadd.xlane.f32.xlu0 %v4806
    %v4808 = vpop.xlane.xlu0 %4807
    %v4809 = vadd.f32 %v2351, %v2353
    %v4810 = vadd.f32 %v4809, %v2524
    %v4811 = vadd.f32 %v4810, %v2526
    %v4812 = vadd.f32 %v4811, %v2697
    %v4813 = vadd.f32 %v4812, %v2699
    %v4814 = vadd.f32 %v4813, %v2870
    %v4815 = vadd.f32 %v4814, %v2872
    %v4816 = vadd.f32 %v4815, %v3043
    %v4817 = vadd.f32 %v4816, %v3045
    %v4818 = vadd.f32 %v4817, %v3216
    %v4819 = vadd.f32 %v4818, %v3218
    %v4820 = vadd.f32 %v4819, %v3389
    %v4821 = vadd.f32 %v4820, %v3391
    %v4822 = vadd.f32 %v4821, %v3562
    %v4823 = vadd.f32 %v4822, %v3564
    %v4824 = vadd.f32 %v4823, %v3735
    %v4825 = vadd.f32 %v4824, %v3737
    %v4826 = vadd.f32 %v4825, %v3908
    %v4827 = vadd.f32 %v4826, %v3910
    %v4828 = vadd.f32 %v4827, %v4081
    %v4829 = vadd.f32 %v4828, %v4083
    %v4830 = vadd.f32 %v4829, %v4254
    %v4831 = vadd.f32 %v4830, %v4256
    %v4832 = vsel %vm1546, %v4413, 0.0
    %v4833 = vadd.f32 %v4831, %v4832
    %4834 = vadd.xlane.f32.xlu0 %v4833
    %v4835 = vpop.xlane.xlu0 %4834
    %v4836 = vadd.f32 %v2357, %v2359
    %v4837 = vadd.f32 %v4836, %v2530
    %v4838 = vadd.f32 %v4837, %v2532
    %v4839 = vadd.f32 %v4838, %v2703
    %v4840 = vadd.f32 %v4839, %v2705
    %v4841 = vadd.f32 %v4840, %v2876
    %v4842 = vadd.f32 %v4841, %v2878
    %v4843 = vadd.f32 %v4842, %v3049
    %v4844 = vadd.f32 %v4843, %v3051
    %v4845 = vadd.f32 %v4844, %v3222
    %v4846 = vadd.f32 %v4845, %v3224
    %v4847 = vadd.f32 %v4846, %v3395
    %v4848 = vadd.f32 %v4847, %v3397
    %v4849 = vadd.f32 %v4848, %v3568
    %v4850 = vadd.f32 %v4849, %v3570
    %v4851 = vadd.f32 %v4850, %v3741
    %v4852 = vadd.f32 %v4851, %v3743
    %v4853 = vadd.f32 %v4852, %v3914
    %v4854 = vadd.f32 %v4853, %v3916
    %v4855 = vadd.f32 %v4854, %v4087
    %v4856 = vadd.f32 %v4855, %v4089
    %v4857 = vadd.f32 %v4856, %v4260
    %v4858 = vadd.f32 %v4857, %v4262
    %v4859 = vsel %vm1546, %v4418, 0.0
    %v4860 = vadd.f32 %v4858, %v4859
    %4861 = vadd.xlane.f32.xlu0 %v4860
    %v4862 = vpop.xlane.xlu0 %4861
    %v4863 = vadd.f32 %v2363, %v2365
    %v4864 = vadd.f32 %v4863, %v2536
    %v4865 = vadd.f32 %v4864, %v2538
    %v4866 = vadd.f32 %v4865, %v2709
    %v4867 = vadd.f32 %v4866, %v2711
    %v4868 = vadd.f32 %v4867, %v2882
    %v4869 = vadd.f32 %v4868, %v2884
    %v4870 = vadd.f32 %v4869, %v3055
    %v4871 = vadd.f32 %v4870, %v3057
    %v4872 = vadd.f32 %v4871, %v3228
    %v4873 = vadd.f32 %v4872, %v3230
    %v4874 = vadd.f32 %v4873, %v3401
    %v4875 = vadd.f32 %v4874, %v3403
    %v4876 = vadd.f32 %v4875, %v3574
    %v4877 = vadd.f32 %v4876, %v3576
    %v4878 = vadd.f32 %v4877, %v3747
    %v4879 = vadd.f32 %v4878, %v3749
    %v4880 = vadd.f32 %v4879, %v3920
    %v4881 = vadd.f32 %v4880, %v3922
    %v4882 = vadd.f32 %v4881, %v4093
    %v4883 = vadd.f32 %v4882, %v4095
    %v4884 = vadd.f32 %v4883, %v4266
    %v4885 = vadd.f32 %v4884, %v4268
    %v4886 = vsel %vm1546, %v4423, 0.0
    %v4887 = vadd.f32 %v4885, %v4886
    %4888 = vadd.xlane.f32.xlu0 %v4887
    %v4889 = vpop.xlane.xlu0 %4888
    %v4890 = vadd.f32 %v2369, %v2371
    %v4891 = vadd.f32 %v4890, %v2542
    %v4892 = vadd.f32 %v4891, %v2544
    %v4893 = vadd.f32 %v4892, %v2715
    %v4894 = vadd.f32 %v4893, %v2717
    %v4895 = vadd.f32 %v4894, %v2888
    %v4896 = vadd.f32 %v4895, %v2890
    %v4897 = vadd.f32 %v4896, %v3061
    %v4898 = vadd.f32 %v4897, %v3063
    %v4899 = vadd.f32 %v4898, %v3234
    %v4900 = vadd.f32 %v4899, %v3236
    %v4901 = vadd.f32 %v4900, %v3407
    %v4902 = vadd.f32 %v4901, %v3409
    %v4903 = vadd.f32 %v4902, %v3580
    %v4904 = vadd.f32 %v4903, %v3582
    %v4905 = vadd.f32 %v4904, %v3753
    %v4906 = vadd.f32 %v4905, %v3755
    %v4907 = vadd.f32 %v4906, %v3926
    %v4908 = vadd.f32 %v4907, %v3928
    %v4909 = vadd.f32 %v4908, %v4099
    %v4910 = vadd.f32 %v4909, %v4101
    %v4911 = vadd.f32 %v4910, %v4272
    %v4912 = vadd.f32 %v4911, %v4274
    %v4913 = vsel %vm1546, %v4428, 0.0
    %v4914 = vadd.f32 %v4912, %v4913
    %4915 = vadd.xlane.f32.xlu0 %v4914
    %v4916 = vpop.xlane.xlu0 %4915
    %v4917 = vmul.f32 %v2267, %v2267
    %v4918 = vmul.f32 %v2269, %v2269
    %v4919 = vmul.f32 %v2440, %v2440
    %v4920 = vmul.f32 %v2442, %v2442
    %v4921 = vmul.f32 %v2613, %v2613
    %v4922 = vmul.f32 %v2615, %v2615
    %v4923 = vmul.f32 %v2786, %v2786
    %v4924 = vmul.f32 %v2788, %v2788
    %v4925 = vmul.f32 %v2959, %v2959
    %v4926 = vmul.f32 %v2961, %v2961
    %v4927 = vmul.f32 %v3132, %v3132
    %v4928 = vmul.f32 %v3134, %v3134
    %v4929 = vmul.f32 %v3305, %v3305
    %v4930 = vmul.f32 %v3307, %v3307
    %v4931 = vmul.f32 %v3478, %v3478
    %v4932 = vmul.f32 %v3480, %v3480
    %v4933 = vmul.f32 %v3651, %v3651
    %v4934 = vmul.f32 %v3653, %v3653
    %v4935 = vmul.f32 %v3824, %v3824
    %v4936 = vmul.f32 %v3826, %v3826
    %v4937 = vmul.f32 %v3997, %v3997
    %v4938 = vmul.f32 %v3999, %v3999
    %v4939 = vmul.f32 %v4170, %v4170
    %v4940 = vmul.f32 %v4172, %v4172
    %v4941 = vmul.f32 %v4343, %v4343
    %v4942 = vmul.f32 %v2273, %v2273
    %v4943 = vmul.f32 %v2275, %v2275
    %v4944 = vmul.f32 %v2446, %v2446
    %v4945 = vmul.f32 %v2448, %v2448
    %v4946 = vmul.f32 %v2619, %v2619
    %v4947 = vmul.f32 %v2621, %v2621
    %v4948 = vmul.f32 %v2792, %v2792
    %v4949 = vmul.f32 %v2794, %v2794
    %v4950 = vmul.f32 %v2965, %v2965
    %v4951 = vmul.f32 %v2967, %v2967
    %v4952 = vmul.f32 %v3138, %v3138
    %v4953 = vmul.f32 %v3140, %v3140
    %v4954 = vmul.f32 %v3311, %v3311
    %v4955 = vmul.f32 %v3313, %v3313
    %v4956 = vmul.f32 %v3484, %v3484
    %v4957 = vmul.f32 %v3486, %v3486
    %v4958 = vmul.f32 %v3657, %v3657
    %v4959 = vmul.f32 %v3659, %v3659
    %v4960 = vmul.f32 %v3830, %v3830
    %v4961 = vmul.f32 %v3832, %v3832
    %v4962 = vmul.f32 %v4003, %v4003
    %v4963 = vmul.f32 %v4005, %v4005
    %v4964 = vmul.f32 %v4176, %v4176
    %v4965 = vmul.f32 %v4178, %v4178
    %v4966 = vmul.f32 %v4348, %v4348
    %v4967 = vmul.f32 %v2279, %v2279
    %v4968 = vmul.f32 %v2281, %v2281
    %v4969 = vmul.f32 %v2452, %v2452
    %v4970 = vmul.f32 %v2454, %v2454
    %v4971 = vmul.f32 %v2625, %v2625
    %v4972 = vmul.f32 %v2627, %v2627
    %v4973 = vmul.f32 %v2798, %v2798
    %v4974 = vmul.f32 %v2800, %v2800
    %v4975 = vmul.f32 %v2971, %v2971
    %v4976 = vmul.f32 %v2973, %v2973
    %v4977 = vmul.f32 %v3144, %v3144
    %v4978 = vmul.f32 %v3146, %v3146
    %v4979 = vmul.f32 %v3317, %v3317
    %v4980 = vmul.f32 %v3319, %v3319
    %v4981 = vmul.f32 %v3490, %v3490
    %v4982 = vmul.f32 %v3492, %v3492
    %v4983 = vmul.f32 %v3663, %v3663
    %v4984 = vmul.f32 %v3665, %v3665
    %v4985 = vmul.f32 %v3836, %v3836
    %v4986 = vmul.f32 %v3838, %v3838
    %v4987 = vmul.f32 %v4009, %v4009
    %v4988 = vmul.f32 %v4011, %v4011
    %v4989 = vmul.f32 %v4182, %v4182
    %v4990 = vmul.f32 %v4184, %v4184
    %v4991 = vmul.f32 %v4353, %v4353
    %v4992 = vmul.f32 %v2285, %v2285
    %v4993 = vmul.f32 %v2287, %v2287
    %v4994 = vmul.f32 %v2458, %v2458
    %v4995 = vmul.f32 %v2460, %v2460
    %v4996 = vmul.f32 %v2631, %v2631
    %v4997 = vmul.f32 %v2633, %v2633
    %v4998 = vmul.f32 %v2804, %v2804
    %v4999 = vmul.f32 %v2806, %v2806
    %v5000 = vmul.f32 %v2977, %v2977
    %v5001 = vmul.f32 %v2979, %v2979
    %v5002 = vmul.f32 %v3150, %v3150
    %v5003 = vmul.f32 %v3152, %v3152
    %v5004 = vmul.f32 %v3323, %v3323
    %v5005 = vmul.f32 %v3325, %v3325
    %v5006 = vmul.f32 %v3496, %v3496
    %v5007 = vmul.f32 %v3498, %v3498
    %v5008 = vmul.f32 %v3669, %v3669
    %v5009 = vmul.f32 %v3671, %v3671
    %v5010 = vmul.f32 %v3842, %v3842
    %v5011 = vmul.f32 %v3844, %v3844
    %v5012 = vmul.f32 %v4015, %v4015
    %v5013 = vmul.f32 %v4017, %v4017
    %v5014 = vmul.f32 %v4188, %v4188
    %v5015 = vmul.f32 %v4190, %v4190
    %v5016 = vmul.f32 %v4358, %v4358
    %v5017 = vmul.f32 %v2291, %v2291
    %v5018 = vmul.f32 %v2293, %v2293
    %v5019 = vmul.f32 %v2464, %v2464
    %v5020 = vmul.f32 %v2466, %v2466
    %v5021 = vmul.f32 %v2637, %v2637
    %v5022 = vmul.f32 %v2639, %v2639
    %v5023 = vmul.f32 %v2810, %v2810
    %v5024 = vmul.f32 %v2812, %v2812
    %v5025 = vmul.f32 %v2983, %v2983
    %v5026 = vmul.f32 %v2985, %v2985
    %v5027 = vmul.f32 %v3156, %v3156
    %v5028 = vmul.f32 %v3158, %v3158
    %v5029 = vmul.f32 %v3329, %v3329
    %v5030 = vmul.f32 %v3331, %v3331
    %v5031 = vmul.f32 %v3502, %v3502
    %v5032 = vmul.f32 %v3504, %v3504
    %v5033 = vmul.f32 %v3675, %v3675
    %v5034 = vmul.f32 %v3677, %v3677
    %v5035 = vmul.f32 %v3848, %v3848
    %v5036 = vmul.f32 %v3850, %v3850
    %v5037 = vmul.f32 %v4021, %v4021
    %v5038 = vmul.f32 %v4023, %v4023
    %v5039 = vmul.f32 %v4194, %v4194
    %v5040 = vmul.f32 %v4196, %v4196
    %v5041 = vmul.f32 %v4363, %v4363
    %v5042 = vmul.f32 %v2297, %v2297
    %v5043 = vmul.f32 %v2299, %v2299
    %v5044 = vmul.f32 %v2470, %v2470
    %v5045 = vmul.f32 %v2472, %v2472
    %v5046 = vmul.f32 %v2643, %v2643
    %v5047 = vmul.f32 %v2645, %v2645
    %v5048 = vmul.f32 %v2816, %v2816
    %v5049 = vmul.f32 %v2818, %v2818
    %v5050 = vmul.f32 %v2989, %v2989
    %v5051 = vmul.f32 %v2991, %v2991
    %v5052 = vmul.f32 %v3162, %v3162
    %v5053 = vmul.f32 %v3164, %v3164
    %v5054 = vmul.f32 %v3335, %v3335
    %v5055 = vmul.f32 %v3337, %v3337
    %v5056 = vmul.f32 %v3508, %v3508
    %v5057 = vmul.f32 %v3510, %v3510
    %v5058 = vmul.f32 %v3681, %v3681
    %v5059 = vmul.f32 %v3683, %v3683
    %v5060 = vmul.f32 %v3854, %v3854
    %v5061 = vmul.f32 %v3856, %v3856
    %v5062 = vmul.f32 %v4027, %v4027
    %v5063 = vmul.f32 %v4029, %v4029
    %v5064 = vmul.f32 %v4200, %v4200
    %v5065 = vmul.f32 %v4202, %v4202
    %v5066 = vmul.f32 %v4368, %v4368
    %v5067 = vmul.f32 %v2303, %v2303
    %v5068 = vmul.f32 %v2305, %v2305
    %v5069 = vmul.f32 %v2476, %v2476
    %v5070 = vmul.f32 %v2478, %v2478
    %v5071 = vmul.f32 %v2649, %v2649
    %v5072 = vmul.f32 %v2651, %v2651
    %v5073 = vmul.f32 %v2822, %v2822
    %v5074 = vmul.f32 %v2824, %v2824
    %v5075 = vmul.f32 %v2995, %v2995
    %v5076 = vmul.f32 %v2997, %v2997
    %v5077 = vmul.f32 %v3168, %v3168
    %v5078 = vmul.f32 %v3170, %v3170
    %v5079 = vmul.f32 %v3341, %v3341
    %v5080 = vmul.f32 %v3343, %v3343
    %v5081 = vmul.f32 %v3514, %v3514
    %v5082 = vmul.f32 %v3516, %v3516
    %v5083 = vmul.f32 %v3687, %v3687
    %v5084 = vmul.f32 %v3689, %v3689
    %v5085 = vmul.f32 %v3860, %v3860
    %v5086 = vmul.f32 %v3862, %v3862
    %v5087 = vmul.f32 %v4033, %v4033
    %v5088 = vmul.f32 %v4035, %v4035
    %v5089 = vmul.f32 %v4206, %v4206
    %v5090 = vmul.f32 %v4208, %v4208
    %v5091 = vmul.f32 %v4373, %v4373
    %v5092 = vmul.f32 %v2309, %v2309
    %v5093 = vmul.f32 %v2311, %v2311
    %v5094 = vmul.f32 %v2482, %v2482
    %v5095 = vmul.f32 %v2484, %v2484
    %v5096 = vmul.f32 %v2655, %v2655
    %v5097 = vmul.f32 %v2657, %v2657
    %v5098 = vmul.f32 %v2828, %v2828
    %v5099 = vmul.f32 %v2830, %v2830
    %v5100 = vmul.f32 %v3001, %v3001
    %v5101 = vmul.f32 %v3003, %v3003
    %v5102 = vmul.f32 %v3174, %v3174
    %v5103 = vmul.f32 %v3176, %v3176
    %v5104 = vmul.f32 %v3347, %v3347
    %v5105 = vmul.f32 %v3349, %v3349
    %v5106 = vmul.f32 %v3520, %v3520
    %v5107 = vmul.f32 %v3522, %v3522
    %v5108 = vmul.f32 %v3693, %v3693
    %v5109 = vmul.f32 %v3695, %v3695
    %v5110 = vmul.f32 %v3866, %v3866
    %v5111 = vmul.f32 %v3868, %v3868
    %v5112 = vmul.f32 %v4039, %v4039
    %v5113 = vmul.f32 %v4041, %v4041
    %v5114 = vmul.f32 %v4212, %v4212
    %v5115 = vmul.f32 %v4214, %v4214
    %v5116 = vmul.f32 %v4378, %v4378
    %v5117 = vmul.f32 %v2315, %v2315
    %v5118 = vmul.f32 %v2317, %v2317
    %v5119 = vmul.f32 %v2488, %v2488
    %v5120 = vmul.f32 %v2490, %v2490
    %v5121 = vmul.f32 %v2661, %v2661
    %v5122 = vmul.f32 %v2663, %v2663
    %v5123 = vmul.f32 %v2834, %v2834
    %v5124 = vmul.f32 %v2836, %v2836
    %v5125 = vmul.f32 %v3007, %v3007
    %v5126 = vmul.f32 %v3009, %v3009
    %v5127 = vmul.f32 %v3180, %v3180
    %v5128 = vmul.f32 %v3182, %v3182
    %v5129 = vmul.f32 %v3353, %v3353
    %v5130 = vmul.f32 %v3355, %v3355
    %v5131 = vmul.f32 %v3526, %v3526
    %v5132 = vmul.f32 %v3528, %v3528
    %v5133 = vmul.f32 %v3699, %v3699
    %v5134 = vmul.f32 %v3701, %v3701
    %v5135 = vmul.f32 %v3872, %v3872
    %v5136 = vmul.f32 %v3874, %v3874
    %v5137 = vmul.f32 %v4045, %v4045
    %v5138 = vmul.f32 %v4047, %v4047
    %v5139 = vmul.f32 %v4218, %v4218
    %v5140 = vmul.f32 %v4220, %v4220
    %v5141 = vmul.f32 %v4383, %v4383
    %v5142 = vmul.f32 %v2321, %v2321
    %v5143 = vmul.f32 %v2323, %v2323
    %v5144 = vmul.f32 %v2494, %v2494
    %v5145 = vmul.f32 %v2496, %v2496
    %v5146 = vmul.f32 %v2667, %v2667
    %v5147 = vmul.f32 %v2669, %v2669
    %v5148 = vmul.f32 %v2840, %v2840
    %v5149 = vmul.f32 %v2842, %v2842
    %v5150 = vmul.f32 %v3013, %v3013
    %v5151 = vmul.f32 %v3015, %v3015
    %v5152 = vmul.f32 %v3186, %v3186
    %v5153 = vmul.f32 %v3188, %v3188
    %v5154 = vmul.f32 %v3359, %v3359
    %v5155 = vmul.f32 %v3361, %v3361
    %v5156 = vmul.f32 %v3532, %v3532
    %v5157 = vmul.f32 %v3534, %v3534
    %v5158 = vmul.f32 %v3705, %v3705
    %v5159 = vmul.f32 %v3707, %v3707
    %v5160 = vmul.f32 %v3878, %v3878
    %v5161 = vmul.f32 %v3880, %v3880
    %v5162 = vmul.f32 %v4051, %v4051
    %v5163 = vmul.f32 %v4053, %v4053
    %v5164 = vmul.f32 %v4224, %v4224
    %v5165 = vmul.f32 %v4226, %v4226
    %v5166 = vmul.f32 %v4388, %v4388
    %v5167 = vmul.f32 %v2327, %v2327
    %v5168 = vmul.f32 %v2329, %v2329
    %v5169 = vmul.f32 %v2500, %v2500
    %v5170 = vmul.f32 %v2502, %v2502
    %v5171 = vmul.f32 %v2673, %v2673
    %v5172 = vmul.f32 %v2675, %v2675
    %v5173 = vmul.f32 %v2846, %v2846
    %v5174 = vmul.f32 %v2848, %v2848
    %v5175 = vmul.f32 %v3019, %v3019
    %v5176 = vmul.f32 %v3021, %v3021
    %v5177 = vmul.f32 %v3192, %v3192
    %v5178 = vmul.f32 %v3194, %v3194
    %v5179 = vmul.f32 %v3365, %v3365
    %v5180 = vmul.f32 %v3367, %v3367
    %v5181 = vmul.f32 %v3538, %v3538
    %v5182 = vmul.f32 %v3540, %v3540
    %v5183 = vmul.f32 %v3711, %v3711
    %v5184 = vmul.f32 %v3713, %v3713
    %v5185 = vmul.f32 %v3884, %v3884
    %v5186 = vmul.f32 %v3886, %v3886
    %v5187 = vmul.f32 %v4057, %v4057
    %v5188 = vmul.f32 %v4059, %v4059
    %v5189 = vmul.f32 %v4230, %v4230
    %v5190 = vmul.f32 %v4232, %v4232
    %v5191 = vmul.f32 %v4393, %v4393
    %v5192 = vmul.f32 %v2333, %v2333
    %v5193 = vmul.f32 %v2335, %v2335
    %v5194 = vmul.f32 %v2506, %v2506
    %v5195 = vmul.f32 %v2508, %v2508
    %v5196 = vmul.f32 %v2679, %v2679
    %v5197 = vmul.f32 %v2681, %v2681
    %v5198 = vmul.f32 %v2852, %v2852
    %v5199 = vmul.f32 %v2854, %v2854
    %v5200 = vmul.f32 %v3025, %v3025
    %v5201 = vmul.f32 %v3027, %v3027
    %v5202 = vmul.f32 %v3198, %v3198
    %v5203 = vmul.f32 %v3200, %v3200
    %v5204 = vmul.f32 %v3371, %v3371
    %v5205 = vmul.f32 %v3373, %v3373
    %v5206 = vmul.f32 %v3544, %v3544
    %v5207 = vmul.f32 %v3546, %v3546
    %v5208 = vmul.f32 %v3717, %v3717
    %v5209 = vmul.f32 %v3719, %v3719
    %v5210 = vmul.f32 %v3890, %v3890
    %v5211 = vmul.f32 %v3892, %v3892
    %v5212 = vmul.f32 %v4063, %v4063
    %v5213 = vmul.f32 %v4065, %v4065
    %v5214 = vmul.f32 %v4236, %v4236
    %v5215 = vmul.f32 %v4238, %v4238
    %v5216 = vmul.f32 %v4398, %v4398
    %v5217 = vmul.f32 %v2339, %v2339
    %v5218 = vmul.f32 %v2341, %v2341
    %v5219 = vmul.f32 %v2512, %v2512
    %v5220 = vmul.f32 %v2514, %v2514
    %v5221 = vmul.f32 %v2685, %v2685
    %v5222 = vmul.f32 %v2687, %v2687
    %v5223 = vmul.f32 %v2858, %v2858
    %v5224 = vmul.f32 %v2860, %v2860
    %v5225 = vmul.f32 %v3031, %v3031
    %v5226 = vmul.f32 %v3033, %v3033
    %v5227 = vmul.f32 %v3204, %v3204
    %v5228 = vmul.f32 %v3206, %v3206
    %v5229 = vmul.f32 %v3377, %v3377
    %v5230 = vmul.f32 %v3379, %v3379
    %v5231 = vmul.f32 %v3550, %v3550
    %v5232 = vmul.f32 %v3552, %v3552
    %v5233 = vmul.f32 %v3723, %v3723
    %v5234 = vmul.f32 %v3725, %v3725
    %v5235 = vmul.f32 %v3896, %v3896
    %v5236 = vmul.f32 %v3898, %v3898
    %v5237 = vmul.f32 %v4069, %v4069
    %v5238 = vmul.f32 %v4071, %v4071
    %v5239 = vmul.f32 %v4242, %v4242
    %v5240 = vmul.f32 %v4244, %v4244
    %v5241 = vmul.f32 %v4403, %v4403
    %v5242 = vmul.f32 %v2345, %v2345
    %v5243 = vmul.f32 %v2347, %v2347
    %v5244 = vmul.f32 %v2518, %v2518
    %v5245 = vmul.f32 %v2520, %v2520
    %v5246 = vmul.f32 %v2691, %v2691
    %v5247 = vmul.f32 %v2693, %v2693
    %v5248 = vmul.f32 %v2864, %v2864
    %v5249 = vmul.f32 %v2866, %v2866
    %v5250 = vmul.f32 %v3037, %v3037
    %v5251 = vmul.f32 %v3039, %v3039
    %v5252 = vmul.f32 %v3210, %v3210
    %v5253 = vmul.f32 %v3212, %v3212
    %v5254 = vmul.f32 %v3383, %v3383
    %v5255 = vmul.f32 %v3385, %v3385
    %v5256 = vmul.f32 %v3556, %v3556
    %v5257 = vmul.f32 %v3558, %v3558
    %v5258 = vmul.f32 %v3729, %v3729
    %v5259 = vmul.f32 %v3731, %v3731
    %v5260 = vmul.f32 %v3902, %v3902
    %v5261 = vmul.f32 %v3904, %v3904
    %v5262 = vmul.f32 %v4075, %v4075
    %v5263 = vmul.f32 %v4077, %v4077
    %v5264 = vmul.f32 %v4248, %v4248
    %v5265 = vmul.f32 %v4250, %v4250
    %v5266 = vmul.f32 %v4408, %v4408
    %v5267 = vmul.f32 %v2351, %v2351
    %v5268 = vmul.f32 %v2353, %v2353
    %v5269 = vmul.f32 %v2524, %v2524
    %v5270 = vmul.f32 %v2526, %v2526
    %v5271 = vmul.f32 %v2697, %v2697
    %v5272 = vmul.f32 %v2699, %v2699
    %v5273 = vmul.f32 %v2870, %v2870
    %v5274 = vmul.f32 %v2872, %v2872
    %v5275 = vmul.f32 %v3043, %v3043
    %v5276 = vmul.f32 %v3045, %v3045
    %v5277 = vmul.f32 %v3216, %v3216
    %v5278 = vmul.f32 %v3218, %v3218
    %v5279 = vmul.f32 %v3389, %v3389
    %v5280 = vmul.f32 %v3391, %v3391
    %v5281 = vmul.f32 %v3562, %v3562
    %v5282 = vmul.f32 %v3564, %v3564
    %v5283 = vmul.f32 %v3735, %v3735
    %v5284 = vmul.f32 %v3737, %v3737
    %v5285 = vmul.f32 %v3908, %v3908
    %v5286 = vmul.f32 %v3910, %v3910
    %v5287 = vmul.f32 %v4081, %v4081
    %v5288 = vmul.f32 %v4083, %v4083
    %v5289 = vmul.f32 %v4254, %v4254
    %v5290 = vmul.f32 %v4256, %v4256
    %v5291 = vmul.f32 %v4413, %v4413
    %v5292 = vmul.f32 %v2357, %v2357
    %v5293 = vmul.f32 %v2359, %v2359
    %v5294 = vmul.f32 %v2530, %v2530
    %v5295 = vmul.f32 %v2532, %v2532
    %v5296 = vmul.f32 %v2703, %v2703
    %v5297 = vmul.f32 %v2705, %v2705
    %v5298 = vmul.f32 %v2876, %v2876
    %v5299 = vmul.f32 %v2878, %v2878
    %v5300 = vmul.f32 %v3049, %v3049
    %v5301 = vmul.f32 %v3051, %v3051
    %v5302 = vmul.f32 %v3222, %v3222
    %v5303 = vmul.f32 %v3224, %v3224
    %v5304 = vmul.f32 %v3395, %v3395
    %v5305 = vmul.f32 %v3397, %v3397
    %v5306 = vmul.f32 %v3568, %v3568
    %v5307 = vmul.f32 %v3570, %v3570
    %v5308 = vmul.f32 %v3741, %v3741
    %v5309 = vmul.f32 %v3743, %v3743
    %v5310 = vmul.f32 %v3914, %v3914
    %v5311 = vmul.f32 %v3916, %v3916
    %v5312 = vmul.f32 %v4087, %v4087
    %v5313 = vmul.f32 %v4089, %v4089
    %v5314 = vmul.f32 %v4260, %v4260
    %v5315 = vmul.f32 %v4262, %v4262
    %v5316 = vmul.f32 %v4418, %v4418
    %v5317 = vmul.f32 %v2363, %v2363
    %v5318 = vmul.f32 %v2365, %v2365
    %v5319 = vmul.f32 %v2536, %v2536
    %v5320 = vmul.f32 %v2538, %v2538
    %v5321 = vmul.f32 %v2709, %v2709
    %v5322 = vmul.f32 %v2711, %v2711
    %v5323 = vmul.f32 %v2882, %v2882
    %v5324 = vmul.f32 %v2884, %v2884
    %v5325 = vmul.f32 %v3055, %v3055
    %v5326 = vmul.f32 %v3057, %v3057
    %v5327 = vmul.f32 %v3228, %v3228
    %v5328 = vmul.f32 %v3230, %v3230
    %v5329 = vmul.f32 %v3401, %v3401
    %v5330 = vmul.f32 %v3403, %v3403
    %v5331 = vmul.f32 %v3574, %v3574
    %v5332 = vmul.f32 %v3576, %v3576
    %v5333 = vmul.f32 %v3747, %v3747
    %v5334 = vmul.f32 %v3749, %v3749
    %v5335 = vmul.f32 %v3920, %v3920
    %v5336 = vmul.f32 %v3922, %v3922
    %v5337 = vmul.f32 %v4093, %v4093
    %v5338 = vmul.f32 %v4095, %v4095
    %v5339 = vmul.f32 %v4266, %v4266
    %v5340 = vmul.f32 %v4268, %v4268
    %v5341 = vmul.f32 %v4423, %v4423
    %v5342 = vmul.f32 %v2369, %v2369
    %v5343 = vmul.f32 %v2371, %v2371
    %v5344 = vmul.f32 %v2542, %v2542
    %v5345 = vmul.f32 %v2544, %v2544
    %v5346 = vmul.f32 %v2715, %v2715
    %v5347 = vmul.f32 %v2717, %v2717
    %v5348 = vmul.f32 %v2888, %v2888
    %v5349 = vmul.f32 %v2890, %v2890
    %v5350 = vmul.f32 %v3061, %v3061
    %v5351 = vmul.f32 %v3063, %v3063
    %v5352 = vmul.f32 %v3234, %v3234
    %v5353 = vmul.f32 %v3236, %v3236
    %v5354 = vmul.f32 %v3407, %v3407
    %v5355 = vmul.f32 %v3409, %v3409
    %v5356 = vmul.f32 %v3580, %v3580
    %v5357 = vmul.f32 %v3582, %v3582
    %v5358 = vmul.f32 %v3753, %v3753
    %v5359 = vmul.f32 %v3755, %v3755
    %v5360 = vmul.f32 %v3926, %v3926
    %v5361 = vmul.f32 %v3928, %v3928
    %v5362 = vmul.f32 %v4099, %v4099
    %v5363 = vmul.f32 %v4101, %v4101
    %v5364 = vmul.f32 %v4272, %v4272
    %v5365 = vmul.f32 %v4274, %v4274
    %v5366 = vmul.f32 %v4428, %v4428
    %v5367 = vadd.f32 %v4917, %v4918
    %v5368 = vadd.f32 %v5367, %v4919
    %v5369 = vadd.f32 %v5368, %v4920
    %v5370 = vadd.f32 %v5369, %v4921
    %v5371 = vadd.f32 %v5370, %v4922
    %v5372 = vadd.f32 %v5371, %v4923
    %v5373 = vadd.f32 %v5372, %v4924
    %v5374 = vadd.f32 %v5373, %v4925
    %v5375 = vadd.f32 %v5374, %v4926
    %v5376 = vadd.f32 %v5375, %v4927
    %v5377 = vadd.f32 %v5376, %v4928
    %v5378 = vadd.f32 %v5377, %v4929
    %v5379 = vadd.f32 %v5378, %v4930
    %v5380 = vadd.f32 %v5379, %v4931
    %v5381 = vadd.f32 %v5380, %v4932
    %v5382 = vadd.f32 %v5381, %v4933
    %v5383 = vadd.f32 %v5382, %v4934
    %v5384 = vadd.f32 %v5383, %v4935
    %v5385 = vadd.f32 %v5384, %v4936
    %v5386 = vadd.f32 %v5385, %v4937
    %v5387 = vadd.f32 %v5386, %v4938
    %v5388 = vadd.f32 %v5387, %v4939
    %v5389 = vadd.f32 %v5388, %v4940
    %v5390 = vsel %vm1546, %v4941, 0.0
    %v5391 = vadd.f32 %v5389, %v5390
    %5392 = vadd.xlane.f32.xlu0 %v5391
    %v5393 = vpop.xlane.xlu0 %5392
    %v5394 = vadd.f32 %v4942, %v4943
    %v5395 = vadd.f32 %v5394, %v4944
    %v5396 = vadd.f32 %v5395, %v4945
    %v5397 = vadd.f32 %v5396, %v4946
    %v5398 = vadd.f32 %v5397, %v4947
    %v5399 = vadd.f32 %v5398, %v4948
    %v5400 = vadd.f32 %v5399, %v4949
    %v5401 = vadd.f32 %v5400, %v4950
    %v5402 = vadd.f32 %v5401, %v4951
    %v5403 = vadd.f32 %v5402, %v4952
    %v5404 = vadd.f32 %v5403, %v4953
    %v5405 = vadd.f32 %v5404, %v4954
    %v5406 = vadd.f32 %v5405, %v4955
    %v5407 = vadd.f32 %v5406, %v4956
    %v5408 = vadd.f32 %v5407, %v4957
    %v5409 = vadd.f32 %v5408, %v4958
    %v5410 = vadd.f32 %v5409, %v4959
    %v5411 = vadd.f32 %v5410, %v4960
    %v5412 = vadd.f32 %v5411, %v4961
    %v5413 = vadd.f32 %v5412, %v4962
    %v5414 = vadd.f32 %v5413, %v4963
    %v5415 = vadd.f32 %v5414, %v4964
    %v5416 = vadd.f32 %v5415, %v4965
    %v5417 = vsel %vm1546, %v4966, 0.0
    %v5418 = vadd.f32 %v5416, %v5417
    %5419 = vadd.xlane.f32.xlu0 %v5418
    %v5420 = vpop.xlane.xlu0 %5419
    %v5421 = vadd.f32 %v4967, %v4968
    %v5422 = vadd.f32 %v5421, %v4969
    %v5423 = vadd.f32 %v5422, %v4970
    %v5424 = vadd.f32 %v5423, %v4971
    %v5425 = vadd.f32 %v5424, %v4972
    %v5426 = vadd.f32 %v5425, %v4973
    %v5427 = vadd.f32 %v5426, %v4974
    %v5428 = vadd.f32 %v5427, %v4975
    %v5429 = vadd.f32 %v5428, %v4976
    %v5430 = vadd.f32 %v5429, %v4977
    %v5431 = vadd.f32 %v5430, %v4978
    %v5432 = vadd.f32 %v5431, %v4979
    %v5433 = vadd.f32 %v5432, %v4980
    %v5434 = vadd.f32 %v5433, %v4981
    %v5435 = vadd.f32 %v5434, %v4982
    %v5436 = vadd.f32 %v5435, %v4983
    %v5437 = vadd.f32 %v5436, %v4984
    %v5438 = vadd.f32 %v5437, %v4985
    %v5439 = vadd.f32 %v5438, %v4986
    %v5440 = vadd.f32 %v5439, %v4987
    %v5441 = vadd.f32 %v5440, %v4988
    %v5442 = vadd.f32 %v5441, %v4989
    %v5443 = vadd.f32 %v5442, %v4990
    %v5444 = vsel %vm1546, %v4991, 0.0
    %v5445 = vadd.f32 %v5443, %v5444
    %5446 = vadd.xlane.f32.xlu0 %v5445
    %v5447 = vpop.xlane.xlu0 %5446
    %v5448 = vadd.f32 %v4992, %v4993
    %v5449 = vadd.f32 %v5448, %v4994
    %v5450 = vadd.f32 %v5449, %v4995
    %v5451 = vadd.f32 %v5450, %v4996
    %v5452 = vadd.f32 %v5451, %v4997
    %v5453 = vadd.f32 %v5452, %v4998
    %v5454 = vadd.f32 %v5453, %v4999
    %v5455 = vadd.f32 %v5454, %v5000
    %v5456 = vadd.f32 %v5455, %v5001
    %v5457 = vadd.f32 %v5456, %v5002
    %v5458 = vadd.f32 %v5457, %v5003
    %v5459 = vadd.f32 %v5458, %v5004
    %v5460 = vadd.f32 %v5459, %v5005
    %v5461 = vadd.f32 %v5460, %v5006
    %v5462 = vadd.f32 %v5461, %v5007
    %v5463 = vadd.f32 %v5462, %v5008
    %v5464 = vadd.f32 %v5463, %v5009
    %v5465 = vadd.f32 %v5464, %v5010
    %v5466 = vadd.f32 %v5465, %v5011
    %v5467 = vadd.f32 %v5466, %v5012
    %v5468 = vadd.f32 %v5467, %v5013
    %v5469 = vadd.f32 %v5468, %v5014
    %v5470 = vadd.f32 %v5469, %v5015
    %v5471 = vsel %vm1546, %v5016, 0.0
    %v5472 = vadd.f32 %v5470, %v5471
    %5473 = vadd.xlane.f32.xlu0 %v5472
    %v5474 = vpop.xlane.xlu0 %5473
    %v5475 = vadd.f32 %v5017, %v5018
    %v5476 = vadd.f32 %v5475, %v5019
    %v5477 = vadd.f32 %v5476, %v5020
    %v5478 = vadd.f32 %v5477, %v5021
    %v5479 = vadd.f32 %v5478, %v5022
    %v5480 = vadd.f32 %v5479, %v5023
    %v5481 = vadd.f32 %v5480, %v5024
    %v5482 = vadd.f32 %v5481, %v5025
    %v5483 = vadd.f32 %v5482, %v5026
    %v5484 = vadd.f32 %v5483, %v5027
    %v5485 = vadd.f32 %v5484, %v5028
    %v5486 = vadd.f32 %v5485, %v5029
    %v5487 = vadd.f32 %v5486, %v5030
    %v5488 = vadd.f32 %v5487, %v5031
    %v5489 = vadd.f32 %v5488, %v5032
    %v5490 = vadd.f32 %v5489, %v5033
    %v5491 = vadd.f32 %v5490, %v5034
    %v5492 = vadd.f32 %v5491, %v5035
    %v5493 = vadd.f32 %v5492, %v5036
    %v5494 = vadd.f32 %v5493, %v5037
    %v5495 = vadd.f32 %v5494, %v5038
    %v5496 = vadd.f32 %v5495, %v5039
    %v5497 = vadd.f32 %v5496, %v5040
    %v5498 = vsel %vm1546, %v5041, 0.0
    %v5499 = vadd.f32 %v5497, %v5498
    %5500 = vadd.xlane.f32.xlu0 %v5499
    %v5501 = vpop.xlane.xlu0 %5500
    %v5502 = vadd.f32 %v5042, %v5043
    %v5503 = vadd.f32 %v5502, %v5044
    %v5504 = vadd.f32 %v5503, %v5045
    %v5505 = vadd.f32 %v5504, %v5046
    %v5506 = vadd.f32 %v5505, %v5047
    %v5507 = vadd.f32 %v5506, %v5048
    %v5508 = vadd.f32 %v5507, %v5049
    %v5509 = vadd.f32 %v5508, %v5050
    %v5510 = vadd.f32 %v5509, %v5051
    %v5511 = vadd.f32 %v5510, %v5052
    %v5512 = vadd.f32 %v5511, %v5053
    %v5513 = vadd.f32 %v5512, %v5054
    %v5514 = vadd.f32 %v5513, %v5055
    %v5515 = vadd.f32 %v5514, %v5056
    %v5516 = vadd.f32 %v5515, %v5057
    %v5517 = vadd.f32 %v5516, %v5058
    %v5518 = vadd.f32 %v5517, %v5059
    %v5519 = vadd.f32 %v5518, %v5060
    %v5520 = vadd.f32 %v5519, %v5061
    %v5521 = vadd.f32 %v5520, %v5062
    %v5522 = vadd.f32 %v5521, %v5063
    %v5523 = vadd.f32 %v5522, %v5064
    %v5524 = vadd.f32 %v5523, %v5065
    %v5525 = vsel %vm1546, %v5066, 0.0
    %v5526 = vadd.f32 %v5524, %v5525
    %5527 = vadd.xlane.f32.xlu0 %v5526
    %v5528 = vpop.xlane.xlu0 %5527
    %v5529 = vadd.f32 %v5067, %v5068
    %v5530 = vadd.f32 %v5529, %v5069
    %v5531 = vadd.f32 %v5530, %v5070
    %v5532 = vadd.f32 %v5531, %v5071
    %v5533 = vadd.f32 %v5532, %v5072
    %v5534 = vadd.f32 %v5533, %v5073
    %v5535 = vadd.f32 %v5534, %v5074
    %v5536 = vadd.f32 %v5535, %v5075
    %v5537 = vadd.f32 %v5536, %v5076
    %v5538 = vadd.f32 %v5537, %v5077
    %v5539 = vadd.f32 %v5538, %v5078
    %v5540 = vadd.f32 %v5539, %v5079
    %v5541 = vadd.f32 %v5540, %v5080
    %v5542 = vadd.f32 %v5541, %v5081
    %v5543 = vadd.f32 %v5542, %v5082
    %v5544 = vadd.f32 %v5543, %v5083
    %v5545 = vadd.f32 %v5544, %v5084
    %v5546 = vadd.f32 %v5545, %v5085
    %v5547 = vadd.f32 %v5546, %v5086
    %v5548 = vadd.f32 %v5547, %v5087
    %v5549 = vadd.f32 %v5548, %v5088
    %v5550 = vadd.f32 %v5549, %v5089
    %v5551 = vadd.f32 %v5550, %v5090
    %v5552 = vsel %vm1546, %v5091, 0.0
    %v5553 = vadd.f32 %v5551, %v5552
    %5554 = vadd.xlane.f32.xlu0 %v5553
    %v5555 = vpop.xlane.xlu0 %5554
    %v5556 = vadd.f32 %v5092, %v5093
    %v5557 = vadd.f32 %v5556, %v5094
    %v5558 = vadd.f32 %v5557, %v5095
    %v5559 = vadd.f32 %v5558, %v5096
    %v5560 = vadd.f32 %v5559, %v5097
    %v5561 = vadd.f32 %v5560, %v5098
    %v5562 = vadd.f32 %v5561, %v5099
    %v5563 = vadd.f32 %v5562, %v5100
    %v5564 = vadd.f32 %v5563, %v5101
    %v5565 = vadd.f32 %v5564, %v5102
    %v5566 = vadd.f32 %v5565, %v5103
    %v5567 = vadd.f32 %v5566, %v5104
    %v5568 = vadd.f32 %v5567, %v5105
    %v5569 = vadd.f32 %v5568, %v5106
    %v5570 = vadd.f32 %v5569, %v5107
    %v5571 = vadd.f32 %v5570, %v5108
    %v5572 = vadd.f32 %v5571, %v5109
    %v5573 = vadd.f32 %v5572, %v5110
    %v5574 = vadd.f32 %v5573, %v5111
    %v5575 = vadd.f32 %v5574, %v5112
    %v5576 = vadd.f32 %v5575, %v5113
    %v5577 = vadd.f32 %v5576, %v5114
    %v5578 = vadd.f32 %v5577, %v5115
    %v5579 = vsel %vm1546, %v5116, 0.0
    %v5580 = vadd.f32 %v5578, %v5579
    %5581 = vadd.xlane.f32.xlu0 %v5580
    %v5582 = vpop.xlane.xlu0 %5581
    %v5583 = vadd.f32 %v5117, %v5118
    %v5584 = vadd.f32 %v5583, %v5119
    %v5585 = vadd.f32 %v5584, %v5120
    %v5586 = vadd.f32 %v5585, %v5121
    %v5587 = vadd.f32 %v5586, %v5122
    %v5588 = vadd.f32 %v5587, %v5123
    %v5589 = vadd.f32 %v5588, %v5124
    %v5590 = vadd.f32 %v5589, %v5125
    %v5591 = vadd.f32 %v5590, %v5126
    %v5592 = vadd.f32 %v5591, %v5127
    %v5593 = vadd.f32 %v5592, %v5128
    %v5594 = vadd.f32 %v5593, %v5129
    %v5595 = vadd.f32 %v5594, %v5130
    %v5596 = vadd.f32 %v5595, %v5131
    %v5597 = vadd.f32 %v5596, %v5132
    %v5598 = vadd.f32 %v5597, %v5133
    %v5599 = vadd.f32 %v5598, %v5134
    %v5600 = vadd.f32 %v5599, %v5135
    %v5601 = vadd.f32 %v5600, %v5136
    %v5602 = vadd.f32 %v5601, %v5137
    %v5603 = vadd.f32 %v5602, %v5138
    %v5604 = vadd.f32 %v5603, %v5139
    %v5605 = vadd.f32 %v5604, %v5140
    %v5606 = vsel %vm1546, %v5141, 0.0
    %v5607 = vadd.f32 %v5605, %v5606
    %5608 = vadd.xlane.f32.xlu0 %v5607
    %v5609 = vpop.xlane.xlu0 %5608
    %v5610 = vadd.f32 %v5142, %v5143
    %v5611 = vadd.f32 %v5610, %v5144
    %v5612 = vadd.f32 %v5611, %v5145
    %v5613 = vadd.f32 %v5612, %v5146
    %v5614 = vadd.f32 %v5613, %v5147
    %v5615 = vadd.f32 %v5614, %v5148
    %v5616 = vadd.f32 %v5615, %v5149
    %v5617 = vadd.f32 %v5616, %v5150
    %v5618 = vadd.f32 %v5617, %v5151
    %v5619 = vadd.f32 %v5618, %v5152
    %v5620 = vadd.f32 %v5619, %v5153
    %v5621 = vadd.f32 %v5620, %v5154
    %v5622 = vadd.f32 %v5621, %v5155
    %v5623 = vadd.f32 %v5622, %v5156
    %v5624 = vadd.f32 %v5623, %v5157
    %v5625 = vadd.f32 %v5624, %v5158
    %v5626 = vadd.f32 %v5625, %v5159
    %v5627 = vadd.f32 %v5626, %v5160
    %v5628 = vadd.f32 %v5627, %v5161
    %v5629 = vadd.f32 %v5628, %v5162
    %v5630 = vadd.f32 %v5629, %v5163
    %v5631 = vadd.f32 %v5630, %v5164
    %v5632 = vadd.f32 %v5631, %v5165
    %v5633 = vsel %vm1546, %v5166, 0.0
    %v5634 = vadd.f32 %v5632, %v5633
    %5635 = vadd.xlane.f32.xlu0 %v5634
    %v5636 = vpop.xlane.xlu0 %5635
    %v5637 = vadd.f32 %v5167, %v5168
    %v5638 = vadd.f32 %v5637, %v5169
    %v5639 = vadd.f32 %v5638, %v5170
    %v5640 = vadd.f32 %v5639, %v5171
    %v5641 = vadd.f32 %v5640, %v5172
    %v5642 = vadd.f32 %v5641, %v5173
    %v5643 = vadd.f32 %v5642, %v5174
    %v5644 = vadd.f32 %v5643, %v5175
    %v5645 = vadd.f32 %v5644, %v5176
    %v5646 = vadd.f32 %v5645, %v5177
    %v5647 = vadd.f32 %v5646, %v5178
    %v5648 = vadd.f32 %v5647, %v5179
    %v5649 = vadd.f32 %v5648, %v5180
    %v5650 = vadd.f32 %v5649, %v5181
    %v5651 = vadd.f32 %v5650, %v5182
    %v5652 = vadd.f32 %v5651, %v5183
    %v5653 = vadd.f32 %v5652, %v5184
    %v5654 = vadd.f32 %v5653, %v5185
    %v5655 = vadd.f32 %v5654, %v5186
    %v5656 = vadd.f32 %v5655, %v5187
    %v5657 = vadd.f32 %v5656, %v5188
    %v5658 = vadd.f32 %v5657, %v5189
    %v5659 = vadd.f32 %v5658, %v5190
    %v5660 = vsel %vm1546, %v5191, 0.0
    %v5661 = vadd.f32 %v5659, %v5660
    %5662 = vadd.xlane.f32.xlu0 %v5661
    %v5663 = vpop.xlane.xlu0 %5662
    %v5664 = vadd.f32 %v5192, %v5193
    %v5665 = vadd.f32 %v5664, %v5194
    %v5666 = vadd.f32 %v5665, %v5195
    %v5667 = vadd.f32 %v5666, %v5196
    %v5668 = vadd.f32 %v5667, %v5197
    %v5669 = vadd.f32 %v5668, %v5198
    %v5670 = vadd.f32 %v5669, %v5199
    %v5671 = vadd.f32 %v5670, %v5200
    %v5672 = vadd.f32 %v5671, %v5201
    %v5673 = vadd.f32 %v5672, %v5202
    %v5674 = vadd.f32 %v5673, %v5203
    %v5675 = vadd.f32 %v5674, %v5204
    %v5676 = vadd.f32 %v5675, %v5205
    %v5677 = vadd.f32 %v5676, %v5206
    %v5678 = vadd.f32 %v5677, %v5207
    %v5679 = vadd.f32 %v5678, %v5208
    %v5680 = vadd.f32 %v5679, %v5209
    %v5681 = vadd.f32 %v5680, %v5210
    %v5682 = vadd.f32 %v5681, %v5211
    %v5683 = vadd.f32 %v5682, %v5212
    %v5684 = vadd.f32 %v5683, %v5213
    %v5685 = vadd.f32 %v5684, %v5214
    %v5686 = vadd.f32 %v5685, %v5215
    %v5687 = vsel %vm1546, %v5216, 0.0
    %v5688 = vadd.f32 %v5686, %v5687
    %5689 = vadd.xlane.f32.xlu0 %v5688
    %v5690 = vpop.xlane.xlu0 %5689
    %v5691 = vadd.f32 %v5217, %v5218
    %v5692 = vadd.f32 %v5691, %v5219
    %v5693 = vadd.f32 %v5692, %v5220
    %v5694 = vadd.f32 %v5693, %v5221
    %v5695 = vadd.f32 %v5694, %v5222
    %v5696 = vadd.f32 %v5695, %v5223
    %v5697 = vadd.f32 %v5696, %v5224
    %v5698 = vadd.f32 %v5697, %v5225
    %v5699 = vadd.f32 %v5698, %v5226
    %v5700 = vadd.f32 %v5699, %v5227
    %v5701 = vadd.f32 %v5700, %v5228
    %v5702 = vadd.f32 %v5701, %v5229
    %v5703 = vadd.f32 %v5702, %v5230
    %v5704 = vadd.f32 %v5703, %v5231
    %v5705 = vadd.f32 %v5704, %v5232
    %v5706 = vadd.f32 %v5705, %v5233
    %v5707 = vadd.f32 %v5706, %v5234
    %v5708 = vadd.f32 %v5707, %v5235
    %v5709 = vadd.f32 %v5708, %v5236
    %v5710 = vadd.f32 %v5709, %v5237
    %v5711 = vadd.f32 %v5710, %v5238
    %v5712 = vadd.f32 %v5711, %v5239
    %v5713 = vadd.f32 %v5712, %v5240
    %v5714 = vsel %vm1546, %v5241, 0.0
    %v5715 = vadd.f32 %v5713, %v5714
    %5716 = vadd.xlane.f32.xlu0 %v5715
    %v5717 = vpop.xlane.xlu0 %5716
    %v5718 = vadd.f32 %v5242, %v5243
    %v5719 = vadd.f32 %v5718, %v5244
    %v5720 = vadd.f32 %v5719, %v5245
    %v5721 = vadd.f32 %v5720, %v5246
    %v5722 = vadd.f32 %v5721, %v5247
    %v5723 = vadd.f32 %v5722, %v5248
    %v5724 = vadd.f32 %v5723, %v5249
    %v5725 = vadd.f32 %v5724, %v5250
    %v5726 = vadd.f32 %v5725, %v5251
    %v5727 = vadd.f32 %v5726, %v5252
    %v5728 = vadd.f32 %v5727, %v5253
    %v5729 = vadd.f32 %v5728, %v5254
    %v5730 = vadd.f32 %v5729, %v5255
    %v5731 = vadd.f32 %v5730, %v5256
    %v5732 = vadd.f32 %v5731, %v5257
    %v5733 = vadd.f32 %v5732, %v5258
    %v5734 = vadd.f32 %v5733, %v5259
    %v5735 = vadd.f32 %v5734, %v5260
    %v5736 = vadd.f32 %v5735, %v5261
    %v5737 = vadd.f32 %v5736, %v5262
    %v5738 = vadd.f32 %v5737, %v5263
    %v5739 = vadd.f32 %v5738, %v5264
    %v5740 = vadd.f32 %v5739, %v5265
    %v5741 = vsel %vm1546, %v5266, 0.0
    %v5742 = vadd.f32 %v5740, %v5741
    %5743 = vadd.xlane.f32.xlu0 %v5742
    %v5744 = vpop.xlane.xlu0 %5743
    %v5745 = vadd.f32 %v5267, %v5268
    %v5746 = vadd.f32 %v5745, %v5269
    %v5747 = vadd.f32 %v5746, %v5270
    %v5748 = vadd.f32 %v5747, %v5271
    %v5749 = vadd.f32 %v5748, %v5272
    %v5750 = vadd.f32 %v5749, %v5273
    %v5751 = vadd.f32 %v5750, %v5274
    %v5752 = vadd.f32 %v5751, %v5275
    %v5753 = vadd.f32 %v5752, %v5276
    %v5754 = vadd.f32 %v5753, %v5277
    %v5755 = vadd.f32 %v5754, %v5278
    %v5756 = vadd.f32 %v5755, %v5279
    %v5757 = vadd.f32 %v5756, %v5280
    %v5758 = vadd.f32 %v5757, %v5281
    %v5759 = vadd.f32 %v5758, %v5282
    %v5760 = vadd.f32 %v5759, %v5283
    %v5761 = vadd.f32 %v5760, %v5284
    %v5762 = vadd.f32 %v5761, %v5285
    %v5763 = vadd.f32 %v5762, %v5286
    %v5764 = vadd.f32 %v5763, %v5287
    %v5765 = vadd.f32 %v5764, %v5288
    %v5766 = vadd.f32 %v5765, %v5289
    %v5767 = vadd.f32 %v5766, %v5290
    %v5768 = vsel %vm1546, %v5291, 0.0
    %v5769 = vadd.f32 %v5767, %v5768
    %5770 = vadd.xlane.f32.xlu0 %v5769
    %v5771 = vpop.xlane.xlu0 %5770
    %v5772 = vadd.f32 %v5292, %v5293
    %v5773 = vadd.f32 %v5772, %v5294
    %v5774 = vadd.f32 %v5773, %v5295
    %v5775 = vadd.f32 %v5774, %v5296
    %v5776 = vadd.f32 %v5775, %v5297
    %v5777 = vadd.f32 %v5776, %v5298
    %v5778 = vadd.f32 %v5777, %v5299
    %v5779 = vadd.f32 %v5778, %v5300
    %v5780 = vadd.f32 %v5779, %v5301
    %v5781 = vadd.f32 %v5780, %v5302
    %v5782 = vadd.f32 %v5781, %v5303
    %v5783 = vadd.f32 %v5782, %v5304
    %v5784 = vadd.f32 %v5783, %v5305
    %v5785 = vadd.f32 %v5784, %v5306
    %v5786 = vadd.f32 %v5785, %v5307
    %v5787 = vadd.f32 %v5786, %v5308
    %v5788 = vadd.f32 %v5787, %v5309
    %v5789 = vadd.f32 %v5788, %v5310
    %v5790 = vadd.f32 %v5789, %v5311
    %v5791 = vadd.f32 %v5790, %v5312
    %v5792 = vadd.f32 %v5791, %v5313
    %v5793 = vadd.f32 %v5792, %v5314
    %v5794 = vadd.f32 %v5793, %v5315
    %v5795 = vsel %vm1546, %v5316, 0.0
    %v5796 = vadd.f32 %v5794, %v5795
    %5797 = vadd.xlane.f32.xlu0 %v5796
    %v5798 = vpop.xlane.xlu0 %5797
    %v5799 = vadd.f32 %v5317, %v5318
    %v5800 = vadd.f32 %v5799, %v5319
    %v5801 = vadd.f32 %v5800, %v5320
    %v5802 = vadd.f32 %v5801, %v5321
    %v5803 = vadd.f32 %v5802, %v5322
    %v5804 = vadd.f32 %v5803, %v5323
    %v5805 = vadd.f32 %v5804, %v5324
    %v5806 = vadd.f32 %v5805, %v5325
    %v5807 = vadd.f32 %v5806, %v5326
    %v5808 = vadd.f32 %v5807, %v5327
    %v5809 = vadd.f32 %v5808, %v5328
    %v5810 = vadd.f32 %v5809, %v5329
    %v5811 = vadd.f32 %v5810, %v5330
    %v5812 = vadd.f32 %v5811, %v5331
    %v5813 = vadd.f32 %v5812, %v5332
    %v5814 = vadd.f32 %v5813, %v5333
    %v5815 = vadd.f32 %v5814, %v5334
    %v5816 = vadd.f32 %v5815, %v5335
    %v5817 = vadd.f32 %v5816, %v5336
    %v5818 = vadd.f32 %v5817, %v5337
    %v5819 = vadd.f32 %v5818, %v5338
    %v5820 = vadd.f32 %v5819, %v5339
    %v5821 = vadd.f32 %v5820, %v5340
    %v5822 = vsel %vm1546, %v5341, 0.0
    %v5823 = vadd.f32 %v5821, %v5822
    %5824 = vadd.xlane.f32.xlu0 %v5823
    %v5825 = vpop.xlane.xlu0 %5824
    %v5826 = vadd.f32 %v5342, %v5343
    %v5827 = vadd.f32 %v5826, %v5344
    %v5828 = vadd.f32 %v5827, %v5345
    %v5829 = vadd.f32 %v5828, %v5346
    %v5830 = vadd.f32 %v5829, %v5347
    %v5831 = vadd.f32 %v5830, %v5348
    %v5832 = vadd.f32 %v5831, %v5349
    %v5833 = vadd.f32 %v5832, %v5350
    %v5834 = vadd.f32 %v5833, %v5351
    %v5835 = vadd.f32 %v5834, %v5352
    %v5836 = vadd.f32 %v5835, %v5353
    %v5837 = vadd.f32 %v5836, %v5354
    %v5838 = vadd.f32 %v5837, %v5355
    %v5839 = vadd.f32 %v5838, %v5356
    %v5840 = vadd.f32 %v5839, %v5357
    %v5841 = vadd.f32 %v5840, %v5358
    %v5842 = vadd.f32 %v5841, %v5359
    %v5843 = vadd.f32 %v5842, %v5360
    %v5844 = vadd.f32 %v5843, %v5361
    %v5845 = vadd.f32 %v5844, %v5362
    %v5846 = vadd.f32 %v5845, %v5363
    %v5847 = vadd.f32 %v5846, %v5364
    %v5848 = vadd.f32 %v5847, %v5365
    %v5849 = vsel %vm1546, %v5366, 0.0
    %v5850 = vadd.f32 %v5848, %v5849
    %5851 = vadd.xlane.f32.xlu0 %v5850
    %v5852 = vpop.xlane.xlu0 %5851
    %v5853 = vmul.f32 %v4457, 0.00031887754
    %v5854 = vmul.f32 %v4484, 0.00031887754
    %v5855 = vmul.f32 %v4511, 0.00031887754
    %v5856 = vmul.f32 %v4538, 0.00031887754
    %v5857 = vmul.f32 %v4565, 0.00031887754
    %v5858 = vmul.f32 %v4592, 0.00031887754
    %v5859 = vmul.f32 %v4619, 0.00031887754
    %v5860 = vmul.f32 %v4646, 0.00031887754
    %v5861 = vmul.f32 %v4673, 0.00031887754
    %v5862 = vmul.f32 %v4700, 0.00031887754
    %v5863 = vmul.f32 %v4727, 0.00031887754
    %v5864 = vmul.f32 %v4754, 0.00031887754
    %v5865 = vmul.f32 %v4781, 0.00031887754
    %v5866 = vmul.f32 %v4808, 0.00031887754
    %v5867 = vmul.f32 %v4835, 0.00031887754
    %v5868 = vmul.f32 %v4862, 0.00031887754
    %v5869 = vmul.f32 %v4889, 0.00031887754
    %v5870 = vmul.f32 %v4916, 0.00031887754
    %v5871 = vmul.f32 %v5393, 0.00031887754
    %v5872 = vmul.f32 %v5420, 0.00031887754
    %v5873 = vmul.f32 %v5447, 0.00031887754
    %v5874 = vmul.f32 %v5474, 0.00031887754
    %v5875 = vmul.f32 %v5501, 0.00031887754
    %v5876 = vmul.f32 %v5528, 0.00031887754
    %v5877 = vmul.f32 %v5555, 0.00031887754
    %v5878 = vmul.f32 %v5582, 0.00031887754
    %v5879 = vmul.f32 %v5609, 0.00031887754
    %v5880 = vmul.f32 %v5636, 0.00031887754
    %v5881 = vmul.f32 %v5663, 0.00031887754
    %v5882 = vmul.f32 %v5690, 0.00031887754
    %v5883 = vmul.f32 %v5717, 0.00031887754
    %v5884 = vmul.f32 %v5744, 0.00031887754
    %v5885 = vmul.f32 %v5771, 0.00031887754
    %v5886 = vmul.f32 %v5798, 0.00031887754
    %v5887 = vmul.f32 %v5825, 0.00031887754
    %v5888 = vmul.f32 %v5852, 0.00031887754
    %v5889 = vmul.f32 %v5853, %v5853
    %v5890 = vmul.f32 %v5854, %v5854
    %v5891 = vmul.f32 %v5855, %v5855
    %v5892 = vmul.f32 %v5856, %v5856
    %v5893 = vmul.f32 %v5857, %v5857
    %v5894 = vmul.f32 %v5858, %v5858
    %v5895 = vmul.f32 %v5859, %v5859
    %v5896 = vmul.f32 %v5860, %v5860
    %v5897 = vmul.f32 %v5861, %v5861
    %v5898 = vmul.f32 %v5862, %v5862
    %v5899 = vmul.f32 %v5863, %v5863
    %v5900 = vmul.f32 %v5864, %v5864
    %v5901 = vmul.f32 %v5865, %v5865
    %v5902 = vmul.f32 %v5866, %v5866
    %v5903 = vmul.f32 %v5867, %v5867
    %v5904 = vmul.f32 %v5868, %v5868
    %v5905 = vmul.f32 %v5869, %v5869
    %v5906 = vmul.f32 %v5870, %v5870
    %v5907 = vsub.f32 %v5871, %v5889
    %v5908 = vsub.f32 %v5872, %v5890
    %v5909 = vsub.f32 %v5873, %v5891
    %v5910 = vsub.f32 %v5874, %v5892
    %v5911 = vsub.f32 %v5875, %v5893
    %v5912 = vsub.f32 %v5876, %v5894
    %v5913 = vsub.f32 %v5877, %v5895
    %v5914 = vsub.f32 %v5878, %v5896
    %v5915 = vsub.f32 %v5879, %v5897
    %v5916 = vsub.f32 %v5880, %v5898
    %v5917 = vsub.f32 %v5881, %v5899
    %v5918 = vsub.f32 %v5882, %v5900
    %v5919 = vsub.f32 %v5883, %v5901
    %v5920 = vsub.f32 %v5884, %v5902
    %v5921 = vsub.f32 %v5885, %v5903
    %v5922 = vsub.f32 %v5886, %v5904
    %v5923 = vsub.f32 %v5887, %v5905
    %v5924 = vsub.f32 %v5888, %v5906
    %v5925 = vmax.f32 %v5907, 0.0
    %v5926 = vmax.f32 %v5908, 0.0
    %v5927 = vmax.f32 %v5909, 0.0
    %v5928 = vmax.f32 %v5910, 0.0
    %v5929 = vmax.f32 %v5911, 0.0
    %v5930 = vmax.f32 %v5912, 0.0
    %v5931 = vmax.f32 %v5913, 0.0
    %v5932 = vmax.f32 %v5914, 0.0
    %v5933 = vmax.f32 %v5915, 0.0
    %v5934 = vmax.f32 %v5916, 0.0
    %v5935 = vmax.f32 %v5917, 0.0
    %v5936 = vmax.f32 %v5918, 0.0
    %v5937 = vmax.f32 %v5919, 0.0
    %v5938 = vmax.f32 %v5920, 0.0
    %v5939 = vmax.f32 %v5921, 0.0
    %v5940 = vmax.f32 %v5922, 0.0
    %v5941 = vmax.f32 %v5923, 0.0
    %v5942 = vmax.f32 %v5924, 0.0
    %v5943 = vld [vmem:[%s9] sm:$0xff]
    %v5944 = vld [vmem:[%s9 + $0x8] sm:$0xff]
    %v5945 = vld [vmem:[%s9 + $0x10] sm:$0xff]
    %v5946 = vld [vmem:[%s9 + $0x18] sm:$0xff]
    %v5947 = vld [vmem:[%s9 + $0x20] sm:$0xff]
    %v5948 = vld [vmem:[%s9 + $0x28] sm:$0xff]
    %v5949 = vld [vmem:[%s9 + $0x30] sm:$0xff]
    %v5950 = vld [vmem:[%s9 + $0x38] sm:$0xff]
    %v5951 = vld [vmem:[%s9 + $0x40] sm:$0xff]
    %v5952 = vld [vmem:[%s9 + $0x48] sm:$0xff]
    %v5953 = vld [vmem:[%s9 + $0x50] sm:$0xff]
    %v5954 = vld [vmem:[%s9 + $0x58] sm:$0xff]
    %v5955 = vld [vmem:[%s9 + $0x60] sm:$0xff]
    %v5956 = vld [vmem:[%s9 + $0x68] sm:$0xff]
    %v5957 = vld [vmem:[%s9 + $0x70] sm:$0xff]
    %v5958 = vld [vmem:[%s9 + $0x78] sm:$0xff]
    %v5959 = vld [vmem:[%s9 + $0x80] sm:$0xff]
    %v5960 = vld [vmem:[%s9 + $0x88] sm:$0xff]
    %v5961 = vadd.f32 %v5925, 1e-05
    %v5962 = vadd.f32 %v5926, 1e-05
    %v5963 = vadd.f32 %v5927, 1e-05
    %v5964 = vadd.f32 %v5928, 1e-05
    %v5965 = vadd.f32 %v5929, 1e-05
    %v5966 = vadd.f32 %v5930, 1e-05
    %v5967 = vadd.f32 %v5931, 1e-05
    %v5968 = vadd.f32 %v5932, 1e-05
    %v5969 = vadd.f32 %v5933, 1e-05
    %v5970 = vadd.f32 %v5934, 1e-05
    %v5971 = vadd.f32 %v5935, 1e-05
    %v5972 = vadd.f32 %v5936, 1e-05
    %v5973 = vadd.f32 %v5937, 1e-05
    %v5974 = vadd.f32 %v5938, 1e-05
    %v5975 = vadd.f32 %v5939, 1e-05
    %v5976 = vadd.f32 %v5940, 1e-05
    %v5977 = vadd.f32 %v5941, 1e-05
    %v5978 = vadd.f32 %v5942, 1e-05
    %v5979 = vrsqrt.pop %v5961
    %v5980 = vrsqrt.pop %v5962
    %v5981 = vrsqrt.pop %v5963
    %v5982 = vrsqrt.pop %v5964
    %v5983 = vrsqrt.pop %v5965
    %v5984 = vrsqrt.pop %v5966
    %v5985 = vrsqrt.pop %v5967
    %v5986 = vrsqrt.pop %v5968
    %v5987 = vrsqrt.pop %v5969
    %v5988 = vrsqrt.pop %v5970
    %v5989 = vrsqrt.pop %v5971
    %v5990 = vrsqrt.pop %v5972
    %v5991 = vrsqrt.pop %v5973
    %v5992 = vrsqrt.pop %v5974
    %v5993 = vrsqrt.pop %v5975
    %v5994 = vrsqrt.pop %v5976
    %v5995 = vrsqrt.pop %v5977
    %v5996 = vrsqrt.pop %v5978
    %v5997 = vmul.f32 %v5943, %v5979
    %v5998 = vmul.f32 %v5944, %v5980
    %v5999 = vmul.f32 %v5945, %v5981
    %v6000 = vmul.f32 %v5946, %v5982
    %v6001 = vmul.f32 %v5947, %v5983
    %v6002 = vmul.f32 %v5948, %v5984
    %v6003 = vmul.f32 %v5949, %v5985
    %v6004 = vmul.f32 %v5950, %v5986
    %v6005 = vmul.f32 %v5951, %v5987
    %v6006 = vmul.f32 %v5952, %v5988
    %v6007 = vmul.f32 %v5953, %v5989
    %v6008 = vmul.f32 %v5954, %v5990
    %v6009 = vmul.f32 %v5955, %v5991
    %v6010 = vmul.f32 %v5956, %v5992
    %v6011 = vmul.f32 %v5957, %v5993
    %v6012 = vmul.f32 %v5958, %v5994
    %v6013 = vmul.f32 %v5959, %v5995
    %v6014 = vmul.f32 %v5960, %v5996
    %v6015 = vld [vmem:[%s10] sm:$0xff]
    %v6016 = vld [vmem:[%s10 + $0x8] sm:$0xff]
    %v6017 = vld [vmem:[%s10 + $0x10] sm:$0xff]
    %v6018 = vld [vmem:[%s10 + $0x18] sm:$0xff]
    %v6019 = vld [vmem:[%s10 + $0x20] sm:$0xff]
    %v6020 = vld [vmem:[%s10 + $0x28] sm:$0xff]
    %v6021 = vld [vmem:[%s10 + $0x30] sm:$0xff]
    %v6022 = vld [vmem:[%s10 + $0x38] sm:$0xff]
    %v6023 = vld [vmem:[%s10 + $0x40] sm:$0xff]
    %v6024 = vld [vmem:[%s10 + $0x48] sm:$0xff]
    %v6025 = vld [vmem:[%s10 + $0x50] sm:$0xff]
    %v6026 = vld [vmem:[%s10 + $0x58] sm:$0xff]
    %v6027 = vld [vmem:[%s10 + $0x60] sm:$0xff]
    %v6028 = vld [vmem:[%s10 + $0x68] sm:$0xff]
    %v6029 = vld [vmem:[%s10 + $0x70] sm:$0xff]
    %v6030 = vld [vmem:[%s10 + $0x78] sm:$0xff]
    %v6031 = vld [vmem:[%s10 + $0x80] sm:$0xff]
    %v6032 = vld [vmem:[%s10 + $0x88] sm:$0xff]
    %v6033 = vmul.f32 %v5853, %v5997
    %v6034 = vmul.f32 %v5854, %v5998
    %v6035 = vmul.f32 %v5855, %v5999
    %v6036 = vmul.f32 %v5856, %v6000
    %v6037 = vmul.f32 %v5857, %v6001
    %v6038 = vmul.f32 %v5858, %v6002
    %v6039 = vmul.f32 %v5859, %v6003
    %v6040 = vmul.f32 %v5860, %v6004
    %v6041 = vmul.f32 %v5861, %v6005
    %v6042 = vmul.f32 %v5862, %v6006
    %v6043 = vmul.f32 %v5863, %v6007
    %v6044 = vmul.f32 %v5864, %v6008
    %v6045 = vmul.f32 %v5865, %v6009
    %v6046 = vmul.f32 %v5866, %v6010
    %v6047 = vmul.f32 %v5867, %v6011
    %v6048 = vmul.f32 %v5868, %v6012
    %v6049 = vmul.f32 %v5869, %v6013
    %v6050 = vmul.f32 %v5870, %v6014
    %v6051 = vsub.f32 %v6015, %v6033
    %v6052 = vsub.f32 %v6016, %v6034
    %v6053 = vsub.f32 %v6017, %v6035
    %v6054 = vsub.f32 %v6018, %v6036
    %v6055 = vsub.f32 %v6019, %v6037
    %v6056 = vsub.f32 %v6020, %v6038
    %v6057 = vsub.f32 %v6021, %v6039
    %v6058 = vsub.f32 %v6022, %v6040
    %v6059 = vsub.f32 %v6023, %v6041
    %v6060 = vsub.f32 %v6024, %v6042
    %v6061 = vsub.f32 %v6025, %v6043
    %v6062 = vsub.f32 %v6026, %v6044
    %v6063 = vsub.f32 %v6027, %v6045
    %v6064 = vsub.f32 %v6028, %v6046
    %v6065 = vsub.f32 %v6029, %v6047
    %v6066 = vsub.f32 %v6030, %v6048
    %v6067 = vsub.f32 %v6031, %v6049
    %v6068 = vsub.f32 %v6032, %v6050
    %6070 = vset.pattern.permute.xlu0 0
    %6071 = vperm.xlu0 %6070, %v5997
    %v6072 = vpop.permute.xlu0 %6071
    %6075 = vset.pattern.permute.xlu0 0
    %6076 = vperm.xlu0 %6075, %v5998
    %v6077 = vpop.permute.xlu0 %6076
    %6080 = vset.pattern.permute.xlu0 0
    %6081 = vperm.xlu0 %6080, %v5999
    %v6082 = vpop.permute.xlu0 %6081
    %6085 = vset.pattern.permute.xlu0 0
    %6086 = vperm.xlu0 %6085, %v6000
    %v6087 = vpop.permute.xlu0 %6086
    %6090 = vset.pattern.permute.xlu0 0
    %6091 = vperm.xlu0 %6090, %v6001
    %v6092 = vpop.permute.xlu0 %6091
    %6095 = vset.pattern.permute.xlu0 0
    %6096 = vperm.xlu0 %6095, %v6002
    %v6097 = vpop.permute.xlu0 %6096
    %6100 = vset.pattern.permute.xlu0 0
    %6101 = vperm.xlu0 %6100, %v6003
    %v6102 = vpop.permute.xlu0 %6101
    %6105 = vset.pattern.permute.xlu0 0
    %6106 = vperm.xlu0 %6105, %v6004
    %v6107 = vpop.permute.xlu0 %6106
    %6110 = vset.pattern.permute.xlu0 0
    %6111 = vperm.xlu0 %6110, %v6005
    %v6112 = vpop.permute.xlu0 %6111
    %6115 = vset.pattern.permute.xlu0 0
    %6116 = vperm.xlu0 %6115, %v6006
    %v6117 = vpop.permute.xlu0 %6116
    %6120 = vset.pattern.permute.xlu0 0
    %6121 = vperm.xlu0 %6120, %v6007
    %v6122 = vpop.permute.xlu0 %6121
    %6125 = vset.pattern.permute.xlu0 0
    %6126 = vperm.xlu0 %6125, %v6008
    %v6127 = vpop.permute.xlu0 %6126
    %6130 = vset.pattern.permute.xlu0 0
    %6131 = vperm.xlu0 %6130, %v6009
    %v6132 = vpop.permute.xlu0 %6131
    %6135 = vset.pattern.permute.xlu0 0
    %6136 = vperm.xlu0 %6135, %v6010
    %v6137 = vpop.permute.xlu0 %6136
    %6140 = vset.pattern.permute.xlu0 0
    %6141 = vperm.xlu0 %6140, %v6011
    %v6142 = vpop.permute.xlu0 %6141
    %6145 = vset.pattern.permute.xlu0 0
    %6146 = vperm.xlu0 %6145, %v6012
    %v6147 = vpop.permute.xlu0 %6146
    %6150 = vset.pattern.permute.xlu0 0
    %6151 = vperm.xlu0 %6150, %v6013
    %v6152 = vpop.permute.xlu0 %6151
    %6155 = vset.pattern.permute.xlu0 0
    %6156 = vperm.xlu0 %6155, %v6014
    %v6157 = vpop.permute.xlu0 %6156
    %v6159 = vmul.f32 %v2267, %v6072
    %v6160 = vmul.f32 %v2269, %v6072
    %v6161 = vmul.f32 %v2440, %v6072
    %v6162 = vmul.f32 %v2442, %v6072
    %v6163 = vmul.f32 %v2613, %v6072
    %v6164 = vmul.f32 %v2615, %v6072
    %v6165 = vmul.f32 %v2786, %v6072
    %v6166 = vmul.f32 %v2788, %v6072
    %v6167 = vmul.f32 %v2959, %v6072
    %v6168 = vmul.f32 %v2961, %v6072
    %v6169 = vmul.f32 %v3132, %v6072
    %v6170 = vmul.f32 %v3134, %v6072
    %v6171 = vmul.f32 %v3305, %v6072
    %v6172 = vmul.f32 %v3307, %v6072
    %v6173 = vmul.f32 %v3478, %v6072
    %v6174 = vmul.f32 %v3480, %v6072
    %v6175 = vmul.f32 %v3651, %v6072
    %v6176 = vmul.f32 %v3653, %v6072
    %v6177 = vmul.f32 %v3824, %v6072
    %v6178 = vmul.f32 %v3826, %v6072
    %v6179 = vmul.f32 %v3997, %v6072
    %v6180 = vmul.f32 %v3999, %v6072
    %v6181 = vmul.f32 %v4170, %v6072
    %v6182 = vmul.f32 %v4172, %v6072
    %v6183 = vmul.f32 %v4343, %v6072
    %v6184 = vmul.f32 %v2273, %v6077
    %v6185 = vmul.f32 %v2275, %v6077
    %v6186 = vmul.f32 %v2446, %v6077
    %v6187 = vmul.f32 %v2448, %v6077
    %v6188 = vmul.f32 %v2619, %v6077
    %v6189 = vmul.f32 %v2621, %v6077
    %v6190 = vmul.f32 %v2792, %v6077
    %v6191 = vmul.f32 %v2794, %v6077
    %v6192 = vmul.f32 %v2965, %v6077
    %v6193 = vmul.f32 %v2967, %v6077
    %v6194 = vmul.f32 %v3138, %v6077
    %v6195 = vmul.f32 %v3140, %v6077
    %v6196 = vmul.f32 %v3311, %v6077
    %v6197 = vmul.f32 %v3313, %v6077
    %v6198 = vmul.f32 %v3484, %v6077
    %v6199 = vmul.f32 %v3486, %v6077
    %v6200 = vmul.f32 %v3657, %v6077
    %v6201 = vmul.f32 %v3659, %v6077
    %v6202 = vmul.f32 %v3830, %v6077
    %v6203 = vmul.f32 %v3832, %v6077
    %v6204 = vmul.f32 %v4003, %v6077
    %v6205 = vmul.f32 %v4005, %v6077
    %v6206 = vmul.f32 %v4176, %v6077
    %v6207 = vmul.f32 %v4178, %v6077
    %v6208 = vmul.f32 %v4348, %v6077
    %v6209 = vmul.f32 %v2279, %v6082
    %v6210 = vmul.f32 %v2281, %v6082
    %v6211 = vmul.f32 %v2452, %v6082
    %v6212 = vmul.f32 %v2454, %v6082
    %v6213 = vmul.f32 %v2625, %v6082
    %v6214 = vmul.f32 %v2627, %v6082
    %v6215 = vmul.f32 %v2798, %v6082
    %v6216 = vmul.f32 %v2800, %v6082
    %v6217 = vmul.f32 %v2971, %v6082
    %v6218 = vmul.f32 %v2973, %v6082
    %v6219 = vmul.f32 %v3144, %v6082
    %v6220 = vmul.f32 %v3146, %v6082
    %v6221 = vmul.f32 %v3317, %v6082
    %v6222 = vmul.f32 %v3319, %v6082
    %v6223 = vmul.f32 %v3490, %v6082
    %v6224 = vmul.f32 %v3492, %v6082
    %v6225 = vmul.f32 %v3663, %v6082
    %v6226 = vmul.f32 %v3665, %v6082
    %v6227 = vmul.f32 %v3836, %v6082
    %v6228 = vmul.f32 %v3838, %v6082
    %v6229 = vmul.f32 %v4009, %v6082
    %v6230 = vmul.f32 %v4011, %v6082
    %v6231 = vmul.f32 %v4182, %v6082
    %v6232 = vmul.f32 %v4184, %v6082
    %v6233 = vmul.f32 %v4353, %v6082
    %v6234 = vmul.f32 %v2285, %v6087
    %v6235 = vmul.f32 %v2287, %v6087
    %v6236 = vmul.f32 %v2458, %v6087
    %v6237 = vmul.f32 %v2460, %v6087
    %v6238 = vmul.f32 %v2631, %v6087
    %v6239 = vmul.f32 %v2633, %v6087
    %v6240 = vmul.f32 %v2804, %v6087
    %v6241 = vmul.f32 %v2806, %v6087
    %v6242 = vmul.f32 %v2977, %v6087
    %v6243 = vmul.f32 %v2979, %v6087
    %v6244 = vmul.f32 %v3150, %v6087
    %v6245 = vmul.f32 %v3152, %v6087
    %v6246 = vmul.f32 %v3323, %v6087
    %v6247 = vmul.f32 %v3325, %v6087
    %v6248 = vmul.f32 %v3496, %v6087
    %v6249 = vmul.f32 %v3498, %v6087
    %v6250 = vmul.f32 %v3669, %v6087
    %v6251 = vmul.f32 %v3671, %v6087
    %v6252 = vmul.f32 %v3842, %v6087
    %v6253 = vmul.f32 %v3844, %v6087
    %v6254 = vmul.f32 %v4015, %v6087
    %v6255 = vmul.f32 %v4017, %v6087
    %v6256 = vmul.f32 %v4188, %v6087
    %v6257 = vmul.f32 %v4190, %v6087
    %v6258 = vmul.f32 %v4358, %v6087
    %v6259 = vmul.f32 %v2291, %v6092
    %v6260 = vmul.f32 %v2293, %v6092
    %v6261 = vmul.f32 %v2464, %v6092
    %v6262 = vmul.f32 %v2466, %v6092
    %v6263 = vmul.f32 %v2637, %v6092
    %v6264 = vmul.f32 %v2639, %v6092
    %v6265 = vmul.f32 %v2810, %v6092
    %v6266 = vmul.f32 %v2812, %v6092
    %v6267 = vmul.f32 %v2983, %v6092
    %v6268 = vmul.f32 %v2985, %v6092
    %v6269 = vmul.f32 %v3156, %v6092
    %v6270 = vmul.f32 %v3158, %v6092
    %v6271 = vmul.f32 %v3329, %v6092
    %v6272 = vmul.f32 %v3331, %v6092
    %v6273 = vmul.f32 %v3502, %v6092
    %v6274 = vmul.f32 %v3504, %v6092
    %v6275 = vmul.f32 %v3675, %v6092
    %v6276 = vmul.f32 %v3677, %v6092
    %v6277 = vmul.f32 %v3848, %v6092
    %v6278 = vmul.f32 %v3850, %v6092
    %v6279 = vmul.f32 %v4021, %v6092
    %v6280 = vmul.f32 %v4023, %v6092
    %v6281 = vmul.f32 %v4194, %v6092
    %v6282 = vmul.f32 %v4196, %v6092
    %v6283 = vmul.f32 %v4363, %v6092
    %v6284 = vmul.f32 %v2297, %v6097
    %v6285 = vmul.f32 %v2299, %v6097
    %v6286 = vmul.f32 %v2470, %v6097
    %v6287 = vmul.f32 %v2472, %v6097
    %v6288 = vmul.f32 %v2643, %v6097
    %v6289 = vmul.f32 %v2645, %v6097
    %v6290 = vmul.f32 %v2816, %v6097
    %v6291 = vmul.f32 %v2818, %v6097
    %v6292 = vmul.f32 %v2989, %v6097
    %v6293 = vmul.f32 %v2991, %v6097
    %v6294 = vmul.f32 %v3162, %v6097
    %v6295 = vmul.f32 %v3164, %v6097
    %v6296 = vmul.f32 %v3335, %v6097
    %v6297 = vmul.f32 %v3337, %v6097
    %v6298 = vmul.f32 %v3508, %v6097
    %v6299 = vmul.f32 %v3510, %v6097
    %v6300 = vmul.f32 %v3681, %v6097
    %v6301 = vmul.f32 %v3683, %v6097
    %v6302 = vmul.f32 %v3854, %v6097
    %v6303 = vmul.f32 %v3856, %v6097
    %v6304 = vmul.f32 %v4027, %v6097
    %v6305 = vmul.f32 %v4029, %v6097
    %v6306 = vmul.f32 %v4200, %v6097
    %v6307 = vmul.f32 %v4202, %v6097
    %v6308 = vmul.f32 %v4368, %v6097
    %v6309 = vmul.f32 %v2303, %v6102
    %v6310 = vmul.f32 %v2305, %v6102
    %v6311 = vmul.f32 %v2476, %v6102
    %v6312 = vmul.f32 %v2478, %v6102
    %v6313 = vmul.f32 %v2649, %v6102
    %v6314 = vmul.f32 %v2651, %v6102
    %v6315 = vmul.f32 %v2822, %v6102
    %v6316 = vmul.f32 %v2824, %v6102
    %v6317 = vmul.f32 %v2995, %v6102
    %v6318 = vmul.f32 %v2997, %v6102
    %v6319 = vmul.f32 %v3168, %v6102
    %v6320 = vmul.f32 %v3170, %v6102
    %v6321 = vmul.f32 %v3341, %v6102
    %v6322 = vmul.f32 %v3343, %v6102
    %v6323 = vmul.f32 %v3514, %v6102
    %v6324 = vmul.f32 %v3516, %v6102
    %v6325 = vmul.f32 %v3687, %v6102
    %v6326 = vmul.f32 %v3689, %v6102
    %v6327 = vmul.f32 %v3860, %v6102
    %v6328 = vmul.f32 %v3862, %v6102
    %v6329 = vmul.f32 %v4033, %v6102
    %v6330 = vmul.f32 %v4035, %v6102
    %v6331 = vmul.f32 %v4206, %v6102
    %v6332 = vmul.f32 %v4208, %v6102
    %v6333 = vmul.f32 %v4373, %v6102
    %v6334 = vmul.f32 %v2309, %v6107
    %v6335 = vmul.f32 %v2311, %v6107
    %v6336 = vmul.f32 %v2482, %v6107
    %v6337 = vmul.f32 %v2484, %v6107
    %v6338 = vmul.f32 %v2655, %v6107
    %v6339 = vmul.f32 %v2657, %v6107
    %v6340 = vmul.f32 %v2828, %v6107
    %v6341 = vmul.f32 %v2830, %v6107
    %v6342 = vmul.f32 %v3001, %v6107
    %v6343 = vmul.f32 %v3003, %v6107
    %v6344 = vmul.f32 %v3174, %v6107
    %v6345 = vmul.f32 %v3176, %v6107
    %v6346 = vmul.f32 %v3347, %v6107
    %v6347 = vmul.f32 %v3349, %v6107
    %v6348 = vmul.f32 %v3520, %v6107
    %v6349 = vmul.f32 %v3522, %v6107
    %v6350 = vmul.f32 %v3693, %v6107
    %v6351 = vmul.f32 %v3695, %v6107
    %v6352 = vmul.f32 %v3866, %v6107
    %v6353 = vmul.f32 %v3868, %v6107
    %v6354 = vmul.f32 %v4039, %v6107
    %v6355 = vmul.f32 %v4041, %v6107
    %v6356 = vmul.f32 %v4212, %v6107
    %v6357 = vmul.f32 %v4214, %v6107
    %v6358 = vmul.f32 %v4378, %v6107
    %v6359 = vmul.f32 %v2315, %v6112
    %v6360 = vmul.f32 %v2317, %v6112
    %v6361 = vmul.f32 %v2488, %v6112
    %v6362 = vmul.f32 %v2490, %v6112
    %v6363 = vmul.f32 %v2661, %v6112
    %v6364 = vmul.f32 %v2663, %v6112
    %v6365 = vmul.f32 %v2834, %v6112
    %v6366 = vmul.f32 %v2836, %v6112
    %v6367 = vmul.f32 %v3007, %v6112
    %v6368 = vmul.f32 %v3009, %v6112
    %v6369 = vmul.f32 %v3180, %v6112
    %v6370 = vmul.f32 %v3182, %v6112
    %v6371 = vmul.f32 %v3353, %v6112
    %v6372 = vmul.f32 %v3355, %v6112
    %v6373 = vmul.f32 %v3526, %v6112
    %v6374 = vmul.f32 %v3528, %v6112
    %v6375 = vmul.f32 %v3699, %v6112
    %v6376 = vmul.f32 %v3701, %v6112
    %v6377 = vmul.f32 %v3872, %v6112
    %v6378 = vmul.f32 %v3874, %v6112
    %v6379 = vmul.f32 %v4045, %v6112
    %v6380 = vmul.f32 %v4047, %v6112
    %v6381 = vmul.f32 %v4218, %v6112
    %v6382 = vmul.f32 %v4220, %v6112
    %v6383 = vmul.f32 %v4383, %v6112
    %v6384 = vmul.f32 %v2321, %v6117
    %v6385 = vmul.f32 %v2323, %v6117
    %v6386 = vmul.f32 %v2494, %v6117
    %v6387 = vmul.f32 %v2496, %v6117
    %v6388 = vmul.f32 %v2667, %v6117
    %v6389 = vmul.f32 %v2669, %v6117
    %v6390 = vmul.f32 %v2840, %v6117
    %v6391 = vmul.f32 %v2842, %v6117
    %v6392 = vmul.f32 %v3013, %v6117
    %v6393 = vmul.f32 %v3015, %v6117
    %v6394 = vmul.f32 %v3186, %v6117
    %v6395 = vmul.f32 %v3188, %v6117
    %v6396 = vmul.f32 %v3359, %v6117
    %v6397 = vmul.f32 %v3361, %v6117
    %v6398 = vmul.f32 %v3532, %v6117
    %v6399 = vmul.f32 %v3534, %v6117
    %v6400 = vmul.f32 %v3705, %v6117
    %v6401 = vmul.f32 %v3707, %v6117
    %v6402 = vmul.f32 %v3878, %v6117
    %v6403 = vmul.f32 %v3880, %v6117
    %v6404 = vmul.f32 %v4051, %v6117
    %v6405 = vmul.f32 %v4053, %v6117
    %v6406 = vmul.f32 %v4224, %v6117
    %v6407 = vmul.f32 %v4226, %v6117
    %v6408 = vmul.f32 %v4388, %v6117
    %v6409 = vmul.f32 %v2327, %v6122
    %v6410 = vmul.f32 %v2329, %v6122
    %v6411 = vmul.f32 %v2500, %v6122
    %v6412 = vmul.f32 %v2502, %v6122
    %v6413 = vmul.f32 %v2673, %v6122
    %v6414 = vmul.f32 %v2675, %v6122
    %v6415 = vmul.f32 %v2846, %v6122
    %v6416 = vmul.f32 %v2848, %v6122
    %v6417 = vmul.f32 %v3019, %v6122
    %v6418 = vmul.f32 %v3021, %v6122
    %v6419 = vmul.f32 %v3192, %v6122
    %v6420 = vmul.f32 %v3194, %v6122
    %v6421 = vmul.f32 %v3365, %v6122
    %v6422 = vmul.f32 %v3367, %v6122
    %v6423 = vmul.f32 %v3538, %v6122
    %v6424 = vmul.f32 %v3540, %v6122
    %v6425 = vmul.f32 %v3711, %v6122
    %v6426 = vmul.f32 %v3713, %v6122
    %v6427 = vmul.f32 %v3884, %v6122
    %v6428 = vmul.f32 %v3886, %v6122
    %v6429 = vmul.f32 %v4057, %v6122
    %v6430 = vmul.f32 %v4059, %v6122
    %v6431 = vmul.f32 %v4230, %v6122
    %v6432 = vmul.f32 %v4232, %v6122
    %v6433 = vmul.f32 %v4393, %v6122
    %v6434 = vmul.f32 %v2333, %v6127
    %v6435 = vmul.f32 %v2335, %v6127
    %v6436 = vmul.f32 %v2506, %v6127
    %v6437 = vmul.f32 %v2508, %v6127
    %v6438 = vmul.f32 %v2679, %v6127
    %v6439 = vmul.f32 %v2681, %v6127
    %v6440 = vmul.f32 %v2852, %v6127
    %v6441 = vmul.f32 %v2854, %v6127
    %v6442 = vmul.f32 %v3025, %v6127
    %v6443 = vmul.f32 %v3027, %v6127
    %v6444 = vmul.f32 %v3198, %v6127
    %v6445 = vmul.f32 %v3200, %v6127
    %v6446 = vmul.f32 %v3371, %v6127
    %v6447 = vmul.f32 %v3373, %v6127
    %v6448 = vmul.f32 %v3544, %v6127
    %v6449 = vmul.f32 %v3546, %v6127
    %v6450 = vmul.f32 %v3717, %v6127
    %v6451 = vmul.f32 %v3719, %v6127
    %v6452 = vmul.f32 %v3890, %v6127
    %v6453 = vmul.f32 %v3892, %v6127
    %v6454 = vmul.f32 %v4063, %v6127
    %v6455 = vmul.f32 %v4065, %v6127
    %v6456 = vmul.f32 %v4236, %v6127
    %v6457 = vmul.f32 %v4238, %v6127
    %v6458 = vmul.f32 %v4398, %v6127
    %v6459 = vmul.f32 %v2339, %v6132
    %v6460 = vmul.f32 %v2341, %v6132
    %v6461 = vmul.f32 %v2512, %v6132
    %v6462 = vmul.f32 %v2514, %v6132
    %v6463 = vmul.f32 %v2685, %v6132
    %v6464 = vmul.f32 %v2687, %v6132
    %v6465 = vmul.f32 %v2858, %v6132
    %v6466 = vmul.f32 %v2860, %v6132
    %v6467 = vmul.f32 %v3031, %v6132
    %v6468 = vmul.f32 %v3033, %v6132
    %v6469 = vmul.f32 %v3204, %v6132
    %v6470 = vmul.f32 %v3206, %v6132
    %v6471 = vmul.f32 %v3377, %v6132
    %v6472 = vmul.f32 %v3379, %v6132
    %v6473 = vmul.f32 %v3550, %v6132
    %v6474 = vmul.f32 %v3552, %v6132
    %v6475 = vmul.f32 %v3723, %v6132
    %v6476 = vmul.f32 %v3725, %v6132
    %v6477 = vmul.f32 %v3896, %v6132
    %v6478 = vmul.f32 %v3898, %v6132
    %v6479 = vmul.f32 %v4069, %v6132
    %v6480 = vmul.f32 %v4071, %v6132
    %v6481 = vmul.f32 %v4242, %v6132
    %v6482 = vmul.f32 %v4244, %v6132
    %v6483 = vmul.f32 %v4403, %v6132
    %v6484 = vmul.f32 %v2345, %v6137
    %v6485 = vmul.f32 %v2347, %v6137
    %v6486 = vmul.f32 %v2518, %v6137
    %v6487 = vmul.f32 %v2520, %v6137
    %v6488 = vmul.f32 %v2691, %v6137
    %v6489 = vmul.f32 %v2693, %v6137
    %v6490 = vmul.f32 %v2864, %v6137
    %v6491 = vmul.f32 %v2866, %v6137
    %v6492 = vmul.f32 %v3037, %v6137
    %v6493 = vmul.f32 %v3039, %v6137
    %v6494 = vmul.f32 %v3210, %v6137
    %v6495 = vmul.f32 %v3212, %v6137
    %v6496 = vmul.f32 %v3383, %v6137
    %v6497 = vmul.f32 %v3385, %v6137
    %v6498 = vmul.f32 %v3556, %v6137
    %v6499 = vmul.f32 %v3558, %v6137
    %v6500 = vmul.f32 %v3729, %v6137
    %v6501 = vmul.f32 %v3731, %v6137
    %v6502 = vmul.f32 %v3902, %v6137
    %v6503 = vmul.f32 %v3904, %v6137
    %v6504 = vmul.f32 %v4075, %v6137
    %v6505 = vmul.f32 %v4077, %v6137
    %v6506 = vmul.f32 %v4248, %v6137
    %v6507 = vmul.f32 %v4250, %v6137
    %v6508 = vmul.f32 %v4408, %v6137
    %v6509 = vmul.f32 %v2351, %v6142
    %v6510 = vmul.f32 %v2353, %v6142
    %v6511 = vmul.f32 %v2524, %v6142
    %v6512 = vmul.f32 %v2526, %v6142
    %v6513 = vmul.f32 %v2697, %v6142
    %v6514 = vmul.f32 %v2699, %v6142
    %v6515 = vmul.f32 %v2870, %v6142
    %v6516 = vmul.f32 %v2872, %v6142
    %v6517 = vmul.f32 %v3043, %v6142
    %v6518 = vmul.f32 %v3045, %v6142
    %v6519 = vmul.f32 %v3216, %v6142
    %v6520 = vmul.f32 %v3218, %v6142
    %v6521 = vmul.f32 %v3389, %v6142
    %v6522 = vmul.f32 %v3391, %v6142
    %v6523 = vmul.f32 %v3562, %v6142
    %v6524 = vmul.f32 %v3564, %v6142
    %v6525 = vmul.f32 %v3735, %v6142
    %v6526 = vmul.f32 %v3737, %v6142
    %v6527 = vmul.f32 %v3908, %v6142
    %v6528 = vmul.f32 %v3910, %v6142
    %v6529 = vmul.f32 %v4081, %v6142
    %v6530 = vmul.f32 %v4083, %v6142
    %v6531 = vmul.f32 %v4254, %v6142
    %v6532 = vmul.f32 %v4256, %v6142
    %v6533 = vmul.f32 %v4413, %v6142
    %v6534 = vmul.f32 %v2357, %v6147
    %v6535 = vmul.f32 %v2359, %v6147
    %v6536 = vmul.f32 %v2530, %v6147
    %v6537 = vmul.f32 %v2532, %v6147
    %v6538 = vmul.f32 %v2703, %v6147
    %v6539 = vmul.f32 %v2705, %v6147
    %v6540 = vmul.f32 %v2876, %v6147
    %v6541 = vmul.f32 %v2878, %v6147
    %v6542 = vmul.f32 %v3049, %v6147
    %v6543 = vmul.f32 %v3051, %v6147
    %v6544 = vmul.f32 %v3222, %v6147
    %v6545 = vmul.f32 %v3224, %v6147
    %v6546 = vmul.f32 %v3395, %v6147
    %v6547 = vmul.f32 %v3397, %v6147
    %v6548 = vmul.f32 %v3568, %v6147
    %v6549 = vmul.f32 %v3570, %v6147
    %v6550 = vmul.f32 %v3741, %v6147
    %v6551 = vmul.f32 %v3743, %v6147
    %v6552 = vmul.f32 %v3914, %v6147
    %v6553 = vmul.f32 %v3916, %v6147
    %v6554 = vmul.f32 %v4087, %v6147
    %v6555 = vmul.f32 %v4089, %v6147
    %v6556 = vmul.f32 %v4260, %v6147
    %v6557 = vmul.f32 %v4262, %v6147
    %v6558 = vmul.f32 %v4418, %v6147
    %v6559 = vmul.f32 %v2363, %v6152
    %v6560 = vmul.f32 %v2365, %v6152
    %v6561 = vmul.f32 %v2536, %v6152
    %v6562 = vmul.f32 %v2538, %v6152
    %v6563 = vmul.f32 %v2709, %v6152
    %v6564 = vmul.f32 %v2711, %v6152
    %v6565 = vmul.f32 %v2882, %v6152
    %v6566 = vmul.f32 %v2884, %v6152
    %v6567 = vmul.f32 %v3055, %v6152
    %v6568 = vmul.f32 %v3057, %v6152
    %v6569 = vmul.f32 %v3228, %v6152
    %v6570 = vmul.f32 %v3230, %v6152
    %v6571 = vmul.f32 %v3401, %v6152
    %v6572 = vmul.f32 %v3403, %v6152
    %v6573 = vmul.f32 %v3574, %v6152
    %v6574 = vmul.f32 %v3576, %v6152
    %v6575 = vmul.f32 %v3747, %v6152
    %v6576 = vmul.f32 %v3749, %v6152
    %v6577 = vmul.f32 %v3920, %v6152
    %v6578 = vmul.f32 %v3922, %v6152
    %v6579 = vmul.f32 %v4093, %v6152
    %v6580 = vmul.f32 %v4095, %v6152
    %v6581 = vmul.f32 %v4266, %v6152
    %v6582 = vmul.f32 %v4268, %v6152
    %v6583 = vmul.f32 %v4423, %v6152
    %v6584 = vmul.f32 %v2369, %v6157
    %v6585 = vmul.f32 %v2371, %v6157
    %v6586 = vmul.f32 %v2542, %v6157
    %v6587 = vmul.f32 %v2544, %v6157
    %v6588 = vmul.f32 %v2715, %v6157
    %v6589 = vmul.f32 %v2717, %v6157
    %v6590 = vmul.f32 %v2888, %v6157
    %v6591 = vmul.f32 %v2890, %v6157
    %v6592 = vmul.f32 %v3061, %v6157
    %v6593 = vmul.f32 %v3063, %v6157
    %v6594 = vmul.f32 %v3234, %v6157
    %v6595 = vmul.f32 %v3236, %v6157
    %v6596 = vmul.f32 %v3407, %v6157
    %v6597 = vmul.f32 %v3409, %v6157
    %v6598 = vmul.f32 %v3580, %v6157
    %v6599 = vmul.f32 %v3582, %v6157
    %v6600 = vmul.f32 %v3753, %v6157
    %v6601 = vmul.f32 %v3755, %v6157
    %v6602 = vmul.f32 %v3926, %v6157
    %v6603 = vmul.f32 %v3928, %v6157
    %v6604 = vmul.f32 %v4099, %v6157
    %v6605 = vmul.f32 %v4101, %v6157
    %v6606 = vmul.f32 %v4272, %v6157
    %v6607 = vmul.f32 %v4274, %v6157
    %v6608 = vmul.f32 %v4428, %v6157
    %6610 = vset.pattern.permute.xlu0 0
    %6611 = vperm.xlu0 %6610, %v6051
    %v6612 = vpop.permute.xlu0 %6611
    %6615 = vset.pattern.permute.xlu0 0
    %6616 = vperm.xlu0 %6615, %v6052
    %v6617 = vpop.permute.xlu0 %6616
    %6620 = vset.pattern.permute.xlu0 0
    %6621 = vperm.xlu0 %6620, %v6053
    %v6622 = vpop.permute.xlu0 %6621
    %6625 = vset.pattern.permute.xlu0 0
    %6626 = vperm.xlu0 %6625, %v6054
    %v6627 = vpop.permute.xlu0 %6626
    %6630 = vset.pattern.permute.xlu0 0
    %6631 = vperm.xlu0 %6630, %v6055
    %v6632 = vpop.permute.xlu0 %6631
    %6635 = vset.pattern.permute.xlu0 0
    %6636 = vperm.xlu0 %6635, %v6056
    %v6637 = vpop.permute.xlu0 %6636
    %6640 = vset.pattern.permute.xlu0 0
    %6641 = vperm.xlu0 %6640, %v6057
    %v6642 = vpop.permute.xlu0 %6641
    %6645 = vset.pattern.permute.xlu0 0
    %6646 = vperm.xlu0 %6645, %v6058
    %v6647 = vpop.permute.xlu0 %6646
    %6650 = vset.pattern.permute.xlu0 0
    %6651 = vperm.xlu0 %6650, %v6059
    %v6652 = vpop.permute.xlu0 %6651
    %6655 = vset.pattern.permute.xlu0 0
    %6656 = vperm.xlu0 %6655, %v6060
    %v6657 = vpop.permute.xlu0 %6656
    %6660 = vset.pattern.permute.xlu0 0
    %6661 = vperm.xlu0 %6660, %v6061
    %v6662 = vpop.permute.xlu0 %6661
    %6665 = vset.pattern.permute.xlu0 0
    %6666 = vperm.xlu0 %6665, %v6062
    %v6667 = vpop.permute.xlu0 %6666
    %6670 = vset.pattern.permute.xlu0 0
    %6671 = vperm.xlu0 %6670, %v6063
    %v6672 = vpop.permute.xlu0 %6671
    %6675 = vset.pattern.permute.xlu0 0
    %6676 = vperm.xlu0 %6675, %v6064
    %v6677 = vpop.permute.xlu0 %6676
    %6680 = vset.pattern.permute.xlu0 0
    %6681 = vperm.xlu0 %6680, %v6065
    %v6682 = vpop.permute.xlu0 %6681
    %6685 = vset.pattern.permute.xlu0 0
    %6686 = vperm.xlu0 %6685, %v6066
    %v6687 = vpop.permute.xlu0 %6686
    %6690 = vset.pattern.permute.xlu0 0
    %6691 = vperm.xlu0 %6690, %v6067
    %v6692 = vpop.permute.xlu0 %6691
    %6695 = vset.pattern.permute.xlu0 0
    %6696 = vperm.xlu0 %6695, %v6068
    %v6697 = vpop.permute.xlu0 %6696
    %v6699 = vadd.f32 %v6159, %v6612
    %v6700 = vadd.f32 %v6160, %v6612
    %v6701 = vadd.f32 %v6161, %v6612
    %v6702 = vadd.f32 %v6162, %v6612
    %v6703 = vadd.f32 %v6163, %v6612
    %v6704 = vadd.f32 %v6164, %v6612
    %v6705 = vadd.f32 %v6165, %v6612
    %v6706 = vadd.f32 %v6166, %v6612
    %v6707 = vadd.f32 %v6167, %v6612
    %v6708 = vadd.f32 %v6168, %v6612
    %v6709 = vadd.f32 %v6169, %v6612
    %v6710 = vadd.f32 %v6170, %v6612
    %v6711 = vadd.f32 %v6171, %v6612
    %v6712 = vadd.f32 %v6172, %v6612
    %v6713 = vadd.f32 %v6173, %v6612
    %v6714 = vadd.f32 %v6174, %v6612
    %v6715 = vadd.f32 %v6175, %v6612
    %v6716 = vadd.f32 %v6176, %v6612
    %v6717 = vadd.f32 %v6177, %v6612
    %v6718 = vadd.f32 %v6178, %v6612
    %v6719 = vadd.f32 %v6179, %v6612
    %v6720 = vadd.f32 %v6180, %v6612
    %v6721 = vadd.f32 %v6181, %v6612
    %v6722 = vadd.f32 %v6182, %v6612
    %v6723 = vadd.f32 %v6183, %v6612
    %v6724 = vadd.f32 %v6184, %v6617
    %v6725 = vadd.f32 %v6185, %v6617
    %v6726 = vadd.f32 %v6186, %v6617
    %v6727 = vadd.f32 %v6187, %v6617
    %v6728 = vadd.f32 %v6188, %v6617
    %v6729 = vadd.f32 %v6189, %v6617
    %v6730 = vadd.f32 %v6190, %v6617
    %v6731 = vadd.f32 %v6191, %v6617
    %v6732 = vadd.f32 %v6192, %v6617
    %v6733 = vadd.f32 %v6193, %v6617
    %v6734 = vadd.f32 %v6194, %v6617
    %v6735 = vadd.f32 %v6195, %v6617
    %v6736 = vadd.f32 %v6196, %v6617
    %v6737 = vadd.f32 %v6197, %v6617
    %v6738 = vadd.f32 %v6198, %v6617
    %v6739 = vadd.f32 %v6199, %v6617
    %v6740 = vadd.f32 %v6200, %v6617
    %v6741 = vadd.f32 %v6201, %v6617
    %v6742 = vadd.f32 %v6202, %v6617
    %v6743 = vadd.f32 %v6203, %v6617
    %v6744 = vadd.f32 %v6204, %v6617
    %v6745 = vadd.f32 %v6205, %v6617
    %v6746 = vadd.f32 %v6206, %v6617
    %v6747 = vadd.f32 %v6207, %v6617
    %v6748 = vadd.f32 %v6208, %v6617
    %v6749 = vadd.f32 %v6209, %v6622
    %v6750 = vadd.f32 %v6210, %v6622
    %v6751 = vadd.f32 %v6211, %v6622
    %v6752 = vadd.f32 %v6212, %v6622
    %v6753 = vadd.f32 %v6213, %v6622
    %v6754 = vadd.f32 %v6214, %v6622
    %v6755 = vadd.f32 %v6215, %v6622
    %v6756 = vadd.f32 %v6216, %v6622
    %v6757 = vadd.f32 %v6217, %v6622
    %v6758 = vadd.f32 %v6218, %v6622
    %v6759 = vadd.f32 %v6219, %v6622
    %v6760 = vadd.f32 %v6220, %v6622
    %v6761 = vadd.f32 %v6221, %v6622
    %v6762 = vadd.f32 %v6222, %v6622
    %v6763 = vadd.f32 %v6223, %v6622
    %v6764 = vadd.f32 %v6224, %v6622
    %v6765 = vadd.f32 %v6225, %v6622
    %v6766 = vadd.f32 %v6226, %v6622
    %v6767 = vadd.f32 %v6227, %v6622
    %v6768 = vadd.f32 %v6228, %v6622
    %v6769 = vadd.f32 %v6229, %v6622
    %v6770 = vadd.f32 %v6230, %v6622
    %v6771 = vadd.f32 %v6231, %v6622
    %v6772 = vadd.f32 %v6232, %v6622
    %v6773 = vadd.f32 %v6233, %v6622
    %v6774 = vadd.f32 %v6234, %v6627
    %v6775 = vadd.f32 %v6235, %v6627
    %v6776 = vadd.f32 %v6236, %v6627
    %v6777 = vadd.f32 %v6237, %v6627
    %v6778 = vadd.f32 %v6238, %v6627
    %v6779 = vadd.f32 %v6239, %v6627
    %v6780 = vadd.f32 %v6240, %v6627
    %v6781 = vadd.f32 %v6241, %v6627
    %v6782 = vadd.f32 %v6242, %v6627
    %v6783 = vadd.f32 %v6243, %v6627
    %v6784 = vadd.f32 %v6244, %v6627
    %v6785 = vadd.f32 %v6245, %v6627
    %v6786 = vadd.f32 %v6246, %v6627
    %v6787 = vadd.f32 %v6247, %v6627
    %v6788 = vadd.f32 %v6248, %v6627
    %v6789 = vadd.f32 %v6249, %v6627
    %v6790 = vadd.f32 %v6250, %v6627
    %v6791 = vadd.f32 %v6251, %v6627
    %v6792 = vadd.f32 %v6252, %v6627
    %v6793 = vadd.f32 %v6253, %v6627
    %v6794 = vadd.f32 %v6254, %v6627
    %v6795 = vadd.f32 %v6255, %v6627
    %v6796 = vadd.f32 %v6256, %v6627
    %v6797 = vadd.f32 %v6257, %v6627
    %v6798 = vadd.f32 %v6258, %v6627
    %v6799 = vadd.f32 %v6259, %v6632
    %v6800 = vadd.f32 %v6260, %v6632
    %v6801 = vadd.f32 %v6261, %v6632
    %v6802 = vadd.f32 %v6262, %v6632
    %v6803 = vadd.f32 %v6263, %v6632
    %v6804 = vadd.f32 %v6264, %v6632
    %v6805 = vadd.f32 %v6265, %v6632
    %v6806 = vadd.f32 %v6266, %v6632
    %v6807 = vadd.f32 %v6267, %v6632
    %v6808 = vadd.f32 %v6268, %v6632
    %v6809 = vadd.f32 %v6269, %v6632
    %v6810 = vadd.f32 %v6270, %v6632
    %v6811 = vadd.f32 %v6271, %v6632
    %v6812 = vadd.f32 %v6272, %v6632
    %v6813 = vadd.f32 %v6273, %v6632
    %v6814 = vadd.f32 %v6274, %v6632
    %v6815 = vadd.f32 %v6275, %v6632
    %v6816 = vadd.f32 %v6276, %v6632
    %v6817 = vadd.f32 %v6277, %v6632
    %v6818 = vadd.f32 %v6278, %v6632
    %v6819 = vadd.f32 %v6279, %v6632
    %v6820 = vadd.f32 %v6280, %v6632
    %v6821 = vadd.f32 %v6281, %v6632
    %v6822 = vadd.f32 %v6282, %v6632
    %v6823 = vadd.f32 %v6283, %v6632
    %v6824 = vadd.f32 %v6284, %v6637
    %v6825 = vadd.f32 %v6285, %v6637
    %v6826 = vadd.f32 %v6286, %v6637
    %v6827 = vadd.f32 %v6287, %v6637
    %v6828 = vadd.f32 %v6288, %v6637
    %v6829 = vadd.f32 %v6289, %v6637
    %v6830 = vadd.f32 %v6290, %v6637
    %v6831 = vadd.f32 %v6291, %v6637
    %v6832 = vadd.f32 %v6292, %v6637
    %v6833 = vadd.f32 %v6293, %v6637
    %v6834 = vadd.f32 %v6294, %v6637
    %v6835 = vadd.f32 %v6295, %v6637
    %v6836 = vadd.f32 %v6296, %v6637
    %v6837 = vadd.f32 %v6297, %v6637
    %v6838 = vadd.f32 %v6298, %v6637
    %v6839 = vadd.f32 %v6299, %v6637
    %v6840 = vadd.f32 %v6300, %v6637
    %v6841 = vadd.f32 %v6301, %v6637
    %v6842 = vadd.f32 %v6302, %v6637
    %v6843 = vadd.f32 %v6303, %v6637
    %v6844 = vadd.f32 %v6304, %v6637
    %v6845 = vadd.f32 %v6305, %v6637
    %v6846 = vadd.f32 %v6306, %v6637
    %v6847 = vadd.f32 %v6307, %v6637
    %v6848 = vadd.f32 %v6308, %v6637
    %v6849 = vadd.f32 %v6309, %v6642
    %v6850 = vadd.f32 %v6310, %v6642
    %v6851 = vadd.f32 %v6311, %v6642
    %v6852 = vadd.f32 %v6312, %v6642
    %v6853 = vadd.f32 %v6313, %v6642
    %v6854 = vadd.f32 %v6314, %v6642
    %v6855 = vadd.f32 %v6315, %v6642
    %v6856 = vadd.f32 %v6316, %v6642
    %v6857 = vadd.f32 %v6317, %v6642
    %v6858 = vadd.f32 %v6318, %v6642
    %v6859 = vadd.f32 %v6319, %v6642
    %v6860 = vadd.f32 %v6320, %v6642
    %v6861 = vadd.f32 %v6321, %v6642
    %v6862 = vadd.f32 %v6322, %v6642
    %v6863 = vadd.f32 %v6323, %v6642
    %v6864 = vadd.f32 %v6324, %v6642
    %v6865 = vadd.f32 %v6325, %v6642
    %v6866 = vadd.f32 %v6326, %v6642
    %v6867 = vadd.f32 %v6327, %v6642
    %v6868 = vadd.f32 %v6328, %v6642
    %v6869 = vadd.f32 %v6329, %v6642
    %v6870 = vadd.f32 %v6330, %v6642
    %v6871 = vadd.f32 %v6331, %v6642
    %v6872 = vadd.f32 %v6332, %v6642
    %v6873 = vadd.f32 %v6333, %v6642
    %v6874 = vadd.f32 %v6334, %v6647
    %v6875 = vadd.f32 %v6335, %v6647
    %v6876 = vadd.f32 %v6336, %v6647
    %v6877 = vadd.f32 %v6337, %v6647
    %v6878 = vadd.f32 %v6338, %v6647
    %v6879 = vadd.f32 %v6339, %v6647
    %v6880 = vadd.f32 %v6340, %v6647
    %v6881 = vadd.f32 %v6341, %v6647
    %v6882 = vadd.f32 %v6342, %v6647
    %v6883 = vadd.f32 %v6343, %v6647
    %v6884 = vadd.f32 %v6344, %v6647
    %v6885 = vadd.f32 %v6345, %v6647
    %v6886 = vadd.f32 %v6346, %v6647
    %v6887 = vadd.f32 %v6347, %v6647
    %v6888 = vadd.f32 %v6348, %v6647
    %v6889 = vadd.f32 %v6349, %v6647
    %v6890 = vadd.f32 %v6350, %v6647
    %v6891 = vadd.f32 %v6351, %v6647
    %v6892 = vadd.f32 %v6352, %v6647
    %v6893 = vadd.f32 %v6353, %v6647
    %v6894 = vadd.f32 %v6354, %v6647
    %v6895 = vadd.f32 %v6355, %v6647
    %v6896 = vadd.f32 %v6356, %v6647
    %v6897 = vadd.f32 %v6357, %v6647
    %v6898 = vadd.f32 %v6358, %v6647
    %v6899 = vadd.f32 %v6359, %v6652
    %v6900 = vadd.f32 %v6360, %v6652
    %v6901 = vadd.f32 %v6361, %v6652
    %v6902 = vadd.f32 %v6362, %v6652
    %v6903 = vadd.f32 %v6363, %v6652
    %v6904 = vadd.f32 %v6364, %v6652
    %v6905 = vadd.f32 %v6365, %v6652
    %v6906 = vadd.f32 %v6366, %v6652
    %v6907 = vadd.f32 %v6367, %v6652
    %v6908 = vadd.f32 %v6368, %v6652
    %v6909 = vadd.f32 %v6369, %v6652
    %v6910 = vadd.f32 %v6370, %v6652
    %v6911 = vadd.f32 %v6371, %v6652
    %v6912 = vadd.f32 %v6372, %v6652
    %v6913 = vadd.f32 %v6373, %v6652
    %v6914 = vadd.f32 %v6374, %v6652
    %v6915 = vadd.f32 %v6375, %v6652
    %v6916 = vadd.f32 %v6376, %v6652
    %v6917 = vadd.f32 %v6377, %v6652
    %v6918 = vadd.f32 %v6378, %v6652
    %v6919 = vadd.f32 %v6379, %v6652
    %v6920 = vadd.f32 %v6380, %v6652
    %v6921 = vadd.f32 %v6381, %v6652
    %v6922 = vadd.f32 %v6382, %v6652
    %v6923 = vadd.f32 %v6383, %v6652
    %v6924 = vadd.f32 %v6384, %v6657
    %v6925 = vadd.f32 %v6385, %v6657
    %v6926 = vadd.f32 %v6386, %v6657
    %v6927 = vadd.f32 %v6387, %v6657
    %v6928 = vadd.f32 %v6388, %v6657
    %v6929 = vadd.f32 %v6389, %v6657
    %v6930 = vadd.f32 %v6390, %v6657
    %v6931 = vadd.f32 %v6391, %v6657
    %v6932 = vadd.f32 %v6392, %v6657
    %v6933 = vadd.f32 %v6393, %v6657
    %v6934 = vadd.f32 %v6394, %v6657
    %v6935 = vadd.f32 %v6395, %v6657
    %v6936 = vadd.f32 %v6396, %v6657
    %v6937 = vadd.f32 %v6397, %v6657
    %v6938 = vadd.f32 %v6398, %v6657
    %v6939 = vadd.f32 %v6399, %v6657
    %v6940 = vadd.f32 %v6400, %v6657
    %v6941 = vadd.f32 %v6401, %v6657
    %v6942 = vadd.f32 %v6402, %v6657
    %v6943 = vadd.f32 %v6403, %v6657
    %v6944 = vadd.f32 %v6404, %v6657
    %v6945 = vadd.f32 %v6405, %v6657
    %v6946 = vadd.f32 %v6406, %v6657
    %v6947 = vadd.f32 %v6407, %v6657
    %v6948 = vadd.f32 %v6408, %v6657
    %v6949 = vadd.f32 %v6409, %v6662
    %v6950 = vadd.f32 %v6410, %v6662
    %v6951 = vadd.f32 %v6411, %v6662
    %v6952 = vadd.f32 %v6412, %v6662
    %v6953 = vadd.f32 %v6413, %v6662
    %v6954 = vadd.f32 %v6414, %v6662
    %v6955 = vadd.f32 %v6415, %v6662
    %v6956 = vadd.f32 %v6416, %v6662
    %v6957 = vadd.f32 %v6417, %v6662
    %v6958 = vadd.f32 %v6418, %v6662
    %v6959 = vadd.f32 %v6419, %v6662
    %v6960 = vadd.f32 %v6420, %v6662
    %v6961 = vadd.f32 %v6421, %v6662
    %v6962 = vadd.f32 %v6422, %v6662
    %v6963 = vadd.f32 %v6423, %v6662
    %v6964 = vadd.f32 %v6424, %v6662
    %v6965 = vadd.f32 %v6425, %v6662
    %v6966 = vadd.f32 %v6426, %v6662
    %v6967 = vadd.f32 %v6427, %v6662
    %v6968 = vadd.f32 %v6428, %v6662
    %v6969 = vadd.f32 %v6429, %v6662
    %v6970 = vadd.f32 %v6430, %v6662
    %v6971 = vadd.f32 %v6431, %v6662
    %v6972 = vadd.f32 %v6432, %v6662
    %v6973 = vadd.f32 %v6433, %v6662
    %v6974 = vadd.f32 %v6434, %v6667
    %v6975 = vadd.f32 %v6435, %v6667
    %v6976 = vadd.f32 %v6436, %v6667
    %v6977 = vadd.f32 %v6437, %v6667
    %v6978 = vadd.f32 %v6438, %v6667
    %v6979 = vadd.f32 %v6439, %v6667
    %v6980 = vadd.f32 %v6440, %v6667
    %v6981 = vadd.f32 %v6441, %v6667
    %v6982 = vadd.f32 %v6442, %v6667
    %v6983 = vadd.f32 %v6443, %v6667
    %v6984 = vadd.f32 %v6444, %v6667
    %v6985 = vadd.f32 %v6445, %v6667
    %v6986 = vadd.f32 %v6446, %v6667
    %v6987 = vadd.f32 %v6447, %v6667
    %v6988 = vadd.f32 %v6448, %v6667
    %v6989 = vadd.f32 %v6449, %v6667
    %v6990 = vadd.f32 %v6450, %v6667
    %v6991 = vadd.f32 %v6451, %v6667
    %v6992 = vadd.f32 %v6452, %v6667
    %v6993 = vadd.f32 %v6453, %v6667
    %v6994 = vadd.f32 %v6454, %v6667
    %v6995 = vadd.f32 %v6455, %v6667
    %v6996 = vadd.f32 %v6456, %v6667
    %v6997 = vadd.f32 %v6457, %v6667
    %v6998 = vadd.f32 %v6458, %v6667
    %v6999 = vadd.f32 %v6459, %v6672
    %v7000 = vadd.f32 %v6460, %v6672
    %v7001 = vadd.f32 %v6461, %v6672
    %v7002 = vadd.f32 %v6462, %v6672
    %v7003 = vadd.f32 %v6463, %v6672
    %v7004 = vadd.f32 %v6464, %v6672
    %v7005 = vadd.f32 %v6465, %v6672
    %v7006 = vadd.f32 %v6466, %v6672
    %v7007 = vadd.f32 %v6467, %v6672
    %v7008 = vadd.f32 %v6468, %v6672
    %v7009 = vadd.f32 %v6469, %v6672
    %v7010 = vadd.f32 %v6470, %v6672
    %v7011 = vadd.f32 %v6471, %v6672
    %v7012 = vadd.f32 %v6472, %v6672
    %v7013 = vadd.f32 %v6473, %v6672
    %v7014 = vadd.f32 %v6474, %v6672
    %v7015 = vadd.f32 %v6475, %v6672
    %v7016 = vadd.f32 %v6476, %v6672
    %v7017 = vadd.f32 %v6477, %v6672
    %v7018 = vadd.f32 %v6478, %v6672
    %v7019 = vadd.f32 %v6479, %v6672
    %v7020 = vadd.f32 %v6480, %v6672
    %v7021 = vadd.f32 %v6481, %v6672
    %v7022 = vadd.f32 %v6482, %v6672
    %v7023 = vadd.f32 %v6483, %v6672
    %v7024 = vadd.f32 %v6484, %v6677
    %v7025 = vadd.f32 %v6485, %v6677
    %v7026 = vadd.f32 %v6486, %v6677
    %v7027 = vadd.f32 %v6487, %v6677
    %v7028 = vadd.f32 %v6488, %v6677
    %v7029 = vadd.f32 %v6489, %v6677
    %v7030 = vadd.f32 %v6490, %v6677
    %v7031 = vadd.f32 %v6491, %v6677
    %v7032 = vadd.f32 %v6492, %v6677
    %v7033 = vadd.f32 %v6493, %v6677
    %v7034 = vadd.f32 %v6494, %v6677
    %v7035 = vadd.f32 %v6495, %v6677
    %v7036 = vadd.f32 %v6496, %v6677
    %v7037 = vadd.f32 %v6497, %v6677
    %v7038 = vadd.f32 %v6498, %v6677
    %v7039 = vadd.f32 %v6499, %v6677
    %v7040 = vadd.f32 %v6500, %v6677
    %v7041 = vadd.f32 %v6501, %v6677
    %v7042 = vadd.f32 %v6502, %v6677
    %v7043 = vadd.f32 %v6503, %v6677
    %v7044 = vadd.f32 %v6504, %v6677
    %v7045 = vadd.f32 %v6505, %v6677
    %v7046 = vadd.f32 %v6506, %v6677
    %v7047 = vadd.f32 %v6507, %v6677
    %v7048 = vadd.f32 %v6508, %v6677
    %v7049 = vadd.f32 %v6509, %v6682
    %v7050 = vadd.f32 %v6510, %v6682
    %v7051 = vadd.f32 %v6511, %v6682
    %v7052 = vadd.f32 %v6512, %v6682
    %v7053 = vadd.f32 %v6513, %v6682
    %v7054 = vadd.f32 %v6514, %v6682
    %v7055 = vadd.f32 %v6515, %v6682
    %v7056 = vadd.f32 %v6516, %v6682
    %v7057 = vadd.f32 %v6517, %v6682
    %v7058 = vadd.f32 %v6518, %v6682
    %v7059 = vadd.f32 %v6519, %v6682
    %v7060 = vadd.f32 %v6520, %v6682
    %v7061 = vadd.f32 %v6521, %v6682
    %v7062 = vadd.f32 %v6522, %v6682
    %v7063 = vadd.f32 %v6523, %v6682
    %v7064 = vadd.f32 %v6524, %v6682
    %v7065 = vadd.f32 %v6525, %v6682
    %v7066 = vadd.f32 %v6526, %v6682
    %v7067 = vadd.f32 %v6527, %v6682
    %v7068 = vadd.f32 %v6528, %v6682
    %v7069 = vadd.f32 %v6529, %v6682
    %v7070 = vadd.f32 %v6530, %v6682
    %v7071 = vadd.f32 %v6531, %v6682
    %v7072 = vadd.f32 %v6532, %v6682
    %v7073 = vadd.f32 %v6533, %v6682
    %v7074 = vadd.f32 %v6534, %v6687
    %v7075 = vadd.f32 %v6535, %v6687
    %v7076 = vadd.f32 %v6536, %v6687
    %v7077 = vadd.f32 %v6537, %v6687
    %v7078 = vadd.f32 %v6538, %v6687
    %v7079 = vadd.f32 %v6539, %v6687
    %v7080 = vadd.f32 %v6540, %v6687
    %v7081 = vadd.f32 %v6541, %v6687
    %v7082 = vadd.f32 %v6542, %v6687
    %v7083 = vadd.f32 %v6543, %v6687
    %v7084 = vadd.f32 %v6544, %v6687
    %v7085 = vadd.f32 %v6545, %v6687
    %v7086 = vadd.f32 %v6546, %v6687
    %v7087 = vadd.f32 %v6547, %v6687
    %v7088 = vadd.f32 %v6548, %v6687
    %v7089 = vadd.f32 %v6549, %v6687
    %v7090 = vadd.f32 %v6550, %v6687
    %v7091 = vadd.f32 %v6551, %v6687
    %v7092 = vadd.f32 %v6552, %v6687
    %v7093 = vadd.f32 %v6553, %v6687
    %v7094 = vadd.f32 %v6554, %v6687
    %v7095 = vadd.f32 %v6555, %v6687
    %v7096 = vadd.f32 %v6556, %v6687
    %v7097 = vadd.f32 %v6557, %v6687
    %v7098 = vadd.f32 %v6558, %v6687
    %v7099 = vadd.f32 %v6559, %v6692
    %v7100 = vadd.f32 %v6560, %v6692
    %v7101 = vadd.f32 %v6561, %v6692
    %v7102 = vadd.f32 %v6562, %v6692
    %v7103 = vadd.f32 %v6563, %v6692
    %v7104 = vadd.f32 %v6564, %v6692
    %v7105 = vadd.f32 %v6565, %v6692
    %v7106 = vadd.f32 %v6566, %v6692
    %v7107 = vadd.f32 %v6567, %v6692
    %v7108 = vadd.f32 %v6568, %v6692
    %v7109 = vadd.f32 %v6569, %v6692
    %v7110 = vadd.f32 %v6570, %v6692
    %v7111 = vadd.f32 %v6571, %v6692
    %v7112 = vadd.f32 %v6572, %v6692
    %v7113 = vadd.f32 %v6573, %v6692
    %v7114 = vadd.f32 %v6574, %v6692
    %v7115 = vadd.f32 %v6575, %v6692
    %v7116 = vadd.f32 %v6576, %v6692
    %v7117 = vadd.f32 %v6577, %v6692
    %v7118 = vadd.f32 %v6578, %v6692
    %v7119 = vadd.f32 %v6579, %v6692
    %v7120 = vadd.f32 %v6580, %v6692
    %v7121 = vadd.f32 %v6581, %v6692
    %v7122 = vadd.f32 %v6582, %v6692
    %v7123 = vadd.f32 %v6583, %v6692
    %v7124 = vadd.f32 %v6584, %v6697
    %v7125 = vadd.f32 %v6585, %v6697
    %v7126 = vadd.f32 %v6586, %v6697
    %v7127 = vadd.f32 %v6587, %v6697
    %v7128 = vadd.f32 %v6588, %v6697
    %v7129 = vadd.f32 %v6589, %v6697
    %v7130 = vadd.f32 %v6590, %v6697
    %v7131 = vadd.f32 %v6591, %v6697
    %v7132 = vadd.f32 %v6592, %v6697
    %v7133 = vadd.f32 %v6593, %v6697
    %v7134 = vadd.f32 %v6594, %v6697
    %v7135 = vadd.f32 %v6595, %v6697
    %v7136 = vadd.f32 %v6596, %v6697
    %v7137 = vadd.f32 %v6597, %v6697
    %v7138 = vadd.f32 %v6598, %v6697
    %v7139 = vadd.f32 %v6599, %v6697
    %v7140 = vadd.f32 %v6600, %v6697
    %v7141 = vadd.f32 %v6601, %v6697
    %v7142 = vadd.f32 %v6602, %v6697
    %v7143 = vadd.f32 %v6603, %v6697
    %v7144 = vadd.f32 %v6604, %v6697
    %v7145 = vadd.f32 %v6605, %v6697
    %v7146 = vadd.f32 %v6606, %v6697
    %v7147 = vadd.f32 %v6607, %v6697
    %v7148 = vadd.f32 %v6608, %v6697
    %7149 = vst [vmem:[#allocation11] sm:$0xff] %v6699
    %7150 = vst [vmem:[#allocation11 + $0x8] sm:$0xff] %v6700
    %7151 = vst [vmem:[#allocation11 + $0x10] sm:$0xff] %v6701
    %7152 = vst [vmem:[#allocation11 + $0x18] sm:$0xff] %v6702
    %7153 = vst [vmem:[#allocation11 + $0x20] sm:$0xff] %v6703
    %7154 = vst [vmem:[#allocation11 + $0x28] sm:$0xff] %v6704
    %7155 = vst [vmem:[#allocation11 + $0x30] sm:$0xff] %v6705
    %7156 = vst [vmem:[#allocation11 + $0x38] sm:$0xff] %v6706
    %7157 = vst [vmem:[#allocation11 + $0x40] sm:$0xff] %v6707
    %7158 = vst [vmem:[#allocation11 + $0x48] sm:$0xff] %v6708
    %7159 = vst [vmem:[#allocation11 + $0x50] sm:$0xff] %v6709
    %7160 = vst [vmem:[#allocation11 + $0x58] sm:$0xff] %v6710
    %7161 = vst [vmem:[#allocation11 + $0x60] sm:$0xff] %v6711
    %7162 = vst [vmem:[#allocation11 + $0x68] sm:$0xff] %v6712
    %7163 = vst [vmem:[#allocation11 + $0x70] sm:$0xff] %v6713
    %7164 = vst [vmem:[#allocation11 + $0x78] sm:$0xff] %v6714
    %7165 = vst [vmem:[#allocation11 + $0x80] sm:$0xff] %v6715
    %7166 = vst [vmem:[#allocation11 + $0x88] sm:$0xff] %v6716
    %7167 = vst [vmem:[#allocation11 + $0x90] sm:$0xff] %v6717
    %7168 = vst [vmem:[#allocation11 + $0x98] sm:$0xff] %v6718
    %7169 = vst [vmem:[#allocation11 + $0xa0] sm:$0xff] %v6719
    %7170 = vst [vmem:[#allocation11 + $0xa8] sm:$0xff] %v6720
    %7171 = vst [vmem:[#allocation11 + $0xb0] sm:$0xff] %v6721
    %7172 = vst [vmem:[#allocation11 + $0xb8] sm:$0xff] %v6722
    %7173 = vst.msk [vmem:[#allocation11 + $0xc0] sm:$0xff] %vm1546, %v6723
    %7174 = vst [vmem:[#allocation11 + $0xc8] sm:$0xff] %v6724
    %7175 = vst [vmem:[#allocation11 + $0xd0] sm:$0xff] %v6725
    %7176 = vst [vmem:[#allocation11 + $0xd8] sm:$0xff] %v6726
    %7177 = vst [vmem:[#allocation11 + $0xe0] sm:$0xff] %v6727
    %7178 = vst [vmem:[#allocation11 + $0xe8] sm:$0xff] %v6728
    %7179 = vst [vmem:[#allocation11 + $0xf0] sm:$0xff] %v6729
    %7180 = vst [vmem:[#allocation11 + $0xf8] sm:$0xff] %v6730
    %7181 = vst [vmem:[#allocation11 + $0x100] sm:$0xff] %v6731
    %7182 = vst [vmem:[#allocation11 + $0x108] sm:$0xff] %v6732
    %7183 = vst [vmem:[#allocation11 + $0x110] sm:$0xff] %v6733
    %7184 = vst [vmem:[#allocation11 + $0x118] sm:$0xff] %v6734
    %7185 = vst [vmem:[#allocation11 + $0x120] sm:$0xff] %v6735
    %7186 = vst [vmem:[#allocation11 + $0x128] sm:$0xff] %v6736
    %7187 = vst [vmem:[#allocation11 + $0x130] sm:$0xff] %v6737
    %7188 = vst [vmem:[#allocation11 + $0x138] sm:$0xff] %v6738
    %7189 = vst [vmem:[#allocation11 + $0x140] sm:$0xff] %v6739
    %7190 = vst [vmem:[#allocation11 + $0x148] sm:$0xff] %v6740
    %7191 = vst [vmem:[#allocation11 + $0x150] sm:$0xff] %v6741
    %7192 = vst [vmem:[#allocation11 + $0x158] sm:$0xff] %v6742
    %7193 = vst [vmem:[#allocation11 + $0x160] sm:$0xff] %v6743
    %7194 = vst [vmem:[#allocation11 + $0x168] sm:$0xff] %v6744
    %7195 = vst [vmem:[#allocation11 + $0x170] sm:$0xff] %v6745
    %7196 = vst [vmem:[#allocation11 + $0x178] sm:$0xff] %v6746
    %7197 = vst [vmem:[#allocation11 + $0x180] sm:$0xff] %v6747
    %7198 = vst.msk [vmem:[#allocation11 + $0x188] sm:$0xff] %vm1546, %v6748
    %7199 = vst [vmem:[#allocation11 + $0x190] sm:$0xff] %v6749
    %7200 = vst [vmem:[#allocation11 + $0x198] sm:$0xff] %v6750
    %7201 = vst [vmem:[#allocation11 + $0x1a0] sm:$0xff] %v6751
    %7202 = vst [vmem:[#allocation11 + $0x1a8] sm:$0xff] %v6752
    %7203 = vst [vmem:[#allocation11 + $0x1b0] sm:$0xff] %v6753
    %7204 = vst [vmem:[#allocation11 + $0x1b8] sm:$0xff] %v6754
    %7205 = vst [vmem:[#allocation11 + $0x1c0] sm:$0xff] %v6755
    %7206 = vst [vmem:[#allocation11 + $0x1c8] sm:$0xff] %v6756
    %7207 = vst [vmem:[#allocation11 + $0x1d0] sm:$0xff] %v6757
    %7208 = vst [vmem:[#allocation11 + $0x1d8] sm:$0xff] %v6758
    %7209 = vst [vmem:[#allocation11 + $0x1e0] sm:$0xff] %v6759
    %7210 = vst [vmem:[#allocation11 + $0x1e8] sm:$0xff] %v6760
    %7211 = vst [vmem:[#allocation11 + $0x1f0] sm:$0xff] %v6761
    %7212 = vst [vmem:[#allocation11 + $0x1f8] sm:$0xff] %v6762
    %7213 = vst [vmem:[#allocation11 + $0x200] sm:$0xff] %v6763
    %7214 = vst [vmem:[#allocation11 + $0x208] sm:$0xff] %v6764
    %7215 = vst [vmem:[#allocation11 + $0x210] sm:$0xff] %v6765
    %7216 = vst [vmem:[#allocation11 + $0x218] sm:$0xff] %v6766
    %7217 = vst [vmem:[#allocation11 + $0x220] sm:$0xff] %v6767
    %7218 = vst [vmem:[#allocation11 + $0x228] sm:$0xff] %v6768
    %7219 = vst [vmem:[#allocation11 + $0x230] sm:$0xff] %v6769
    %7220 = vst [vmem:[#allocation11 + $0x238] sm:$0xff] %v6770
    %7221 = vst [vmem:[#allocation11 + $0x240] sm:$0xff] %v6771
    %7222 = vst [vmem:[#allocation11 + $0x248] sm:$0xff] %v6772
    %7223 = vst.msk [vmem:[#allocation11 + $0x250] sm:$0xff] %vm1546, %v6773
    %7224 = vst [vmem:[#allocation11 + $0x258] sm:$0xff] %v6774
    %7225 = vst [vmem:[#allocation11 + $0x260] sm:$0xff] %v6775
    %7226 = vst [vmem:[#allocation11 + $0x268] sm:$0xff] %v6776
    %7227 = vst [vmem:[#allocation11 + $0x270] sm:$0xff] %v6777
    %7228 = vst [vmem:[#allocation11 + $0x278] sm:$0xff] %v6778
    %7229 = vst [vmem:[#allocation11 + $0x280] sm:$0xff] %v6779
    %7230 = vst [vmem:[#allocation11 + $0x288] sm:$0xff] %v6780
    %7231 = vst [vmem:[#allocation11 + $0x290] sm:$0xff] %v6781
    %7232 = vst [vmem:[#allocation11 + $0x298] sm:$0xff] %v6782
    %7233 = vst [vmem:[#allocation11 + $0x2a0] sm:$0xff] %v6783
    %7234 = vst [vmem:[#allocation11 + $0x2a8] sm:$0xff] %v6784
    %7235 = vst [vmem:[#allocation11 + $0x2b0] sm:$0xff] %v6785
    %7236 = vst [vmem:[#allocation11 + $0x2b8] sm:$0xff] %v6786
    %7237 = vst [vmem:[#allocation11 + $0x2c0] sm:$0xff] %v6787
    %7238 = vst [vmem:[#allocation11 + $0x2c8] sm:$0xff] %v6788
    %7239 = vst [vmem:[#allocation11 + $0x2d0] sm:$0xff] %v6789
    %7240 = vst [vmem:[#allocation11 + $0x2d8] sm:$0xff] %v6790
    %7241 = vst [vmem:[#allocation11 + $0x2e0] sm:$0xff] %v6791
    %7242 = vst [vmem:[#allocation11 + $0x2e8] sm:$0xff] %v6792
    %7243 = vst [vmem:[#allocation11 + $0x2f0] sm:$0xff] %v6793
    %7244 = vst [vmem:[#allocation11 + $0x2f8] sm:$0xff] %v6794
    %7245 = vst [vmem:[#allocation11 + $0x300] sm:$0xff] %v6795
    %7246 = vst [vmem:[#allocation11 + $0x308] sm:$0xff] %v6796
    %7247 = vst [vmem:[#allocation11 + $0x310] sm:$0xff] %v6797
    %7248 = vst.msk [vmem:[#allocation11 + $0x318] sm:$0xff] %vm1546, %v6798
    %7249 = vst [vmem:[#allocation11 + $0x320] sm:$0xff] %v6799
    %7250 = vst [vmem:[#allocation11 + $0x328] sm:$0xff] %v6800
    %7251 = vst [vmem:[#allocation11 + $0x330] sm:$0xff] %v6801
    %7252 = vst [vmem:[#allocation11 + $0x338] sm:$0xff] %v6802
    %7253 = vst [vmem:[#allocation11 + $0x340] sm:$0xff] %v6803
    %7254 = vst [vmem:[#allocation11 + $0x348] sm:$0xff] %v6804
    %7255 = vst [vmem:[#allocation11 + $0x350] sm:$0xff] %v6805
    %7256 = vst [vmem:[#allocation11 + $0x358] sm:$0xff] %v6806
    %7257 = vst [vmem:[#allocation11 + $0x360] sm:$0xff] %v6807
    %7258 = vst [vmem:[#allocation11 + $0x368] sm:$0xff] %v6808
    %7259 = vst [vmem:[#allocation11 + $0x370] sm:$0xff] %v6809
    %7260 = vst [vmem:[#allocation11 + $0x378] sm:$0xff] %v6810
    %7261 = vst [vmem:[#allocation11 + $0x380] sm:$0xff] %v6811
    %7262 = vst [vmem:[#allocation11 + $0x388] sm:$0xff] %v6812
    %7263 = vst [vmem:[#allocation11 + $0x390] sm:$0xff] %v6813
    %7264 = vst [vmem:[#allocation11 + $0x398] sm:$0xff] %v6814
    %7265 = vst [vmem:[#allocation11 + $0x3a0] sm:$0xff] %v6815
    %7266 = vst [vmem:[#allocation11 + $0x3a8] sm:$0xff] %v6816
    %7267 = vst [vmem:[#allocation11 + $0x3b0] sm:$0xff] %v6817
    %7268 = vst [vmem:[#allocation11 + $0x3b8] sm:$0xff] %v6818
    %7269 = vst [vmem:[#allocation11 + $0x3c0] sm:$0xff] %v6819
    %7270 = vst [vmem:[#allocation11 + $0x3c8] sm:$0xff] %v6820
    %7271 = vst [vmem:[#allocation11 + $0x3d0] sm:$0xff] %v6821
    %7272 = vst [vmem:[#allocation11 + $0x3d8] sm:$0xff] %v6822
    %7273 = vst.msk [vmem:[#allocation11 + $0x3e0] sm:$0xff] %vm1546, %v6823
    %7274 = vst [vmem:[#allocation11 + $0x3e8] sm:$0xff] %v6824
    %7275 = vst [vmem:[#allocation11 + $0x3f0] sm:$0xff] %v6825
    %7276 = vst [vmem:[#allocation11 + $0x3f8] sm:$0xff] %v6826
    %7277 = vst [vmem:[#allocation11 + $0x400] sm:$0xff] %v6827
    %7278 = vst [vmem:[#allocation11 + $0x408] sm:$0xff] %v6828
    %7279 = vst [vmem:[#allocation11 + $0x410] sm:$0xff] %v6829
    %7280 = vst [vmem:[#allocation11 + $0x418] sm:$0xff] %v6830
    %7281 = vst [vmem:[#allocation11 + $0x420] sm:$0xff] %v6831
    %7282 = vst [vmem:[#allocation11 + $0x428] sm:$0xff] %v6832
    %7283 = vst [vmem:[#allocation11 + $0x430] sm:$0xff] %v6833
    %7284 = vst [vmem:[#allocation11 + $0x438] sm:$0xff] %v6834
    %7285 = vst [vmem:[#allocation11 + $0x440] sm:$0xff] %v6835
    %7286 = vst [vmem:[#allocation11 + $0x448] sm:$0xff] %v6836
    %7287 = vst [vmem:[#allocation11 + $0x450] sm:$0xff] %v6837
    %7288 = vst [vmem:[#allocation11 + $0x458] sm:$0xff] %v6838
    %7289 = vst [vmem:[#allocation11 + $0x460] sm:$0xff] %v6839
    %7290 = vst [vmem:[#allocation11 + $0x468] sm:$0xff] %v6840
    %7291 = vst [vmem:[#allocation11 + $0x470] sm:$0xff] %v6841
    %7292 = vst [vmem:[#allocation11 + $0x478] sm:$0xff] %v6842
    %7293 = vst [vmem:[#allocation11 + $0x480] sm:$0xff] %v6843
    %7294 = vst [vmem:[#allocation11 + $0x488] sm:$0xff] %v6844
    %7295 = vst [vmem:[#allocation11 + $0x490] sm:$0xff] %v6845
    %7296 = vst [vmem:[#allocation11 + $0x498] sm:$0xff] %v6846
    %7297 = vst [vmem:[#allocation11 + $0x4a0] sm:$0xff] %v6847
    %7298 = vst.msk [vmem:[#allocation11 + $0x4a8] sm:$0xff] %vm1546, %v6848
    %7299 = vst [vmem:[#allocation11 + $0x4b0] sm:$0xff] %v6849
    %7300 = vst [vmem:[#allocation11 + $0x4b8] sm:$0xff] %v6850
    %7301 = vst [vmem:[#allocation11 + $0x4c0] sm:$0xff] %v6851
    %7302 = vst [vmem:[#allocation11 + $0x4c8] sm:$0xff] %v6852
    %7303 = vst [vmem:[#allocation11 + $0x4d0] sm:$0xff] %v6853
    %7304 = vst [vmem:[#allocation11 + $0x4d8] sm:$0xff] %v6854
    %7305 = vst [vmem:[#allocation11 + $0x4e0] sm:$0xff] %v6855
    %7306 = vst [vmem:[#allocation11 + $0x4e8] sm:$0xff] %v6856
    %7307 = vst [vmem:[#allocation11 + $0x4f0] sm:$0xff] %v6857
    %7308 = vst [vmem:[#allocation11 + $0x4f8] sm:$0xff] %v6858
    %7309 = vst [vmem:[#allocation11 + $0x500] sm:$0xff] %v6859
    %7310 = vst [vmem:[#allocation11 + $0x508] sm:$0xff] %v6860
    %7311 = vst [vmem:[#allocation11 + $0x510] sm:$0xff] %v6861
    %7312 = vst [vmem:[#allocation11 + $0x518] sm:$0xff] %v6862
    %7313 = vst [vmem:[#allocation11 + $0x520] sm:$0xff] %v6863
    %7314 = vst [vmem:[#allocation11 + $0x528] sm:$0xff] %v6864
    %7315 = vst [vmem:[#allocation11 + $0x530] sm:$0xff] %v6865
    %7316 = vst [vmem:[#allocation11 + $0x538] sm:$0xff] %v6866
    %7317 = vst [vmem:[#allocation11 + $0x540] sm:$0xff] %v6867
    %7318 = vst [vmem:[#allocation11 + $0x548] sm:$0xff] %v6868
    %7319 = vst [vmem:[#allocation11 + $0x550] sm:$0xff] %v6869
    %7320 = vst [vmem:[#allocation11 + $0x558] sm:$0xff] %v6870
    %7321 = vst [vmem:[#allocation11 + $0x560] sm:$0xff] %v6871
    %7322 = vst [vmem:[#allocation11 + $0x568] sm:$0xff] %v6872
    %7323 = vst.msk [vmem:[#allocation11 + $0x570] sm:$0xff] %vm1546, %v6873
    %7324 = vst [vmem:[#allocation11 + $0x578] sm:$0xff] %v6874
    %7325 = vst [vmem:[#allocation11 + $0x580] sm:$0xff] %v6875
    %7326 = vst [vmem:[#allocation11 + $0x588] sm:$0xff] %v6876
    %7327 = vst [vmem:[#allocation11 + $0x590] sm:$0xff] %v6877
    %7328 = vst [vmem:[#allocation11 + $0x598] sm:$0xff] %v6878
    %7329 = vst [vmem:[#allocation11 + $0x5a0] sm:$0xff] %v6879
    %7330 = vst [vmem:[#allocation11 + $0x5a8] sm:$0xff] %v6880
    %7331 = vst [vmem:[#allocation11 + $0x5b0] sm:$0xff] %v6881
    %7332 = vst [vmem:[#allocation11 + $0x5b8] sm:$0xff] %v6882
    %7333 = vst [vmem:[#allocation11 + $0x5c0] sm:$0xff] %v6883
    %7334 = vst [vmem:[#allocation11 + $0x5c8] sm:$0xff] %v6884
    %7335 = vst [vmem:[#allocation11 + $0x5d0] sm:$0xff] %v6885
    %7336 = vst [vmem:[#allocation11 + $0x5d8] sm:$0xff] %v6886
    %7337 = vst [vmem:[#allocation11 + $0x5e0] sm:$0xff] %v6887
    %7338 = vst [vmem:[#allocation11 + $0x5e8] sm:$0xff] %v6888
    %7339 = vst [vmem:[#allocation11 + $0x5f0] sm:$0xff] %v6889
    %7340 = vst [vmem:[#allocation11 + $0x5f8] sm:$0xff] %v6890
    %7341 = vst [vmem:[#allocation11 + $0x600] sm:$0xff] %v6891
    %7342 = vst [vmem:[#allocation11 + $0x608] sm:$0xff] %v6892
    %7343 = vst [vmem:[#allocation11 + $0x610] sm:$0xff] %v6893
    %7344 = vst [vmem:[#allocation11 + $0x618] sm:$0xff] %v6894
    %7345 = vst [vmem:[#allocation11 + $0x620] sm:$0xff] %v6895
    %7346 = vst [vmem:[#allocation11 + $0x628] sm:$0xff] %v6896
    %7347 = vst [vmem:[#allocation11 + $0x630] sm:$0xff] %v6897
    %7348 = vst.msk [vmem:[#allocation11 + $0x638] sm:$0xff] %vm1546, %v6898
    %7349 = vst [vmem:[#allocation11 + $0x640] sm:$0xff] %v6899
    %7350 = vst [vmem:[#allocation11 + $0x648] sm:$0xff] %v6900
    %7351 = vst [vmem:[#allocation11 + $0x650] sm:$0xff] %v6901
    %7352 = vst [vmem:[#allocation11 + $0x658] sm:$0xff] %v6902
    %7353 = vst [vmem:[#allocation11 + $0x660] sm:$0xff] %v6903
    %7354 = vst [vmem:[#allocation11 + $0x668] sm:$0xff] %v6904
    %7355 = vst [vmem:[#allocation11 + $0x670] sm:$0xff] %v6905
    %7356 = vst [vmem:[#allocation11 + $0x678] sm:$0xff] %v6906
    %7357 = vst [vmem:[#allocation11 + $0x680] sm:$0xff] %v6907
    %7358 = vst [vmem:[#allocation11 + $0x688] sm:$0xff] %v6908
    %7359 = vst [vmem:[#allocation11 + $0x690] sm:$0xff] %v6909
    %7360 = vst [vmem:[#allocation11 + $0x698] sm:$0xff] %v6910
    %7361 = vst [vmem:[#allocation11 + $0x6a0] sm:$0xff] %v6911
    %7362 = vst [vmem:[#allocation11 + $0x6a8] sm:$0xff] %v6912
    %7363 = vst [vmem:[#allocation11 + $0x6b0] sm:$0xff] %v6913
    %7364 = vst [vmem:[#allocation11 + $0x6b8] sm:$0xff] %v6914
    %7365 = vst [vmem:[#allocation11 + $0x6c0] sm:$0xff] %v6915
    %7366 = vst [vmem:[#allocation11 + $0x6c8] sm:$0xff] %v6916
    %7367 = vst [vmem:[#allocation11 + $0x6d0] sm:$0xff] %v6917
    %7368 = vst [vmem:[#allocation11 + $0x6d8] sm:$0xff] %v6918
    %7369 = vst [vmem:[#allocation11 + $0x6e0] sm:$0xff] %v6919
    %7370 = vst [vmem:[#allocation11 + $0x6e8] sm:$0xff] %v6920
    %7371 = vst [vmem:[#allocation11 + $0x6f0] sm:$0xff] %v6921
    %7372 = vst [vmem:[#allocation11 + $0x6f8] sm:$0xff] %v6922
    %7373 = vst.msk [vmem:[#allocation11 + $0x700] sm:$0xff] %vm1546, %v6923
    %7374 = vst [vmem:[#allocation11 + $0x708] sm:$0xff] %v6924
    %7375 = vst [vmem:[#allocation11 + $0x710] sm:$0xff] %v6925
    %7376 = vst [vmem:[#allocation11 + $0x718] sm:$0xff] %v6926
    %7377 = vst [vmem:[#allocation11 + $0x720] sm:$0xff] %v6927
    %7378 = vst [vmem:[#allocation11 + $0x728] sm:$0xff] %v6928
    %7379 = vst [vmem:[#allocation11 + $0x730] sm:$0xff] %v6929
    %7380 = vst [vmem:[#allocation11 + $0x738] sm:$0xff] %v6930
    %7381 = vst [vmem:[#allocation11 + $0x740] sm:$0xff] %v6931
    %7382 = vst [vmem:[#allocation11 + $0x748] sm:$0xff] %v6932
    %7383 = vst [vmem:[#allocation11 + $0x750] sm:$0xff] %v6933
    %7384 = vst [vmem:[#allocation11 + $0x758] sm:$0xff] %v6934
    %7385 = vst [vmem:[#allocation11 + $0x760] sm:$0xff] %v6935
    %7386 = vst [vmem:[#allocation11 + $0x768] sm:$0xff] %v6936
    %7387 = vst [vmem:[#allocation11 + $0x770] sm:$0xff] %v6937
    %7388 = vst [vmem:[#allocation11 + $0x778] sm:$0xff] %v6938
    %7389 = vst [vmem:[#allocation11 + $0x780] sm:$0xff] %v6939
    %7390 = vst [vmem:[#allocation11 + $0x788] sm:$0xff] %v6940
    %7391 = vst [vmem:[#allocation11 + $0x790] sm:$0xff] %v6941
    %7392 = vst [vmem:[#allocation11 + $0x798] sm:$0xff] %v6942
    %7393 = vst [vmem:[#allocation11 + $0x7a0] sm:$0xff] %v6943
    %7394 = vst [vmem:[#allocation11 + $0x7a8] sm:$0xff] %v6944
    %7395 = vst [vmem:[#allocation11 + $0x7b0] sm:$0xff] %v6945
    %7396 = vst [vmem:[#allocation11 + $0x7b8] sm:$0xff] %v6946
    %7397 = vst [vmem:[#allocation11 + $0x7c0] sm:$0xff] %v6947
    %7398 = vst.msk [vmem:[#allocation11 + $0x7c8] sm:$0xff] %vm1546, %v6948
    %7399 = vst [vmem:[#allocation11 + $0x7d0] sm:$0xff] %v6949
    %7400 = vst [vmem:[#allocation11 + $0x7d8] sm:$0xff] %v6950
    %7401 = vst [vmem:[#allocation11 + $0x7e0] sm:$0xff] %v6951
    %7402 = vst [vmem:[#allocation11 + $0x7e8] sm:$0xff] %v6952
    %7403 = vst [vmem:[#allocation11 + $0x7f0] sm:$0xff] %v6953
    %7404 = vst [vmem:[#allocation11 + $0x7f8] sm:$0xff] %v6954
    %7405 = vst [vmem:[#allocation11 + $0x800] sm:$0xff] %v6955
    %7406 = vst [vmem:[#allocation11 + $0x808] sm:$0xff] %v6956
    %7407 = vst [vmem:[#allocation11 + $0x810] sm:$0xff] %v6957
    %7408 = vst [vmem:[#allocation11 + $0x818] sm:$0xff] %v6958
    %7409 = vst [vmem:[#allocation11 + $0x820] sm:$0xff] %v6959
    %7410 = vst [vmem:[#allocation11 + $0x828] sm:$0xff] %v6960
    %7411 = vst [vmem:[#allocation11 + $0x830] sm:$0xff] %v6961
    %7412 = vst [vmem:[#allocation11 + $0x838] sm:$0xff] %v6962
    %7413 = vst [vmem:[#allocation11 + $0x840] sm:$0xff] %v6963
    %7414 = vst [vmem:[#allocation11 + $0x848] sm:$0xff] %v6964
    %7415 = vst [vmem:[#allocation11 + $0x850] sm:$0xff] %v6965
    %7416 = vst [vmem:[#allocation11 + $0x858] sm:$0xff] %v6966
    %7417 = vst [vmem:[#allocation11 + $0x860] sm:$0xff] %v6967
    %7418 = vst [vmem:[#allocation11 + $0x868] sm:$0xff] %v6968
    %7419 = vst [vmem:[#allocation11 + $0x870] sm:$0xff] %v6969
    %7420 = vst [vmem:[#allocation11 + $0x878] sm:$0xff] %v6970
    %7421 = vst [vmem:[#allocation11 + $0x880] sm:$0xff] %v6971
    %7422 = vst [vmem:[#allocation11 + $0x888] sm:$0xff] %v6972
    %7423 = vst.msk [vmem:[#allocation11 + $0x890] sm:$0xff] %vm1546, %v6973
    %7424 = vst [vmem:[#allocation11 + $0x898] sm:$0xff] %v6974
    %7425 = vst [vmem:[#allocation11 + $0x8a0] sm:$0xff] %v6975
    %7426 = vst [vmem:[#allocation11 + $0x8a8] sm:$0xff] %v6976
    %7427 = vst [vmem:[#allocation11 + $0x8b0] sm:$0xff] %v6977
    %7428 = vst [vmem:[#allocation11 + $0x8b8] sm:$0xff] %v6978
    %7429 = vst [vmem:[#allocation11 + $0x8c0] sm:$0xff] %v6979
    %7430 = vst [vmem:[#allocation11 + $0x8c8] sm:$0xff] %v6980
    %7431 = vst [vmem:[#allocation11 + $0x8d0] sm:$0xff] %v6981
    %7432 = vst [vmem:[#allocation11 + $0x8d8] sm:$0xff] %v6982
    %7433 = vst [vmem:[#allocation11 + $0x8e0] sm:$0xff] %v6983
    %7434 = vst [vmem:[#allocation11 + $0x8e8] sm:$0xff] %v6984
    %7435 = vst [vmem:[#allocation11 + $0x8f0] sm:$0xff] %v6985
    %7436 = vst [vmem:[#allocation11 + $0x8f8] sm:$0xff] %v6986
    %7437 = vst [vmem:[#allocation11 + $0x900] sm:$0xff] %v6987
    %7438 = vst [vmem:[#allocation11 + $0x908] sm:$0xff] %v6988
    %7439 = vst [vmem:[#allocation11 + $0x910] sm:$0xff] %v6989
    %7440 = vst [vmem:[#allocation11 + $0x918] sm:$0xff] %v6990
    %7441 = vst [vmem:[#allocation11 + $0x920] sm:$0xff] %v6991
    %7442 = vst [vmem:[#allocation11 + $0x928] sm:$0xff] %v6992
    %7443 = vst [vmem:[#allocation11 + $0x930] sm:$0xff] %v6993
    %7444 = vst [vmem:[#allocation11 + $0x938] sm:$0xff] %v6994
    %7445 = vst [vmem:[#allocation11 + $0x940] sm:$0xff] %v6995
    %7446 = vst [vmem:[#allocation11 + $0x948] sm:$0xff] %v6996
    %7447 = vst [vmem:[#allocation11 + $0x950] sm:$0xff] %v6997
    %7448 = vst.msk [vmem:[#allocation11 + $0x958] sm:$0xff] %vm1546, %v6998
    %7449 = vst [vmem:[#allocation11 + $0x960] sm:$0xff] %v6999
    %7450 = vst [vmem:[#allocation11 + $0x968] sm:$0xff] %v7000
    %7451 = vst [vmem:[#allocation11 + $0x970] sm:$0xff] %v7001
    %7452 = vst [vmem:[#allocation11 + $0x978] sm:$0xff] %v7002
    %7453 = vst [vmem:[#allocation11 + $0x980] sm:$0xff] %v7003
    %7454 = vst [vmem:[#allocation11 + $0x988] sm:$0xff] %v7004
    %7455 = vst [vmem:[#allocation11 + $0x990] sm:$0xff] %v7005
    %7456 = vst [vmem:[#allocation11 + $0x998] sm:$0xff] %v7006
    %7457 = vst [vmem:[#allocation11 + $0x9a0] sm:$0xff] %v7007
    %7458 = vst [vmem:[#allocation11 + $0x9a8] sm:$0xff] %v7008
    %7459 = vst [vmem:[#allocation11 + $0x9b0] sm:$0xff] %v7009
    %7460 = vst [vmem:[#allocation11 + $0x9b8] sm:$0xff] %v7010
    %7461 = vst [vmem:[#allocation11 + $0x9c0] sm:$0xff] %v7011
    %7462 = vst [vmem:[#allocation11 + $0x9c8] sm:$0xff] %v7012
    %7463 = vst [vmem:[#allocation11 + $0x9d0] sm:$0xff] %v7013
    %7464 = vst [vmem:[#allocation11 + $0x9d8] sm:$0xff] %v7014
    %7465 = vst [vmem:[#allocation11 + $0x9e0] sm:$0xff] %v7015
    %7466 = vst [vmem:[#allocation11 + $0x9e8] sm:$0xff] %v7016
    %7467 = vst [vmem:[#allocation11 + $0x9f0] sm:$0xff] %v7017
    %7468 = vst [vmem:[#allocation11 + $0x9f8] sm:$0xff] %v7018
    %7469 = vst [vmem:[#allocation11 + $0xa00] sm:$0xff] %v7019
    %7470 = vst [vmem:[#allocation11 + $0xa08] sm:$0xff] %v7020
    %7471 = vst [vmem:[#allocation11 + $0xa10] sm:$0xff] %v7021
    %7472 = vst [vmem:[#allocation11 + $0xa18] sm:$0xff] %v7022
    %7473 = vst.msk [vmem:[#allocation11 + $0xa20] sm:$0xff] %vm1546, %v7023
    %7474 = vst [vmem:[#allocation11 + $0xa28] sm:$0xff] %v7024
    %7475 = vst [vmem:[#allocation11 + $0xa30] sm:$0xff] %v7025
    %7476 = vst [vmem:[#allocation11 + $0xa38] sm:$0xff] %v7026
    %7477 = vst [vmem:[#allocation11 + $0xa40] sm:$0xff] %v7027
    %7478 = vst [vmem:[#allocation11 + $0xa48] sm:$0xff] %v7028
    %7479 = vst [vmem:[#allocation11 + $0xa50] sm:$0xff] %v7029
    %7480 = vst [vmem:[#allocation11 + $0xa58] sm:$0xff] %v7030
    %7481 = vst [vmem:[#allocation11 + $0xa60] sm:$0xff] %v7031
    %7482 = vst [vmem:[#allocation11 + $0xa68] sm:$0xff] %v7032
    %7483 = vst [vmem:[#allocation11 + $0xa70] sm:$0xff] %v7033
    %7484 = vst [vmem:[#allocation11 + $0xa78] sm:$0xff] %v7034
    %7485 = vst [vmem:[#allocation11 + $0xa80] sm:$0xff] %v7035
    %7486 = vst [vmem:[#allocation11 + $0xa88] sm:$0xff] %v7036
    %7487 = vst [vmem:[#allocation11 + $0xa90] sm:$0xff] %v7037
    %7488 = vst [vmem:[#allocation11 + $0xa98] sm:$0xff] %v7038
    %7489 = vst [vmem:[#allocation11 + $0xaa0] sm:$0xff] %v7039
    %7490 = vst [vmem:[#allocation11 + $0xaa8] sm:$0xff] %v7040
    %7491 = vst [vmem:[#allocation11 + $0xab0] sm:$0xff] %v7041
    %7492 = vst [vmem:[#allocation11 + $0xab8] sm:$0xff] %v7042
    %7493 = vst [vmem:[#allocation11 + $0xac0] sm:$0xff] %v7043
    %7494 = vst [vmem:[#allocation11 + $0xac8] sm:$0xff] %v7044
    %7495 = vst [vmem:[#allocation11 + $0xad0] sm:$0xff] %v7045
    %7496 = vst [vmem:[#allocation11 + $0xad8] sm:$0xff] %v7046
    %7497 = vst [vmem:[#allocation11 + $0xae0] sm:$0xff] %v7047
    %7498 = vst.msk [vmem:[#allocation11 + $0xae8] sm:$0xff] %vm1546, %v7048
    %7499 = vst [vmem:[#allocation11 + $0xaf0] sm:$0xff] %v7049
    %7500 = vst [vmem:[#allocation11 + $0xaf8] sm:$0xff] %v7050
    %7501 = vst [vmem:[#allocation11 + $0xb00] sm:$0xff] %v7051
    %7502 = vst [vmem:[#allocation11 + $0xb08] sm:$0xff] %v7052
    %7503 = vst [vmem:[#allocation11 + $0xb10] sm:$0xff] %v7053
    %7504 = vst [vmem:[#allocation11 + $0xb18] sm:$0xff] %v7054
    %7505 = vst [vmem:[#allocation11 + $0xb20] sm:$0xff] %v7055
    %7506 = vst [vmem:[#allocation11 + $0xb28] sm:$0xff] %v7056
    %7507 = vst [vmem:[#allocation11 + $0xb30] sm:$0xff] %v7057
    %7508 = vst [vmem:[#allocation11 + $0xb38] sm:$0xff] %v7058
    %7509 = vst [vmem:[#allocation11 + $0xb40] sm:$0xff] %v7059
    %7510 = vst [vmem:[#allocation11 + $0xb48] sm:$0xff] %v7060
    %7511 = vst [vmem:[#allocation11 + $0xb50] sm:$0xff] %v7061
    %7512 = vst [vmem:[#allocation11 + $0xb58] sm:$0xff] %v7062
    %7513 = vst [vmem:[#allocation11 + $0xb60] sm:$0xff] %v7063
    %7514 = vst [vmem:[#allocation11 + $0xb68] sm:$0xff] %v7064
    %7515 = vst [vmem:[#allocation11 + $0xb70] sm:$0xff] %v7065
    %7516 = vst [vmem:[#allocation11 + $0xb78] sm:$0xff] %v7066
    %7517 = vst [vmem:[#allocation11 + $0xb80] sm:$0xff] %v7067
    %7518 = vst [vmem:[#allocation11 + $0xb88] sm:$0xff] %v7068
    %7519 = vst [vmem:[#allocation11 + $0xb90] sm:$0xff] %v7069
    %7520 = vst [vmem:[#allocation11 + $0xb98] sm:$0xff] %v7070
    %7521 = vst [vmem:[#allocation11 + $0xba0] sm:$0xff] %v7071
    %7522 = vst [vmem:[#allocation11 + $0xba8] sm:$0xff] %v7072
    %7523 = vst.msk [vmem:[#allocation11 + $0xbb0] sm:$0xff] %vm1546, %v7073
    %7524 = vst [vmem:[#allocation11 + $0xbb8] sm:$0xff] %v7074
    %7525 = vst [vmem:[#allocation11 + $0xbc0] sm:$0xff] %v7075
    %7526 = vst [vmem:[#allocation11 + $0xbc8] sm:$0xff] %v7076
    %7527 = vst [vmem:[#allocation11 + $0xbd0] sm:$0xff] %v7077
    %7528 = vst [vmem:[#allocation11 + $0xbd8] sm:$0xff] %v7078
    %7529 = vst [vmem:[#allocation11 + $0xbe0] sm:$0xff] %v7079
    %7530 = vst [vmem:[#allocation11 + $0xbe8] sm:$0xff] %v7080
    %7531 = vst [vmem:[#allocation11 + $0xbf0] sm:$0xff] %v7081
    %7532 = vst [vmem:[#allocation11 + $0xbf8] sm:$0xff] %v7082
    %7533 = vst [vmem:[#allocation11 + $0xc00] sm:$0xff] %v7083
    %7534 = vst [vmem:[#allocation11 + $0xc08] sm:$0xff] %v7084
    %7535 = vst [vmem:[#allocation11 + $0xc10] sm:$0xff] %v7085
    %7536 = vst [vmem:[#allocation11 + $0xc18] sm:$0xff] %v7086
    %7537 = vst [vmem:[#allocation11 + $0xc20] sm:$0xff] %v7087
    %7538 = vst [vmem:[#allocation11 + $0xc28] sm:$0xff] %v7088
    %7539 = vst [vmem:[#allocation11 + $0xc30] sm:$0xff] %v7089
    %7540 = vst [vmem:[#allocation11 + $0xc38] sm:$0xff] %v7090
    %7541 = vst [vmem:[#allocation11 + $0xc40] sm:$0xff] %v7091
    %7542 = vst [vmem:[#allocation11 + $0xc48] sm:$0xff] %v7092
    %7543 = vst [vmem:[#allocation11 + $0xc50] sm:$0xff] %v7093
    %7544 = vst [vmem:[#allocation11 + $0xc58] sm:$0xff] %v7094
    %7545 = vst [vmem:[#allocation11 + $0xc60] sm:$0xff] %v7095
    %7546 = vst [vmem:[#allocation11 + $0xc68] sm:$0xff] %v7096
    %7547 = vst [vmem:[#allocation11 + $0xc70] sm:$0xff] %v7097
    %7548 = vst.msk [vmem:[#allocation11 + $0xc78] sm:$0xff] %vm1546, %v7098
    %7549 = vst [vmem:[#allocation11 + $0xc80] sm:$0xff] %v7099
    %7550 = vst [vmem:[#allocation11 + $0xc88] sm:$0xff] %v7100
    %7551 = vst [vmem:[#allocation11 + $0xc90] sm:$0xff] %v7101
    %7552 = vst [vmem:[#allocation11 + $0xc98] sm:$0xff] %v7102
    %7553 = vst [vmem:[#allocation11 + $0xca0] sm:$0xff] %v7103
    %7554 = vst [vmem:[#allocation11 + $0xca8] sm:$0xff] %v7104
    %7555 = vst [vmem:[#allocation11 + $0xcb0] sm:$0xff] %v7105
    %7556 = vst [vmem:[#allocation11 + $0xcb8] sm:$0xff] %v7106
    %7557 = vst [vmem:[#allocation11 + $0xcc0] sm:$0xff] %v7107
    %7558 = vst [vmem:[#allocation11 + $0xcc8] sm:$0xff] %v7108
    %7559 = vst [vmem:[#allocation11 + $0xcd0] sm:$0xff] %v7109
    %7560 = vst [vmem:[#allocation11 + $0xcd8] sm:$0xff] %v7110
    %7561 = vst [vmem:[#allocation11 + $0xce0] sm:$0xff] %v7111
    %7562 = vst [vmem:[#allocation11 + $0xce8] sm:$0xff] %v7112
    %7563 = vst [vmem:[#allocation11 + $0xcf0] sm:$0xff] %v7113
    %7564 = vst [vmem:[#allocation11 + $0xcf8] sm:$0xff] %v7114
    %7565 = vst [vmem:[#allocation11 + $0xd00] sm:$0xff] %v7115
    %7566 = vst [vmem:[#allocation11 + $0xd08] sm:$0xff] %v7116
    %7567 = vst [vmem:[#allocation11 + $0xd10] sm:$0xff] %v7117
    %7568 = vst [vmem:[#allocation11 + $0xd18] sm:$0xff] %v7118
    %7569 = vst [vmem:[#allocation11 + $0xd20] sm:$0xff] %v7119
    %7570 = vst [vmem:[#allocation11 + $0xd28] sm:$0xff] %v7120
    %7571 = vst [vmem:[#allocation11 + $0xd30] sm:$0xff] %v7121
    %7572 = vst [vmem:[#allocation11 + $0xd38] sm:$0xff] %v7122
    %7573 = vst.msk [vmem:[#allocation11 + $0xd40] sm:$0xff] %vm1546, %v7123
    %7574 = vst [vmem:[#allocation11 + $0xd48] sm:$0xff] %v7124
    %7575 = vst [vmem:[#allocation11 + $0xd50] sm:$0xff] %v7125
    %7576 = vst [vmem:[#allocation11 + $0xd58] sm:$0xff] %v7126
    %7577 = vst [vmem:[#allocation11 + $0xd60] sm:$0xff] %v7127
    %7578 = vst [vmem:[#allocation11 + $0xd68] sm:$0xff] %v7128
    %7579 = vst [vmem:[#allocation11 + $0xd70] sm:$0xff] %v7129
    %7580 = vst [vmem:[#allocation11 + $0xd78] sm:$0xff] %v7130
    %7581 = vst [vmem:[#allocation11 + $0xd80] sm:$0xff] %v7131
    %7582 = vst [vmem:[#allocation11 + $0xd88] sm:$0xff] %v7132
    %7583 = vst [vmem:[#allocation11 + $0xd90] sm:$0xff] %v7133
    %7584 = vst [vmem:[#allocation11 + $0xd98] sm:$0xff] %v7134
    %7585 = vst [vmem:[#allocation11 + $0xda0] sm:$0xff] %v7135
    %7586 = vst [vmem:[#allocation11 + $0xda8] sm:$0xff] %v7136
    %7587 = vst [vmem:[#allocation11 + $0xdb0] sm:$0xff] %v7137
    %7588 = vst [vmem:[#allocation11 + $0xdb8] sm:$0xff] %v7138
    %7589 = vst [vmem:[#allocation11 + $0xdc0] sm:$0xff] %v7139
    %7590 = vst [vmem:[#allocation11 + $0xdc8] sm:$0xff] %v7140
    %7591 = vst [vmem:[#allocation11 + $0xdd0] sm:$0xff] %v7141
    %7592 = vst [vmem:[#allocation11 + $0xdd8] sm:$0xff] %v7142
    %7593 = vst [vmem:[#allocation11 + $0xde0] sm:$0xff] %v7143
    %7594 = vst [vmem:[#allocation11 + $0xde8] sm:$0xff] %v7144
    %7595 = vst [vmem:[#allocation11 + $0xdf0] sm:$0xff] %v7145
    %7596 = vst [vmem:[#allocation11 + $0xdf8] sm:$0xff] %v7146
    %7597 = vst [vmem:[#allocation11 + $0xe00] sm:$0xff] %v7147
    %7598 = vst.msk [vmem:[#allocation11 + $0xe08] sm:$0xff] %vm1546, %v7148
    // Predicated region
    $region66: #{tpu_custom_call.1} parent=1 // pred_check
      _
    $region67: #{tpu_custom_call.1} parent=1 // pred_check_branch
      %7600 = sbr.rel (0) target = $region69
    $region68: #{tpu_custom_call.1} parent=1 // pred_region
      %s7602 = ssub.s32 57600, 57600
      %7603 = vsyncadd [#allocation4], %s7602
      %s7604 = sshll.u32 [#allocation11], 4
      %s7605 = int_to_ptr.vmem [resolvable:$true] %s7604
      %7610 = dma.vmem_to_hbm [thread:$0]  %s7605, 57600, %s11, [#allocation4], 3200, 3200, 200
    $region69: #{tpu_custom_call.1} parent=1 // pred_fallthru
      _
    // Predicated region
    $region70: #{tpu_custom_call.1} parent=1 // pred_check
      _
    $region71: #{tpu_custom_call.1} parent=1 // pred_check_branch
      %7612 = sbr.rel (0) target = $region73
    $region72: #{tpu_custom_call.1} parent=1 // pred_region
      %7613 = dma.done [#allocation4], 57600
    $region73: #{tpu_custom_call.1} parent=1 // pred_fallthru
      _
    %7614 = vsyncpa [#allocation3], 1
    %7615 = vsyncpa [#allocation6], 1
    %7616 = vsyncpa [#allocation9], 1
    %7617 = vsyncpa [#allocation4], 1

</llo_original>
